<compile_context>
chip_gen: v7x
topology: tpu7x:2x2x1
jax: 0.10.0
libtpu: 0.0.40
codegen_flags: <defaults>
</compile_context>

<pallas_src>
import functools

import jax
import jax.numpy as jnp
from jax.experimental import pallas as pl
from jax.experimental.pallas import tpu as pltpu

LEAKY_SLOPE = 0.01   # nn.LeakyReLU() default
BN_EPS = 1e-5        # nn.BatchNorm2d default
LANE = 128           # TPU lane width
MIN_CIN = 16         # minimum input-channel pad (bf16 sublane packing quantum)


def _round_up(x, m):
    return ((x + m - 1) // m) * m


# ----------------------------------------------------------------------------
# Fused direct-conv kernel: 3x3 stride-1 conv + (folded BN) bias + LeakyReLU.
# One image per grid step; padded activation kept in a VMEM scratch; the conv
# is k*k tap-dots on the MXU accumulated in f32.
# ----------------------------------------------------------------------------
def _make_conv_kernel(h, w, cin, k, pad):
    hp, wp = h + 2 * pad, w + 2 * pad
    ho, wo = hp - k + 1, wp - k + 1          # stride-1 output extent

    def kernel(x_ref, w_ref, b_ref, o_ref, xpad_ref):
        cout = o_ref.shape[-1]
        # Row-chunk size keeps the live f32 accumulator at <= ~64 KiB of vregs.
        th = max(1, min(ho, (16384 // cout) // max(wo, 1)))

        # Zero-padded copy of this image in VMEM.  Re-zeroed every grid step so
        # the kernel stays correct when the batch grid is split across cores.
        xpad_ref[...] = jnp.zeros_like(xpad_ref)
        xpad_ref[pad:pad + h, pad:pad + w, :] = x_ref[0].astype(xpad_ref.dtype)

        bias = b_ref[...]                                    # (1, cout) f32

        for oy0 in range(0, ho, th):                         # static unroll
            rows = min(th, ho - oy0)
            acc = jnp.zeros((rows * wo, cout), jnp.float32)
            for ky in range(k):
                for kx in range(k):
                    tap = xpad_ref[oy0 + ky:oy0 + ky + rows, kx:kx + wo, :]
                    wt = w_ref[(ky * k + kx) * cin:(ky * k + kx + 1) * cin, :]
                    acc = acc + jnp.dot(tap.reshape(rows * wo, cin), wt,
                                        preferred_element_type=jnp.float32)
            y = acc + bias                                   # folded BN bias
            y = jnp.where(y >= 0.0, y, LEAKY_SLOPE * y)      # LeakyReLU (f32)
            o_ref[0, oy0:oy0 + rows] = (
                y.reshape(rows, wo, cout).astype(o_ref.dtype))

    return kernel


def conv_bn_lrelu(x_nhwc, weight_oihw, bn_scale, bn_bias, stride, padding,
                  out_dtype=jnp.bfloat16):
    """One ConvNet block.  x_nhwc may carry zero-padded extra channels."""
    n, h, w, cin = x_nhwc.shape
    c_out, c_in_nat, k, _ = weight_oihw.shape
    assert cin >= c_in_nat
    cout_pad = _round_up(c_out, LANE)

    # Weight: (Cout, Cin, kh, kw) -> (kh, kw, cin, cout_pad); fold the BN scale
    # into the columns; flatten to (k*k*cin, cout_pad) in the kernel's tap
    # order.  The transpose is on the tiny weight, never on activations.
    w_t = jnp.transpose(weight_oihw, (2, 3, 1, 0))
    w_t = jnp.pad(w_t, ((0, 0), (0, 0),
                        (0, cin - c_in_nat), (0, cout_pad - c_out)))
    scale_p = jnp.pad(bn_scale, (0, cout_pad - c_out))
    bias_p = jnp.pad(bn_bias, (0, cout_pad - c_out))
    w2d = (w_t * scale_p[None, None, None, :]).reshape(k * k * cin, cout_pad)
    w2d = w2d.astype(jnp.bfloat16)
    b2d = bias_p.reshape(1, cout_pad).astype(jnp.float32)

    hp, wp = h + 2 * padding, w + 2 * padding
    ho, wo = hp - k + 1, wp - k + 1          # stride-1 output extent

    kernel = _make_conv_kernel(h, w, cin, k, padding)

    flops = 2 * n * ho * wo * (k * k * cin) * cout_pad
    bytes_accessed = (x_nhwc.size * x_nhwc.dtype.itemsize
                      + w2d.size * 2
                      + n * ho * wo * cout_pad * jnp.dtype(out_dtype).itemsize)

    y = pl.pallas_call(
        kernel,
        out_shape=jax.ShapeDtypeStruct((n, ho, wo, cout_pad), out_dtype),
        grid_spec=pltpu.PrefetchScalarGridSpec(
            num_scalar_prefetch=0,
            grid=(n,),                       # >=2 steps keeps both v7x TCs busy
            in_specs=[
                pl.BlockSpec((1, h, w, cin), lambda i: (i, 0, 0, 0)),
                pl.BlockSpec((k * k * cin, cout_pad), lambda i: (0, 0)),
                pl.BlockSpec((1, cout_pad), lambda i: (0, 0)),
            ],
            out_specs=pl.BlockSpec((1, ho, wo, cout_pad),
                                   lambda i: (i, 0, 0, 0)),
            scratch_shapes=[pltpu.VMEM((hp, wp, cin), jnp.bfloat16)],
        ),
        compiler_params=pltpu.CompilerParams(
            dimension_semantics=("parallel",)),
        cost_estimate=pl.CostEstimate(flops=flops, transcendentals=0,
                                      bytes_accessed=bytes_accessed),
    )(x_nhwc, w2d, b2d)

    if stride > 1:
        # stride-s conv == stride-1 conv subsampled at multiples of s.  Only
        # layer 0 (the cheapest layer) is strided in this network.
        ho_s = (h + 2 * padding - k) // stride + 1
        wo_s = (w + 2 * padding - k) // stride + 1
        y = y[:, ::stride, ::stride, :][:, :ho_s, :wo_s, :]
    return y


# ----------------------------------------------------------------------------
# CoordConv coordinate channels
# ----------------------------------------------------------------------------
def add_coords(x_nhwc):
    # TODO(synk): CoordConv internals are not shown in the source; assuming the
    # standard AddCoords that appends [-1, 1]-normalized (x, y) channels.
    n, h, w, _ = x_nhwc.shape
    ys = jnp.linspace(-1.0, 1.0, h, dtype=x_nhwc.dtype)
    xs = jnp.linspace(-1.0, 1.0, w, dtype=x_nhwc.dtype)
    yy = jnp.broadcast_to(ys[None, :, None, None], (n, h, w, 1))
    xx = jnp.broadcast_to(xs[None, None, :, None], (n, h, w, 1))
    return jnp.concatenate([x_nhwc, xx, yy], axis=-1)


# ----------------------------------------------------------------------------
# Parameter init (deterministic, synthetic)
# ----------------------------------------------------------------------------
def init_convnet_params(key, image_channels=1,
                        filters=(32, 64, 128, 256),
                        strides=(2, 1, 1, 1),
                        kernel_sizes=(3, 3, 3, 3),
                        paddings=(1, 1, 1, 1),
                        use_coord_conv=True):
    params = []
    in_ch = image_channels
    for i, (f, s, ksz, p) in enumerate(zip(filters, strides, kernel_sizes, paddings)):
        cin = in_ch + (2 if (use_coord_conv and i == 0) else 0)
        key, k1, k2, k3, k4, k5 = jax.random.split(key, 6)
        fan_in = cin * ksz * ksz
        wgt = jax.random.normal(k1, (f, cin, ksz, ksz), jnp.float32) * (2.0 / fan_in) ** 0.5
        gamma = 1.0 + 0.1 * jax.random.normal(k2, (f,), jnp.float32)
        beta = 0.1 * jax.random.normal(k3, (f,), jnp.float32)
        running_mean = 0.1 * jax.random.normal(k4, (f,), jnp.float32)
        running_var = jnp.abs(1.0 + 0.1 * jax.random.normal(k5, (f,), jnp.float32))
        # fold inference-mode BatchNorm2d into a per-channel affine
        scale = gamma / jnp.sqrt(running_var + BN_EPS)
        bias = beta - running_mean * scale
        params.append(dict(weight=wgt, scale=scale, bias=bias,
                           stride=s, padding=p, ksz=ksz))
        in_ch = f
    return params


# ----------------------------------------------------------------------------
# Full ConvNet forward
# ----------------------------------------------------------------------------
def convnet_forward(params, x_nchw, use_coord_conv=True):
    # External layout is NCHW (PyTorch); internal compute layout is NHWC.
    # Inter-layer activations are bf16 with channels zero-padded to a multiple
    # of 128 (padded channels are exact zeros; consuming weight rows are zero).
    # TODO(synk): BatchNorm2d is implemented in inference mode only (running
    # stats folded to an affine); training-mode batch stats are not reproduced.
    # TODO(synk): all four blocks could be fused into one pallas_call holding
    # activations in VMEM; kept as one kernel per block for clarity here.
    x = jnp.transpose(x_nchw, (0, 2, 3, 1)).astype(jnp.float32)
    n_layers = len(params)
    for i, p in enumerate(params):
        if use_coord_conv and i == 0:
            x = add_coords(x)
        if x.shape[-1] < MIN_CIN:   # tiny pad so every tap-dot contraction >= 16
            x = jnp.pad(x, ((0, 0), (0, 0), (0, 0), (0, MIN_CIN - x.shape[-1])))
        last = i == n_layers - 1
        x = conv_bn_lrelu(x, p["weight"], p["scale"], p["bias"],
                          p["stride"], p["padding"],
                          out_dtype=jnp.float32 if last else jnp.bfloat16)
    x = x[..., :params[-1]["weight"].shape[0]]   # no-op if already aligned
    return jnp.transpose(x, (0, 3, 1, 2))


if __name__ == "__main__":
    key = jax.random.PRNGKey(0)
    kp, kx = jax.random.split(key)

    B, C, H, W = 2, 1, 16, 16            # small square image, image_channels=1
    params = init_convnet_params(kp, image_channels=C)
    x = jax.random.normal(kx, (B, C, H, W), jnp.float32)

    fwd = jax.jit(functools.partial(convnet_forward, params))
    out = jax.block_until_ready(fwd(x))

    # stride pattern [2,1,1,1] -> spatial halved once; last filter count = 256
    assert out.shape == (B, 256, H // 2, W // 2), out.shape
    assert bool(jnp.all(jnp.isfinite(out)))
    print("KERNEL_OK")
</pallas_src>

<mosaic_0001>
module attributes {stable_mosaic.version = 11 : i64} {
  func.func @kernel(%arg0: i32, %arg1: memref<1x16x16x16xf32, #tpu.memory_space<vmem>>, %arg2: memref<144x128xbf16, #tpu.memory_space<vmem>>, %arg3: memref<1x128xf32, #tpu.memory_space<vmem>>, %arg4: memref<1x16x16x128xbf16, #tpu.memory_space<vmem>>, %arg5: memref<18x18x16xbf16, #tpu.memory_space<vmem>>) attributes {dimension_semantics = [#tpu.dimension_semantics<parallel>], iteration_bounds = array<i64: 2>, scalar_prefetch = 0 : i64, scratch_operands = 1 : i64, tpu.core_type = #tpu.core_type<tc>, window_params = [{transform_indices = @transform_0, window_bounds = array<i64: 1, 16, 16, 16>}, {pipeline_mode = #tpu.pipeline_mode<synchronous>, transform_indices = @transform_1, window_bounds = array<i64: 144, 128>}, {pipeline_mode = #tpu.pipeline_mode<synchronous>, transform_indices = @transform_2, window_bounds = array<i64: 1, 128>}, {transform_indices = @transform_3, window_bounds = array<i64: 1, 16, 16, 128>}]} {
    %cst = arith.constant 0.000000e+00 : bf16
    %0 = vector.broadcast %cst : bf16 to vector<18x18x16xbf16>
    %c0 = arith.constant 0 : index
    %c0_0 = arith.constant 0 : index
    %c0_1 = arith.constant 0 : index
    %1 = vector.load %arg5[%c0, %c0_0, %c0_1] : memref<18x18x16xbf16, #tpu.memory_space<vmem>>, vector<18x18x16xbf16>
    tpu.vector_store %arg5[%c0, %c0_0, %c0_1], %0 {strides = array<i32>} : memref<18x18x16xbf16, #tpu.memory_space<vmem>>, vector<18x18x16xbf16>,
    %c0_2 = arith.constant 0 : index
    %c0_3 = arith.constant 0 : index
    %c0_4 = arith.constant 0 : index
    %c0_5 = arith.constant 0 : index
    %2 = vector.load %arg1[%c0_2, %c0_3, %c0_4, %c0_5] : memref<1x16x16x16xf32, #tpu.memory_space<vmem>>, vector<1x16x16x16xf32>
    %3 = vector.shape_cast %2 : vector<1x16x16x16xf32> to vector<16x16x16xf32>
    %4 = arith.truncf %3 : vector<16x16x16xf32> to vector<16x16x16xbf16>
    %c1 = arith.constant 1 : index
    %c1_6 = arith.constant 1 : index
    %c0_7 = arith.constant 0 : index
    %5 = vector.load %arg5[%c1, %c1_6, %c0_7] : memref<18x18x16xbf16, #tpu.memory_space<vmem>>, vector<16x16x16xbf16>
    tpu.vector_store %arg5[%c1, %c1_6, %c0_7], %4 {strides = array<i32>} : memref<18x18x16xbf16, #tpu.memory_space<vmem>>, vector<16x16x16xbf16>,
    %c0_8 = arith.constant 0 : index
    %c0_9 = arith.constant 0 : index
    %6 = vector.load %arg3[%c0_8, %c0_9] : memref<1x128xf32, #tpu.memory_space<vmem>>, vector<1x128xf32>
    %cst_10 = arith.constant 0.000000e+00 : f32
    %7 = vector.broadcast %cst_10 : f32 to vector<128x128xf32>
    %c0_11 = arith.constant 0 : index
    %c0_12 = arith.constant 0 : index
    %c0_13 = arith.constant 0 : index
    %8 = vector.load %arg5[%c0_11, %c0_12, %c0_13] : memref<18x18x16xbf16, #tpu.memory_space<vmem>>, vector<8x16x16xbf16>
    %c0_14 = arith.constant 0 : index
    %c0_15 = arith.constant 0 : index
    %9 = vector.load %arg2[%c0_14, %c0_15] : memref<144x128xbf16, #tpu.memory_space<vmem>>, vector<16x128xbf16>
    %10 = vector.shape_cast %8 : vector<8x16x16xbf16> to vector<128x16xbf16>
    %cst_16 = arith.constant dense<0.000000e+00> : vector<128x128xf32>
    %11 = tpu.matmul %10, %9, %cst_16 {dimension_numbers = #tpu.dot_dimension_numbers<[1], [0], [0], [1], [0, 0, 1, 1], [], []>} : vector<128x16xbf16>, vector<16x128xbf16>, vector<128x128xf32> -> vector<128x128xf32>
    %12 = arith.addf %7, %11 : vector<128x128xf32>
    %c0_17 = arith.constant 0 : index
    %c1_18 = arith.constant 1 : index
    %c0_19 = arith.constant 0 : index
    %13 = vector.load %arg5[%c0_17, %c1_18, %c0_19] : memref<18x18x16xbf16, #tpu.memory_space<vmem>>, vector<8x16x16xbf16>
    %c16 = arith.constant 16 : index
    %c0_20 = arith.constant 0 : index
    %14 = vector.load %arg2[%c16, %c0_20] : memref<144x128xbf16, #tpu.memory_space<vmem>>, vector<16x128xbf16>
    %15 = vector.shape_cast %13 : vector<8x16x16xbf16> to vector<128x16xbf16>
    %cst_21 = arith.constant dense<0.000000e+00> : vector<128x128xf32>
    %16 = tpu.matmul %15, %14, %cst_21 {dimension_numbers = #tpu.dot_dimension_numbers<[1], [0], [0], [1], [0, 0, 1, 1], [], []>} : vector<128x16xbf16>, vector<16x128xbf16>, vector<128x128xf32> -> vector<128x128xf32>
    %17 = arith.addf %12, %16 : vector<128x128xf32>
    %c0_22 = arith.constant 0 : index
    %c2 = arith.constant 2 : index
    %c0_23 = arith.constant 0 : index
    %18 = vector.load %arg5[%c0_22, %c2, %c0_23] : memref<18x18x16xbf16, #tpu.memory_space<vmem>>, vector<8x16x16xbf16>
    %c32 = arith.constant 32 : index
    %c0_24 = arith.constant 0 : index
    %19 = vector.load %arg2[%c32, %c0_24] : memref<144x128xbf16, #tpu.memory_space<vmem>>, vector<16x128xbf16>
    %20 = vector.shape_cast %18 : vector<8x16x16xbf16> to vector<128x16xbf16>
    %cst_25 = arith.constant dense<0.000000e+00> : vector<128x128xf32>
    %21 = tpu.matmul %20, %19, %cst_25 {dimension_numbers = #tpu.dot_dimension_numbers<[1], [0], [0], [1], [0, 0, 1, 1], [], []>} : vector<128x16xbf16>, vector<16x128xbf16>, vector<128x128xf32> -> vector<128x128xf32>
    %22 = arith.addf %17, %21 : vector<128x128xf32>
    %c1_26 = arith.constant 1 : index
    %c0_27 = arith.constant 0 : index
    %c0_28 = arith.constant 0 : index
    %23 = vector.load %arg5[%c1_26, %c0_27, %c0_28] : memref<18x18x16xbf16, #tpu.memory_space<vmem>>, vector<8x16x16xbf16>
    %c48 = arith.constant 48 : index
    %c0_29 = arith.constant 0 : index
    %24 = vector.load %arg2[%c48, %c0_29] : memref<144x128xbf16, #tpu.memory_space<vmem>>, vector<16x128xbf16>
    %25 = vector.shape_cast %23 : vector<8x16x16xbf16> to vector<128x16xbf16>
    %cst_30 = arith.constant dense<0.000000e+00> : vector<128x128xf32>
    %26 = tpu.matmul %25, %24, %cst_30 {dimension_numbers = #tpu.dot_dimension_numbers<[1], [0], [0], [1], [0, 0, 1, 1], [], []>} : vector<128x16xbf16>, vector<16x128xbf16>, vector<128x128xf32> -> vector<128x128xf32>
    %27 = arith.addf %22, %26 : vector<128x128xf32>
    %c1_31 = arith.constant 1 : index
    %c1_32 = arith.constant 1 : index
    %c0_33 = arith.constant 0 : index
    %28 = vector.load %arg5[%c1_31, %c1_32, %c0_33] : memref<18x18x16xbf16, #tpu.memory_space<vmem>>, vector<8x16x16xbf16>
    %c64 = arith.constant 64 : index
    %c0_34 = arith.constant 0 : index
    %29 = vector.load %arg2[%c64, %c0_34] : memref<144x128xbf16, #tpu.memory_space<vmem>>, vector<16x128xbf16>
    %30 = vector.shape_cast %28 : vector<8x16x16xbf16> to vector<128x16xbf16>
    %cst_35 = arith.constant dense<0.000000e+00> : vector<128x128xf32>
    %31 = tpu.matmul %30, %29, %cst_35 {dimension_numbers = #tpu.dot_dimension_numbers<[1], [0], [0], [1], [0, 0, 1, 1], [], []>} : vector<128x16xbf16>, vector<16x128xbf16>, vector<128x128xf32> -> vector<128x128xf32>
    %32 = arith.addf %27, %31 : vector<128x128xf32>
    %c1_36 = arith.constant 1 : index
    %c2_37 = arith.constant 2 : index
    %c0_38 = arith.constant 0 : index
    %33 = vector.load %arg5[%c1_36, %c2_37, %c0_38] : memref<18x18x16xbf16, #tpu.memory_space<vmem>>, vector<8x16x16xbf16>
    %c80 = arith.constant 80 : index
    %c0_39 = arith.constant 0 : index
    %34 = vector.load %arg2[%c80, %c0_39] : memref<144x128xbf16, #tpu.memory_space<vmem>>, vector<16x128xbf16>
    %35 = vector.shape_cast %33 : vector<8x16x16xbf16> to vector<128x16xbf16>
    %cst_40 = arith.constant dense<0.000000e+00> : vector<128x128xf32>
    %36 = tpu.matmul %35, %34, %cst_40 {dimension_numbers = #tpu.dot_dimension_numbers<[1], [0], [0], [1], [0, 0, 1, 1], [], []>} : vector<128x16xbf16>, vector<16x128xbf16>, vector<128x128xf32> -> vector<128x128xf32>
    %37 = arith.addf %32, %36 : vector<128x128xf32>
    %c2_41 = arith.constant 2 : index
    %c0_42 = arith.constant 0 : index
    %c0_43 = arith.constant 0 : index
    %38 = vector.load %arg5[%c2_41, %c0_42, %c0_43] : memref<18x18x16xbf16, #tpu.memory_space<vmem>>, vector<8x16x16xbf16>
    %c96 = arith.constant 96 : index
    %c0_44 = arith.constant 0 : index
    %39 = vector.load %arg2[%c96, %c0_44] : memref<144x128xbf16, #tpu.memory_space<vmem>>, vector<16x128xbf16>
    %40 = vector.shape_cast %38 : vector<8x16x16xbf16> to vector<128x16xbf16>
    %cst_45 = arith.constant dense<0.000000e+00> : vector<128x128xf32>
    %41 = tpu.matmul %40, %39, %cst_45 {dimension_numbers = #tpu.dot_dimension_numbers<[1], [0], [0], [1], [0, 0, 1, 1], [], []>} : vector<128x16xbf16>, vector<16x128xbf16>, vector<128x128xf32> -> vector<128x128xf32>
    %42 = arith.addf %37, %41 : vector<128x128xf32>
    %c2_46 = arith.constant 2 : index
    %c1_47 = arith.constant 1 : index
    %c0_48 = arith.constant 0 : index
    %43 = vector.load %arg5[%c2_46, %c1_47, %c0_48] : memref<18x18x16xbf16, #tpu.memory_space<vmem>>, vector<8x16x16xbf16>
    %c112 = arith.constant 112 : index
    %c0_49 = arith.constant 0 : index
    %44 = vector.load %arg2[%c112, %c0_49] : memref<144x128xbf16, #tpu.memory_space<vmem>>, vector<16x128xbf16>
    %45 = vector.shape_cast %43 : vector<8x16x16xbf16> to vector<128x16xbf16>
    %cst_50 = arith.constant dense<0.000000e+00> : vector<128x128xf32>
    %46 = tpu.matmul %45, %44, %cst_50 {dimension_numbers = #tpu.dot_dimension_numbers<[1], [0], [0], [1], [0, 0, 1, 1], [], []>} : vector<128x16xbf16>, vector<16x128xbf16>, vector<128x128xf32> -> vector<128x128xf32>
    %47 = arith.addf %42, %46 : vector<128x128xf32>
    %c2_51 = arith.constant 2 : index
    %c2_52 = arith.constant 2 : index
    %c0_53 = arith.constant 0 : index
    %48 = vector.load %arg5[%c2_51, %c2_52, %c0_53] : memref<18x18x16xbf16, #tpu.memory_space<vmem>>, vector<8x16x16xbf16>
    %c128 = arith.constant 128 : index
    %c0_54 = arith.constant 0 : index
    %49 = vector.load %arg2[%c128, %c0_54] : memref<144x128xbf16, #tpu.memory_space<vmem>>, vector<16x128xbf16>
    %50 = vector.shape_cast %48 : vector<8x16x16xbf16> to vector<128x16xbf16>
    %cst_55 = arith.constant dense<0.000000e+00> : vector<128x128xf32>
    %51 = tpu.matmul %50, %49, %cst_55 {dimension_numbers = #tpu.dot_dimension_numbers<[1], [0], [0], [1], [0, 0, 1, 1], [], []>} : vector<128x16xbf16>, vector<16x128xbf16>, vector<128x128xf32> -> vector<128x128xf32>
    %52 = arith.addf %47, %51 : vector<128x128xf32>
    %53 = vector.broadcast %6 : vector<1x128xf32> to vector<128x128xf32>
    %54 = arith.addf %52, %53 : vector<128x128xf32>
    %cst_56 = arith.constant 0.000000e+00 : f32
    %55 = vector.broadcast %cst_56 : f32 to vector<128x128xf32>
    %56 = arith.cmpf oge, %54, %55 : vector<128x128xf32>
    %cst_57 = arith.constant 0.00999999977 : f32
    %57 = vector.broadcast %cst_57 : f32 to vector<128x128xf32>
    %58 = arith.mulf %57, %54 : vector<128x128xf32>
    %59 = arith.select %56, %54, %58 : vector<128x128xi1>, vector<128x128xf32>
    %60 = vector.shape_cast %59 : vector<128x128xf32> to vector<8x16x128xf32>
    %61 = arith.truncf %60 : vector<8x16x128xf32> to vector<8x16x128xbf16>
    %c0_58 = arith.constant 0 : index
    %c0_59 = arith.constant 0 : index
    %c0_60 = arith.constant 0 : index
    %c0_61 = arith.constant 0 : index
    %62 = vector.load %arg4[%c0_58, %c0_59, %c0_60, %c0_61] : memref<1x16x16x128xbf16, #tpu.memory_space<vmem>>, vector<1x8x16x128xbf16>
    %63 = vector.shape_cast %62 : vector<1x8x16x128xbf16> to vector<8x16x128xbf16>
    %64 = vector.shape_cast %61 : vector<8x16x128xbf16> to vector<1x8x16x128xbf16>
    tpu.vector_store %arg4[%c0_58, %c0_59, %c0_60, %c0_61], %64 {strides = array<i32>} : memref<1x16x16x128xbf16, #tpu.memory_space<vmem>>, vector<1x8x16x128xbf16>,
    %cst_62 = arith.constant 0.000000e+00 : f32
    %65 = vector.broadcast %cst_62 : f32 to vector<128x128xf32>
    %c8 = arith.constant 8 : index
    %c0_63 = arith.constant 0 : index
    %c0_64 = arith.constant 0 : index
    %66 = vector.load %arg5[%c8, %c0_63, %c0_64] : memref<18x18x16xbf16, #tpu.memory_space<vmem>>, vector<8x16x16xbf16>
    %c0_65 = arith.constant 0 : index
    %c0_66 = arith.constant 0 : index
    %67 = vector.load %arg2[%c0_65, %c0_66] : memref<144x128xbf16, #tpu.memory_space<vmem>>, vector<16x128xbf16>
    %68 = vector.shape_cast %66 : vector<8x16x16xbf16> to vector<128x16xbf16>
    %cst_67 = arith.constant dense<0.000000e+00> : vector<128x128xf32>
    %69 = tpu.matmul %68, %67, %cst_67 {dimension_numbers = #tpu.dot_dimension_numbers<[1], [0], [0], [1], [0, 0, 1, 1], [], []>} : vector<128x16xbf16>, vector<16x128xbf16>, vector<128x128xf32> -> vector<128x128xf32>
    %70 = arith.addf %65, %69 : vector<128x128xf32>
    %c8_68 = arith.constant 8 : index
    %c1_69 = arith.constant 1 : index
    %c0_70 = arith.constant 0 : index
    %71 = vector.load %arg5[%c8_68, %c1_69, %c0_70] : memref<18x18x16xbf16, #tpu.memory_space<vmem>>, vector<8x16x16xbf16>
    %c16_71 = arith.constant 16 : index
    %c0_72 = arith.constant 0 : index
    %72 = vector.load %arg2[%c16_71, %c0_72] : memref<144x128xbf16, #tpu.memory_space<vmem>>, vector<16x128xbf16>
    %73 = vector.shape_cast %71 : vector<8x16x16xbf16> to vector<128x16xbf16>
    %cst_73 = arith.constant dense<0.000000e+00> : vector<128x128xf32>
    %74 = tpu.matmul %73, %72, %cst_73 {dimension_numbers = #tpu.dot_dimension_numbers<[1], [0], [0], [1], [0, 0, 1, 1], [], []>} : vector<128x16xbf16>, vector<16x128xbf16>, vector<128x128xf32> -> vector<128x128xf32>
    %75 = arith.addf %70, %74 : vector<128x128xf32>
    %c8_74 = arith.constant 8 : index
    %c2_75 = arith.constant 2 : index
    %c0_76 = arith.constant 0 : index
    %76 = vector.load %arg5[%c8_74, %c2_75, %c0_76] : memref<18x18x16xbf16, #tpu.memory_space<vmem>>, vector<8x16x16xbf16>
    %c32_77 = arith.constant 32 : index
    %c0_78 = arith.constant 0 : index
    %77 = vector.load %arg2[%c32_77, %c0_78] : memref<144x128xbf16, #tpu.memory_space<vmem>>, vector<16x128xbf16>
    %78 = vector.shape_cast %76 : vector<8x16x16xbf16> to vector<128x16xbf16>
    %cst_79 = arith.constant dense<0.000000e+00> : vector<128x128xf32>
    %79 = tpu.matmul %78, %77, %cst_79 {dimension_numbers = #tpu.dot_dimension_numbers<[1], [0], [0], [1], [0, 0, 1, 1], [], []>} : vector<128x16xbf16>, vector<16x128xbf16>, vector<128x128xf32> -> vector<128x128xf32>
    %80 = arith.addf %75, %79 : vector<128x128xf32>
    %c9 = arith.constant 9 : index
    %c0_80 = arith.constant 0 : index
    %c0_81 = arith.constant 0 : index
    %81 = vector.load %arg5[%c9, %c0_80, %c0_81] : memref<18x18x16xbf16, #tpu.memory_space<vmem>>, vector<8x16x16xbf16>
    %c48_82 = arith.constant 48 : index
    %c0_83 = arith.constant 0 : index
    %82 = vector.load %arg2[%c48_82, %c0_83] : memref<144x128xbf16, #tpu.memory_space<vmem>>, vector<16x128xbf16>
    %83 = vector.shape_cast %81 : vector<8x16x16xbf16> to vector<128x16xbf16>
    %cst_84 = arith.constant dense<0.000000e+00> : vector<128x128xf32>
    %84 = tpu.matmul %83, %82, %cst_84 {dimension_numbers = #tpu.dot_dimension_numbers<[1], [0], [0], [1], [0, 0, 1, 1], [], []>} : vector<128x16xbf16>, vector<16x128xbf16>, vector<128x128xf32> -> vector<128x128xf32>
    %85 = arith.addf %80, %84 : vector<128x128xf32>
    %c9_85 = arith.constant 9 : index
    %c1_86 = arith.constant 1 : index
    %c0_87 = arith.constant 0 : index
    %86 = vector.load %arg5[%c9_85, %c1_86, %c0_87] : memref<18x18x16xbf16, #tpu.memory_space<vmem>>, vector<8x16x16xbf16>
    %c64_88 = arith.constant 64 : index
    %c0_89 = arith.constant 0 : index
    %87 = vector.load %arg2[%c64_88, %c0_89] : memref<144x128xbf16, #tpu.memory_space<vmem>>, vector<16x128xbf16>
    %88 = vector.shape_cast %86 : vector<8x16x16xbf16> to vector<128x16xbf16>
    %cst_90 = arith.constant dense<0.000000e+00> : vector<128x128xf32>
    %89 = tpu.matmul %88, %87, %cst_90 {dimension_numbers = #tpu.dot_dimension_numbers<[1], [0], [0], [1], [0, 0, 1, 1], [], []>} : vector<128x16xbf16>, vector<16x128xbf16>, vector<128x128xf32> -> vector<128x128xf32>
    %90 = arith.addf %85, %89 : vector<128x128xf32>
    %c9_91 = arith.constant 9 : index
    %c2_92 = arith.constant 2 : index
    %c0_93 = arith.constant 0 : index
    %91 = vector.load %arg5[%c9_91, %c2_92, %c0_93] : memref<18x18x16xbf16, #tpu.memory_space<vmem>>, vector<8x16x16xbf16>
    %c80_94 = arith.constant 80 : index
    %c0_95 = arith.constant 0 : index
    %92 = vector.load %arg2[%c80_94, %c0_95] : memref<144x128xbf16, #tpu.memory_space<vmem>>, vector<16x128xbf16>
    %93 = vector.shape_cast %91 : vector<8x16x16xbf16> to vector<128x16xbf16>
    %cst_96 = arith.constant dense<0.000000e+00> : vector<128x128xf32>
    %94 = tpu.matmul %93, %92, %cst_96 {dimension_numbers = #tpu.dot_dimension_numbers<[1], [0], [0], [1], [0, 0, 1, 1], [], []>} : vector<128x16xbf16>, vector<16x128xbf16>, vector<128x128xf32> -> vector<128x128xf32>
    %95 = arith.addf %90, %94 : vector<128x128xf32>
    %c10 = arith.constant 10 : index
    %c0_97 = arith.constant 0 : index
    %c0_98 = arith.constant 0 : index
    %96 = vector.load %arg5[%c10, %c0_97, %c0_98] : memref<18x18x16xbf16, #tpu.memory_space<vmem>>, vector<8x16x16xbf16>
    %c96_99 = arith.constant 96 : index
    %c0_100 = arith.constant 0 : index
    %97 = vector.load %arg2[%c96_99, %c0_100] : memref<144x128xbf16, #tpu.memory_space<vmem>>, vector<16x128xbf16>
    %98 = vector.shape_cast %96 : vector<8x16x16xbf16> to vector<128x16xbf16>
    %cst_101 = arith.constant dense<0.000000e+00> : vector<128x128xf32>
    %99 = tpu.matmul %98, %97, %cst_101 {dimension_numbers = #tpu.dot_dimension_numbers<[1], [0], [0], [1], [0, 0, 1, 1], [], []>} : vector<128x16xbf16>, vector<16x128xbf16>, vector<128x128xf32> -> vector<128x128xf32>
    %100 = arith.addf %95, %99 : vector<128x128xf32>
    %c10_102 = arith.constant 10 : index
    %c1_103 = arith.constant 1 : index
    %c0_104 = arith.constant 0 : index
    %101 = vector.load %arg5[%c10_102, %c1_103, %c0_104] : memref<18x18x16xbf16, #tpu.memory_space<vmem>>, vector<8x16x16xbf16>
    %c112_105 = arith.constant 112 : index
    %c0_106 = arith.constant 0 : index
    %102 = vector.load %arg2[%c112_105, %c0_106] : memref<144x128xbf16, #tpu.memory_space<vmem>>, vector<16x128xbf16>
    %103 = vector.shape_cast %101 : vector<8x16x16xbf16> to vector<128x16xbf16>
    %cst_107 = arith.constant dense<0.000000e+00> : vector<128x128xf32>
    %104 = tpu.matmul %103, %102, %cst_107 {dimension_numbers = #tpu.dot_dimension_numbers<[1], [0], [0], [1], [0, 0, 1, 1], [], []>} : vector<128x16xbf16>, vector<16x128xbf16>, vector<128x128xf32> -> vector<128x128xf32>
    %105 = arith.addf %100, %104 : vector<128x128xf32>
    %c10_108 = arith.constant 10 : index
    %c2_109 = arith.constant 2 : index
    %c0_110 = arith.constant 0 : index
    %106 = vector.load %arg5[%c10_108, %c2_109, %c0_110] : memref<18x18x16xbf16, #tpu.memory_space<vmem>>, vector<8x16x16xbf16>
    %c128_111 = arith.constant 128 : index
    %c0_112 = arith.constant 0 : index
    %107 = vector.load %arg2[%c128_111, %c0_112] : memref<144x128xbf16, #tpu.memory_space<vmem>>, vector<16x128xbf16>
    %108 = vector.shape_cast %106 : vector<8x16x16xbf16> to vector<128x16xbf16>
    %cst_113 = arith.constant dense<0.000000e+00> : vector<128x128xf32>
    %109 = tpu.matmul %108, %107, %cst_113 {dimension_numbers = #tpu.dot_dimension_numbers<[1], [0], [0], [1], [0, 0, 1, 1], [], []>} : vector<128x16xbf16>, vector<16x128xbf16>, vector<128x128xf32> -> vector<128x128xf32>
    %110 = arith.addf %105, %109 : vector<128x128xf32>
    %111 = vector.broadcast %6 : vector<1x128xf32> to vector<128x128xf32>
    %112 = arith.addf %110, %111 : vector<128x128xf32>
    %cst_114 = arith.constant 0.000000e+00 : f32
    %113 = vector.broadcast %cst_114 : f32 to vector<128x128xf32>
    %114 = arith.cmpf oge, %112, %113 : vector<128x128xf32>
    %cst_115 = arith.constant 0.00999999977 : f32
    %115 = vector.broadcast %cst_115 : f32 to vector<128x128xf32>
    %116 = arith.mulf %115, %112 : vector<128x128xf32>
    %117 = arith.select %114, %112, %116 : vector<128x128xi1>, vector<128x128xf32>
    %118 = vector.shape_cast %117 : vector<128x128xf32> to vector<8x16x128xf32>
    %119 = arith.truncf %118 : vector<8x16x128xf32> to vector<8x16x128xbf16>
    %c0_116 = arith.constant 0 : index
    %c8_117 = arith.constant 8 : index
    %c0_118 = arith.constant 0 : index
    %c0_119 = arith.constant 0 : index
    %120 = vector.load %arg4[%c0_116, %c8_117, %c0_118, %c0_119] : memref<1x16x16x128xbf16, #tpu.memory_space<vmem>>, vector<1x8x16x128xbf16>
    %121 = vector.shape_cast %120 : vector<1x8x16x128xbf16> to vector<8x16x128xbf16>
    %122 = vector.shape_cast %119 : vector<8x16x128xbf16> to vector<1x8x16x128xbf16>
    tpu.vector_store %arg4[%c0_116, %c8_117, %c0_118, %c0_119], %122 {strides = array<i32>} : memref<1x16x16x128xbf16, #tpu.memory_space<vmem>>, vector<1x8x16x128xbf16>,
    return
  }
  func.func @transform_0(%arg0: i32) -> (i32, i32, i32, i32) {
    %c0_i32 = arith.constant 0 : i32
    %c0_i32_0 = arith.constant 0 : i32
    %c0_i32_1 = arith.constant 0 : i32
    %c0_i32_2 = arith.constant 0 : i32
    return %arg0, %c0_i32, %c0_i32_0, %c0_i32_1 : i32, i32, i32, i32
  }
  func.func @transform_1(%arg0: i32) -> (i32, i32) {
    %c0_i32 = arith.constant 0 : i32
    %c0_i32_0 = arith.constant 0 : i32
    %c0_i32_1 = arith.constant 0 : i32
    return %c0_i32, %c0_i32_0 : i32, i32
  }
  func.func @transform_2(%arg0: i32) -> (i32, i32) {
    %c0_i32 = arith.constant 0 : i32
    %c0_i32_0 = arith.constant 0 : i32
    %c0_i32_1 = arith.constant 0 : i32
    return %c0_i32, %c0_i32_0 : i32, i32
  }
  func.func @transform_3(%arg0: i32) -> (i32, i32, i32, i32) {
    %c0_i32 = arith.constant 0 : i32
    %c0_i32_0 = arith.constant 0 : i32
    %c0_i32_1 = arith.constant 0 : i32
    %c0_i32_2 = arith.constant 0 : i32
    return %arg0, %c0_i32, %c0_i32_0, %c0_i32_1 : i32, i32, i32, i32
  }
}

module attributes {stable_mosaic.version = 11 : i64} {
  func.func @kernel(%arg0: i32, %arg1: memref<1x8x8x128xbf16, #tpu.memory_space<vmem>>, %arg2: memref<1152x128xbf16, #tpu.memory_space<vmem>>, %arg3: memref<1x128xf32, #tpu.memory_space<vmem>>, %arg4: memref<1x8x8x128xbf16, #tpu.memory_space<vmem>>, %arg5: memref<10x10x128xbf16, #tpu.memory_space<vmem>>) attributes {dimension_semantics = [#tpu.dimension_semantics<parallel>], iteration_bounds = array<i64: 2>, scalar_prefetch = 0 : i64, scratch_operands = 1 : i64, tpu.core_type = #tpu.core_type<tc>, window_params = [{transform_indices = @transform_0, window_bounds = array<i64: 1, 8, 8, 128>}, {pipeline_mode = #tpu.pipeline_mode<synchronous>, transform_indices = @transform_1, window_bounds = array<i64: 1152, 128>}, {pipeline_mode = #tpu.pipeline_mode<synchronous>, transform_indices = @transform_2, window_bounds = array<i64: 1, 128>}, {transform_indices = @transform_3, window_bounds = array<i64: 1, 8, 8, 128>}]} {
    %cst = arith.constant 0.000000e+00 : bf16
    %0 = vector.broadcast %cst : bf16 to vector<10x10x128xbf16>
    %c0 = arith.constant 0 : index
    %c0_0 = arith.constant 0 : index
    %c0_1 = arith.constant 0 : index
    %1 = vector.load %arg5[%c0, %c0_0, %c0_1] : memref<10x10x128xbf16, #tpu.memory_space<vmem>>, vector<10x10x128xbf16>
    tpu.vector_store %arg5[%c0, %c0_0, %c0_1], %0 {strides = array<i32>} : memref<10x10x128xbf16, #tpu.memory_space<vmem>>, vector<10x10x128xbf16>,
    %c0_2 = arith.constant 0 : index
    %c0_3 = arith.constant 0 : index
    %c0_4 = arith.constant 0 : index
    %c0_5 = arith.constant 0 : index
    %2 = vector.load %arg1[%c0_2, %c0_3, %c0_4, %c0_5] : memref<1x8x8x128xbf16, #tpu.memory_space<vmem>>, vector<1x8x8x128xbf16>
    %3 = vector.shape_cast %2 : vector<1x8x8x128xbf16> to vector<8x8x128xbf16>
    %c1 = arith.constant 1 : index
    %c1_6 = arith.constant 1 : index
    %c0_7 = arith.constant 0 : index
    %4 = vector.load %arg5[%c1, %c1_6, %c0_7] : memref<10x10x128xbf16, #tpu.memory_space<vmem>>, vector<8x8x128xbf16>
    tpu.vector_store %arg5[%c1, %c1_6, %c0_7], %3 {strides = array<i32>} : memref<10x10x128xbf16, #tpu.memory_space<vmem>>, vector<8x8x128xbf16>,
    %c0_8 = arith.constant 0 : index
    %c0_9 = arith.constant 0 : index
    %5 = vector.load %arg3[%c0_8, %c0_9] : memref<1x128xf32, #tpu.memory_space<vmem>>, vector<1x128xf32>
    %cst_10 = arith.constant 0.000000e+00 : f32
    %6 = vector.broadcast %cst_10 : f32 to vector<64x128xf32>
    %c0_11 = arith.constant 0 : index
    %c0_12 = arith.constant 0 : index
    %c0_13 = arith.constant 0 : index
    %7 = vector.load %arg5[%c0_11, %c0_12, %c0_13] : memref<10x10x128xbf16, #tpu.memory_space<vmem>>, vector<8x8x128xbf16>
    %c0_14 = arith.constant 0 : index
    %c0_15 = arith.constant 0 : index
    %8 = vector.load %arg2[%c0_14, %c0_15] : memref<1152x128xbf16, #tpu.memory_space<vmem>>, vector<128x128xbf16>
    %9 = vector.shape_cast %7 : vector<8x8x128xbf16> to vector<64x128xbf16>
    %cst_16 = arith.constant dense<0.000000e+00> : vector<64x128xf32>
    %10 = tpu.matmul %9, %8, %cst_16 {dimension_numbers = #tpu.dot_dimension_numbers<[1], [0], [0], [1], [0, 0, 1, 1], [], []>} : vector<64x128xbf16>, vector<128x128xbf16>, vector<64x128xf32> -> vector<64x128xf32>
    %11 = arith.addf %6, %10 : vector<64x128xf32>
    %c0_17 = arith.constant 0 : index
    %c1_18 = arith.constant 1 : index
    %c0_19 = arith.constant 0 : index
    %12 = vector.load %arg5[%c0_17, %c1_18, %c0_19] : memref<10x10x128xbf16, #tpu.memory_space<vmem>>, vector<8x8x128xbf16>
    %c128 = arith.constant 128 : index
    %c0_20 = arith.constant 0 : index
    %13 = vector.load %arg2[%c128, %c0_20] : memref<1152x128xbf16, #tpu.memory_space<vmem>>, vector<128x128xbf16>
    %14 = vector.shape_cast %12 : vector<8x8x128xbf16> to vector<64x128xbf16>
    %cst_21 = arith.constant dense<0.000000e+00> : vector<64x128xf32>
    %15 = tpu.matmul %14, %13, %cst_21 {dimension_numbers = #tpu.dot_dimension_numbers<[1], [0], [0], [1], [0, 0, 1, 1], [], []>} : vector<64x128xbf16>, vector<128x128xbf16>, vector<64x128xf32> -> vector<64x128xf32>
    %16 = arith.addf %11, %15 : vector<64x128xf32>
    %c0_22 = arith.constant 0 : index
    %c2 = arith.constant 2 : index
    %c0_23 = arith.constant 0 : index
    %17 = vector.load %arg5[%c0_22, %c2, %c0_23] : memref<10x10x128xbf16, #tpu.memory_space<vmem>>, vector<8x8x128xbf16>
    %c256 = arith.constant 256 : index
    %c0_24 = arith.constant 0 : index
    %18 = vector.load %arg2[%c256, %c0_24] : memref<1152x128xbf16, #tpu.memory_space<vmem>>, vector<128x128xbf16>
    %19 = vector.shape_cast %17 : vector<8x8x128xbf16> to vector<64x128xbf16>
    %cst_25 = arith.constant dense<0.000000e+00> : vector<64x128xf32>
    %20 = tpu.matmul %19, %18, %cst_25 {dimension_numbers = #tpu.dot_dimension_numbers<[1], [0], [0], [1], [0, 0, 1, 1], [], []>} : vector<64x128xbf16>, vector<128x128xbf16>, vector<64x128xf32> -> vector<64x128xf32>
    %21 = arith.addf %16, %20 : vector<64x128xf32>
    %c1_26 = arith.constant 1 : index
    %c0_27 = arith.constant 0 : index
    %c0_28 = arith.constant 0 : index
    %22 = vector.load %arg5[%c1_26, %c0_27, %c0_28] : memref<10x10x128xbf16, #tpu.memory_space<vmem>>, vector<8x8x128xbf16>
    %c384 = arith.constant 384 : index
    %c0_29 = arith.constant 0 : index
    %23 = vector.load %arg2[%c384, %c0_29] : memref<1152x128xbf16, #tpu.memory_space<vmem>>, vector<128x128xbf16>
    %24 = vector.shape_cast %22 : vector<8x8x128xbf16> to vector<64x128xbf16>
    %cst_30 = arith.constant dense<0.000000e+00> : vector<64x128xf32>
    %25 = tpu.matmul %24, %23, %cst_30 {dimension_numbers = #tpu.dot_dimension_numbers<[1], [0], [0], [1], [0, 0, 1, 1], [], []>} : vector<64x128xbf16>, vector<128x128xbf16>, vector<64x128xf32> -> vector<64x128xf32>
    %26 = arith.addf %21, %25 : vector<64x128xf32>
    %c1_31 = arith.constant 1 : index
    %c1_32 = arith.constant 1 : index
    %c0_33 = arith.constant 0 : index
    %27 = vector.load %arg5[%c1_31, %c1_32, %c0_33] : memref<10x10x128xbf16, #tpu.memory_space<vmem>>, vector<8x8x128xbf16>
    %c512 = arith.constant 512 : index
    %c0_34 = arith.constant 0 : index
    %28 = vector.load %arg2[%c512, %c0_34] : memref<1152x128xbf16, #tpu.memory_space<vmem>>, vector<128x128xbf16>
    %29 = vector.shape_cast %27 : vector<8x8x128xbf16> to vector<64x128xbf16>
    %cst_35 = arith.constant dense<0.000000e+00> : vector<64x128xf32>
    %30 = tpu.matmul %29, %28, %cst_35 {dimension_numbers = #tpu.dot_dimension_numbers<[1], [0], [0], [1], [0, 0, 1, 1], [], []>} : vector<64x128xbf16>, vector<128x128xbf16>, vector<64x128xf32> -> vector<64x128xf32>
    %31 = arith.addf %26, %30 : vector<64x128xf32>
    %c1_36 = arith.constant 1 : index
    %c2_37 = arith.constant 2 : index
    %c0_38 = arith.constant 0 : index
    %32 = vector.load %arg5[%c1_36, %c2_37, %c0_38] : memref<10x10x128xbf16, #tpu.memory_space<vmem>>, vector<8x8x128xbf16>
    %c640 = arith.constant 640 : index
    %c0_39 = arith.constant 0 : index
    %33 = vector.load %arg2[%c640, %c0_39] : memref<1152x128xbf16, #tpu.memory_space<vmem>>, vector<128x128xbf16>
    %34 = vector.shape_cast %32 : vector<8x8x128xbf16> to vector<64x128xbf16>
    %cst_40 = arith.constant dense<0.000000e+00> : vector<64x128xf32>
    %35 = tpu.matmul %34, %33, %cst_40 {dimension_numbers = #tpu.dot_dimension_numbers<[1], [0], [0], [1], [0, 0, 1, 1], [], []>} : vector<64x128xbf16>, vector<128x128xbf16>, vector<64x128xf32> -> vector<64x128xf32>
    %36 = arith.addf %31, %35 : vector<64x128xf32>
    %c2_41 = arith.constant 2 : index
    %c0_42 = arith.constant 0 : index
    %c0_43 = arith.constant 0 : index
    %37 = vector.load %arg5[%c2_41, %c0_42, %c0_43] : memref<10x10x128xbf16, #tpu.memory_space<vmem>>, vector<8x8x128xbf16>
    %c768 = arith.constant 768 : index
    %c0_44 = arith.constant 0 : index
    %38 = vector.load %arg2[%c768, %c0_44] : memref<1152x128xbf16, #tpu.memory_space<vmem>>, vector<128x128xbf16>
    %39 = vector.shape_cast %37 : vector<8x8x128xbf16> to vector<64x128xbf16>
    %cst_45 = arith.constant dense<0.000000e+00> : vector<64x128xf32>
    %40 = tpu.matmul %39, %38, %cst_45 {dimension_numbers = #tpu.dot_dimension_numbers<[1], [0], [0], [1], [0, 0, 1, 1], [], []>} : vector<64x128xbf16>, vector<128x128xbf16>, vector<64x128xf32> -> vector<64x128xf32>
    %41 = arith.addf %36, %40 : vector<64x128xf32>
    %c2_46 = arith.constant 2 : index
    %c1_47 = arith.constant 1 : index
    %c0_48 = arith.constant 0 : index
    %42 = vector.load %arg5[%c2_46, %c1_47, %c0_48] : memref<10x10x128xbf16, #tpu.memory_space<vmem>>, vector<8x8x128xbf16>
    %c896 = arith.constant 896 : index
    %c0_49 = arith.constant 0 : index
    %43 = vector.load %arg2[%c896, %c0_49] : memref<1152x128xbf16, #tpu.memory_space<vmem>>, vector<128x128xbf16>
    %44 = vector.shape_cast %42 : vector<8x8x128xbf16> to vector<64x128xbf16>
    %cst_50 = arith.constant dense<0.000000e+00> : vector<64x128xf32>
    %45 = tpu.matmul %44, %43, %cst_50 {dimension_numbers = #tpu.dot_dimension_numbers<[1], [0], [0], [1], [0, 0, 1, 1], [], []>} : vector<64x128xbf16>, vector<128x128xbf16>, vector<64x128xf32> -> vector<64x128xf32>
    %46 = arith.addf %41, %45 : vector<64x128xf32>
    %c2_51 = arith.constant 2 : index
    %c2_52 = arith.constant 2 : index
    %c0_53 = arith.constant 0 : index
    %47 = vector.load %arg5[%c2_51, %c2_52, %c0_53] : memref<10x10x128xbf16, #tpu.memory_space<vmem>>, vector<8x8x128xbf16>
    %c1024 = arith.constant 1024 : index
    %c0_54 = arith.constant 0 : index
    %48 = vector.load %arg2[%c1024, %c0_54] : memref<1152x128xbf16, #tpu.memory_space<vmem>>, vector<128x128xbf16>
    %49 = vector.shape_cast %47 : vector<8x8x128xbf16> to vector<64x128xbf16>
    %cst_55 = arith.constant dense<0.000000e+00> : vector<64x128xf32>
    %50 = tpu.matmul %49, %48, %cst_55 {dimension_numbers = #tpu.dot_dimension_numbers<[1], [0], [0], [1], [0, 0, 1, 1], [], []>} : vector<64x128xbf16>, vector<128x128xbf16>, vector<64x128xf32> -> vector<64x128xf32>
    %51 = arith.addf %46, %50 : vector<64x128xf32>
    %52 = vector.broadcast %5 : vector<1x128xf32> to vector<64x128xf32>
    %53 = arith.addf %51, %52 : vector<64x128xf32>
    %cst_56 = arith.constant 0.000000e+00 : f32
    %54 = vector.broadcast %cst_56 : f32 to vector<64x128xf32>
    %55 = arith.cmpf oge, %53, %54 : vector<64x128xf32>
    %cst_57 = arith.constant 0.00999999977 : f32
    %56 = vector.broadcast %cst_57 : f32 to vector<64x128xf32>
    %57 = arith.mulf %56, %53 : vector<64x128xf32>
    %58 = arith.select %55, %53, %57 : vector<64x128xi1>, vector<64x128xf32>
    %59 = vector.shape_cast %58 : vector<64x128xf32> to vector<8x8x128xf32>
    %60 = arith.truncf %59 : vector<8x8x128xf32> to vector<8x8x128xbf16>
    %c0_58 = arith.constant 0 : index
    %c0_59 = arith.constant 0 : index
    %c0_60 = arith.constant 0 : index
    %c0_61 = arith.constant 0 : index
    %61 = vector.load %arg4[%c0_58, %c0_59, %c0_60, %c0_61] : memref<1x8x8x128xbf16, #tpu.memory_space<vmem>>, vector<1x8x8x128xbf16>
    %62 = vector.shape_cast %61 : vector<1x8x8x128xbf16> to vector<8x8x128xbf16>
    %63 = vector.shape_cast %60 : vector<8x8x128xbf16> to vector<1x8x8x128xbf16>
    tpu.vector_store %arg4[%c0_58, %c0_59, %c0_60, %c0_61], %63 {strides = array<i32>} : memref<1x8x8x128xbf16, #tpu.memory_space<vmem>>, vector<1x8x8x128xbf16>,
    return
  }
  func.func @transform_0(%arg0: i32) -> (i32, i32, i32, i32) {
    %c0_i32 = arith.constant 0 : i32
    %c0_i32_0 = arith.constant 0 : i32
    %c0_i32_1 = arith.constant 0 : i32
    %c0_i32_2 = arith.constant 0 : i32
    return %arg0, %c0_i32, %c0_i32_0, %c0_i32_1 : i32, i32, i32, i32
  }
  func.func @transform_1(%arg0: i32) -> (i32, i32) {
    %c0_i32 = arith.constant 0 : i32
    %c0_i32_0 = arith.constant 0 : i32
    %c0_i32_1 = arith.constant 0 : i32
    return %c0_i32, %c0_i32_0 : i32, i32
  }
  func.func @transform_2(%arg0: i32) -> (i32, i32) {
    %c0_i32 = arith.constant 0 : i32
    %c0_i32_0 = arith.constant 0 : i32
    %c0_i32_1 = arith.constant 0 : i32
    return %c0_i32, %c0_i32_0 : i32, i32
  }
  func.func @transform_3(%arg0: i32) -> (i32, i32, i32, i32) {
    %c0_i32 = arith.constant 0 : i32
    %c0_i32_0 = arith.constant 0 : i32
    %c0_i32_1 = arith.constant 0 : i32
    %c0_i32_2 = arith.constant 0 : i32
    return %arg0, %c0_i32, %c0_i32_0, %c0_i32_1 : i32, i32, i32, i32
  }
}

module attributes {stable_mosaic.version = 11 : i64} {
  func.func @kernel(%arg0: i32, %arg1: memref<1x8x8x128xbf16, #tpu.memory_space<vmem>>, %arg2: memref<1152x256xbf16, #tpu.memory_space<vmem>>, %arg3: memref<1x256xf32, #tpu.memory_space<vmem>>, %arg4: memref<1x8x8x256xf32, #tpu.memory_space<vmem>>, %arg5: memref<10x10x128xbf16, #tpu.memory_space<vmem>>) attributes {dimension_semantics = [#tpu.dimension_semantics<parallel>], iteration_bounds = array<i64: 2>, scalar_prefetch = 0 : i64, scratch_operands = 1 : i64, tpu.core_type = #tpu.core_type<tc>, window_params = [{transform_indices = @transform_0, window_bounds = array<i64: 1, 8, 8, 128>}, {pipeline_mode = #tpu.pipeline_mode<synchronous>, transform_indices = @transform_1, window_bounds = array<i64: 1152, 256>}, {pipeline_mode = #tpu.pipeline_mode<synchronous>, transform_indices = @transform_2, window_bounds = array<i64: 1, 256>}, {transform_indices = @transform_3, window_bounds = array<i64: 1, 8, 8, 256>}]} {
    %cst = arith.constant 0.000000e+00 : bf16
    %0 = vector.broadcast %cst : bf16 to vector<10x10x128xbf16>
    %c0 = arith.constant 0 : index
    %c0_0 = arith.constant 0 : index
    %c0_1 = arith.constant 0 : index
    %1 = vector.load %arg5[%c0, %c0_0, %c0_1] : memref<10x10x128xbf16, #tpu.memory_space<vmem>>, vector<10x10x128xbf16>
    tpu.vector_store %arg5[%c0, %c0_0, %c0_1], %0 {strides = array<i32>} : memref<10x10x128xbf16, #tpu.memory_space<vmem>>, vector<10x10x128xbf16>,
    %c0_2 = arith.constant 0 : index
    %c0_3 = arith.constant 0 : index
    %c0_4 = arith.constant 0 : index
    %c0_5 = arith.constant 0 : index
    %2 = vector.load %arg1[%c0_2, %c0_3, %c0_4, %c0_5] : memref<1x8x8x128xbf16, #tpu.memory_space<vmem>>, vector<1x8x8x128xbf16>
    %3 = vector.shape_cast %2 : vector<1x8x8x128xbf16> to vector<8x8x128xbf16>
    %c1 = arith.constant 1 : index
    %c1_6 = arith.constant 1 : index
    %c0_7 = arith.constant 0 : index
    %4 = vector.load %arg5[%c1, %c1_6, %c0_7] : memref<10x10x128xbf16, #tpu.memory_space<vmem>>, vector<8x8x128xbf16>
    tpu.vector_store %arg5[%c1, %c1_6, %c0_7], %3 {strides = array<i32>} : memref<10x10x128xbf16, #tpu.memory_space<vmem>>, vector<8x8x128xbf16>,
    %c0_8 = arith.constant 0 : index
    %c0_9 = arith.constant 0 : index
    %5 = vector.load %arg3[%c0_8, %c0_9] : memref<1x256xf32, #tpu.memory_space<vmem>>, vector<1x256xf32>
    %cst_10 = arith.constant 0.000000e+00 : f32
    %6 = vector.broadcast %cst_10 : f32 to vector<64x256xf32>
    %c0_11 = arith.constant 0 : index
    %c0_12 = arith.constant 0 : index
    %c0_13 = arith.constant 0 : index
    %7 = vector.load %arg5[%c0_11, %c0_12, %c0_13] : memref<10x10x128xbf16, #tpu.memory_space<vmem>>, vector<8x8x128xbf16>
    %c0_14 = arith.constant 0 : index
    %c0_15 = arith.constant 0 : index
    %8 = vector.load %arg2[%c0_14, %c0_15] : memref<1152x256xbf16, #tpu.memory_space<vmem>>, vector<128x256xbf16>
    %9 = vector.shape_cast %7 : vector<8x8x128xbf16> to vector<64x128xbf16>
    %cst_16 = arith.constant dense<0.000000e+00> : vector<64x256xf32>
    %10 = tpu.matmul %9, %8, %cst_16 {dimension_numbers = #tpu.dot_dimension_numbers<[1], [0], [0], [1], [0, 0, 1, 1], [], []>} : vector<64x128xbf16>, vector<128x256xbf16>, vector<64x256xf32> -> vector<64x256xf32>
    %11 = arith.addf %6, %10 : vector<64x256xf32>
    %c0_17 = arith.constant 0 : index
    %c1_18 = arith.constant 1 : index
    %c0_19 = arith.constant 0 : index
    %12 = vector.load %arg5[%c0_17, %c1_18, %c0_19] : memref<10x10x128xbf16, #tpu.memory_space<vmem>>, vector<8x8x128xbf16>
    %c128 = arith.constant 128 : index
    %c0_20 = arith.constant 0 : index
    %13 = vector.load %arg2[%c128, %c0_20] : memref<1152x256xbf16, #tpu.memory_space<vmem>>, vector<128x256xbf16>
    %14 = vector.shape_cast %12 : vector<8x8x128xbf16> to vector<64x128xbf16>
    %cst_21 = arith.constant dense<0.000000e+00> : vector<64x256xf32>
    %15 = tpu.matmul %14, %13, %cst_21 {dimension_numbers = #tpu.dot_dimension_numbers<[1], [0], [0], [1], [0, 0, 1, 1], [], []>} : vector<64x128xbf16>, vector<128x256xbf16>, vector<64x256xf32> -> vector<64x256xf32>
    %16 = arith.addf %11, %15 : vector<64x256xf32>
    %c0_22 = arith.constant 0 : index
    %c2 = arith.constant 2 : index
    %c0_23 = arith.constant 0 : index
    %17 = vector.load %arg5[%c0_22, %c2, %c0_23] : memref<10x10x128xbf16, #tpu.memory_space<vmem>>, vector<8x8x128xbf16>
    %c256 = arith.constant 256 : index
    %c0_24 = arith.constant 0 : index
    %18 = vector.load %arg2[%c256, %c0_24] : memref<1152x256xbf16, #tpu.memory_space<vmem>>, vector<128x256xbf16>
    %19 = vector.shape_cast %17 : vector<8x8x128xbf16> to vector<64x128xbf16>
    %cst_25 = arith.constant dense<0.000000e+00> : vector<64x256xf32>
    %20 = tpu.matmul %19, %18, %cst_25 {dimension_numbers = #tpu.dot_dimension_numbers<[1], [0], [0], [1], [0, 0, 1, 1], [], []>} : vector<64x128xbf16>, vector<128x256xbf16>, vector<64x256xf32> -> vector<64x256xf32>
    %21 = arith.addf %16, %20 : vector<64x256xf32>
    %c1_26 = arith.constant 1 : index
    %c0_27 = arith.constant 0 : index
    %c0_28 = arith.constant 0 : index
    %22 = vector.load %arg5[%c1_26, %c0_27, %c0_28] : memref<10x10x128xbf16, #tpu.memory_space<vmem>>, vector<8x8x128xbf16>
    %c384 = arith.constant 384 : index
    %c0_29 = arith.constant 0 : index
    %23 = vector.load %arg2[%c384, %c0_29] : memref<1152x256xbf16, #tpu.memory_space<vmem>>, vector<128x256xbf16>
    %24 = vector.shape_cast %22 : vector<8x8x128xbf16> to vector<64x128xbf16>
    %cst_30 = arith.constant dense<0.000000e+00> : vector<64x256xf32>
    %25 = tpu.matmul %24, %23, %cst_30 {dimension_numbers = #tpu.dot_dimension_numbers<[1], [0], [0], [1], [0, 0, 1, 1], [], []>} : vector<64x128xbf16>, vector<128x256xbf16>, vector<64x256xf32> -> vector<64x256xf32>
    %26 = arith.addf %21, %25 : vector<64x256xf32>
    %c1_31 = arith.constant 1 : index
    %c1_32 = arith.constant 1 : index
    %c0_33 = arith.constant 0 : index
    %27 = vector.load %arg5[%c1_31, %c1_32, %c0_33] : memref<10x10x128xbf16, #tpu.memory_space<vmem>>, vector<8x8x128xbf16>
    %c512 = arith.constant 512 : index
    %c0_34 = arith.constant 0 : index
    %28 = vector.load %arg2[%c512, %c0_34] : memref<1152x256xbf16, #tpu.memory_space<vmem>>, vector<128x256xbf16>
    %29 = vector.shape_cast %27 : vector<8x8x128xbf16> to vector<64x128xbf16>
    %cst_35 = arith.constant dense<0.000000e+00> : vector<64x256xf32>
    %30 = tpu.matmul %29, %28, %cst_35 {dimension_numbers = #tpu.dot_dimension_numbers<[1], [0], [0], [1], [0, 0, 1, 1], [], []>} : vector<64x128xbf16>, vector<128x256xbf16>, vector<64x256xf32> -> vector<64x256xf32>
    %31 = arith.addf %26, %30 : vector<64x256xf32>
    %c1_36 = arith.constant 1 : index
    %c2_37 = arith.constant 2 : index
    %c0_38 = arith.constant 0 : index
    %32 = vector.load %arg5[%c1_36, %c2_37, %c0_38] : memref<10x10x128xbf16, #tpu.memory_space<vmem>>, vector<8x8x128xbf16>
    %c640 = arith.constant 640 : index
    %c0_39 = arith.constant 0 : index
    %33 = vector.load %arg2[%c640, %c0_39] : memref<1152x256xbf16, #tpu.memory_space<vmem>>, vector<128x256xbf16>
    %34 = vector.shape_cast %32 : vector<8x8x128xbf16> to vector<64x128xbf16>
    %cst_40 = arith.constant dense<0.000000e+00> : vector<64x256xf32>
    %35 = tpu.matmul %34, %33, %cst_40 {dimension_numbers = #tpu.dot_dimension_numbers<[1], [0], [0], [1], [0, 0, 1, 1], [], []>} : vector<64x128xbf16>, vector<128x256xbf16>, vector<64x256xf32> -> vector<64x256xf32>
    %36 = arith.addf %31, %35 : vector<64x256xf32>
    %c2_41 = arith.constant 2 : index
    %c0_42 = arith.constant 0 : index
    %c0_43 = arith.constant 0 : index
    %37 = vector.load %arg5[%c2_41, %c0_42, %c0_43] : memref<10x10x128xbf16, #tpu.memory_space<vmem>>, vector<8x8x128xbf16>
    %c768 = arith.constant 768 : index
    %c0_44 = arith.constant 0 : index
    %38 = vector.load %arg2[%c768, %c0_44] : memref<1152x256xbf16, #tpu.memory_space<vmem>>, vector<128x256xbf16>
    %39 = vector.shape_cast %37 : vector<8x8x128xbf16> to vector<64x128xbf16>
    %cst_45 = arith.constant dense<0.000000e+00> : vector<64x256xf32>
    %40 = tpu.matmul %39, %38, %cst_45 {dimension_numbers = #tpu.dot_dimension_numbers<[1], [0], [0], [1], [0, 0, 1, 1], [], []>} : vector<64x128xbf16>, vector<128x256xbf16>, vector<64x256xf32> -> vector<64x256xf32>
    %41 = arith.addf %36, %40 : vector<64x256xf32>
    %c2_46 = arith.constant 2 : index
    %c1_47 = arith.constant 1 : index
    %c0_48 = arith.constant 0 : index
    %42 = vector.load %arg5[%c2_46, %c1_47, %c0_48] : memref<10x10x128xbf16, #tpu.memory_space<vmem>>, vector<8x8x128xbf16>
    %c896 = arith.constant 896 : index
    %c0_49 = arith.constant 0 : index
    %43 = vector.load %arg2[%c896, %c0_49] : memref<1152x256xbf16, #tpu.memory_space<vmem>>, vector<128x256xbf16>
    %44 = vector.shape_cast %42 : vector<8x8x128xbf16> to vector<64x128xbf16>
    %cst_50 = arith.constant dense<0.000000e+00> : vector<64x256xf32>
    %45 = tpu.matmul %44, %43, %cst_50 {dimension_numbers = #tpu.dot_dimension_numbers<[1], [0], [0], [1], [0, 0, 1, 1], [], []>} : vector<64x128xbf16>, vector<128x256xbf16>, vector<64x256xf32> -> vector<64x256xf32>
    %46 = arith.addf %41, %45 : vector<64x256xf32>
    %c2_51 = arith.constant 2 : index
    %c2_52 = arith.constant 2 : index
    %c0_53 = arith.constant 0 : index
    %47 = vector.load %arg5[%c2_51, %c2_52, %c0_53] : memref<10x10x128xbf16, #tpu.memory_space<vmem>>, vector<8x8x128xbf16>
    %c1024 = arith.constant 1024 : index
    %c0_54 = arith.constant 0 : index
    %48 = vector.load %arg2[%c1024, %c0_54] : memref<1152x256xbf16, #tpu.memory_space<vmem>>, vector<128x256xbf16>
    %49 = vector.shape_cast %47 : vector<8x8x128xbf16> to vector<64x128xbf16>
    %cst_55 = arith.constant dense<0.000000e+00> : vector<64x256xf32>
    %50 = tpu.matmul %49, %48, %cst_55 {dimension_numbers = #tpu.dot_dimension_numbers<[1], [0], [0], [1], [0, 0, 1, 1], [], []>} : vector<64x128xbf16>, vector<128x256xbf16>, vector<64x256xf32> -> vector<64x256xf32>
    %51 = arith.addf %46, %50 : vector<64x256xf32>
    %52 = vector.broadcast %5 : vector<1x256xf32> to vector<64x256xf32>
    %53 = arith.addf %51, %52 : vector<64x256xf32>
    %cst_56 = arith.constant 0.000000e+00 : f32
    %54 = vector.broadcast %cst_56 : f32 to vector<64x256xf32>
    %55 = arith.cmpf oge, %53, %54 : vector<64x256xf32>
    %cst_57 = arith.constant 0.00999999977 : f32
    %56 = vector.broadcast %cst_57 : f32 to vector<64x256xf32>
    %57 = arith.mulf %56, %53 : vector<64x256xf32>
    %58 = arith.select %55, %53, %57 : vector<64x256xi1>, vector<64x256xf32>
    %59 = vector.shape_cast %58 : vector<64x256xf32> to vector<8x8x256xf32>
    %c0_58 = arith.constant 0 : index
    %c0_59 = arith.constant 0 : index
    %c0_60 = arith.constant 0 : index
    %c0_61 = arith.constant 0 : index
    %60 = vector.load %arg4[%c0_58, %c0_59, %c0_60, %c0_61] : memref<1x8x8x256xf32, #tpu.memory_space<vmem>>, vector<1x8x8x256xf32>
    %61 = vector.shape_cast %60 : vector<1x8x8x256xf32> to vector<8x8x256xf32>
    %62 = vector.shape_cast %59 : vector<8x8x256xf32> to vector<1x8x8x256xf32>
    tpu.vector_store %arg4[%c0_58, %c0_59, %c0_60, %c0_61], %62 {strides = array<i32>} : memref<1x8x8x256xf32, #tpu.memory_space<vmem>>, vector<1x8x8x256xf32>,
    return
  }
  func.func @transform_0(%arg0: i32) -> (i32, i32, i32, i32) {
    %c0_i32 = arith.constant 0 : i32
    %c0_i32_0 = arith.constant 0 : i32
    %c0_i32_1 = arith.constant 0 : i32
    %c0_i32_2 = arith.constant 0 : i32
    return %arg0, %c0_i32, %c0_i32_0, %c0_i32_1 : i32, i32, i32, i32
  }
  func.func @transform_1(%arg0: i32) -> (i32, i32) {
    %c0_i32 = arith.constant 0 : i32
    %c0_i32_0 = arith.constant 0 : i32
    %c0_i32_1 = arith.constant 0 : i32
    return %c0_i32, %c0_i32_0 : i32, i32
  }
  func.func @transform_2(%arg0: i32) -> (i32, i32) {
    %c0_i32 = arith.constant 0 : i32
    %c0_i32_0 = arith.constant 0 : i32
    %c0_i32_1 = arith.constant 0 : i32
    return %c0_i32, %c0_i32_0 : i32, i32
  }
  func.func @transform_3(%arg0: i32) -> (i32, i32, i32, i32) {
    %c0_i32 = arith.constant 0 : i32
    %c0_i32_0 = arith.constant 0 : i32
    %c0_i32_1 = arith.constant 0 : i32
    %c0_i32_2 = arith.constant 0 : i32
    return %arg0, %c0_i32, %c0_i32_0, %c0_i32_1 : i32, i32, i32, i32
  }
}

</mosaic_0001>

<llo_original>
// kernel: convnet_forward.5
$region0: #{convnet_forward.5}
  #allocation0 [shape = 'u32[]', space=smem, size = 0x4, offset = 0x4, fixed_abs, tag = 'smem constant byte address 0x4 - core index']
  #allocation1 [shape = 'u32[144,128]{1,0:T(1,128)}', space=vmem, size = 0x12000, scoped, tag = 'internal scratch']
  #allocation2 [shape = 'bf16[10,10,128]{2,1,0:T(8,128)(2,1)}', space=vmem, size = 0xa000, scoped, tag = 'scratch operand']
  %s0 = inlined_call_operand.vmem [shape: bf16[2,8,8,128], index: 0, kind: input, shape index: {}]
  %s1 = inlined_call_operand.vmem [shape: bf16[1152,128], index: 1, kind: input, shape index: {}]
  %s2 = inlined_call_operand.vmem [shape: f32[1,128], index: 2, kind: input, shape index: {}]
  %s3 = inlined_call_operand.vmem [shape: bf16[2,8,8,128], index: 3, kind: output, shape index: {}]
  %s4 = sld [smem:[#allocation0]]
  $region45: #{convnet_forward.5} parent=0
    _
  %s6 = ssub.s32 1, %s4
  %s7 = scalar_select 0, %s6, %s4
  loop: start=0, step=1, limit=4
  $region2: #{convnet_forward.5} parent=0 // loop_pre_header
    _
  $region3: #{convnet_forward.5} parent=0 // loop_header
    %s9 = sphi 0, %s13
    %p10 = scmp.ge.s32.totalorder %s9, 4
    %s19 = sphi 0, %s21
    %s22 = sphi 0, %s19
    %s23 = sphi 0, %s22
    %s39 = sphi 0, %s23
    %s43 = sphi 0, %s43
    %s45 = sphi 0, %s43
    %s46 = sphi 0, %s45
    %s60 = sphi 0, %s46
    %s64 = sphi 0, %s64
    %s66 = sphi 0, %s64
    %s67 = sphi 0, %s66
    %s81 = sphi 0, %s67
    %s87 = sphi 0, %s89
    %s90 = sphi 0, %s87
    %s91 = sphi 0, %s90
    %s107 = sphi 0, %s91
  $region4: #{convnet_forward.5} parent=0 // loop_header_branch
    %12 = sbr.rel (%p10) target = $region8
  $region5: #{convnet_forward.5} parent=0 // loop_body
    %s14 = ssub.s32 %s9, 1
    %s15 = ssub.s32 %s9, 2
    %s16 = sadd.s32 %s9, 1
    %s17 = ssub.s32 %s9, %s16
    %p18 = scmp.eq.s32.totalorder %s17, 0
    %s20 = sadd.s32 %s19, 1
    %s21 = scalar_select %p18, %s19, %s20
    %p24 = pneg %p18
    %p25 = scmp.eq.s32.totalorder %s9, 1
    %p26 = por %p24, %p25
    %p27 = scmp.ne.s32.totalorder %s19, %s22
    %p28 = scmp.eq.s32.totalorder %s9, 0
    %p29 = por %p27, %p28
    %p30 = scmp.ne.s32.totalorder %s19, %s22
    %p31 = scmp.eq.s32.totalorder %s14, 1
    %p32 = por %p30, %p31
    %p33 = scmp.ne.s32.totalorder %s22, %s23
    %p34 = scmp.eq.s32.totalorder %s14, 0
    %p35 = por %p33, %p34
    %p36 = scmp.ne.s32.totalorder %s22, %s23
    %p37 = scmp.eq.s32.totalorder %s15, 1
    %p38 = por %p36, %p37
    %p40 = scmp.ne.s32.totalorder %s23, %s39
    %p41 = scmp.eq.s32.totalorder %s15, 0
    %p42 = por %p40, %p41
    %s44 = sadd.s32 %s43, 1
    %p47 = scmp.eq.s32.totalorder %s9, 1
    %p48 = scmp.ne.s32.totalorder %s43, %s45
    %p49 = scmp.eq.s32.totalorder %s9, 0
    %p50 = por %p48, %p49
    %p51 = scmp.ne.s32.totalorder %s43, %s45
    %p52 = scmp.eq.s32.totalorder %s14, 1
    %p53 = por %p51, %p52
    %p54 = scmp.ne.s32.totalorder %s45, %s46
    %p55 = scmp.eq.s32.totalorder %s14, 0
    %p56 = por %p54, %p55
    %p57 = scmp.ne.s32.totalorder %s45, %s46
    %p58 = scmp.eq.s32.totalorder %s15, 1
    %p59 = por %p57, %p58
    %p61 = scmp.ne.s32.totalorder %s46, %s60
    %p62 = scmp.eq.s32.totalorder %s15, 0
    %p63 = por %p61, %p62
    %s65 = sadd.s32 %s64, 1
    %p68 = scmp.eq.s32.totalorder %s9, 1
    %p69 = scmp.ne.s32.totalorder %s64, %s66
    %p70 = scmp.eq.s32.totalorder %s9, 0
    %p71 = por %p69, %p70
    %p72 = scmp.ne.s32.totalorder %s64, %s66
    %p73 = scmp.eq.s32.totalorder %s14, 1
    %p74 = por %p72, %p73
    %p75 = scmp.ne.s32.totalorder %s66, %s67
    %p76 = scmp.eq.s32.totalorder %s14, 0
    %p77 = por %p75, %p76
    %p78 = scmp.ne.s32.totalorder %s66, %s67
    %p79 = scmp.eq.s32.totalorder %s15, 1
    %p80 = por %p78, %p79
    %p82 = scmp.ne.s32.totalorder %s67, %s81
    %p83 = scmp.eq.s32.totalorder %s15, 0
    %p84 = por %p82, %p83
    %s85 = ssub.s32 %s9, %s16
    %p86 = scmp.eq.s32.totalorder %s85, 0
    %s88 = sadd.s32 %s87, 1
    %s89 = scalar_select %p86, %s87, %s88
    %p92 = pneg %p86
    %p93 = scmp.eq.s32.totalorder %s9, 1
    %p94 = por %p92, %p93
    %p95 = scmp.ne.s32.totalorder %s87, %s90
    %p96 = scmp.eq.s32.totalorder %s9, 0
    %p97 = por %p95, %p96
    %p98 = scmp.ne.s32.totalorder %s87, %s90
    %p99 = scmp.eq.s32.totalorder %s14, 1
    %p100 = por %p98, %p99
    %p101 = scmp.ne.s32.totalorder %s90, %s91
    %p102 = scmp.eq.s32.totalorder %s14, 0
    %p103 = por %p101, %p102
    %p104 = scmp.ne.s32.totalorder %s90, %s91
    %p105 = scmp.eq.s32.totalorder %s15, 1
    %p106 = por %p104, %p105
    %p108 = scmp.ne.s32.totalorder %s91, %s107
    %p109 = scmp.eq.s32.totalorder %s15, 0
    %p110 = por %p108, %p109
    %p111 = scmp.le.s32.totalorder 1, %s9
    %p112 = scmp.lt.s32.totalorder %s9, 3
    %p113 = pnand %p111, %p112
    %p114 = pneg %p113
    // Predicated region
    $region9: #{convnet_forward.5} parent=5 // pred_check
      _
    $region10: #{convnet_forward.5} parent=5 // pred_check_branch
      %116 = sbr.rel (%p113) target = $region12
    $region11: #{convnet_forward.5} parent=5 // pred_region
      %s117 = ssub.s32 %s9, 1
      // Predicated region
      $region13: #{convnet_forward.5} parent=11 // pred_check
        %p118 = pneg %p56
      $region14: #{convnet_forward.5} parent=11 // pred_check_branch
        %120 = sbr.rel (%p118) target = $region16
      $region15: #{convnet_forward.5} parent=11 // pred_region
        _
      $region16: #{convnet_forward.5} parent=11 // pred_fallthru
        _
      // Predicated region
      $region17: #{convnet_forward.5} parent=11 // pred_check
        %p121 = pneg %p77
      $region18: #{convnet_forward.5} parent=11 // pred_check_branch
        %123 = sbr.rel (%p121) target = $region20
      $region19: #{convnet_forward.5} parent=11 // pred_region
        _
      $region20: #{convnet_forward.5} parent=11 // pred_fallthru
        _
    $region12: #{convnet_forward.5} parent=5 // pred_fallthru
      _
    %p124 = scmp.lt.s32.totalorder %s9, 2
    // Predicated region
    $region21: #{convnet_forward.5} parent=5 // pred_check
      %p125 = pneg %p124
    $region22: #{convnet_forward.5} parent=5 // pred_check_branch
      %127 = sbr.rel (%p125) target = $region24
    $region23: #{convnet_forward.5} parent=5 // pred_region
      // Predicated region
      $region25: #{convnet_forward.5} parent=23 // pred_check
        %p128 = pneg %p29
      $region26: #{convnet_forward.5} parent=23 // pred_check_branch
        %130 = sbr.rel (%p128) target = $region28
      $region27: #{convnet_forward.5} parent=23 // pred_region
        %p131 = scmp.lt.s32.totalorder %s9, 1
        %s132 = scalar_select %p131, %s9, 1
        %s133 = smul.addr %s132, 8
        %s134 = smul.addr %s133, 4
        %s135 = scalar_lea.vmem %s0, %s134
      $region28: #{convnet_forward.5} parent=23 // pred_fallthru
        _
    $region24: #{convnet_forward.5} parent=5 // pred_fallthru
      _
    %p136 = scmp.le.s32.totalorder 1, %s9
    %p137 = scmp.lt.s32.totalorder %s9, 3
    %p138 = pnand %p136, %p137
    %p139 = pneg %p138
    // Predicated region
    $region29: #{convnet_forward.5} parent=5 // pred_check
      _
    $region30: #{convnet_forward.5} parent=5 // pred_check_branch
      %141 = sbr.rel (%p138) target = $region32
    $region31: #{convnet_forward.5} parent=5 // pred_region
      %s142 = ssub.s32 %s9, 1
      %p143 = scmp.lt.s32.totalorder %s14, 1
      %s144 = scalar_select %p143, %s14, 1
      %s145 = smul.addr %s144, 8
      %s146 = smul.addr %s145, 4
      %s147 = scalar_lea.vmem %s0, %s146
      %p148 = pneg %p35
      %p149 = pneg %p32
      %p150 = pneg %p56
      %p151 = pneg %p53
      %p152 = pneg %p77
      %p153 = pneg %p74
      %p154 = pneg %p103
      %p155 = pneg %p100
      %p156 = scmp.lt.s32.totalorder %s14, 1
      %s157 = scalar_select %p156, %s14, 1
      %s158 = smul.addr %s157, 8
      %s159 = smul.addr %s158, 4
      %s160 = scalar_lea.vmem %s3, %s159
      %p161 = scmp.lt.s32.totalorder %s14, 1
      %s162 = scalar_select %p161, %s14, 1
      %s163 = smul.addr %s162, 8
      %s164 = smul.addr %s163, 4
      %s165 = scalar_lea.vmem %s0, %s164
      %p166 = scmp.lt.s32.totalorder %s14, 1
      %s167 = scalar_select %p166, %s14, 1
      %s168 = smul.addr %s167, 8
      %s169 = smul.addr %s168, 4
      %s170 = scalar_lea.vmem %s3, %s169
      %172 = vst [vmem:[#allocation2] sm:$0xf] 0
      %173 = vst [vmem:[#allocation2 + $0x4] sm:$0x1] 0
      %174 = vst [vmem:[#allocation2 + $0x8] sm:$0xf] 0
      %175 = vst [vmem:[#allocation2 + $0xc] sm:$0x1] 0
      %176 = vst [vmem:[#allocation2 + $0x10] sm:$0xf] 0
      %177 = vst [vmem:[#allocation2 + $0x14] sm:$0x1] 0
      %178 = vst [vmem:[#allocation2 + $0x18] sm:$0xf] 0
      %179 = vst [vmem:[#allocation2 + $0x1c] sm:$0x1] 0
      %180 = vst [vmem:[#allocation2 + $0x20] sm:$0xf] 0
      %181 = vst [vmem:[#allocation2 + $0x24] sm:$0x1] 0
      %182 = vst [vmem:[#allocation2 + $0x28] sm:$0xf] 0
      %183 = vst [vmem:[#allocation2 + $0x2c] sm:$0x1] 0
      %184 = vst [vmem:[#allocation2 + $0x30] sm:$0xf] 0
      %185 = vst [vmem:[#allocation2 + $0x34] sm:$0x1] 0
      %186 = vst [vmem:[#allocation2 + $0x38] sm:$0xf] 0
      %187 = vst [vmem:[#allocation2 + $0x3c] sm:$0x1] 0
      %188 = vst [vmem:[#allocation2 + $0x40] sm:$0xf] 0
      %189 = vst [vmem:[#allocation2 + $0x44] sm:$0x1] 0
      %190 = vst [vmem:[#allocation2 + $0x48] sm:$0xf] 0
      %191 = vst [vmem:[#allocation2 + $0x4c] sm:$0x1] 0
      %v192 = vld [vmem:[%s165] sm:$0xf]
      %v193 = vld [vmem:[%s165 + $0x4] sm:$0xf]
      %v194 = vld [vmem:[%s165 + $0x8] sm:$0xf]
      %v195 = vld [vmem:[%s165 + $0xc] sm:$0xf]
      %v196 = vld [vmem:[%s165 + $0x10] sm:$0xf]
      %v197 = vld [vmem:[%s165 + $0x14] sm:$0xf]
      %v198 = vld [vmem:[%s165 + $0x18] sm:$0xf]
      %v199 = vld [vmem:[%s165 + $0x1c] sm:$0xf]
      %v201 = vshrl.u32 %v192, 16
      %v203 = vrot.slane %v201, 7
      %v204 = vshll.u32 %v192, 16
      %v206 = vor.u32 %v203, %v204
      %v207 = vrot.slane %v203, 4
      %v209 = vshrl.u32 %v193, 16
      %v211 = vrot.slane %v209, 7
      %v212 = vshll.u32 %v193, 16
      %v214 = vor.u32 %v211, %v212
      %v215 = vrot.slane %v211, 4
      %v217 = vshrl.u32 %v194, 16
      %v219 = vrot.slane %v217, 7
      %v220 = vshll.u32 %v194, 16
      %v222 = vor.u32 %v219, %v220
      %v223 = vrot.slane %v219, 4
      %v225 = vshrl.u32 %v195, 16
      %v227 = vrot.slane %v225, 7
      %v228 = vshll.u32 %v195, 16
      %v230 = vor.u32 %v227, %v228
      %v231 = vrot.slane %v227, 4
      %v233 = vshrl.u32 %v196, 16
      %v235 = vrot.slane %v233, 7
      %v236 = vshll.u32 %v196, 16
      %v238 = vor.u32 %v235, %v236
      %v239 = vrot.slane %v235, 4
      %v241 = vshrl.u32 %v197, 16
      %v243 = vrot.slane %v241, 7
      %v244 = vshll.u32 %v197, 16
      %v246 = vor.u32 %v243, %v244
      %v247 = vrot.slane %v243, 4
      %v249 = vshrl.u32 %v198, 16
      %v251 = vrot.slane %v249, 7
      %v252 = vshll.u32 %v198, 16
      %v254 = vor.u32 %v251, %v252
      %v255 = vrot.slane %v251, 4
      %v257 = vshrl.u32 %v199, 16
      %v259 = vrot.slane %v257, 7
      %v260 = vshll.u32 %v199, 16
      %v262 = vor.u32 %v259, %v260
      %v263 = vrot.slane %v259, 4
      %s280 = scalar_lea.vmem [#allocation2], 8
      %vm281 = vcmask 1043456
      %vm282 = vsmask.f32 7938
      %vm283 = vmand %vm281, %vm282
      %v284 = vld [vmem:[%s280] sm:$0xf]
      %v285 = vsel %vm283, %v206, %v284
      %286 = vst [vmem:[%s280] sm:$0xf] %v285
      %vm287 = vcmask 1040384
      %vm288 = vsmask.f32 256
      %vm289 = vmand %vm287, %vm288
      %v290 = vld [vmem:[%s280 + $0x4] sm:$0x1]
      %v291 = vsel %vm289, %v207, %v290
      %292 = vst [vmem:[%s280 + $0x4] sm:$0x1] %v291
      %v293 = vld [vmem:[%s280 + $0x8] sm:$0xf]
      %v294 = vsel %vm283, %v214, %v293
      %295 = vst [vmem:[%s280 + $0x8] sm:$0xf] %v294
      %v296 = vld [vmem:[%s280 + $0xc] sm:$0x1]
      %v297 = vsel %vm289, %v215, %v296
      %298 = vst [vmem:[%s280 + $0xc] sm:$0x1] %v297
      %v299 = vld [vmem:[%s280 + $0x10] sm:$0xf]
      %v300 = vsel %vm283, %v222, %v299
      %301 = vst [vmem:[%s280 + $0x10] sm:$0xf] %v300
      %v302 = vld [vmem:[%s280 + $0x14] sm:$0x1]
      %v303 = vsel %vm289, %v223, %v302
      %304 = vst [vmem:[%s280 + $0x14] sm:$0x1] %v303
      %v305 = vld [vmem:[%s280 + $0x18] sm:$0xf]
      %v306 = vsel %vm283, %v230, %v305
      %307 = vst [vmem:[%s280 + $0x18] sm:$0xf] %v306
      %v308 = vld [vmem:[%s280 + $0x1c] sm:$0x1]
      %v309 = vsel %vm289, %v231, %v308
      %310 = vst [vmem:[%s280 + $0x1c] sm:$0x1] %v309
      %v311 = vld [vmem:[%s280 + $0x20] sm:$0xf]
      %v312 = vsel %vm283, %v238, %v311
      %313 = vst [vmem:[%s280 + $0x20] sm:$0xf] %v312
      %v314 = vld [vmem:[%s280 + $0x24] sm:$0x1]
      %v315 = vsel %vm289, %v239, %v314
      %316 = vst [vmem:[%s280 + $0x24] sm:$0x1] %v315
      %v317 = vld [vmem:[%s280 + $0x28] sm:$0xf]
      %v318 = vsel %vm283, %v246, %v317
      %319 = vst [vmem:[%s280 + $0x28] sm:$0xf] %v318
      %v320 = vld [vmem:[%s280 + $0x2c] sm:$0x1]
      %v321 = vsel %vm289, %v247, %v320
      %322 = vst [vmem:[%s280 + $0x2c] sm:$0x1] %v321
      %v323 = vld [vmem:[%s280 + $0x30] sm:$0xf]
      %v324 = vsel %vm283, %v254, %v323
      %325 = vst [vmem:[%s280 + $0x30] sm:$0xf] %v324
      %v326 = vld [vmem:[%s280 + $0x34] sm:$0x1]
      %v327 = vsel %vm289, %v255, %v326
      %328 = vst [vmem:[%s280 + $0x34] sm:$0x1] %v327
      %v329 = vld [vmem:[%s280 + $0x38] sm:$0xf]
      %v330 = vsel %vm283, %v262, %v329
      %331 = vst [vmem:[%s280 + $0x38] sm:$0xf] %v330
      %v332 = vld [vmem:[%s280 + $0x3c] sm:$0x1]
      %v333 = vsel %vm289, %v263, %v332
      %334 = vst [vmem:[%s280 + $0x3c] sm:$0x1] %v333
      %v335 = vld [vmem:[%s2] sm:$0x1]
      %v336 = vld [vmem:[#allocation2] sm:$0xf]
      %v337 = vld [vmem:[#allocation2 + $0x8] sm:$0xf]
      %v338 = vld [vmem:[#allocation2 + $0x10] sm:$0xf]
      %v339 = vld [vmem:[#allocation2 + $0x18] sm:$0xf]
      %v340 = vld [vmem:[#allocation2 + $0x20] sm:$0xf]
      %v341 = vld [vmem:[#allocation2 + $0x28] sm:$0xf]
      %v342 = vld [vmem:[#allocation2 + $0x30] sm:$0xf]
      %v343 = vld [vmem:[#allocation2 + $0x38] sm:$0xf]
      %v344 = vld [vmem:[%s1] sm:$0xf]
      %v345 = vld [vmem:[%s1 + $0x4] sm:$0xf]
      %v346 = vld [vmem:[%s1 + $0x8] sm:$0xf]
      %v347 = vld [vmem:[%s1 + $0xc] sm:$0xf]
      %v348 = vld [vmem:[%s1 + $0x10] sm:$0xf]
      %v349 = vld [vmem:[%s1 + $0x14] sm:$0xf]
      %v350 = vld [vmem:[%s1 + $0x18] sm:$0xf]
      %v351 = vld [vmem:[%s1 + $0x1c] sm:$0xf]
      %v352 = vld [vmem:[%s1 + $0x20] sm:$0xf]
      %v353 = vld [vmem:[%s1 + $0x24] sm:$0xf]
      %v354 = vld [vmem:[%s1 + $0x28] sm:$0xf]
      %v355 = vld [vmem:[%s1 + $0x2c] sm:$0xf]
      %v356 = vld [vmem:[%s1 + $0x30] sm:$0xf]
      %v357 = vld [vmem:[%s1 + $0x34] sm:$0xf]
      %v358 = vld [vmem:[%s1 + $0x38] sm:$0xf]
      %v359 = vld [vmem:[%s1 + $0x3c] sm:$0xf]
      %v360 = vld [vmem:[#allocation2 + $0x4] sm:$0x1]
      %v361 = vld [vmem:[#allocation2 + $0xc] sm:$0x1]
      %v362 = vld [vmem:[#allocation2 + $0x14] sm:$0x1]
      %v363 = vld [vmem:[#allocation2 + $0x1c] sm:$0x1]
      %v364 = vld [vmem:[#allocation2 + $0x24] sm:$0x1]
      %v365 = vld [vmem:[#allocation2 + $0x2c] sm:$0x1]
      %v366 = vld [vmem:[#allocation2 + $0x34] sm:$0x1]
      %v367 = vld [vmem:[#allocation2 + $0x3c] sm:$0x1]
      %v368 = vld [vmem:[%s1 + $0x40] sm:$0xf]
      %v369 = vld [vmem:[%s1 + $0x44] sm:$0xf]
      %v370 = vld [vmem:[%s1 + $0x48] sm:$0xf]
      %v371 = vld [vmem:[%s1 + $0x4c] sm:$0xf]
      %v372 = vld [vmem:[%s1 + $0x50] sm:$0xf]
      %v373 = vld [vmem:[%s1 + $0x54] sm:$0xf]
      %v374 = vld [vmem:[%s1 + $0x58] sm:$0xf]
      %v375 = vld [vmem:[%s1 + $0x5c] sm:$0xf]
      %v376 = vld [vmem:[%s1 + $0x60] sm:$0xf]
      %v377 = vld [vmem:[%s1 + $0x64] sm:$0xf]
      %v378 = vld [vmem:[%s1 + $0x68] sm:$0xf]
      %v379 = vld [vmem:[%s1 + $0x6c] sm:$0xf]
      %v380 = vld [vmem:[%s1 + $0x70] sm:$0xf]
      %v381 = vld [vmem:[%s1 + $0x74] sm:$0xf]
      %v382 = vld [vmem:[%s1 + $0x78] sm:$0xf]
      %v383 = vld [vmem:[%s1 + $0x7c] sm:$0xf]
      %vm384 = vsmask.f32 3328
      %vm385 = vsmask.f32 7440
      %vm386 = vmor %vm384, %vm385
      %v388 = vshrl.u32 %v336, 16
      %v390 = vrot.slane %v388, 4
      %v391 = vshll.u32 %v336, 16
      %v393 = vrot.slane %v391, 5
      %v394 = vor.u32 %v390, %v393
      %v395 = vrot.slane %v394, 4
      %v397 = vshll.u32 %v360, 16
      %v399 = vrot.slane %v397, 5
      %v400 = vsel %vm386, %v395, %v399
      %v402 = vshrl.u32 %v337, 16
      %v404 = vrot.slane %v402, 4
      %v405 = vshll.u32 %v337, 16
      %v407 = vrot.slane %v405, 5
      %v408 = vor.u32 %v404, %v407
      %v409 = vrot.slane %v408, 4
      %v411 = vshll.u32 %v361, 16
      %v413 = vrot.slane %v411, 5
      %v414 = vsel %vm386, %v409, %v413
      %v416 = vshrl.u32 %v338, 16
      %v418 = vrot.slane %v416, 4
      %v419 = vshll.u32 %v338, 16
      %v421 = vrot.slane %v419, 5
      %v422 = vor.u32 %v418, %v421
      %v423 = vrot.slane %v422, 4
      %v425 = vshll.u32 %v362, 16
      %v427 = vrot.slane %v425, 5
      %v428 = vsel %vm386, %v423, %v427
      %v430 = vshrl.u32 %v339, 16
      %v432 = vrot.slane %v430, 4
      %v433 = vshll.u32 %v339, 16
      %v435 = vrot.slane %v433, 5
      %v436 = vor.u32 %v432, %v435
      %v437 = vrot.slane %v436, 4
      %v439 = vshll.u32 %v363, 16
      %v441 = vrot.slane %v439, 5
      %v442 = vsel %vm386, %v437, %v441
      %v444 = vshrl.u32 %v340, 16
      %v446 = vrot.slane %v444, 4
      %v447 = vshll.u32 %v340, 16
      %v449 = vrot.slane %v447, 5
      %v450 = vor.u32 %v446, %v449
      %v451 = vrot.slane %v450, 4
      %v453 = vshll.u32 %v364, 16
      %v455 = vrot.slane %v453, 5
      %v456 = vsel %vm386, %v451, %v455
      %v458 = vshrl.u32 %v341, 16
      %v460 = vrot.slane %v458, 4
      %v461 = vshll.u32 %v341, 16
      %v463 = vrot.slane %v461, 5
      %v464 = vor.u32 %v460, %v463
      %v465 = vrot.slane %v464, 4
      %v467 = vshll.u32 %v365, 16
      %v469 = vrot.slane %v467, 5
      %v470 = vsel %vm386, %v465, %v469
      %v472 = vshrl.u32 %v342, 16
      %v474 = vrot.slane %v472, 4
      %v475 = vshll.u32 %v342, 16
      %v477 = vrot.slane %v475, 5
      %v478 = vor.u32 %v474, %v477
      %v479 = vrot.slane %v478, 4
      %v481 = vshll.u32 %v366, 16
      %v483 = vrot.slane %v481, 5
      %v484 = vsel %vm386, %v479, %v483
      %v486 = vshrl.u32 %v343, 16
      %v488 = vrot.slane %v486, 4
      %v489 = vshll.u32 %v343, 16
      %v491 = vrot.slane %v489, 5
      %v492 = vor.u32 %v488, %v491
      %v493 = vrot.slane %v492, 4
      %v495 = vshll.u32 %v367, 16
      %v497 = vrot.slane %v495, 5
      %v498 = vsel %vm386, %v493, %v497
      %v499 = vunpack.c.l.b16 %v400
      %v500 = vunpack.c.l.b16 %v414
      %v501 = vunpack.c.l.b16 %v428
      %v502 = vunpack.c.l.b16 %v442
      %v503 = vunpack.c.l.b16 %v456
      %v504 = vunpack.c.l.b16 %v470
      %v505 = vunpack.c.l.b16 %v484
      %v506 = vunpack.c.l.b16 %v498
      %v507 = vpack.c.b16 %v500, %v499
      %v508 = vpack.c.b16 %v502, %v501
      %v509 = vpack.c.b16 %v504, %v503
      %v510 = vpack.c.b16 %v506, %v505
      %v531 = vunpack.c.l.b16 %v368
      %v532 = vunpack.c.l.b16 %v369
      %v533 = vunpack.c.l.b16 %v370
      %v534 = vunpack.c.l.b16 %v371
      %v535 = vunpack.c.l.b16 %v372
      %v536 = vunpack.c.l.b16 %v373
      %v537 = vunpack.c.l.b16 %v374
      %v538 = vunpack.c.l.b16 %v375
      %v539 = vunpack.c.l.b16 %v376
      %v540 = vunpack.c.l.b16 %v377
      %v541 = vunpack.c.l.b16 %v378
      %v542 = vunpack.c.l.b16 %v379
      %v543 = vunpack.c.l.b16 %v380
      %v544 = vunpack.c.l.b16 %v381
      %v545 = vunpack.c.l.b16 %v382
      %v546 = vunpack.c.l.b16 %v383
      %v547 = vpack.c.b16 %v532, %v531
      %v548 = vpack.c.b16 %v534, %v533
      %v549 = vpack.c.b16 %v536, %v535
      %v550 = vpack.c.b16 %v538, %v537
      %v551 = vpack.c.b16 %v540, %v539
      %v552 = vpack.c.b16 %v542, %v541
      %v553 = vpack.c.b16 %v544, %v543
      %v554 = vpack.c.b16 %v546, %v545
      %563 = vmatprep.subr.bf16.mxu0 0
      %564 = vmatpush1.bf16.msra.mxu0 %v547
      %565 = vmatprep.subr.bf16.mxu0 0
      %566 = vmatpush1.bf16.msra.mxu0 %v548
      %567 = vmatprep.subr.bf16.mxu0 0
      %568 = vmatpush1.bf16.msra.mxu0 %v549
      %569 = vmatprep.subr.bf16.mxu0 0
      %570 = vmatpush1.bf16.msra.mxu0 %v550
      %571 = vmatprep.subr.bf16.mxu0 0
      %572 = vmatpush1.bf16.msra.mxu0 %v551
      %573 = vmatprep.subr.bf16.mxu0 0
      %574 = vmatpush1.bf16.msra.mxu0 %v552
      %575 = vmatprep.subr.bf16.mxu0 0
      %576 = vmatpush1.bf16.msra.mxu0 %v553
      %577 = vmatprep.subr.bf16.mxu0 0
      %578 = vmatpush1.bf16.msra.mxu0 %v554
      %579 = vmatprep.subr.bf16.mxu0 0
      %580 = vmatpush1.bf16.msra.mxu0 0
      %581 = vmatprep.subr.bf16.mxu0 0
      %582 = vmatpush1.bf16.msra.mxu0 0
      %583 = vmatprep.subr.bf16.mxu0 0
      %584 = vmatpush1.bf16.msra.mxu0 0
      %585 = vmatprep.subr.bf16.mxu0 0
      %586 = vmatpush1.bf16.msra.mxu0 0
      %587 = vmatprep.subr.bf16.mxu0 0
      %588 = vmatpush1.bf16.msra.mxu0 0
      %589 = vmatprep.subr.bf16.mxu0 0
      %590 = vmatpush1.bf16.msra.mxu0 0
      %591 = vmatprep.subr.bf16.mxu0 0
      %592 = vmatpush1.bf16.msra.mxu0 0
      %593 = vmatprep.subr.bf16.mxu0 0
      %594 = vmatpush1.bf16.msra.mxu0 0
      %595 = vmatprep.mubr.bf16.mxu0 0
      %596 = vmatmul.mubr.bf16.gmra.mrb[0].mxu0 %v507
      %v597 = vpop.f32.mrb[0].mxu0
      %v598 = vadd.f32 0.0, %v597
      %v599 = vpop.f32.mrb[0].mxu0
      %v600 = vpop.f32.mrb[0].mxu0
      %v601 = vadd.f32 0.0, %v600
      %v602 = vpop.f32.mrb[0].mxu0
      %603 = vmatprep.mubr.bf16.mxu0 0
      %604 = vmatmul.mubr.bf16.gmra.mrb[0].mxu0 %v508
      %v605 = vpop.f32.mrb[0].mxu0
      %v606 = vadd.f32 0.0, %v605
      %v607 = vpop.f32.mrb[0].mxu0
      %v608 = vpop.f32.mrb[0].mxu0
      %v609 = vadd.f32 0.0, %v608
      %v610 = vpop.f32.mrb[0].mxu0
      %611 = vmatprep.mubr.bf16.mxu0 0
      %612 = vmatmul.mubr.bf16.gmra.mrb[0].mxu0 %v509
      %v613 = vpop.f32.mrb[0].mxu0
      %v614 = vadd.f32 0.0, %v613
      %v615 = vpop.f32.mrb[0].mxu0
      %v616 = vpop.f32.mrb[0].mxu0
      %v617 = vadd.f32 0.0, %v616
      %v618 = vpop.f32.mrb[0].mxu0
      %619 = vmatprep.mubr.bf16.mxu0 0
      %620 = vmatmul.mubr.bf16.gmra.mrb[0].mxu0 %v510
      %v621 = vpop.f32.mrb[0].mxu0
      %v622 = vadd.f32 0.0, %v621
      %v623 = vpop.f32.mrb[0].mxu0
      %v624 = vpop.f32.mrb[0].mxu0
      %v625 = vadd.f32 0.0, %v624
      %v626 = vpop.f32.mrb[0].mxu0
      %627 = vdwg.mxu0
      %v636 = vunpack.c.l.b16 %v336
      %v637 = vunpack.c.l.b16 %v337
      %v638 = vunpack.c.l.b16 %v338
      %v639 = vunpack.c.l.b16 %v339
      %v640 = vunpack.c.l.b16 %v340
      %v641 = vunpack.c.l.b16 %v341
      %v642 = vunpack.c.l.b16 %v342
      %v643 = vunpack.c.l.b16 %v343
      %v644 = vpack.c.b16 %v637, %v636
      %v645 = vpack.c.b16 %v639, %v638
      %v646 = vpack.c.b16 %v641, %v640
      %v647 = vpack.c.b16 %v643, %v642
      %v668 = vunpack.c.l.b16 %v344
      %v669 = vunpack.c.l.b16 %v345
      %v670 = vunpack.c.l.b16 %v346
      %v671 = vunpack.c.l.b16 %v347
      %v672 = vunpack.c.l.b16 %v348
      %v673 = vunpack.c.l.b16 %v349
      %v674 = vunpack.c.l.b16 %v350
      %v675 = vunpack.c.l.b16 %v351
      %v676 = vunpack.c.l.b16 %v352
      %v677 = vunpack.c.l.b16 %v353
      %v678 = vunpack.c.l.b16 %v354
      %v679 = vunpack.c.l.b16 %v355
      %v680 = vunpack.c.l.b16 %v356
      %v681 = vunpack.c.l.b16 %v357
      %v682 = vunpack.c.l.b16 %v358
      %v683 = vunpack.c.l.b16 %v359
      %v684 = vpack.c.b16 %v669, %v668
      %v685 = vpack.c.b16 %v671, %v670
      %v686 = vpack.c.b16 %v673, %v672
      %v687 = vpack.c.b16 %v675, %v674
      %v688 = vpack.c.b16 %v677, %v676
      %v689 = vpack.c.b16 %v679, %v678
      %v690 = vpack.c.b16 %v681, %v680
      %v691 = vpack.c.b16 %v683, %v682
      %700 = vmatprep.subr.bf16.mxu0 0
      %701 = vmatpush1.bf16.msra.mxu0 %v684
      %702 = vmatprep.subr.bf16.mxu0 0
      %703 = vmatpush1.bf16.msra.mxu0 %v685
      %704 = vmatprep.subr.bf16.mxu0 0
      %705 = vmatpush1.bf16.msra.mxu0 %v686
      %706 = vmatprep.subr.bf16.mxu0 0
      %707 = vmatpush1.bf16.msra.mxu0 %v687
      %708 = vmatprep.subr.bf16.mxu0 0
      %709 = vmatpush1.bf16.msra.mxu0 %v688
      %710 = vmatprep.subr.bf16.mxu0 0
      %711 = vmatpush1.bf16.msra.mxu0 %v689
      %712 = vmatprep.subr.bf16.mxu0 0
      %713 = vmatpush1.bf16.msra.mxu0 %v690
      %714 = vmatprep.subr.bf16.mxu0 0
      %715 = vmatpush1.bf16.msra.mxu0 %v691
      %716 = vmatprep.subr.bf16.mxu0 0
      %717 = vmatpush1.bf16.msra.mxu0 0
      %718 = vmatprep.subr.bf16.mxu0 0
      %719 = vmatpush1.bf16.msra.mxu0 0
      %720 = vmatprep.subr.bf16.mxu0 0
      %721 = vmatpush1.bf16.msra.mxu0 0
      %722 = vmatprep.subr.bf16.mxu0 0
      %723 = vmatpush1.bf16.msra.mxu0 0
      %724 = vmatprep.subr.bf16.mxu0 0
      %725 = vmatpush1.bf16.msra.mxu0 0
      %726 = vmatprep.subr.bf16.mxu0 0
      %727 = vmatpush1.bf16.msra.mxu0 0
      %728 = vmatprep.subr.bf16.mxu0 0
      %729 = vmatpush1.bf16.msra.mxu0 0
      %730 = vmatprep.subr.bf16.mxu0 0
      %731 = vmatpush1.bf16.msra.mxu0 0
      %732 = vmatprep.mubr.bf16.mxu0 0
      %733 = vmatmul.mubr.bf16.gmra.mrb[0].mxu0 %v644
      %v734 = vpop.f32.mrb[0].mxu0
      %v735 = vadd.f32 %v598, %v734
      %v736 = vpop.f32.mrb[0].mxu0
      %v737 = vpop.f32.mrb[0].mxu0
      %v738 = vadd.f32 %v601, %v737
      %v739 = vpop.f32.mrb[0].mxu0
      %740 = vmatprep.mubr.bf16.mxu0 0
      %741 = vmatmul.mubr.bf16.gmra.mrb[0].mxu0 %v645
      %v742 = vpop.f32.mrb[0].mxu0
      %v743 = vadd.f32 %v606, %v742
      %v744 = vpop.f32.mrb[0].mxu0
      %v745 = vpop.f32.mrb[0].mxu0
      %v746 = vadd.f32 %v609, %v745
      %v747 = vpop.f32.mrb[0].mxu0
      %748 = vmatprep.mubr.bf16.mxu0 0
      %749 = vmatmul.mubr.bf16.gmra.mrb[0].mxu0 %v646
      %v750 = vpop.f32.mrb[0].mxu0
      %v751 = vadd.f32 %v614, %v750
      %v752 = vpop.f32.mrb[0].mxu0
      %v753 = vpop.f32.mrb[0].mxu0
      %v754 = vadd.f32 %v617, %v753
      %v755 = vpop.f32.mrb[0].mxu0
      %756 = vmatprep.mubr.bf16.mxu0 0
      %757 = vmatmul.mubr.bf16.gmra.mrb[0].mxu0 %v647
      %v758 = vpop.f32.mrb[0].mxu0
      %v759 = vadd.f32 %v622, %v758
      %v760 = vpop.f32.mrb[0].mxu0
      %v761 = vpop.f32.mrb[0].mxu0
      %v762 = vadd.f32 %v625, %v761
      %v763 = vpop.f32.mrb[0].mxu0
      %764 = vdwg.mxu0
      %v765 = vld [vmem:[#allocation2] sm:$0xe]
      %v766 = vld [vmem:[#allocation2 + $0x8] sm:$0xe]
      %v767 = vld [vmem:[#allocation2 + $0x10] sm:$0xe]
      %v768 = vld [vmem:[#allocation2 + $0x18] sm:$0xe]
      %v769 = vld [vmem:[#allocation2 + $0x20] sm:$0xe]
      %v770 = vld [vmem:[#allocation2 + $0x28] sm:$0xe]
      %v771 = vld [vmem:[#allocation2 + $0x30] sm:$0xe]
      %v772 = vld [vmem:[#allocation2 + $0x38] sm:$0xe]
      %v773 = vld [vmem:[%s1 + $0x80] sm:$0xf]
      %v774 = vld [vmem:[%s1 + $0x84] sm:$0xf]
      %v775 = vld [vmem:[%s1 + $0x88] sm:$0xf]
      %v776 = vld [vmem:[%s1 + $0x8c] sm:$0xf]
      %v777 = vld [vmem:[%s1 + $0x90] sm:$0xf]
      %v778 = vld [vmem:[%s1 + $0x94] sm:$0xf]
      %v779 = vld [vmem:[%s1 + $0x98] sm:$0xf]
      %v780 = vld [vmem:[%s1 + $0x9c] sm:$0xf]
      %v781 = vld [vmem:[%s1 + $0xa0] sm:$0xf]
      %v782 = vld [vmem:[%s1 + $0xa4] sm:$0xf]
      %v783 = vld [vmem:[%s1 + $0xa8] sm:$0xf]
      %v784 = vld [vmem:[%s1 + $0xac] sm:$0xf]
      %v785 = vld [vmem:[%s1 + $0xb0] sm:$0xf]
      %v786 = vld [vmem:[%s1 + $0xb4] sm:$0xf]
      %v787 = vld [vmem:[%s1 + $0xb8] sm:$0xf]
      %v788 = vld [vmem:[%s1 + $0xbc] sm:$0xf]
      %vm805 = vcmask 1042432
      %vm806 = vcmask 1046532
      %vm807 = vmor %vm805, %vm806
      %v808 = vrot.slane %v765, 5
      %v809 = vrot.slane %v808, 4
      %v810 = vrot.slane %v360, 5
      %v811 = vsel %vm807, %v809, %v810
      %v812 = vrot.slane %v766, 5
      %v813 = vrot.slane %v812, 4
      %v814 = vrot.slane %v361, 5
      %v815 = vsel %vm807, %v813, %v814
      %v816 = vrot.slane %v767, 5
      %v817 = vrot.slane %v816, 4
      %v818 = vrot.slane %v362, 5
      %v819 = vsel %vm807, %v817, %v818
      %v820 = vrot.slane %v768, 5
      %v821 = vrot.slane %v820, 4
      %v822 = vrot.slane %v363, 5
      %v823 = vsel %vm807, %v821, %v822
      %v824 = vrot.slane %v769, 5
      %v825 = vrot.slane %v824, 4
      %v826 = vrot.slane %v364, 5
      %v827 = vsel %vm807, %v825, %v826
      %v828 = vrot.slane %v770, 5
      %v829 = vrot.slane %v828, 4
      %v830 = vrot.slane %v365, 5
      %v831 = vsel %vm807, %v829, %v830
      %v832 = vrot.slane %v771, 5
      %v833 = vrot.slane %v832, 4
      %v834 = vrot.slane %v366, 5
      %v835 = vsel %vm807, %v833, %v834
      %v836 = vrot.slane %v772, 5
      %v837 = vrot.slane %v836, 4
      %v838 = vrot.slane %v367, 5
      %v839 = vsel %vm807, %v837, %v838
      %v840 = vunpack.c.l.b16 %v811
      %v841 = vunpack.c.l.b16 %v815
      %v842 = vunpack.c.l.b16 %v819
      %v843 = vunpack.c.l.b16 %v823
      %v844 = vunpack.c.l.b16 %v827
      %v845 = vunpack.c.l.b16 %v831
      %v846 = vunpack.c.l.b16 %v835
      %v847 = vunpack.c.l.b16 %v839
      %v848 = vpack.c.b16 %v841, %v840
      %v849 = vpack.c.b16 %v843, %v842
      %v850 = vpack.c.b16 %v845, %v844
      %v851 = vpack.c.b16 %v847, %v846
      %v872 = vunpack.c.l.b16 %v773
      %v873 = vunpack.c.l.b16 %v774
      %v874 = vunpack.c.l.b16 %v775
      %v875 = vunpack.c.l.b16 %v776
      %v876 = vunpack.c.l.b16 %v777
      %v877 = vunpack.c.l.b16 %v778
      %v878 = vunpack.c.l.b16 %v779
      %v879 = vunpack.c.l.b16 %v780
      %v880 = vunpack.c.l.b16 %v781
      %v881 = vunpack.c.l.b16 %v782
      %v882 = vunpack.c.l.b16 %v783
      %v883 = vunpack.c.l.b16 %v784
      %v884 = vunpack.c.l.b16 %v785
      %v885 = vunpack.c.l.b16 %v786
      %v886 = vunpack.c.l.b16 %v787
      %v887 = vunpack.c.l.b16 %v788
      %v888 = vpack.c.b16 %v873, %v872
      %v889 = vpack.c.b16 %v875, %v874
      %v890 = vpack.c.b16 %v877, %v876
      %v891 = vpack.c.b16 %v879, %v878
      %v892 = vpack.c.b16 %v881, %v880
      %v893 = vpack.c.b16 %v883, %v882
      %v894 = vpack.c.b16 %v885, %v884
      %v895 = vpack.c.b16 %v887, %v886
      %904 = vmatprep.subr.bf16.mxu0 0
      %905 = vmatpush1.bf16.msra.mxu0 %v888
      %906 = vmatprep.subr.bf16.mxu0 0
      %907 = vmatpush1.bf16.msra.mxu0 %v889
      %908 = vmatprep.subr.bf16.mxu0 0
      %909 = vmatpush1.bf16.msra.mxu0 %v890
      %910 = vmatprep.subr.bf16.mxu0 0
      %911 = vmatpush1.bf16.msra.mxu0 %v891
      %912 = vmatprep.subr.bf16.mxu0 0
      %913 = vmatpush1.bf16.msra.mxu0 %v892
      %914 = vmatprep.subr.bf16.mxu0 0
      %915 = vmatpush1.bf16.msra.mxu0 %v893
      %916 = vmatprep.subr.bf16.mxu0 0
      %917 = vmatpush1.bf16.msra.mxu0 %v894
      %918 = vmatprep.subr.bf16.mxu0 0
      %919 = vmatpush1.bf16.msra.mxu0 %v895
      %920 = vmatprep.subr.bf16.mxu0 0
      %921 = vmatpush1.bf16.msra.mxu0 0
      %922 = vmatprep.subr.bf16.mxu0 0
      %923 = vmatpush1.bf16.msra.mxu0 0
      %924 = vmatprep.subr.bf16.mxu0 0
      %925 = vmatpush1.bf16.msra.mxu0 0
      %926 = vmatprep.subr.bf16.mxu0 0
      %927 = vmatpush1.bf16.msra.mxu0 0
      %928 = vmatprep.subr.bf16.mxu0 0
      %929 = vmatpush1.bf16.msra.mxu0 0
      %930 = vmatprep.subr.bf16.mxu0 0
      %931 = vmatpush1.bf16.msra.mxu0 0
      %932 = vmatprep.subr.bf16.mxu0 0
      %933 = vmatpush1.bf16.msra.mxu0 0
      %934 = vmatprep.subr.bf16.mxu0 0
      %935 = vmatpush1.bf16.msra.mxu0 0
      %936 = vmatprep.mubr.bf16.mxu0 0
      %937 = vmatmul.mubr.bf16.gmra.mrb[0].mxu0 %v848
      %v938 = vpop.f32.mrb[0].mxu0
      %v939 = vadd.f32 0.0, %v938
      %v940 = vpop.f32.mrb[0].mxu0
      %v941 = vpop.f32.mrb[0].mxu0
      %v942 = vadd.f32 0.0, %v941
      %v943 = vpop.f32.mrb[0].mxu0
      %944 = vmatprep.mubr.bf16.mxu0 0
      %945 = vmatmul.mubr.bf16.gmra.mrb[0].mxu0 %v849
      %v946 = vpop.f32.mrb[0].mxu0
      %v947 = vadd.f32 0.0, %v946
      %v948 = vpop.f32.mrb[0].mxu0
      %v949 = vpop.f32.mrb[0].mxu0
      %v950 = vadd.f32 0.0, %v949
      %v951 = vpop.f32.mrb[0].mxu0
      %952 = vmatprep.mubr.bf16.mxu0 0
      %953 = vmatmul.mubr.bf16.gmra.mrb[0].mxu0 %v850
      %v954 = vpop.f32.mrb[0].mxu0
      %v955 = vadd.f32 0.0, %v954
      %v956 = vpop.f32.mrb[0].mxu0
      %v957 = vpop.f32.mrb[0].mxu0
      %v958 = vadd.f32 0.0, %v957
      %v959 = vpop.f32.mrb[0].mxu0
      %960 = vmatprep.mubr.bf16.mxu0 0
      %961 = vmatmul.mubr.bf16.gmra.mrb[0].mxu0 %v851
      %v962 = vpop.f32.mrb[0].mxu0
      %v963 = vadd.f32 0.0, %v962
      %v964 = vpop.f32.mrb[0].mxu0
      %v965 = vpop.f32.mrb[0].mxu0
      %v966 = vadd.f32 0.0, %v965
      %v967 = vpop.f32.mrb[0].mxu0
      %968 = vdwg.mxu0
      %v969 = vadd.f32 %v735, %v939
      %v970 = vadd.f32 %v738, %v942
      %v971 = vadd.f32 %v743, %v947
      %v972 = vadd.f32 %v746, %v950
      %v973 = vadd.f32 %v751, %v955
      %v974 = vadd.f32 %v754, %v958
      %v975 = vadd.f32 %v759, %v963
      %v976 = vadd.f32 %v762, %v966
      %v977 = vld [vmem:[%s280] sm:$0xf]
      %v978 = vld [vmem:[%s280 + $0x8] sm:$0xf]
      %v979 = vld [vmem:[%s280 + $0x10] sm:$0xf]
      %v980 = vld [vmem:[%s280 + $0x18] sm:$0xf]
      %v981 = vld [vmem:[%s280 + $0x20] sm:$0xf]
      %v982 = vld [vmem:[%s280 + $0x28] sm:$0xf]
      %v983 = vld [vmem:[%s280 + $0x30] sm:$0xf]
      %v984 = vld [vmem:[%s280 + $0x38] sm:$0xf]
      %v985 = vld [vmem:[%s1 + $0xc0] sm:$0xf]
      %v986 = vld [vmem:[%s1 + $0xc4] sm:$0xf]
      %v987 = vld [vmem:[%s1 + $0xc8] sm:$0xf]
      %v988 = vld [vmem:[%s1 + $0xcc] sm:$0xf]
      %v989 = vld [vmem:[%s1 + $0xd0] sm:$0xf]
      %v990 = vld [vmem:[%s1 + $0xd4] sm:$0xf]
      %v991 = vld [vmem:[%s1 + $0xd8] sm:$0xf]
      %v992 = vld [vmem:[%s1 + $0xdc] sm:$0xf]
      %v993 = vld [vmem:[%s1 + $0xe0] sm:$0xf]
      %v994 = vld [vmem:[%s1 + $0xe4] sm:$0xf]
      %v995 = vld [vmem:[%s1 + $0xe8] sm:$0xf]
      %v996 = vld [vmem:[%s1 + $0xec] sm:$0xf]
      %v997 = vld [vmem:[%s1 + $0xf0] sm:$0xf]
      %v998 = vld [vmem:[%s1 + $0xf4] sm:$0xf]
      %v999 = vld [vmem:[%s1 + $0xf8] sm:$0xf]
      %v1000 = vld [vmem:[%s1 + $0xfc] sm:$0xf]
      %v1009 = vunpack.c.l.b16 %v977
      %v1010 = vunpack.c.l.b16 %v978
      %v1011 = vunpack.c.l.b16 %v979
      %v1012 = vunpack.c.l.b16 %v980
      %v1013 = vunpack.c.l.b16 %v981
      %v1014 = vunpack.c.l.b16 %v982
      %v1015 = vunpack.c.l.b16 %v983
      %v1016 = vunpack.c.l.b16 %v984
      %v1017 = vpack.c.b16 %v1010, %v1009
      %v1018 = vpack.c.b16 %v1012, %v1011
      %v1019 = vpack.c.b16 %v1014, %v1013
      %v1020 = vpack.c.b16 %v1016, %v1015
      %v1041 = vunpack.c.l.b16 %v985
      %v1042 = vunpack.c.l.b16 %v986
      %v1043 = vunpack.c.l.b16 %v987
      %v1044 = vunpack.c.l.b16 %v988
      %v1045 = vunpack.c.l.b16 %v989
      %v1046 = vunpack.c.l.b16 %v990
      %v1047 = vunpack.c.l.b16 %v991
      %v1048 = vunpack.c.l.b16 %v992
      %v1049 = vunpack.c.l.b16 %v993
      %v1050 = vunpack.c.l.b16 %v994
      %v1051 = vunpack.c.l.b16 %v995
      %v1052 = vunpack.c.l.b16 %v996
      %v1053 = vunpack.c.l.b16 %v997
      %v1054 = vunpack.c.l.b16 %v998
      %v1055 = vunpack.c.l.b16 %v999
      %v1056 = vunpack.c.l.b16 %v1000
      %v1057 = vpack.c.b16 %v1042, %v1041
      %v1058 = vpack.c.b16 %v1044, %v1043
      %v1059 = vpack.c.b16 %v1046, %v1045
      %v1060 = vpack.c.b16 %v1048, %v1047
      %v1061 = vpack.c.b16 %v1050, %v1049
      %v1062 = vpack.c.b16 %v1052, %v1051
      %v1063 = vpack.c.b16 %v1054, %v1053
      %v1064 = vpack.c.b16 %v1056, %v1055
      %1073 = vmatprep.subr.bf16.mxu0 0
      %1074 = vmatpush1.bf16.msra.mxu0 %v1057
      %1075 = vmatprep.subr.bf16.mxu0 0
      %1076 = vmatpush1.bf16.msra.mxu0 %v1058
      %1077 = vmatprep.subr.bf16.mxu0 0
      %1078 = vmatpush1.bf16.msra.mxu0 %v1059
      %1079 = vmatprep.subr.bf16.mxu0 0
      %1080 = vmatpush1.bf16.msra.mxu0 %v1060
      %1081 = vmatprep.subr.bf16.mxu0 0
      %1082 = vmatpush1.bf16.msra.mxu0 %v1061
      %1083 = vmatprep.subr.bf16.mxu0 0
      %1084 = vmatpush1.bf16.msra.mxu0 %v1062
      %1085 = vmatprep.subr.bf16.mxu0 0
      %1086 = vmatpush1.bf16.msra.mxu0 %v1063
      %1087 = vmatprep.subr.bf16.mxu0 0
      %1088 = vmatpush1.bf16.msra.mxu0 %v1064
      %1089 = vmatprep.subr.bf16.mxu0 0
      %1090 = vmatpush1.bf16.msra.mxu0 0
      %1091 = vmatprep.subr.bf16.mxu0 0
      %1092 = vmatpush1.bf16.msra.mxu0 0
      %1093 = vmatprep.subr.bf16.mxu0 0
      %1094 = vmatpush1.bf16.msra.mxu0 0
      %1095 = vmatprep.subr.bf16.mxu0 0
      %1096 = vmatpush1.bf16.msra.mxu0 0
      %1097 = vmatprep.subr.bf16.mxu0 0
      %1098 = vmatpush1.bf16.msra.mxu0 0
      %1099 = vmatprep.subr.bf16.mxu0 0
      %1100 = vmatpush1.bf16.msra.mxu0 0
      %1101 = vmatprep.subr.bf16.mxu0 0
      %1102 = vmatpush1.bf16.msra.mxu0 0
      %1103 = vmatprep.subr.bf16.mxu0 0
      %1104 = vmatpush1.bf16.msra.mxu0 0
      %1105 = vmatprep.mubr.bf16.mxu0 0
      %1106 = vmatmul.mubr.bf16.gmra.mrb[0].mxu0 %v1017
      %v1107 = vpop.f32.mrb[0].mxu0
      %v1108 = vadd.f32 0.0, %v1107
      %v1109 = vpop.f32.mrb[0].mxu0
      %v1110 = vpop.f32.mrb[0].mxu0
      %v1111 = vadd.f32 0.0, %v1110
      %v1112 = vpop.f32.mrb[0].mxu0
      %1113 = vmatprep.mubr.bf16.mxu0 0
      %1114 = vmatmul.mubr.bf16.gmra.mrb[0].mxu0 %v1018
      %v1115 = vpop.f32.mrb[0].mxu0
      %v1116 = vadd.f32 0.0, %v1115
      %v1117 = vpop.f32.mrb[0].mxu0
      %v1118 = vpop.f32.mrb[0].mxu0
      %v1119 = vadd.f32 0.0, %v1118
      %v1120 = vpop.f32.mrb[0].mxu0
      %1121 = vmatprep.mubr.bf16.mxu0 0
      %1122 = vmatmul.mubr.bf16.gmra.mrb[0].mxu0 %v1019
      %v1123 = vpop.f32.mrb[0].mxu0
      %v1124 = vadd.f32 0.0, %v1123
      %v1125 = vpop.f32.mrb[0].mxu0
      %v1126 = vpop.f32.mrb[0].mxu0
      %v1127 = vadd.f32 0.0, %v1126
      %v1128 = vpop.f32.mrb[0].mxu0
      %1129 = vmatprep.mubr.bf16.mxu0 0
      %1130 = vmatmul.mubr.bf16.gmra.mrb[0].mxu0 %v1020
      %v1131 = vpop.f32.mrb[0].mxu0
      %v1132 = vadd.f32 0.0, %v1131
      %v1133 = vpop.f32.mrb[0].mxu0
      %v1134 = vpop.f32.mrb[0].mxu0
      %v1135 = vadd.f32 0.0, %v1134
      %v1136 = vpop.f32.mrb[0].mxu0
      %1137 = vdwg.mxu0
      %v1138 = vadd.f32 %v969, %v1108
      %v1139 = vadd.f32 %v970, %v1111
      %v1140 = vadd.f32 %v971, %v1116
      %v1141 = vadd.f32 %v972, %v1119
      %v1142 = vadd.f32 %v973, %v1124
      %v1143 = vadd.f32 %v974, %v1127
      %v1144 = vadd.f32 %v975, %v1132
      %v1145 = vadd.f32 %v976, %v1135
      %v1146 = vld [vmem:[%s280] sm:$0xf]
      %v1147 = vld [vmem:[%s280 + $0x4] sm:$0x1]
      %v1148 = vld [vmem:[%s280 + $0x8] sm:$0xf]
      %v1149 = vld [vmem:[%s280 + $0xc] sm:$0x1]
      %v1150 = vld [vmem:[%s280 + $0x10] sm:$0xf]
      %v1151 = vld [vmem:[%s280 + $0x14] sm:$0x1]
      %v1152 = vld [vmem:[%s280 + $0x18] sm:$0xf]
      %v1153 = vld [vmem:[%s280 + $0x1c] sm:$0x1]
      %v1154 = vld [vmem:[%s280 + $0x20] sm:$0xf]
      %v1155 = vld [vmem:[%s280 + $0x24] sm:$0x1]
      %v1156 = vld [vmem:[%s280 + $0x28] sm:$0xf]
      %v1157 = vld [vmem:[%s280 + $0x2c] sm:$0x1]
      %v1158 = vld [vmem:[%s280 + $0x30] sm:$0xf]
      %v1159 = vld [vmem:[%s280 + $0x34] sm:$0x1]
      %v1160 = vld [vmem:[%s280 + $0x38] sm:$0xf]
      %v1161 = vld [vmem:[%s280 + $0x3c] sm:$0x1]
      %v1162 = vld [vmem:[%s1 + $0x100] sm:$0xf]
      %v1163 = vld [vmem:[%s1 + $0x104] sm:$0xf]
      %v1164 = vld [vmem:[%s1 + $0x108] sm:$0xf]
      %v1165 = vld [vmem:[%s1 + $0x10c] sm:$0xf]
      %v1166 = vld [vmem:[%s1 + $0x110] sm:$0xf]
      %v1167 = vld [vmem:[%s1 + $0x114] sm:$0xf]
      %v1168 = vld [vmem:[%s1 + $0x118] sm:$0xf]
      %v1169 = vld [vmem:[%s1 + $0x11c] sm:$0xf]
      %v1170 = vld [vmem:[%s1 + $0x120] sm:$0xf]
      %v1171 = vld [vmem:[%s1 + $0x124] sm:$0xf]
      %v1172 = vld [vmem:[%s1 + $0x128] sm:$0xf]
      %v1173 = vld [vmem:[%s1 + $0x12c] sm:$0xf]
      %v1174 = vld [vmem:[%s1 + $0x130] sm:$0xf]
      %v1175 = vld [vmem:[%s1 + $0x134] sm:$0xf]
      %v1176 = vld [vmem:[%s1 + $0x138] sm:$0xf]
      %v1177 = vld [vmem:[%s1 + $0x13c] sm:$0xf]
      %v1179 = vshrl.u32 %v1146, 16
      %v1181 = vrot.slane %v1179, 4
      %v1182 = vshll.u32 %v1146, 16
      %v1184 = vrot.slane %v1182, 5
      %v1185 = vor.u32 %v1181, %v1184
      %v1186 = vrot.slane %v1185, 4
      %v1188 = vshll.u32 %v1147, 16
      %v1190 = vrot.slane %v1188, 5
      %v1191 = vsel %vm386, %v1186, %v1190
      %v1193 = vshrl.u32 %v1148, 16
      %v1195 = vrot.slane %v1193, 4
      %v1196 = vshll.u32 %v1148, 16
      %v1198 = vrot.slane %v1196, 5
      %v1199 = vor.u32 %v1195, %v1198
      %v1200 = vrot.slane %v1199, 4
      %v1202 = vshll.u32 %v1149, 16
      %v1204 = vrot.slane %v1202, 5
      %v1205 = vsel %vm386, %v1200, %v1204
      %v1207 = vshrl.u32 %v1150, 16
      %v1209 = vrot.slane %v1207, 4
      %v1210 = vshll.u32 %v1150, 16
      %v1212 = vrot.slane %v1210, 5
      %v1213 = vor.u32 %v1209, %v1212
      %v1214 = vrot.slane %v1213, 4
      %v1216 = vshll.u32 %v1151, 16
      %v1218 = vrot.slane %v1216, 5
      %v1219 = vsel %vm386, %v1214, %v1218
      %v1221 = vshrl.u32 %v1152, 16
      %v1223 = vrot.slane %v1221, 4
      %v1224 = vshll.u32 %v1152, 16
      %v1226 = vrot.slane %v1224, 5
      %v1227 = vor.u32 %v1223, %v1226
      %v1228 = vrot.slane %v1227, 4
      %v1230 = vshll.u32 %v1153, 16
      %v1232 = vrot.slane %v1230, 5
      %v1233 = vsel %vm386, %v1228, %v1232
      %v1235 = vshrl.u32 %v1154, 16
      %v1237 = vrot.slane %v1235, 4
      %v1238 = vshll.u32 %v1154, 16
      %v1240 = vrot.slane %v1238, 5
      %v1241 = vor.u32 %v1237, %v1240
      %v1242 = vrot.slane %v1241, 4
      %v1244 = vshll.u32 %v1155, 16
      %v1246 = vrot.slane %v1244, 5
      %v1247 = vsel %vm386, %v1242, %v1246
      %v1249 = vshrl.u32 %v1156, 16
      %v1251 = vrot.slane %v1249, 4
      %v1252 = vshll.u32 %v1156, 16
      %v1254 = vrot.slane %v1252, 5
      %v1255 = vor.u32 %v1251, %v1254
      %v1256 = vrot.slane %v1255, 4
      %v1258 = vshll.u32 %v1157, 16
      %v1260 = vrot.slane %v1258, 5
      %v1261 = vsel %vm386, %v1256, %v1260
      %v1263 = vshrl.u32 %v1158, 16
      %v1265 = vrot.slane %v1263, 4
      %v1266 = vshll.u32 %v1158, 16
      %v1268 = vrot.slane %v1266, 5
      %v1269 = vor.u32 %v1265, %v1268
      %v1270 = vrot.slane %v1269, 4
      %v1272 = vshll.u32 %v1159, 16
      %v1274 = vrot.slane %v1272, 5
      %v1275 = vsel %vm386, %v1270, %v1274
      %v1277 = vshrl.u32 %v1160, 16
      %v1279 = vrot.slane %v1277, 4
      %v1280 = vshll.u32 %v1160, 16
      %v1282 = vrot.slane %v1280, 5
      %v1283 = vor.u32 %v1279, %v1282
      %v1284 = vrot.slane %v1283, 4
      %v1286 = vshll.u32 %v1161, 16
      %v1288 = vrot.slane %v1286, 5
      %v1289 = vsel %vm386, %v1284, %v1288
      %v1290 = vunpack.c.l.b16 %v1191
      %v1291 = vunpack.c.l.b16 %v1205
      %v1292 = vunpack.c.l.b16 %v1219
      %v1293 = vunpack.c.l.b16 %v1233
      %v1294 = vunpack.c.l.b16 %v1247
      %v1295 = vunpack.c.l.b16 %v1261
      %v1296 = vunpack.c.l.b16 %v1275
      %v1297 = vunpack.c.l.b16 %v1289
      %v1298 = vpack.c.b16 %v1291, %v1290
      %v1299 = vpack.c.b16 %v1293, %v1292
      %v1300 = vpack.c.b16 %v1295, %v1294
      %v1301 = vpack.c.b16 %v1297, %v1296
      %v1322 = vunpack.c.l.b16 %v1162
      %v1323 = vunpack.c.l.b16 %v1163
      %v1324 = vunpack.c.l.b16 %v1164
      %v1325 = vunpack.c.l.b16 %v1165
      %v1326 = vunpack.c.l.b16 %v1166
      %v1327 = vunpack.c.l.b16 %v1167
      %v1328 = vunpack.c.l.b16 %v1168
      %v1329 = vunpack.c.l.b16 %v1169
      %v1330 = vunpack.c.l.b16 %v1170
      %v1331 = vunpack.c.l.b16 %v1171
      %v1332 = vunpack.c.l.b16 %v1172
      %v1333 = vunpack.c.l.b16 %v1173
      %v1334 = vunpack.c.l.b16 %v1174
      %v1335 = vunpack.c.l.b16 %v1175
      %v1336 = vunpack.c.l.b16 %v1176
      %v1337 = vunpack.c.l.b16 %v1177
      %v1338 = vpack.c.b16 %v1323, %v1322
      %v1339 = vpack.c.b16 %v1325, %v1324
      %v1340 = vpack.c.b16 %v1327, %v1326
      %v1341 = vpack.c.b16 %v1329, %v1328
      %v1342 = vpack.c.b16 %v1331, %v1330
      %v1343 = vpack.c.b16 %v1333, %v1332
      %v1344 = vpack.c.b16 %v1335, %v1334
      %v1345 = vpack.c.b16 %v1337, %v1336
      %1354 = vmatprep.subr.bf16.mxu0 0
      %1355 = vmatpush1.bf16.msra.mxu0 %v1338
      %1356 = vmatprep.subr.bf16.mxu0 0
      %1357 = vmatpush1.bf16.msra.mxu0 %v1339
      %1358 = vmatprep.subr.bf16.mxu0 0
      %1359 = vmatpush1.bf16.msra.mxu0 %v1340
      %1360 = vmatprep.subr.bf16.mxu0 0
      %1361 = vmatpush1.bf16.msra.mxu0 %v1341
      %1362 = vmatprep.subr.bf16.mxu0 0
      %1363 = vmatpush1.bf16.msra.mxu0 %v1342
      %1364 = vmatprep.subr.bf16.mxu0 0
      %1365 = vmatpush1.bf16.msra.mxu0 %v1343
      %1366 = vmatprep.subr.bf16.mxu0 0
      %1367 = vmatpush1.bf16.msra.mxu0 %v1344
      %1368 = vmatprep.subr.bf16.mxu0 0
      %1369 = vmatpush1.bf16.msra.mxu0 %v1345
      %1370 = vmatprep.subr.bf16.mxu0 0
      %1371 = vmatpush1.bf16.msra.mxu0 0
      %1372 = vmatprep.subr.bf16.mxu0 0
      %1373 = vmatpush1.bf16.msra.mxu0 0
      %1374 = vmatprep.subr.bf16.mxu0 0
      %1375 = vmatpush1.bf16.msra.mxu0 0
      %1376 = vmatprep.subr.bf16.mxu0 0
      %1377 = vmatpush1.bf16.msra.mxu0 0
      %1378 = vmatprep.subr.bf16.mxu0 0
      %1379 = vmatpush1.bf16.msra.mxu0 0
      %1380 = vmatprep.subr.bf16.mxu0 0
      %1381 = vmatpush1.bf16.msra.mxu0 0
      %1382 = vmatprep.subr.bf16.mxu0 0
      %1383 = vmatpush1.bf16.msra.mxu0 0
      %1384 = vmatprep.subr.bf16.mxu0 0
      %1385 = vmatpush1.bf16.msra.mxu0 0
      %1386 = vmatprep.mubr.bf16.mxu0 0
      %1387 = vmatmul.mubr.bf16.gmra.mrb[0].mxu0 %v1298
      %v1388 = vpop.f32.mrb[0].mxu0
      %v1389 = vadd.f32 0.0, %v1388
      %v1390 = vpop.f32.mrb[0].mxu0
      %v1391 = vpop.f32.mrb[0].mxu0
      %v1392 = vadd.f32 0.0, %v1391
      %v1393 = vpop.f32.mrb[0].mxu0
      %1394 = vmatprep.mubr.bf16.mxu0 0
      %1395 = vmatmul.mubr.bf16.gmra.mrb[0].mxu0 %v1299
      %v1396 = vpop.f32.mrb[0].mxu0
      %v1397 = vadd.f32 0.0, %v1396
      %v1398 = vpop.f32.mrb[0].mxu0
      %v1399 = vpop.f32.mrb[0].mxu0
      %v1400 = vadd.f32 0.0, %v1399
      %v1401 = vpop.f32.mrb[0].mxu0
      %1402 = vmatprep.mubr.bf16.mxu0 0
      %1403 = vmatmul.mubr.bf16.gmra.mrb[0].mxu0 %v1300
      %v1404 = vpop.f32.mrb[0].mxu0
      %v1405 = vadd.f32 0.0, %v1404
      %v1406 = vpop.f32.mrb[0].mxu0
      %v1407 = vpop.f32.mrb[0].mxu0
      %v1408 = vadd.f32 0.0, %v1407
      %v1409 = vpop.f32.mrb[0].mxu0
      %1410 = vmatprep.mubr.bf16.mxu0 0
      %1411 = vmatmul.mubr.bf16.gmra.mrb[0].mxu0 %v1301
      %v1412 = vpop.f32.mrb[0].mxu0
      %v1413 = vadd.f32 0.0, %v1412
      %v1414 = vpop.f32.mrb[0].mxu0
      %v1415 = vpop.f32.mrb[0].mxu0
      %v1416 = vadd.f32 0.0, %v1415
      %v1417 = vpop.f32.mrb[0].mxu0
      %1418 = vdwg.mxu0
      %v1419 = vadd.f32 %v1138, %v1389
      %v1420 = vadd.f32 %v1139, %v1392
      %v1421 = vadd.f32 %v1140, %v1397
      %v1422 = vadd.f32 %v1141, %v1400
      %v1423 = vadd.f32 %v1142, %v1405
      %v1424 = vadd.f32 %v1143, %v1408
      %v1425 = vadd.f32 %v1144, %v1413
      %v1426 = vadd.f32 %v1145, %v1416
      %v1427 = vld [vmem:[%s280] sm:$0xe]
      %v1428 = vld [vmem:[%s280 + $0x8] sm:$0xe]
      %v1429 = vld [vmem:[%s280 + $0x10] sm:$0xe]
      %v1430 = vld [vmem:[%s280 + $0x18] sm:$0xe]
      %v1431 = vld [vmem:[%s280 + $0x20] sm:$0xe]
      %v1432 = vld [vmem:[%s280 + $0x28] sm:$0xe]
      %v1433 = vld [vmem:[%s280 + $0x30] sm:$0xe]
      %v1434 = vld [vmem:[%s280 + $0x38] sm:$0xe]
      %v1435 = vld [vmem:[%s1 + $0x140] sm:$0xf]
      %v1436 = vld [vmem:[%s1 + $0x144] sm:$0xf]
      %v1437 = vld [vmem:[%s1 + $0x148] sm:$0xf]
      %v1438 = vld [vmem:[%s1 + $0x14c] sm:$0xf]
      %v1439 = vld [vmem:[%s1 + $0x150] sm:$0xf]
      %v1440 = vld [vmem:[%s1 + $0x154] sm:$0xf]
      %v1441 = vld [vmem:[%s1 + $0x158] sm:$0xf]
      %v1442 = vld [vmem:[%s1 + $0x15c] sm:$0xf]
      %v1443 = vld [vmem:[%s1 + $0x160] sm:$0xf]
      %v1444 = vld [vmem:[%s1 + $0x164] sm:$0xf]
      %v1445 = vld [vmem:[%s1 + $0x168] sm:$0xf]
      %v1446 = vld [vmem:[%s1 + $0x16c] sm:$0xf]
      %v1447 = vld [vmem:[%s1 + $0x170] sm:$0xf]
      %v1448 = vld [vmem:[%s1 + $0x174] sm:$0xf]
      %v1449 = vld [vmem:[%s1 + $0x178] sm:$0xf]
      %v1450 = vld [vmem:[%s1 + $0x17c] sm:$0xf]
      %v1467 = vrot.slane %v1427, 5
      %v1468 = vrot.slane %v1467, 4
      %v1469 = vrot.slane %v1147, 5
      %v1470 = vsel %vm807, %v1468, %v1469
      %v1471 = vrot.slane %v1428, 5
      %v1472 = vrot.slane %v1471, 4
      %v1473 = vrot.slane %v1149, 5
      %v1474 = vsel %vm807, %v1472, %v1473
      %v1475 = vrot.slane %v1429, 5
      %v1476 = vrot.slane %v1475, 4
      %v1477 = vrot.slane %v1151, 5
      %v1478 = vsel %vm807, %v1476, %v1477
      %v1479 = vrot.slane %v1430, 5
      %v1480 = vrot.slane %v1479, 4
      %v1481 = vrot.slane %v1153, 5
      %v1482 = vsel %vm807, %v1480, %v1481
      %v1483 = vrot.slane %v1431, 5
      %v1484 = vrot.slane %v1483, 4
      %v1485 = vrot.slane %v1155, 5
      %v1486 = vsel %vm807, %v1484, %v1485
      %v1487 = vrot.slane %v1432, 5
      %v1488 = vrot.slane %v1487, 4
      %v1489 = vrot.slane %v1157, 5
      %v1490 = vsel %vm807, %v1488, %v1489
      %v1491 = vrot.slane %v1433, 5
      %v1492 = vrot.slane %v1491, 4
      %v1493 = vrot.slane %v1159, 5
      %v1494 = vsel %vm807, %v1492, %v1493
      %v1495 = vrot.slane %v1434, 5
      %v1496 = vrot.slane %v1495, 4
      %v1497 = vrot.slane %v1161, 5
      %v1498 = vsel %vm807, %v1496, %v1497
      %v1499 = vunpack.c.l.b16 %v1470
      %v1500 = vunpack.c.l.b16 %v1474
      %v1501 = vunpack.c.l.b16 %v1478
      %v1502 = vunpack.c.l.b16 %v1482
      %v1503 = vunpack.c.l.b16 %v1486
      %v1504 = vunpack.c.l.b16 %v1490
      %v1505 = vunpack.c.l.b16 %v1494
      %v1506 = vunpack.c.l.b16 %v1498
      %v1507 = vpack.c.b16 %v1500, %v1499
      %v1508 = vpack.c.b16 %v1502, %v1501
      %v1509 = vpack.c.b16 %v1504, %v1503
      %v1510 = vpack.c.b16 %v1506, %v1505
      %v1531 = vunpack.c.l.b16 %v1435
      %v1532 = vunpack.c.l.b16 %v1436
      %v1533 = vunpack.c.l.b16 %v1437
      %v1534 = vunpack.c.l.b16 %v1438
      %v1535 = vunpack.c.l.b16 %v1439
      %v1536 = vunpack.c.l.b16 %v1440
      %v1537 = vunpack.c.l.b16 %v1441
      %v1538 = vunpack.c.l.b16 %v1442
      %v1539 = vunpack.c.l.b16 %v1443
      %v1540 = vunpack.c.l.b16 %v1444
      %v1541 = vunpack.c.l.b16 %v1445
      %v1542 = vunpack.c.l.b16 %v1446
      %v1543 = vunpack.c.l.b16 %v1447
      %v1544 = vunpack.c.l.b16 %v1448
      %v1545 = vunpack.c.l.b16 %v1449
      %v1546 = vunpack.c.l.b16 %v1450
      %v1547 = vpack.c.b16 %v1532, %v1531
      %v1548 = vpack.c.b16 %v1534, %v1533
      %v1549 = vpack.c.b16 %v1536, %v1535
      %v1550 = vpack.c.b16 %v1538, %v1537
      %v1551 = vpack.c.b16 %v1540, %v1539
      %v1552 = vpack.c.b16 %v1542, %v1541
      %v1553 = vpack.c.b16 %v1544, %v1543
      %v1554 = vpack.c.b16 %v1546, %v1545
      %1563 = vmatprep.subr.bf16.mxu0 0
      %1564 = vmatpush1.bf16.msra.mxu0 %v1547
      %1565 = vmatprep.subr.bf16.mxu0 0
      %1566 = vmatpush1.bf16.msra.mxu0 %v1548
      %1567 = vmatprep.subr.bf16.mxu0 0
      %1568 = vmatpush1.bf16.msra.mxu0 %v1549
      %1569 = vmatprep.subr.bf16.mxu0 0
      %1570 = vmatpush1.bf16.msra.mxu0 %v1550
      %1571 = vmatprep.subr.bf16.mxu0 0
      %1572 = vmatpush1.bf16.msra.mxu0 %v1551
      %1573 = vmatprep.subr.bf16.mxu0 0
      %1574 = vmatpush1.bf16.msra.mxu0 %v1552
      %1575 = vmatprep.subr.bf16.mxu0 0
      %1576 = vmatpush1.bf16.msra.mxu0 %v1553
      %1577 = vmatprep.subr.bf16.mxu0 0
      %1578 = vmatpush1.bf16.msra.mxu0 %v1554
      %1579 = vmatprep.subr.bf16.mxu0 0
      %1580 = vmatpush1.bf16.msra.mxu0 0
      %1581 = vmatprep.subr.bf16.mxu0 0
      %1582 = vmatpush1.bf16.msra.mxu0 0
      %1583 = vmatprep.subr.bf16.mxu0 0
      %1584 = vmatpush1.bf16.msra.mxu0 0
      %1585 = vmatprep.subr.bf16.mxu0 0
      %1586 = vmatpush1.bf16.msra.mxu0 0
      %1587 = vmatprep.subr.bf16.mxu0 0
      %1588 = vmatpush1.bf16.msra.mxu0 0
      %1589 = vmatprep.subr.bf16.mxu0 0
      %1590 = vmatpush1.bf16.msra.mxu0 0
      %1591 = vmatprep.subr.bf16.mxu0 0
      %1592 = vmatpush1.bf16.msra.mxu0 0
      %1593 = vmatprep.subr.bf16.mxu0 0
      %1594 = vmatpush1.bf16.msra.mxu0 0
      %1595 = vmatprep.mubr.bf16.mxu0 0
      %1596 = vmatmul.mubr.bf16.gmra.mrb[0].mxu0 %v1507
      %v1597 = vpop.f32.mrb[0].mxu0
      %v1598 = vadd.f32 0.0, %v1597
      %v1599 = vpop.f32.mrb[0].mxu0
      %v1600 = vpop.f32.mrb[0].mxu0
      %v1601 = vadd.f32 0.0, %v1600
      %v1602 = vpop.f32.mrb[0].mxu0
      %1603 = vmatprep.mubr.bf16.mxu0 0
      %1604 = vmatmul.mubr.bf16.gmra.mrb[0].mxu0 %v1508
      %v1605 = vpop.f32.mrb[0].mxu0
      %v1606 = vadd.f32 0.0, %v1605
      %v1607 = vpop.f32.mrb[0].mxu0
      %v1608 = vpop.f32.mrb[0].mxu0
      %v1609 = vadd.f32 0.0, %v1608
      %v1610 = vpop.f32.mrb[0].mxu0
      %1611 = vmatprep.mubr.bf16.mxu0 0
      %1612 = vmatmul.mubr.bf16.gmra.mrb[0].mxu0 %v1509
      %v1613 = vpop.f32.mrb[0].mxu0
      %v1614 = vadd.f32 0.0, %v1613
      %v1615 = vpop.f32.mrb[0].mxu0
      %v1616 = vpop.f32.mrb[0].mxu0
      %v1617 = vadd.f32 0.0, %v1616
      %v1618 = vpop.f32.mrb[0].mxu0
      %1619 = vmatprep.mubr.bf16.mxu0 0
      %1620 = vmatmul.mubr.bf16.gmra.mrb[0].mxu0 %v1510
      %v1621 = vpop.f32.mrb[0].mxu0
      %v1622 = vadd.f32 0.0, %v1621
      %v1623 = vpop.f32.mrb[0].mxu0
      %v1624 = vpop.f32.mrb[0].mxu0
      %v1625 = vadd.f32 0.0, %v1624
      %v1626 = vpop.f32.mrb[0].mxu0
      %1627 = vdwg.mxu0
      %v1628 = vadd.f32 %v1419, %v1598
      %v1629 = vadd.f32 %v1420, %v1601
      %v1630 = vadd.f32 %v1421, %v1606
      %v1631 = vadd.f32 %v1422, %v1609
      %v1632 = vadd.f32 %v1423, %v1614
      %v1633 = vadd.f32 %v1424, %v1617
      %v1634 = vadd.f32 %v1425, %v1622
      %v1635 = vadd.f32 %v1426, %v1625
      %s1636 = scalar_lea.vmem [#allocation2], 16
      %v1637 = vld [vmem:[%s1636] sm:$0xf]
      %v1638 = vld [vmem:[%s1636 + $0x8] sm:$0xf]
      %v1639 = vld [vmem:[%s1636 + $0x10] sm:$0xf]
      %v1640 = vld [vmem:[%s1636 + $0x18] sm:$0xf]
      %v1641 = vld [vmem:[%s1636 + $0x20] sm:$0xf]
      %v1642 = vld [vmem:[%s1636 + $0x28] sm:$0xf]
      %v1643 = vld [vmem:[%s1636 + $0x30] sm:$0xf]
      %v1644 = vld [vmem:[%s1636 + $0x38] sm:$0xf]
      %v1645 = vld [vmem:[%s1 + $0x180] sm:$0xf]
      %v1646 = vld [vmem:[%s1 + $0x184] sm:$0xf]
      %v1647 = vld [vmem:[%s1 + $0x188] sm:$0xf]
      %v1648 = vld [vmem:[%s1 + $0x18c] sm:$0xf]
      %v1649 = vld [vmem:[%s1 + $0x190] sm:$0xf]
      %v1650 = vld [vmem:[%s1 + $0x194] sm:$0xf]
      %v1651 = vld [vmem:[%s1 + $0x198] sm:$0xf]
      %v1652 = vld [vmem:[%s1 + $0x19c] sm:$0xf]
      %v1653 = vld [vmem:[%s1 + $0x1a0] sm:$0xf]
      %v1654 = vld [vmem:[%s1 + $0x1a4] sm:$0xf]
      %v1655 = vld [vmem:[%s1 + $0x1a8] sm:$0xf]
      %v1656 = vld [vmem:[%s1 + $0x1ac] sm:$0xf]
      %v1657 = vld [vmem:[%s1 + $0x1b0] sm:$0xf]
      %v1658 = vld [vmem:[%s1 + $0x1b4] sm:$0xf]
      %v1659 = vld [vmem:[%s1 + $0x1b8] sm:$0xf]
      %v1660 = vld [vmem:[%s1 + $0x1bc] sm:$0xf]
      %v1669 = vunpack.c.l.b16 %v1637
      %v1670 = vunpack.c.l.b16 %v1638
      %v1671 = vunpack.c.l.b16 %v1639
      %v1672 = vunpack.c.l.b16 %v1640
      %v1673 = vunpack.c.l.b16 %v1641
      %v1674 = vunpack.c.l.b16 %v1642
      %v1675 = vunpack.c.l.b16 %v1643
      %v1676 = vunpack.c.l.b16 %v1644
      %v1677 = vpack.c.b16 %v1670, %v1669
      %v1678 = vpack.c.b16 %v1672, %v1671
      %v1679 = vpack.c.b16 %v1674, %v1673
      %v1680 = vpack.c.b16 %v1676, %v1675
      %v1701 = vunpack.c.l.b16 %v1645
      %v1702 = vunpack.c.l.b16 %v1646
      %v1703 = vunpack.c.l.b16 %v1647
      %v1704 = vunpack.c.l.b16 %v1648
      %v1705 = vunpack.c.l.b16 %v1649
      %v1706 = vunpack.c.l.b16 %v1650
      %v1707 = vunpack.c.l.b16 %v1651
      %v1708 = vunpack.c.l.b16 %v1652
      %v1709 = vunpack.c.l.b16 %v1653
      %v1710 = vunpack.c.l.b16 %v1654
      %v1711 = vunpack.c.l.b16 %v1655
      %v1712 = vunpack.c.l.b16 %v1656
      %v1713 = vunpack.c.l.b16 %v1657
      %v1714 = vunpack.c.l.b16 %v1658
      %v1715 = vunpack.c.l.b16 %v1659
      %v1716 = vunpack.c.l.b16 %v1660
      %v1717 = vpack.c.b16 %v1702, %v1701
      %v1718 = vpack.c.b16 %v1704, %v1703
      %v1719 = vpack.c.b16 %v1706, %v1705
      %v1720 = vpack.c.b16 %v1708, %v1707
      %v1721 = vpack.c.b16 %v1710, %v1709
      %v1722 = vpack.c.b16 %v1712, %v1711
      %v1723 = vpack.c.b16 %v1714, %v1713
      %v1724 = vpack.c.b16 %v1716, %v1715
      %1733 = vmatprep.subr.bf16.mxu0 0
      %1734 = vmatpush1.bf16.msra.mxu0 %v1717
      %1735 = vmatprep.subr.bf16.mxu0 0
      %1736 = vmatpush1.bf16.msra.mxu0 %v1718
      %1737 = vmatprep.subr.bf16.mxu0 0
      %1738 = vmatpush1.bf16.msra.mxu0 %v1719
      %1739 = vmatprep.subr.bf16.mxu0 0
      %1740 = vmatpush1.bf16.msra.mxu0 %v1720
      %1741 = vmatprep.subr.bf16.mxu0 0
      %1742 = vmatpush1.bf16.msra.mxu0 %v1721
      %1743 = vmatprep.subr.bf16.mxu0 0
      %1744 = vmatpush1.bf16.msra.mxu0 %v1722
      %1745 = vmatprep.subr.bf16.mxu0 0
      %1746 = vmatpush1.bf16.msra.mxu0 %v1723
      %1747 = vmatprep.subr.bf16.mxu0 0
      %1748 = vmatpush1.bf16.msra.mxu0 %v1724
      %1749 = vmatprep.subr.bf16.mxu0 0
      %1750 = vmatpush1.bf16.msra.mxu0 0
      %1751 = vmatprep.subr.bf16.mxu0 0
      %1752 = vmatpush1.bf16.msra.mxu0 0
      %1753 = vmatprep.subr.bf16.mxu0 0
      %1754 = vmatpush1.bf16.msra.mxu0 0
      %1755 = vmatprep.subr.bf16.mxu0 0
      %1756 = vmatpush1.bf16.msra.mxu0 0
      %1757 = vmatprep.subr.bf16.mxu0 0
      %1758 = vmatpush1.bf16.msra.mxu0 0
      %1759 = vmatprep.subr.bf16.mxu0 0
      %1760 = vmatpush1.bf16.msra.mxu0 0
      %1761 = vmatprep.subr.bf16.mxu0 0
      %1762 = vmatpush1.bf16.msra.mxu0 0
      %1763 = vmatprep.subr.bf16.mxu0 0
      %1764 = vmatpush1.bf16.msra.mxu0 0
      %1765 = vmatprep.mubr.bf16.mxu0 0
      %1766 = vmatmul.mubr.bf16.gmra.mrb[0].mxu0 %v1677
      %v1767 = vpop.f32.mrb[0].mxu0
      %v1768 = vadd.f32 0.0, %v1767
      %v1769 = vpop.f32.mrb[0].mxu0
      %v1770 = vpop.f32.mrb[0].mxu0
      %v1771 = vadd.f32 0.0, %v1770
      %v1772 = vpop.f32.mrb[0].mxu0
      %1773 = vmatprep.mubr.bf16.mxu0 0
      %1774 = vmatmul.mubr.bf16.gmra.mrb[0].mxu0 %v1678
      %v1775 = vpop.f32.mrb[0].mxu0
      %v1776 = vadd.f32 0.0, %v1775
      %v1777 = vpop.f32.mrb[0].mxu0
      %v1778 = vpop.f32.mrb[0].mxu0
      %v1779 = vadd.f32 0.0, %v1778
      %v1780 = vpop.f32.mrb[0].mxu0
      %1781 = vmatprep.mubr.bf16.mxu0 0
      %1782 = vmatmul.mubr.bf16.gmra.mrb[0].mxu0 %v1679
      %v1783 = vpop.f32.mrb[0].mxu0
      %v1784 = vadd.f32 0.0, %v1783
      %v1785 = vpop.f32.mrb[0].mxu0
      %v1786 = vpop.f32.mrb[0].mxu0
      %v1787 = vadd.f32 0.0, %v1786
      %v1788 = vpop.f32.mrb[0].mxu0
      %1789 = vmatprep.mubr.bf16.mxu0 0
      %1790 = vmatmul.mubr.bf16.gmra.mrb[0].mxu0 %v1680
      %v1791 = vpop.f32.mrb[0].mxu0
      %v1792 = vadd.f32 0.0, %v1791
      %v1793 = vpop.f32.mrb[0].mxu0
      %v1794 = vpop.f32.mrb[0].mxu0
      %v1795 = vadd.f32 0.0, %v1794
      %v1796 = vpop.f32.mrb[0].mxu0
      %1797 = vdwg.mxu0
      %v1798 = vadd.f32 %v1628, %v1768
      %v1799 = vadd.f32 %v1629, %v1771
      %v1800 = vadd.f32 %v1630, %v1776
      %v1801 = vadd.f32 %v1631, %v1779
      %v1802 = vadd.f32 %v1632, %v1784
      %v1803 = vadd.f32 %v1633, %v1787
      %v1804 = vadd.f32 %v1634, %v1792
      %v1805 = vadd.f32 %v1635, %v1795
      %v1806 = vld [vmem:[%s1636] sm:$0xf]
      %v1807 = vld [vmem:[%s1636 + $0x4] sm:$0x1]
      %v1808 = vld [vmem:[%s1636 + $0x8] sm:$0xf]
      %v1809 = vld [vmem:[%s1636 + $0xc] sm:$0x1]
      %v1810 = vld [vmem:[%s1636 + $0x10] sm:$0xf]
      %v1811 = vld [vmem:[%s1636 + $0x14] sm:$0x1]
      %v1812 = vld [vmem:[%s1636 + $0x18] sm:$0xf]
      %v1813 = vld [vmem:[%s1636 + $0x1c] sm:$0x1]
      %v1814 = vld [vmem:[%s1636 + $0x20] sm:$0xf]
      %v1815 = vld [vmem:[%s1636 + $0x24] sm:$0x1]
      %v1816 = vld [vmem:[%s1636 + $0x28] sm:$0xf]
      %v1817 = vld [vmem:[%s1636 + $0x2c] sm:$0x1]
      %v1818 = vld [vmem:[%s1636 + $0x30] sm:$0xf]
      %v1819 = vld [vmem:[%s1636 + $0x34] sm:$0x1]
      %v1820 = vld [vmem:[%s1636 + $0x38] sm:$0xf]
      %v1821 = vld [vmem:[%s1636 + $0x3c] sm:$0x1]
      %v1822 = vld [vmem:[%s1 + $0x1c0] sm:$0xf]
      %v1823 = vld [vmem:[%s1 + $0x1c4] sm:$0xf]
      %v1824 = vld [vmem:[%s1 + $0x1c8] sm:$0xf]
      %v1825 = vld [vmem:[%s1 + $0x1cc] sm:$0xf]
      %v1826 = vld [vmem:[%s1 + $0x1d0] sm:$0xf]
      %v1827 = vld [vmem:[%s1 + $0x1d4] sm:$0xf]
      %v1828 = vld [vmem:[%s1 + $0x1d8] sm:$0xf]
      %v1829 = vld [vmem:[%s1 + $0x1dc] sm:$0xf]
      %v1830 = vld [vmem:[%s1 + $0x1e0] sm:$0xf]
      %v1831 = vld [vmem:[%s1 + $0x1e4] sm:$0xf]
      %v1832 = vld [vmem:[%s1 + $0x1e8] sm:$0xf]
      %v1833 = vld [vmem:[%s1 + $0x1ec] sm:$0xf]
      %v1834 = vld [vmem:[%s1 + $0x1f0] sm:$0xf]
      %v1835 = vld [vmem:[%s1 + $0x1f4] sm:$0xf]
      %v1836 = vld [vmem:[%s1 + $0x1f8] sm:$0xf]
      %v1837 = vld [vmem:[%s1 + $0x1fc] sm:$0xf]
      %v1839 = vshrl.u32 %v1806, 16
      %v1841 = vrot.slane %v1839, 4
      %v1842 = vshll.u32 %v1806, 16
      %v1844 = vrot.slane %v1842, 5
      %v1845 = vor.u32 %v1841, %v1844
      %v1846 = vrot.slane %v1845, 4
      %v1848 = vshll.u32 %v1807, 16
      %v1850 = vrot.slane %v1848, 5
      %v1851 = vsel %vm386, %v1846, %v1850
      %v1853 = vshrl.u32 %v1808, 16
      %v1855 = vrot.slane %v1853, 4
      %v1856 = vshll.u32 %v1808, 16
      %v1858 = vrot.slane %v1856, 5
      %v1859 = vor.u32 %v1855, %v1858
      %v1860 = vrot.slane %v1859, 4
      %v1862 = vshll.u32 %v1809, 16
      %v1864 = vrot.slane %v1862, 5
      %v1865 = vsel %vm386, %v1860, %v1864
      %v1867 = vshrl.u32 %v1810, 16
      %v1869 = vrot.slane %v1867, 4
      %v1870 = vshll.u32 %v1810, 16
      %v1872 = vrot.slane %v1870, 5
      %v1873 = vor.u32 %v1869, %v1872
      %v1874 = vrot.slane %v1873, 4
      %v1876 = vshll.u32 %v1811, 16
      %v1878 = vrot.slane %v1876, 5
      %v1879 = vsel %vm386, %v1874, %v1878
      %v1881 = vshrl.u32 %v1812, 16
      %v1883 = vrot.slane %v1881, 4
      %v1884 = vshll.u32 %v1812, 16
      %v1886 = vrot.slane %v1884, 5
      %v1887 = vor.u32 %v1883, %v1886
      %v1888 = vrot.slane %v1887, 4
      %v1890 = vshll.u32 %v1813, 16
      %v1892 = vrot.slane %v1890, 5
      %v1893 = vsel %vm386, %v1888, %v1892
      %v1895 = vshrl.u32 %v1814, 16
      %v1897 = vrot.slane %v1895, 4
      %v1898 = vshll.u32 %v1814, 16
      %v1900 = vrot.slane %v1898, 5
      %v1901 = vor.u32 %v1897, %v1900
      %v1902 = vrot.slane %v1901, 4
      %v1904 = vshll.u32 %v1815, 16
      %v1906 = vrot.slane %v1904, 5
      %v1907 = vsel %vm386, %v1902, %v1906
      %v1909 = vshrl.u32 %v1816, 16
      %v1911 = vrot.slane %v1909, 4
      %v1912 = vshll.u32 %v1816, 16
      %v1914 = vrot.slane %v1912, 5
      %v1915 = vor.u32 %v1911, %v1914
      %v1916 = vrot.slane %v1915, 4
      %v1918 = vshll.u32 %v1817, 16
      %v1920 = vrot.slane %v1918, 5
      %v1921 = vsel %vm386, %v1916, %v1920
      %v1923 = vshrl.u32 %v1818, 16
      %v1925 = vrot.slane %v1923, 4
      %v1926 = vshll.u32 %v1818, 16
      %v1928 = vrot.slane %v1926, 5
      %v1929 = vor.u32 %v1925, %v1928
      %v1930 = vrot.slane %v1929, 4
      %v1932 = vshll.u32 %v1819, 16
      %v1934 = vrot.slane %v1932, 5
      %v1935 = vsel %vm386, %v1930, %v1934
      %v1937 = vshrl.u32 %v1820, 16
      %v1939 = vrot.slane %v1937, 4
      %v1940 = vshll.u32 %v1820, 16
      %v1942 = vrot.slane %v1940, 5
      %v1943 = vor.u32 %v1939, %v1942
      %v1944 = vrot.slane %v1943, 4
      %v1946 = vshll.u32 %v1821, 16
      %v1948 = vrot.slane %v1946, 5
      %v1949 = vsel %vm386, %v1944, %v1948
      %v1950 = vunpack.c.l.b16 %v1851
      %v1951 = vunpack.c.l.b16 %v1865
      %v1952 = vunpack.c.l.b16 %v1879
      %v1953 = vunpack.c.l.b16 %v1893
      %v1954 = vunpack.c.l.b16 %v1907
      %v1955 = vunpack.c.l.b16 %v1921
      %v1956 = vunpack.c.l.b16 %v1935
      %v1957 = vunpack.c.l.b16 %v1949
      %v1958 = vpack.c.b16 %v1951, %v1950
      %v1959 = vpack.c.b16 %v1953, %v1952
      %v1960 = vpack.c.b16 %v1955, %v1954
      %v1961 = vpack.c.b16 %v1957, %v1956
      %v1982 = vunpack.c.l.b16 %v1822
      %v1983 = vunpack.c.l.b16 %v1823
      %v1984 = vunpack.c.l.b16 %v1824
      %v1985 = vunpack.c.l.b16 %v1825
      %v1986 = vunpack.c.l.b16 %v1826
      %v1987 = vunpack.c.l.b16 %v1827
      %v1988 = vunpack.c.l.b16 %v1828
      %v1989 = vunpack.c.l.b16 %v1829
      %v1990 = vunpack.c.l.b16 %v1830
      %v1991 = vunpack.c.l.b16 %v1831
      %v1992 = vunpack.c.l.b16 %v1832
      %v1993 = vunpack.c.l.b16 %v1833
      %v1994 = vunpack.c.l.b16 %v1834
      %v1995 = vunpack.c.l.b16 %v1835
      %v1996 = vunpack.c.l.b16 %v1836
      %v1997 = vunpack.c.l.b16 %v1837
      %v1998 = vpack.c.b16 %v1983, %v1982
      %v1999 = vpack.c.b16 %v1985, %v1984
      %v2000 = vpack.c.b16 %v1987, %v1986
      %v2001 = vpack.c.b16 %v1989, %v1988
      %v2002 = vpack.c.b16 %v1991, %v1990
      %v2003 = vpack.c.b16 %v1993, %v1992
      %v2004 = vpack.c.b16 %v1995, %v1994
      %v2005 = vpack.c.b16 %v1997, %v1996
      %2014 = vmatprep.subr.bf16.mxu0 0
      %2015 = vmatpush1.bf16.msra.mxu0 %v1998
      %2016 = vmatprep.subr.bf16.mxu0 0
      %2017 = vmatpush1.bf16.msra.mxu0 %v1999
      %2018 = vmatprep.subr.bf16.mxu0 0
      %2019 = vmatpush1.bf16.msra.mxu0 %v2000
      %2020 = vmatprep.subr.bf16.mxu0 0
      %2021 = vmatpush1.bf16.msra.mxu0 %v2001
      %2022 = vmatprep.subr.bf16.mxu0 0
      %2023 = vmatpush1.bf16.msra.mxu0 %v2002
      %2024 = vmatprep.subr.bf16.mxu0 0
      %2025 = vmatpush1.bf16.msra.mxu0 %v2003
      %2026 = vmatprep.subr.bf16.mxu0 0
      %2027 = vmatpush1.bf16.msra.mxu0 %v2004
      %2028 = vmatprep.subr.bf16.mxu0 0
      %2029 = vmatpush1.bf16.msra.mxu0 %v2005
      %2030 = vmatprep.subr.bf16.mxu0 0
      %2031 = vmatpush1.bf16.msra.mxu0 0
      %2032 = vmatprep.subr.bf16.mxu0 0
      %2033 = vmatpush1.bf16.msra.mxu0 0
      %2034 = vmatprep.subr.bf16.mxu0 0
      %2035 = vmatpush1.bf16.msra.mxu0 0
      %2036 = vmatprep.subr.bf16.mxu0 0
      %2037 = vmatpush1.bf16.msra.mxu0 0
      %2038 = vmatprep.subr.bf16.mxu0 0
      %2039 = vmatpush1.bf16.msra.mxu0 0
      %2040 = vmatprep.subr.bf16.mxu0 0
      %2041 = vmatpush1.bf16.msra.mxu0 0
      %2042 = vmatprep.subr.bf16.mxu0 0
      %2043 = vmatpush1.bf16.msra.mxu0 0
      %2044 = vmatprep.subr.bf16.mxu0 0
      %2045 = vmatpush1.bf16.msra.mxu0 0
      %2046 = vmatprep.mubr.bf16.mxu0 0
      %2047 = vmatmul.mubr.bf16.gmra.mrb[0].mxu0 %v1958
      %v2048 = vpop.f32.mrb[0].mxu0
      %v2049 = vadd.f32 0.0, %v2048
      %v2050 = vpop.f32.mrb[0].mxu0
      %v2051 = vpop.f32.mrb[0].mxu0
      %v2052 = vadd.f32 0.0, %v2051
      %v2053 = vpop.f32.mrb[0].mxu0
      %2054 = vmatprep.mubr.bf16.mxu0 0
      %2055 = vmatmul.mubr.bf16.gmra.mrb[0].mxu0 %v1959
      %v2056 = vpop.f32.mrb[0].mxu0
      %v2057 = vadd.f32 0.0, %v2056
      %v2058 = vpop.f32.mrb[0].mxu0
      %v2059 = vpop.f32.mrb[0].mxu0
      %v2060 = vadd.f32 0.0, %v2059
      %v2061 = vpop.f32.mrb[0].mxu0
      %2062 = vmatprep.mubr.bf16.mxu0 0
      %2063 = vmatmul.mubr.bf16.gmra.mrb[0].mxu0 %v1960
      %v2064 = vpop.f32.mrb[0].mxu0
      %v2065 = vadd.f32 0.0, %v2064
      %v2066 = vpop.f32.mrb[0].mxu0
      %v2067 = vpop.f32.mrb[0].mxu0
      %v2068 = vadd.f32 0.0, %v2067
      %v2069 = vpop.f32.mrb[0].mxu0
      %2070 = vmatprep.mubr.bf16.mxu0 0
      %2071 = vmatmul.mubr.bf16.gmra.mrb[0].mxu0 %v1961
      %v2072 = vpop.f32.mrb[0].mxu0
      %v2073 = vadd.f32 0.0, %v2072
      %v2074 = vpop.f32.mrb[0].mxu0
      %v2075 = vpop.f32.mrb[0].mxu0
      %v2076 = vadd.f32 0.0, %v2075
      %v2077 = vpop.f32.mrb[0].mxu0
      %2078 = vdwg.mxu0
      %v2079 = vadd.f32 %v1798, %v2049
      %v2080 = vadd.f32 %v1799, %v2052
      %v2081 = vadd.f32 %v1800, %v2057
      %v2082 = vadd.f32 %v1801, %v2060
      %v2083 = vadd.f32 %v1802, %v2065
      %v2084 = vadd.f32 %v1803, %v2068
      %v2085 = vadd.f32 %v1804, %v2073
      %v2086 = vadd.f32 %v1805, %v2076
      %v2087 = vld [vmem:[%s1636] sm:$0xe]
      %v2088 = vld [vmem:[%s1636 + $0x8] sm:$0xe]
      %v2089 = vld [vmem:[%s1636 + $0x10] sm:$0xe]
      %v2090 = vld [vmem:[%s1636 + $0x18] sm:$0xe]
      %v2091 = vld [vmem:[%s1636 + $0x20] sm:$0xe]
      %v2092 = vld [vmem:[%s1636 + $0x28] sm:$0xe]
      %v2093 = vld [vmem:[%s1636 + $0x30] sm:$0xe]
      %v2094 = vld [vmem:[%s1636 + $0x38] sm:$0xe]
      %v2095 = vld [vmem:[%s1 + $0x200] sm:$0xf]
      %v2096 = vld [vmem:[%s1 + $0x204] sm:$0xf]
      %v2097 = vld [vmem:[%s1 + $0x208] sm:$0xf]
      %v2098 = vld [vmem:[%s1 + $0x20c] sm:$0xf]
      %v2099 = vld [vmem:[%s1 + $0x210] sm:$0xf]
      %v2100 = vld [vmem:[%s1 + $0x214] sm:$0xf]
      %v2101 = vld [vmem:[%s1 + $0x218] sm:$0xf]
      %v2102 = vld [vmem:[%s1 + $0x21c] sm:$0xf]
      %v2103 = vld [vmem:[%s1 + $0x220] sm:$0xf]
      %v2104 = vld [vmem:[%s1 + $0x224] sm:$0xf]
      %v2105 = vld [vmem:[%s1 + $0x228] sm:$0xf]
      %v2106 = vld [vmem:[%s1 + $0x22c] sm:$0xf]
      %v2107 = vld [vmem:[%s1 + $0x230] sm:$0xf]
      %v2108 = vld [vmem:[%s1 + $0x234] sm:$0xf]
      %v2109 = vld [vmem:[%s1 + $0x238] sm:$0xf]
      %v2110 = vld [vmem:[%s1 + $0x23c] sm:$0xf]
      %v2127 = vrot.slane %v2087, 5
      %v2128 = vrot.slane %v2127, 4
      %v2129 = vrot.slane %v1807, 5
      %v2130 = vsel %vm807, %v2128, %v2129
      %v2131 = vrot.slane %v2088, 5
      %v2132 = vrot.slane %v2131, 4
      %v2133 = vrot.slane %v1809, 5
      %v2134 = vsel %vm807, %v2132, %v2133
      %v2135 = vrot.slane %v2089, 5
      %v2136 = vrot.slane %v2135, 4
      %v2137 = vrot.slane %v1811, 5
      %v2138 = vsel %vm807, %v2136, %v2137
      %v2139 = vrot.slane %v2090, 5
      %v2140 = vrot.slane %v2139, 4
      %v2141 = vrot.slane %v1813, 5
      %v2142 = vsel %vm807, %v2140, %v2141
      %v2143 = vrot.slane %v2091, 5
      %v2144 = vrot.slane %v2143, 4
      %v2145 = vrot.slane %v1815, 5
      %v2146 = vsel %vm807, %v2144, %v2145
      %v2147 = vrot.slane %v2092, 5
      %v2148 = vrot.slane %v2147, 4
      %v2149 = vrot.slane %v1817, 5
      %v2150 = vsel %vm807, %v2148, %v2149
      %v2151 = vrot.slane %v2093, 5
      %v2152 = vrot.slane %v2151, 4
      %v2153 = vrot.slane %v1819, 5
      %v2154 = vsel %vm807, %v2152, %v2153
      %v2155 = vrot.slane %v2094, 5
      %v2156 = vrot.slane %v2155, 4
      %v2157 = vrot.slane %v1821, 5
      %v2158 = vsel %vm807, %v2156, %v2157
      %v2159 = vunpack.c.l.b16 %v2130
      %v2160 = vunpack.c.l.b16 %v2134
      %v2161 = vunpack.c.l.b16 %v2138
      %v2162 = vunpack.c.l.b16 %v2142
      %v2163 = vunpack.c.l.b16 %v2146
      %v2164 = vunpack.c.l.b16 %v2150
      %v2165 = vunpack.c.l.b16 %v2154
      %v2166 = vunpack.c.l.b16 %v2158
      %v2167 = vpack.c.b16 %v2160, %v2159
      %v2168 = vpack.c.b16 %v2162, %v2161
      %v2169 = vpack.c.b16 %v2164, %v2163
      %v2170 = vpack.c.b16 %v2166, %v2165
      %v2191 = vunpack.c.l.b16 %v2095
      %v2192 = vunpack.c.l.b16 %v2096
      %v2193 = vunpack.c.l.b16 %v2097
      %v2194 = vunpack.c.l.b16 %v2098
      %v2195 = vunpack.c.l.b16 %v2099
      %v2196 = vunpack.c.l.b16 %v2100
      %v2197 = vunpack.c.l.b16 %v2101
      %v2198 = vunpack.c.l.b16 %v2102
      %v2199 = vunpack.c.l.b16 %v2103
      %v2200 = vunpack.c.l.b16 %v2104
      %v2201 = vunpack.c.l.b16 %v2105
      %v2202 = vunpack.c.l.b16 %v2106
      %v2203 = vunpack.c.l.b16 %v2107
      %v2204 = vunpack.c.l.b16 %v2108
      %v2205 = vunpack.c.l.b16 %v2109
      %v2206 = vunpack.c.l.b16 %v2110
      %v2207 = vpack.c.b16 %v2192, %v2191
      %v2208 = vpack.c.b16 %v2194, %v2193
      %v2209 = vpack.c.b16 %v2196, %v2195
      %v2210 = vpack.c.b16 %v2198, %v2197
      %v2211 = vpack.c.b16 %v2200, %v2199
      %v2212 = vpack.c.b16 %v2202, %v2201
      %v2213 = vpack.c.b16 %v2204, %v2203
      %v2214 = vpack.c.b16 %v2206, %v2205
      %2223 = vmatprep.subr.bf16.mxu0 0
      %2224 = vmatpush1.bf16.msra.mxu0 %v2207
      %2225 = vmatprep.subr.bf16.mxu0 0
      %2226 = vmatpush1.bf16.msra.mxu0 %v2208
      %2227 = vmatprep.subr.bf16.mxu0 0
      %2228 = vmatpush1.bf16.msra.mxu0 %v2209
      %2229 = vmatprep.subr.bf16.mxu0 0
      %2230 = vmatpush1.bf16.msra.mxu0 %v2210
      %2231 = vmatprep.subr.bf16.mxu0 0
      %2232 = vmatpush1.bf16.msra.mxu0 %v2211
      %2233 = vmatprep.subr.bf16.mxu0 0
      %2234 = vmatpush1.bf16.msra.mxu0 %v2212
      %2235 = vmatprep.subr.bf16.mxu0 0
      %2236 = vmatpush1.bf16.msra.mxu0 %v2213
      %2237 = vmatprep.subr.bf16.mxu0 0
      %2238 = vmatpush1.bf16.msra.mxu0 %v2214
      %2239 = vmatprep.subr.bf16.mxu0 0
      %2240 = vmatpush1.bf16.msra.mxu0 0
      %2241 = vmatprep.subr.bf16.mxu0 0
      %2242 = vmatpush1.bf16.msra.mxu0 0
      %2243 = vmatprep.subr.bf16.mxu0 0
      %2244 = vmatpush1.bf16.msra.mxu0 0
      %2245 = vmatprep.subr.bf16.mxu0 0
      %2246 = vmatpush1.bf16.msra.mxu0 0
      %2247 = vmatprep.subr.bf16.mxu0 0
      %2248 = vmatpush1.bf16.msra.mxu0 0
      %2249 = vmatprep.subr.bf16.mxu0 0
      %2250 = vmatpush1.bf16.msra.mxu0 0
      %2251 = vmatprep.subr.bf16.mxu0 0
      %2252 = vmatpush1.bf16.msra.mxu0 0
      %2253 = vmatprep.subr.bf16.mxu0 0
      %2254 = vmatpush1.bf16.msra.mxu0 0
      %2255 = vmatprep.mubr.bf16.mxu0 0
      %2256 = vmatmul.mubr.bf16.gmra.mrb[0].mxu0 %v2167
      %v2257 = vpop.f32.mrb[0].mxu0
      %v2258 = vadd.f32 0.0, %v2257
      %v2259 = vpop.f32.mrb[0].mxu0
      %v2260 = vpop.f32.mrb[0].mxu0
      %v2261 = vadd.f32 0.0, %v2260
      %v2262 = vpop.f32.mrb[0].mxu0
      %2263 = vmatprep.mubr.bf16.mxu0 0
      %2264 = vmatmul.mubr.bf16.gmra.mrb[0].mxu0 %v2168
      %v2265 = vpop.f32.mrb[0].mxu0
      %v2266 = vadd.f32 0.0, %v2265
      %v2267 = vpop.f32.mrb[0].mxu0
      %v2268 = vpop.f32.mrb[0].mxu0
      %v2269 = vadd.f32 0.0, %v2268
      %v2270 = vpop.f32.mrb[0].mxu0
      %2271 = vmatprep.mubr.bf16.mxu0 0
      %2272 = vmatmul.mubr.bf16.gmra.mrb[0].mxu0 %v2169
      %v2273 = vpop.f32.mrb[0].mxu0
      %v2274 = vadd.f32 0.0, %v2273
      %v2275 = vpop.f32.mrb[0].mxu0
      %v2276 = vpop.f32.mrb[0].mxu0
      %v2277 = vadd.f32 0.0, %v2276
      %v2278 = vpop.f32.mrb[0].mxu0
      %2279 = vmatprep.mubr.bf16.mxu0 0
      %2280 = vmatmul.mubr.bf16.gmra.mrb[0].mxu0 %v2170
      %v2281 = vpop.f32.mrb[0].mxu0
      %v2282 = vadd.f32 0.0, %v2281
      %v2283 = vpop.f32.mrb[0].mxu0
      %v2284 = vpop.f32.mrb[0].mxu0
      %v2285 = vadd.f32 0.0, %v2284
      %v2286 = vpop.f32.mrb[0].mxu0
      %2287 = vdwg.mxu0
      %v2288 = vadd.f32 %v2079, %v2258
      %v2289 = vadd.f32 %v2080, %v2261
      %v2290 = vadd.f32 %v2081, %v2266
      %v2291 = vadd.f32 %v2082, %v2269
      %v2292 = vadd.f32 %v2083, %v2274
      %v2293 = vadd.f32 %v2084, %v2277
      %v2294 = vadd.f32 %v2085, %v2282
      %v2295 = vadd.f32 %v2086, %v2285
      %v2297 = vlaneseq
      %v2298 = vshrl.u32 %v2297, 7
      %v2299 = vsub.s32 0, %v2298
      %v2300 = vrot.slane %v335, %v2299
      %v2302 = vadd.f32 %v2288, %v2300
      %v2303 = vadd.f32 %v2289, %v2300
      %v2304 = vadd.f32 %v2290, %v2300
      %v2305 = vadd.f32 %v2291, %v2300
      %v2306 = vadd.f32 %v2292, %v2300
      %v2307 = vadd.f32 %v2293, %v2300
      %v2308 = vadd.f32 %v2294, %v2300
      %v2309 = vadd.f32 %v2295, %v2300
      %vm2310 = vcmp.ge.f32.partialorder %v2302, 0.0
      %vm2311 = vcmp.ge.f32.partialorder %v2303, 0.0
      %vm2312 = vcmp.ge.f32.partialorder %v2304, 0.0
      %vm2313 = vcmp.ge.f32.partialorder %v2305, 0.0
      %vm2314 = vcmp.ge.f32.partialorder %v2306, 0.0
      %vm2315 = vcmp.ge.f32.partialorder %v2307, 0.0
      %vm2316 = vcmp.ge.f32.partialorder %v2308, 0.0
      %vm2317 = vcmp.ge.f32.partialorder %v2309, 0.0
      %v2318 = vmul.f32 %v2302, 0.01
      %v2319 = vmul.f32 %v2303, 0.01
      %v2320 = vmul.f32 %v2304, 0.01
      %v2321 = vmul.f32 %v2305, 0.01
      %v2322 = vmul.f32 %v2306, 0.01
      %v2323 = vmul.f32 %v2307, 0.01
      %v2324 = vmul.f32 %v2308, 0.01
      %v2325 = vmul.f32 %v2309, 0.01
      %v2326 = vsel %vm2310, %v2302, %v2318
      %v2327 = vsel %vm2311, %v2303, %v2319
      %v2328 = vsel %vm2312, %v2304, %v2320
      %v2329 = vsel %vm2313, %v2305, %v2321
      %v2330 = vsel %vm2314, %v2306, %v2322
      %v2331 = vsel %vm2315, %v2307, %v2323
      %v2332 = vsel %vm2316, %v2308, %v2324
      %v2333 = vsel %vm2317, %v2309, %v2325
      %v2334 = vpack.c.bf16 %v2326, %v2326
      %v2335 = vpack.c.bf16 %v2327, %v2327
      %v2336 = vpack.c.bf16 %v2328, %v2328
      %v2337 = vpack.c.bf16 %v2329, %v2329
      %v2338 = vpack.c.bf16 %v2330, %v2330
      %v2339 = vpack.c.bf16 %v2331, %v2331
      %v2340 = vpack.c.bf16 %v2332, %v2332
      %v2341 = vpack.c.bf16 %v2333, %v2333
      %2342 = vst [vmem:[%s170] sm:$0xf] %v2334
      %2343 = vst [vmem:[%s170 + $0x4] sm:$0xf] %v2335
      %2344 = vst [vmem:[%s170 + $0x8] sm:$0xf] %v2336
      %2345 = vst [vmem:[%s170 + $0xc] sm:$0xf] %v2337
      %2346 = vst [vmem:[%s170 + $0x10] sm:$0xf] %v2338
      %2347 = vst [vmem:[%s170 + $0x14] sm:$0xf] %v2339
      %2348 = vst [vmem:[%s170 + $0x18] sm:$0xf] %v2340
      %2349 = vst [vmem:[%s170 + $0x1c] sm:$0xf] %v2341
      %p2350 = scmp.lt.s32.totalorder %s14, 1
      %s2351 = scalar_select %p2350, %s14, 1
      %s2352 = smul.addr %s2351, 8
      %s2353 = smul.addr %s2352, 4
      %s2354 = scalar_lea.vmem %s3, %s2353
      // Predicated region
      $region33: #{convnet_forward.5} parent=31 // pred_check
        %p2355 = pneg %p100
      $region34: #{convnet_forward.5} parent=31 // pred_check_branch
        %2357 = sbr.rel (%p2355) target = $region36
      $region35: #{convnet_forward.5} parent=31 // pred_region
        _
      $region36: #{convnet_forward.5} parent=31 // pred_fallthru
        _
    $region32: #{convnet_forward.5} parent=5 // pred_fallthru
      _
    %p2358 = scmp.le.s32.totalorder 2, %s9
    // Predicated region
    $region37: #{convnet_forward.5} parent=5 // pred_check
      %p2359 = pneg %p2358
    $region38: #{convnet_forward.5} parent=5 // pred_check_branch
      %2361 = sbr.rel (%p2359) target = $region40
    $region39: #{convnet_forward.5} parent=5 // pred_region
      %s2362 = ssub.s32 %s9, 2
      // Predicated region
      $region41: #{convnet_forward.5} parent=39 // pred_check
        %p2363 = pneg %p106
      $region42: #{convnet_forward.5} parent=39 // pred_check_branch
        %2365 = sbr.rel (%p2363) target = $region44
      $region43: #{convnet_forward.5} parent=39 // pred_region
        %p2366 = scmp.lt.s32.totalorder %s15, 1
        %s2367 = scalar_select %p2366, %s15, 1
        %s2368 = smul.addr %s2367, 8
        %s2369 = smul.addr %s2368, 4
        %s2370 = scalar_lea.vmem %s3, %s2369
      $region44: #{convnet_forward.5} parent=39 // pred_fallthru
        _
    $region40: #{convnet_forward.5} parent=5 // pred_fallthru
      _
  $region6: #{convnet_forward.5} parent=0 // loop_footer
    %s13 = sadd.s32 1, %s9
  $region7: #{convnet_forward.5} parent=0 // loop_footer_branch
    %8 = sbr.rel target = $region3
  $region8: #{convnet_forward.5} parent=0 // loop_exit
    _

// kernel: convnet_forward.7
$region0: #{convnet_forward.7}
  #allocation0 [shape = 'u32[]', space=smem, size = 0x4, offset = 0x4, fixed_abs, tag = 'smem constant byte address 0x4 - core index']
  #allocation1 [shape = 'u32[144,128]{1,0:T(1,128)}', space=vmem, size = 0x12000, scoped, tag = 'internal scratch']
  #allocation2 [shape = 'bf16[10,10,128]{2,1,0:T(8,128)(2,1)}', space=vmem, size = 0xa000, scoped, tag = 'scratch operand']
  %s0 = inlined_call_operand.vmem [shape: bf16[2,8,8,128], index: 0, kind: input, shape index: {}]
  %s1 = inlined_call_operand.vmem [shape: bf16[1152,256], index: 1, kind: input, shape index: {}]
  %s2 = inlined_call_operand.vmem [shape: f32[1,256], index: 2, kind: input, shape index: {}]
  %s3 = inlined_call_operand.hbm [shape: f32[2,8,8,256], index: 3, kind: output, shape index: {}]
  %s4 = sld [smem:[#allocation0]]
  $region45: #{convnet_forward.7} parent=0
    _
  %s6 = ssub.s32 1, %s4
  %s7 = scalar_select 0, %s6, %s4
  $region1: #{convnet_forward.7} parent=0
    #allocation3 [shape = 'u8[131072]{0}', space=vmem, size = 0x20000, scoped, tag = 'output window, operand 0']
    #allocation4 [shape = 's32[2]{0}', space=sflag, size = 0x8, scoped, tag = 'scoped memory for convnet_forward.7']
    %8 = vsyncpa [#allocation4], 0
    %s9 = scalar_lea.sflag [#allocation4], 1
    %10 = vsyncpa %s9, 0
    loop: start=0, step=1, limit=4
    $region2: #{convnet_forward.7} parent=1 // loop_pre_header
      _
    $region3: #{convnet_forward.7} parent=1 // loop_header
      %s12 = sphi 0, %s16
      %p13 = scmp.ge.s32.totalorder %s12, 4
      %s22 = sphi 0, %s24
      %s25 = sphi 0, %s22
      %s26 = sphi 0, %s25
      %s42 = sphi 0, %s26
      %s46 = sphi 0, %s46
      %s48 = sphi 0, %s46
      %s49 = sphi 0, %s48
      %s63 = sphi 0, %s49
      %s67 = sphi 0, %s67
      %s69 = sphi 0, %s67
      %s70 = sphi 0, %s69
      %s84 = sphi 0, %s70
      %s90 = sphi 0, %s92
      %s93 = sphi 0, %s90
      %s94 = sphi 0, %s93
      %s110 = sphi 0, %s94
    $region4: #{convnet_forward.7} parent=1 // loop_header_branch
      %15 = sbr.rel (%p13) target = $region8
    $region5: #{convnet_forward.7} parent=1 // loop_body
      %s17 = ssub.s32 %s12, 1
      %s18 = ssub.s32 %s12, 2
      %s19 = sadd.s32 %s12, 1
      %s20 = ssub.s32 %s12, %s19
      %p21 = scmp.eq.s32.totalorder %s20, 0
      %s23 = sadd.s32 %s22, 1
      %s24 = scalar_select %p21, %s22, %s23
      %p27 = pneg %p21
      %p28 = scmp.eq.s32.totalorder %s12, 1
      %p29 = por %p27, %p28
      %p30 = scmp.ne.s32.totalorder %s22, %s25
      %p31 = scmp.eq.s32.totalorder %s12, 0
      %p32 = por %p30, %p31
      %p33 = scmp.ne.s32.totalorder %s22, %s25
      %p34 = scmp.eq.s32.totalorder %s17, 1
      %p35 = por %p33, %p34
      %p36 = scmp.ne.s32.totalorder %s25, %s26
      %p37 = scmp.eq.s32.totalorder %s17, 0
      %p38 = por %p36, %p37
      %p39 = scmp.ne.s32.totalorder %s25, %s26
      %p40 = scmp.eq.s32.totalorder %s18, 1
      %p41 = por %p39, %p40
      %p43 = scmp.ne.s32.totalorder %s26, %s42
      %p44 = scmp.eq.s32.totalorder %s18, 0
      %p45 = por %p43, %p44
      %s47 = sadd.s32 %s46, 1
      %p50 = scmp.eq.s32.totalorder %s12, 1
      %p51 = scmp.ne.s32.totalorder %s46, %s48
      %p52 = scmp.eq.s32.totalorder %s12, 0
      %p53 = por %p51, %p52
      %p54 = scmp.ne.s32.totalorder %s46, %s48
      %p55 = scmp.eq.s32.totalorder %s17, 1
      %p56 = por %p54, %p55
      %p57 = scmp.ne.s32.totalorder %s48, %s49
      %p58 = scmp.eq.s32.totalorder %s17, 0
      %p59 = por %p57, %p58
      %p60 = scmp.ne.s32.totalorder %s48, %s49
      %p61 = scmp.eq.s32.totalorder %s18, 1
      %p62 = por %p60, %p61
      %p64 = scmp.ne.s32.totalorder %s49, %s63
      %p65 = scmp.eq.s32.totalorder %s18, 0
      %p66 = por %p64, %p65
      %s68 = sadd.s32 %s67, 1
      %p71 = scmp.eq.s32.totalorder %s12, 1
      %p72 = scmp.ne.s32.totalorder %s67, %s69
      %p73 = scmp.eq.s32.totalorder %s12, 0
      %p74 = por %p72, %p73
      %p75 = scmp.ne.s32.totalorder %s67, %s69
      %p76 = scmp.eq.s32.totalorder %s17, 1
      %p77 = por %p75, %p76
      %p78 = scmp.ne.s32.totalorder %s69, %s70
      %p79 = scmp.eq.s32.totalorder %s17, 0
      %p80 = por %p78, %p79
      %p81 = scmp.ne.s32.totalorder %s69, %s70
      %p82 = scmp.eq.s32.totalorder %s18, 1
      %p83 = por %p81, %p82
      %p85 = scmp.ne.s32.totalorder %s70, %s84
      %p86 = scmp.eq.s32.totalorder %s18, 0
      %p87 = por %p85, %p86
      %s88 = ssub.s32 %s12, %s19
      %p89 = scmp.eq.s32.totalorder %s88, 0
      %s91 = sadd.s32 %s90, 1
      %s92 = scalar_select %p89, %s90, %s91
      %p95 = pneg %p89
      %p96 = scmp.eq.s32.totalorder %s12, 1
      %p97 = por %p95, %p96
      %p98 = scmp.ne.s32.totalorder %s90, %s93
      %p99 = scmp.eq.s32.totalorder %s12, 0
      %p100 = por %p98, %p99
      %p101 = scmp.ne.s32.totalorder %s90, %s93
      %p102 = scmp.eq.s32.totalorder %s17, 1
      %p103 = por %p101, %p102
      %p104 = scmp.ne.s32.totalorder %s93, %s94
      %p105 = scmp.eq.s32.totalorder %s17, 0
      %p106 = por %p104, %p105
      %p107 = scmp.ne.s32.totalorder %s93, %s94
      %p108 = scmp.eq.s32.totalorder %s18, 1
      %p109 = por %p107, %p108
      %p111 = scmp.ne.s32.totalorder %s94, %s110
      %p112 = scmp.eq.s32.totalorder %s18, 0
      %p113 = por %p111, %p112
      %p114 = scmp.le.s32.totalorder 1, %s12
      %p115 = scmp.lt.s32.totalorder %s12, 3
      %p116 = pnand %p114, %p115
      %p117 = pneg %p116
      // Predicated region
      $region9: #{convnet_forward.7} parent=5 // pred_check
        _
      $region10: #{convnet_forward.7} parent=5 // pred_check_branch
        %119 = sbr.rel (%p116) target = $region12
      $region11: #{convnet_forward.7} parent=5 // pred_region
        %s120 = ssub.s32 %s12, 1
        // Predicated region
        $region13: #{convnet_forward.7} parent=11 // pred_check
          %p121 = pneg %p59
        $region14: #{convnet_forward.7} parent=11 // pred_check_branch
          %123 = sbr.rel (%p121) target = $region16
        $region15: #{convnet_forward.7} parent=11 // pred_region
          _
        $region16: #{convnet_forward.7} parent=11 // pred_fallthru
          _
        // Predicated region
        $region17: #{convnet_forward.7} parent=11 // pred_check
          %p124 = pneg %p80
        $region18: #{convnet_forward.7} parent=11 // pred_check_branch
          %126 = sbr.rel (%p124) target = $region20
        $region19: #{convnet_forward.7} parent=11 // pred_region
          _
        $region20: #{convnet_forward.7} parent=11 // pred_fallthru
          _
      $region12: #{convnet_forward.7} parent=5 // pred_fallthru
        _
      %p127 = scmp.lt.s32.totalorder %s12, 2
      // Predicated region
      $region21: #{convnet_forward.7} parent=5 // pred_check
        %p128 = pneg %p127
      $region22: #{convnet_forward.7} parent=5 // pred_check_branch
        %130 = sbr.rel (%p128) target = $region24
      $region23: #{convnet_forward.7} parent=5 // pred_region
        // Predicated region
        $region25: #{convnet_forward.7} parent=23 // pred_check
          %p131 = pneg %p32
        $region26: #{convnet_forward.7} parent=23 // pred_check_branch
          %133 = sbr.rel (%p131) target = $region28
        $region27: #{convnet_forward.7} parent=23 // pred_region
          %p134 = scmp.lt.s32.totalorder %s12, 1
          %s135 = scalar_select %p134, %s12, 1
          %s136 = smul.addr %s135, 8
          %s137 = smul.addr %s136, 4
          %s138 = scalar_lea.vmem %s0, %s137
        $region28: #{convnet_forward.7} parent=23 // pred_fallthru
          _
      $region24: #{convnet_forward.7} parent=5 // pred_fallthru
        _
      %p139 = scmp.le.s32.totalorder 1, %s12
      %p140 = scmp.lt.s32.totalorder %s12, 3
      %p141 = pnand %p139, %p140
      %p142 = pneg %p141
      // Predicated region
      $region29: #{convnet_forward.7} parent=5 // pred_check
        _
      $region30: #{convnet_forward.7} parent=5 // pred_check_branch
        %144 = sbr.rel (%p141) target = $region32
      $region31: #{convnet_forward.7} parent=5 // pred_region
        %s145 = ssub.s32 %s12, 1
        %p146 = scmp.lt.s32.totalorder %s17, 1
        %s147 = scalar_select %p146, %s17, 1
        %s148 = smul.addr %s147, 8
        %s149 = smul.addr %s148, 4
        %s150 = scalar_lea.vmem %s0, %s149
        %p151 = pneg %p38
        %p152 = pneg %p35
        %p153 = pneg %p59
        %p154 = pneg %p56
        %p155 = pneg %p80
        %p156 = pneg %p77
        %p157 = pneg %p106
        %p158 = pneg %p103
        %s159 = sand.u32 %s93, 1
        %s160 = scalar_lea.sflag [#allocation4], %s159
        %s161 = sand.u32 %s93, 1
        %s162 = smul.addr %s161, 128
        %s163 = scalar_lea.vmem [#allocation3], %s162
        %p164 = scmp.lt.s32.totalorder %s17, 1
        %s165 = scalar_select %p164, %s17, 1
        %s166 = smul.addr %s165, 8
        %s167 = smul.addr %s166, 4
        %s168 = scalar_lea.vmem %s0, %s167
        %170 = vst [vmem:[#allocation2] sm:$0xf] 0
        %171 = vst [vmem:[#allocation2 + $0x4] sm:$0x1] 0
        %172 = vst [vmem:[#allocation2 + $0x8] sm:$0xf] 0
        %173 = vst [vmem:[#allocation2 + $0xc] sm:$0x1] 0
        %174 = vst [vmem:[#allocation2 + $0x10] sm:$0xf] 0
        %175 = vst [vmem:[#allocation2 + $0x14] sm:$0x1] 0
        %176 = vst [vmem:[#allocation2 + $0x18] sm:$0xf] 0
        %177 = vst [vmem:[#allocation2 + $0x1c] sm:$0x1] 0
        %178 = vst [vmem:[#allocation2 + $0x20] sm:$0xf] 0
        %179 = vst [vmem:[#allocation2 + $0x24] sm:$0x1] 0
        %180 = vst [vmem:[#allocation2 + $0x28] sm:$0xf] 0
        %181 = vst [vmem:[#allocation2 + $0x2c] sm:$0x1] 0
        %182 = vst [vmem:[#allocation2 + $0x30] sm:$0xf] 0
        %183 = vst [vmem:[#allocation2 + $0x34] sm:$0x1] 0
        %184 = vst [vmem:[#allocation2 + $0x38] sm:$0xf] 0
        %185 = vst [vmem:[#allocation2 + $0x3c] sm:$0x1] 0
        %186 = vst [vmem:[#allocation2 + $0x40] sm:$0xf] 0
        %187 = vst [vmem:[#allocation2 + $0x44] sm:$0x1] 0
        %188 = vst [vmem:[#allocation2 + $0x48] sm:$0xf] 0
        %189 = vst [vmem:[#allocation2 + $0x4c] sm:$0x1] 0
        %v190 = vld [vmem:[%s168] sm:$0xf]
        %v191 = vld [vmem:[%s168 + $0x4] sm:$0xf]
        %v192 = vld [vmem:[%s168 + $0x8] sm:$0xf]
        %v193 = vld [vmem:[%s168 + $0xc] sm:$0xf]
        %v194 = vld [vmem:[%s168 + $0x10] sm:$0xf]
        %v195 = vld [vmem:[%s168 + $0x14] sm:$0xf]
        %v196 = vld [vmem:[%s168 + $0x18] sm:$0xf]
        %v197 = vld [vmem:[%s168 + $0x1c] sm:$0xf]
        %v199 = vshrl.u32 %v190, 16
        %v201 = vrot.slane %v199, 7
        %v202 = vshll.u32 %v190, 16
        %v204 = vor.u32 %v201, %v202
        %v205 = vrot.slane %v201, 4
        %v207 = vshrl.u32 %v191, 16
        %v209 = vrot.slane %v207, 7
        %v210 = vshll.u32 %v191, 16
        %v212 = vor.u32 %v209, %v210
        %v213 = vrot.slane %v209, 4
        %v215 = vshrl.u32 %v192, 16
        %v217 = vrot.slane %v215, 7
        %v218 = vshll.u32 %v192, 16
        %v220 = vor.u32 %v217, %v218
        %v221 = vrot.slane %v217, 4
        %v223 = vshrl.u32 %v193, 16
        %v225 = vrot.slane %v223, 7
        %v226 = vshll.u32 %v193, 16
        %v228 = vor.u32 %v225, %v226
        %v229 = vrot.slane %v225, 4
        %v231 = vshrl.u32 %v194, 16
        %v233 = vrot.slane %v231, 7
        %v234 = vshll.u32 %v194, 16
        %v236 = vor.u32 %v233, %v234
        %v237 = vrot.slane %v233, 4
        %v239 = vshrl.u32 %v195, 16
        %v241 = vrot.slane %v239, 7
        %v242 = vshll.u32 %v195, 16
        %v244 = vor.u32 %v241, %v242
        %v245 = vrot.slane %v241, 4
        %v247 = vshrl.u32 %v196, 16
        %v249 = vrot.slane %v247, 7
        %v250 = vshll.u32 %v196, 16
        %v252 = vor.u32 %v249, %v250
        %v253 = vrot.slane %v249, 4
        %v255 = vshrl.u32 %v197, 16
        %v257 = vrot.slane %v255, 7
        %v258 = vshll.u32 %v197, 16
        %v260 = vor.u32 %v257, %v258
        %v261 = vrot.slane %v257, 4
        %s278 = scalar_lea.vmem [#allocation2], 8
        %vm279 = vcmask 1043456
        %vm280 = vsmask.f32 7938
        %vm281 = vmand %vm279, %vm280
        %v282 = vld [vmem:[%s278] sm:$0xf]
        %v283 = vsel %vm281, %v204, %v282
        %284 = vst [vmem:[%s278] sm:$0xf] %v283
        %vm285 = vcmask 1040384
        %vm286 = vsmask.f32 256
        %vm287 = vmand %vm285, %vm286
        %v288 = vld [vmem:[%s278 + $0x4] sm:$0x1]
        %v289 = vsel %vm287, %v205, %v288
        %290 = vst [vmem:[%s278 + $0x4] sm:$0x1] %v289
        %v291 = vld [vmem:[%s278 + $0x8] sm:$0xf]
        %v292 = vsel %vm281, %v212, %v291
        %293 = vst [vmem:[%s278 + $0x8] sm:$0xf] %v292
        %v294 = vld [vmem:[%s278 + $0xc] sm:$0x1]
        %v295 = vsel %vm287, %v213, %v294
        %296 = vst [vmem:[%s278 + $0xc] sm:$0x1] %v295
        %v297 = vld [vmem:[%s278 + $0x10] sm:$0xf]
        %v298 = vsel %vm281, %v220, %v297
        %299 = vst [vmem:[%s278 + $0x10] sm:$0xf] %v298
        %v300 = vld [vmem:[%s278 + $0x14] sm:$0x1]
        %v301 = vsel %vm287, %v221, %v300
        %302 = vst [vmem:[%s278 + $0x14] sm:$0x1] %v301
        %v303 = vld [vmem:[%s278 + $0x18] sm:$0xf]
        %v304 = vsel %vm281, %v228, %v303
        %305 = vst [vmem:[%s278 + $0x18] sm:$0xf] %v304
        %v306 = vld [vmem:[%s278 + $0x1c] sm:$0x1]
        %v307 = vsel %vm287, %v229, %v306
        %308 = vst [vmem:[%s278 + $0x1c] sm:$0x1] %v307
        %v309 = vld [vmem:[%s278 + $0x20] sm:$0xf]
        %v310 = vsel %vm281, %v236, %v309
        %311 = vst [vmem:[%s278 + $0x20] sm:$0xf] %v310
        %v312 = vld [vmem:[%s278 + $0x24] sm:$0x1]
        %v313 = vsel %vm287, %v237, %v312
        %314 = vst [vmem:[%s278 + $0x24] sm:$0x1] %v313
        %v315 = vld [vmem:[%s278 + $0x28] sm:$0xf]
        %v316 = vsel %vm281, %v244, %v315
        %317 = vst [vmem:[%s278 + $0x28] sm:$0xf] %v316
        %v318 = vld [vmem:[%s278 + $0x2c] sm:$0x1]
        %v319 = vsel %vm287, %v245, %v318
        %320 = vst [vmem:[%s278 + $0x2c] sm:$0x1] %v319
        %v321 = vld [vmem:[%s278 + $0x30] sm:$0xf]
        %v322 = vsel %vm281, %v252, %v321
        %323 = vst [vmem:[%s278 + $0x30] sm:$0xf] %v322
        %v324 = vld [vmem:[%s278 + $0x34] sm:$0x1]
        %v325 = vsel %vm287, %v253, %v324
        %326 = vst [vmem:[%s278 + $0x34] sm:$0x1] %v325
        %v327 = vld [vmem:[%s278 + $0x38] sm:$0xf]
        %v328 = vsel %vm281, %v260, %v327
        %329 = vst [vmem:[%s278 + $0x38] sm:$0xf] %v328
        %v330 = vld [vmem:[%s278 + $0x3c] sm:$0x1]
        %v331 = vsel %vm287, %v261, %v330
        %332 = vst [vmem:[%s278 + $0x3c] sm:$0x1] %v331
        %v333 = vld [vmem:[%s2] sm:$0x3]
        %v334 = vld [vmem:[#allocation2] sm:$0xf]
        %v335 = vld [vmem:[#allocation2 + $0x8] sm:$0xf]
        %v336 = vld [vmem:[#allocation2 + $0x10] sm:$0xf]
        %v337 = vld [vmem:[#allocation2 + $0x18] sm:$0xf]
        %v338 = vld [vmem:[#allocation2 + $0x20] sm:$0xf]
        %v339 = vld [vmem:[#allocation2 + $0x28] sm:$0xf]
        %v340 = vld [vmem:[#allocation2 + $0x30] sm:$0xf]
        %v341 = vld [vmem:[#allocation2 + $0x38] sm:$0xf]
        %v342 = vld [vmem:[%s1] sm:$0xff]
        %v343 = vld [vmem:[%s1 + $0x8] sm:$0xff]
        %v344 = vld [vmem:[%s1 + $0x10] sm:$0xff]
        %v345 = vld [vmem:[%s1 + $0x18] sm:$0xff]
        %v346 = vld [vmem:[%s1 + $0x20] sm:$0xff]
        %v347 = vld [vmem:[%s1 + $0x28] sm:$0xff]
        %v348 = vld [vmem:[%s1 + $0x30] sm:$0xff]
        %v349 = vld [vmem:[%s1 + $0x38] sm:$0xff]
        %v350 = vld [vmem:[%s1 + $0x40] sm:$0xff]
        %v351 = vld [vmem:[%s1 + $0x48] sm:$0xff]
        %v352 = vld [vmem:[%s1 + $0x50] sm:$0xff]
        %v353 = vld [vmem:[%s1 + $0x58] sm:$0xff]
        %v354 = vld [vmem:[%s1 + $0x60] sm:$0xff]
        %v355 = vld [vmem:[%s1 + $0x68] sm:$0xff]
        %v356 = vld [vmem:[%s1 + $0x70] sm:$0xff]
        %v357 = vld [vmem:[%s1 + $0x78] sm:$0xff]
        %v358 = vld [vmem:[#allocation2 + $0x4] sm:$0x1]
        %v359 = vld [vmem:[#allocation2 + $0xc] sm:$0x1]
        %v360 = vld [vmem:[#allocation2 + $0x14] sm:$0x1]
        %v361 = vld [vmem:[#allocation2 + $0x1c] sm:$0x1]
        %v362 = vld [vmem:[#allocation2 + $0x24] sm:$0x1]
        %v363 = vld [vmem:[#allocation2 + $0x2c] sm:$0x1]
        %v364 = vld [vmem:[#allocation2 + $0x34] sm:$0x1]
        %v365 = vld [vmem:[#allocation2 + $0x3c] sm:$0x1]
        %v366 = vld [vmem:[%s1 + $0x80] sm:$0xff]
        %v367 = vld [vmem:[%s1 + $0x88] sm:$0xff]
        %v368 = vld [vmem:[%s1 + $0x90] sm:$0xff]
        %v369 = vld [vmem:[%s1 + $0x98] sm:$0xff]
        %v370 = vld [vmem:[%s1 + $0xa0] sm:$0xff]
        %v371 = vld [vmem:[%s1 + $0xa8] sm:$0xff]
        %v372 = vld [vmem:[%s1 + $0xb0] sm:$0xff]
        %v373 = vld [vmem:[%s1 + $0xb8] sm:$0xff]
        %v374 = vld [vmem:[%s1 + $0xc0] sm:$0xff]
        %v375 = vld [vmem:[%s1 + $0xc8] sm:$0xff]
        %v376 = vld [vmem:[%s1 + $0xd0] sm:$0xff]
        %v377 = vld [vmem:[%s1 + $0xd8] sm:$0xff]
        %v378 = vld [vmem:[%s1 + $0xe0] sm:$0xff]
        %v379 = vld [vmem:[%s1 + $0xe8] sm:$0xff]
        %v380 = vld [vmem:[%s1 + $0xf0] sm:$0xff]
        %v381 = vld [vmem:[%s1 + $0xf8] sm:$0xff]
        %vm382 = vsmask.f32 3328
        %vm383 = vsmask.f32 7440
        %vm384 = vmor %vm382, %vm383
        %v386 = vshrl.u32 %v334, 16
        %v388 = vrot.slane %v386, 4
        %v389 = vshll.u32 %v334, 16
        %v391 = vrot.slane %v389, 5
        %v392 = vor.u32 %v388, %v391
        %v393 = vrot.slane %v392, 4
        %v395 = vshll.u32 %v358, 16
        %v397 = vrot.slane %v395, 5
        %v398 = vsel %vm384, %v393, %v397
        %v400 = vshrl.u32 %v335, 16
        %v402 = vrot.slane %v400, 4
        %v403 = vshll.u32 %v335, 16
        %v405 = vrot.slane %v403, 5
        %v406 = vor.u32 %v402, %v405
        %v407 = vrot.slane %v406, 4
        %v409 = vshll.u32 %v359, 16
        %v411 = vrot.slane %v409, 5
        %v412 = vsel %vm384, %v407, %v411
        %v414 = vshrl.u32 %v336, 16
        %v416 = vrot.slane %v414, 4
        %v417 = vshll.u32 %v336, 16
        %v419 = vrot.slane %v417, 5
        %v420 = vor.u32 %v416, %v419
        %v421 = vrot.slane %v420, 4
        %v423 = vshll.u32 %v360, 16
        %v425 = vrot.slane %v423, 5
        %v426 = vsel %vm384, %v421, %v425
        %v428 = vshrl.u32 %v337, 16
        %v430 = vrot.slane %v428, 4
        %v431 = vshll.u32 %v337, 16
        %v433 = vrot.slane %v431, 5
        %v434 = vor.u32 %v430, %v433
        %v435 = vrot.slane %v434, 4
        %v437 = vshll.u32 %v361, 16
        %v439 = vrot.slane %v437, 5
        %v440 = vsel %vm384, %v435, %v439
        %v442 = vshrl.u32 %v338, 16
        %v444 = vrot.slane %v442, 4
        %v445 = vshll.u32 %v338, 16
        %v447 = vrot.slane %v445, 5
        %v448 = vor.u32 %v444, %v447
        %v449 = vrot.slane %v448, 4
        %v451 = vshll.u32 %v362, 16
        %v453 = vrot.slane %v451, 5
        %v454 = vsel %vm384, %v449, %v453
        %v456 = vshrl.u32 %v339, 16
        %v458 = vrot.slane %v456, 4
        %v459 = vshll.u32 %v339, 16
        %v461 = vrot.slane %v459, 5
        %v462 = vor.u32 %v458, %v461
        %v463 = vrot.slane %v462, 4
        %v465 = vshll.u32 %v363, 16
        %v467 = vrot.slane %v465, 5
        %v468 = vsel %vm384, %v463, %v467
        %v470 = vshrl.u32 %v340, 16
        %v472 = vrot.slane %v470, 4
        %v473 = vshll.u32 %v340, 16
        %v475 = vrot.slane %v473, 5
        %v476 = vor.u32 %v472, %v475
        %v477 = vrot.slane %v476, 4
        %v479 = vshll.u32 %v364, 16
        %v481 = vrot.slane %v479, 5
        %v482 = vsel %vm384, %v477, %v481
        %v484 = vshrl.u32 %v341, 16
        %v486 = vrot.slane %v484, 4
        %v487 = vshll.u32 %v341, 16
        %v489 = vrot.slane %v487, 5
        %v490 = vor.u32 %v486, %v489
        %v491 = vrot.slane %v490, 4
        %v493 = vshll.u32 %v365, 16
        %v495 = vrot.slane %v493, 5
        %v496 = vsel %vm384, %v491, %v495
        %v497 = vunpack.c.l.b16 %v398
        %v498 = vunpack.c.l.b16 %v412
        %v499 = vunpack.c.l.b16 %v426
        %v500 = vunpack.c.l.b16 %v440
        %v501 = vunpack.c.l.b16 %v454
        %v502 = vunpack.c.l.b16 %v468
        %v503 = vunpack.c.l.b16 %v482
        %v504 = vunpack.c.l.b16 %v496
        %v505 = vpack.c.b16 %v498, %v497
        %v506 = vpack.c.b16 %v500, %v499
        %v507 = vpack.c.b16 %v502, %v501
        %v508 = vpack.c.b16 %v504, %v503
        %v529 = vunpack.c.l.b16 %v366
        %v530 = vunpack.c.h.b16 %v366
        %v531 = vunpack.c.l.b16 %v367
        %v532 = vunpack.c.h.b16 %v367
        %v533 = vunpack.c.l.b16 %v368
        %v534 = vunpack.c.h.b16 %v368
        %v535 = vunpack.c.l.b16 %v369
        %v536 = vunpack.c.h.b16 %v369
        %v537 = vunpack.c.l.b16 %v370
        %v538 = vunpack.c.h.b16 %v370
        %v539 = vunpack.c.l.b16 %v371
        %v540 = vunpack.c.h.b16 %v371
        %v541 = vunpack.c.l.b16 %v372
        %v542 = vunpack.c.h.b16 %v372
        %v543 = vunpack.c.l.b16 %v373
        %v544 = vunpack.c.h.b16 %v373
        %v545 = vunpack.c.l.b16 %v374
        %v546 = vunpack.c.h.b16 %v374
        %v547 = vunpack.c.l.b16 %v375
        %v548 = vunpack.c.h.b16 %v375
        %v549 = vunpack.c.l.b16 %v376
        %v550 = vunpack.c.h.b16 %v376
        %v551 = vunpack.c.l.b16 %v377
        %v552 = vunpack.c.h.b16 %v377
        %v553 = vunpack.c.l.b16 %v378
        %v554 = vunpack.c.h.b16 %v378
        %v555 = vunpack.c.l.b16 %v379
        %v556 = vunpack.c.h.b16 %v379
        %v557 = vunpack.c.l.b16 %v380
        %v558 = vunpack.c.h.b16 %v380
        %v559 = vunpack.c.l.b16 %v381
        %v560 = vunpack.c.h.b16 %v381
        %v561 = vpack.c.b16 %v531, %v529
        %v562 = vpack.c.b16 %v532, %v530
        %v563 = vpack.c.b16 %v535, %v533
        %v564 = vpack.c.b16 %v536, %v534
        %v565 = vpack.c.b16 %v539, %v537
        %v566 = vpack.c.b16 %v540, %v538
        %v567 = vpack.c.b16 %v543, %v541
        %v568 = vpack.c.b16 %v544, %v542
        %v569 = vpack.c.b16 %v547, %v545
        %v570 = vpack.c.b16 %v548, %v546
        %v571 = vpack.c.b16 %v551, %v549
        %v572 = vpack.c.b16 %v552, %v550
        %v573 = vpack.c.b16 %v555, %v553
        %v574 = vpack.c.b16 %v556, %v554
        %v575 = vpack.c.b16 %v559, %v557
        %v576 = vpack.c.b16 %v560, %v558
        %593 = vmatprep.subr.bf16.mxu0 %v562
        %594 = vmatpush1.bf16.msra.mxu0 %v561
        %595 = vmatprep.subr.bf16.mxu0 %v564
        %596 = vmatpush1.bf16.msra.mxu0 %v563
        %597 = vmatprep.subr.bf16.mxu0 %v566
        %598 = vmatpush1.bf16.msra.mxu0 %v565
        %599 = vmatprep.subr.bf16.mxu0 %v568
        %600 = vmatpush1.bf16.msra.mxu0 %v567
        %601 = vmatprep.subr.bf16.mxu0 %v570
        %602 = vmatpush1.bf16.msra.mxu0 %v569
        %603 = vmatprep.subr.bf16.mxu0 %v572
        %604 = vmatpush1.bf16.msra.mxu0 %v571
        %605 = vmatprep.subr.bf16.mxu0 %v574
        %606 = vmatpush1.bf16.msra.mxu0 %v573
        %607 = vmatprep.subr.bf16.mxu0 %v576
        %608 = vmatpush1.bf16.msra.mxu0 %v575
        %609 = vmatprep.subr.bf16.mxu0 0
        %610 = vmatpush1.bf16.msra.mxu0 0
        %611 = vmatprep.subr.bf16.mxu0 0
        %612 = vmatpush1.bf16.msra.mxu0 0
        %613 = vmatprep.subr.bf16.mxu0 0
        %614 = vmatpush1.bf16.msra.mxu0 0
        %615 = vmatprep.subr.bf16.mxu0 0
        %616 = vmatpush1.bf16.msra.mxu0 0
        %617 = vmatprep.subr.bf16.mxu0 0
        %618 = vmatpush1.bf16.msra.mxu0 0
        %619 = vmatprep.subr.bf16.mxu0 0
        %620 = vmatpush1.bf16.msra.mxu0 0
        %621 = vmatprep.subr.bf16.mxu0 0
        %622 = vmatpush1.bf16.msra.mxu0 0
        %623 = vmatprep.subr.bf16.mxu0 0
        %624 = vmatpush1.bf16.msra.mxu0 0
        %625 = vmatprep.mubr.bf16.mxu0 0
        %626 = vmatmul.mubr.bf16.gmra.mrb[0].mxu0 %v505
        %v627 = vpop.f32.mrb[0].mxu0
        %v628 = vadd.f32 0.0, %v627
        %v629 = vpop.f32.mrb[0].mxu0
        %v630 = vadd.f32 0.0, %v629
        %v631 = vpop.f32.mrb[0].mxu0
        %v632 = vadd.f32 0.0, %v631
        %v633 = vpop.f32.mrb[0].mxu0
        %v634 = vadd.f32 0.0, %v633
        %635 = vmatprep.mubr.bf16.mxu0 0
        %636 = vmatmul.mubr.bf16.gmra.mrb[0].mxu0 %v506
        %v637 = vpop.f32.mrb[0].mxu0
        %v638 = vadd.f32 0.0, %v637
        %v639 = vpop.f32.mrb[0].mxu0
        %v640 = vadd.f32 0.0, %v639
        %v641 = vpop.f32.mrb[0].mxu0
        %v642 = vadd.f32 0.0, %v641
        %v643 = vpop.f32.mrb[0].mxu0
        %v644 = vadd.f32 0.0, %v643
        %645 = vmatprep.mubr.bf16.mxu0 0
        %646 = vmatmul.mubr.bf16.gmra.mrb[0].mxu0 %v507
        %v647 = vpop.f32.mrb[0].mxu0
        %v648 = vadd.f32 0.0, %v647
        %v649 = vpop.f32.mrb[0].mxu0
        %v650 = vadd.f32 0.0, %v649
        %v651 = vpop.f32.mrb[0].mxu0
        %v652 = vadd.f32 0.0, %v651
        %v653 = vpop.f32.mrb[0].mxu0
        %v654 = vadd.f32 0.0, %v653
        %655 = vmatprep.mubr.bf16.mxu0 0
        %656 = vmatmul.mubr.bf16.gmra.mrb[0].mxu0 %v508
        %v657 = vpop.f32.mrb[0].mxu0
        %v658 = vadd.f32 0.0, %v657
        %v659 = vpop.f32.mrb[0].mxu0
        %v660 = vadd.f32 0.0, %v659
        %v661 = vpop.f32.mrb[0].mxu0
        %v662 = vadd.f32 0.0, %v661
        %v663 = vpop.f32.mrb[0].mxu0
        %v664 = vadd.f32 0.0, %v663
        %665 = vdwg.mxu0
        %v674 = vunpack.c.l.b16 %v334
        %v675 = vunpack.c.l.b16 %v335
        %v676 = vunpack.c.l.b16 %v336
        %v677 = vunpack.c.l.b16 %v337
        %v678 = vunpack.c.l.b16 %v338
        %v679 = vunpack.c.l.b16 %v339
        %v680 = vunpack.c.l.b16 %v340
        %v681 = vunpack.c.l.b16 %v341
        %v682 = vpack.c.b16 %v675, %v674
        %v683 = vpack.c.b16 %v677, %v676
        %v684 = vpack.c.b16 %v679, %v678
        %v685 = vpack.c.b16 %v681, %v680
        %v706 = vunpack.c.l.b16 %v342
        %v707 = vunpack.c.h.b16 %v342
        %v708 = vunpack.c.l.b16 %v343
        %v709 = vunpack.c.h.b16 %v343
        %v710 = vunpack.c.l.b16 %v344
        %v711 = vunpack.c.h.b16 %v344
        %v712 = vunpack.c.l.b16 %v345
        %v713 = vunpack.c.h.b16 %v345
        %v714 = vunpack.c.l.b16 %v346
        %v715 = vunpack.c.h.b16 %v346
        %v716 = vunpack.c.l.b16 %v347
        %v717 = vunpack.c.h.b16 %v347
        %v718 = vunpack.c.l.b16 %v348
        %v719 = vunpack.c.h.b16 %v348
        %v720 = vunpack.c.l.b16 %v349
        %v721 = vunpack.c.h.b16 %v349
        %v722 = vunpack.c.l.b16 %v350
        %v723 = vunpack.c.h.b16 %v350
        %v724 = vunpack.c.l.b16 %v351
        %v725 = vunpack.c.h.b16 %v351
        %v726 = vunpack.c.l.b16 %v352
        %v727 = vunpack.c.h.b16 %v352
        %v728 = vunpack.c.l.b16 %v353
        %v729 = vunpack.c.h.b16 %v353
        %v730 = vunpack.c.l.b16 %v354
        %v731 = vunpack.c.h.b16 %v354
        %v732 = vunpack.c.l.b16 %v355
        %v733 = vunpack.c.h.b16 %v355
        %v734 = vunpack.c.l.b16 %v356
        %v735 = vunpack.c.h.b16 %v356
        %v736 = vunpack.c.l.b16 %v357
        %v737 = vunpack.c.h.b16 %v357
        %v738 = vpack.c.b16 %v708, %v706
        %v739 = vpack.c.b16 %v709, %v707
        %v740 = vpack.c.b16 %v712, %v710
        %v741 = vpack.c.b16 %v713, %v711
        %v742 = vpack.c.b16 %v716, %v714
        %v743 = vpack.c.b16 %v717, %v715
        %v744 = vpack.c.b16 %v720, %v718
        %v745 = vpack.c.b16 %v721, %v719
        %v746 = vpack.c.b16 %v724, %v722
        %v747 = vpack.c.b16 %v725, %v723
        %v748 = vpack.c.b16 %v728, %v726
        %v749 = vpack.c.b16 %v729, %v727
        %v750 = vpack.c.b16 %v732, %v730
        %v751 = vpack.c.b16 %v733, %v731
        %v752 = vpack.c.b16 %v736, %v734
        %v753 = vpack.c.b16 %v737, %v735
        %770 = vmatprep.subr.bf16.mxu0 %v739
        %771 = vmatpush1.bf16.msra.mxu0 %v738
        %772 = vmatprep.subr.bf16.mxu0 %v741
        %773 = vmatpush1.bf16.msra.mxu0 %v740
        %774 = vmatprep.subr.bf16.mxu0 %v743
        %775 = vmatpush1.bf16.msra.mxu0 %v742
        %776 = vmatprep.subr.bf16.mxu0 %v745
        %777 = vmatpush1.bf16.msra.mxu0 %v744
        %778 = vmatprep.subr.bf16.mxu0 %v747
        %779 = vmatpush1.bf16.msra.mxu0 %v746
        %780 = vmatprep.subr.bf16.mxu0 %v749
        %781 = vmatpush1.bf16.msra.mxu0 %v748
        %782 = vmatprep.subr.bf16.mxu0 %v751
        %783 = vmatpush1.bf16.msra.mxu0 %v750
        %784 = vmatprep.subr.bf16.mxu0 %v753
        %785 = vmatpush1.bf16.msra.mxu0 %v752
        %786 = vmatprep.subr.bf16.mxu0 0
        %787 = vmatpush1.bf16.msra.mxu0 0
        %788 = vmatprep.subr.bf16.mxu0 0
        %789 = vmatpush1.bf16.msra.mxu0 0
        %790 = vmatprep.subr.bf16.mxu0 0
        %791 = vmatpush1.bf16.msra.mxu0 0
        %792 = vmatprep.subr.bf16.mxu0 0
        %793 = vmatpush1.bf16.msra.mxu0 0
        %794 = vmatprep.subr.bf16.mxu0 0
        %795 = vmatpush1.bf16.msra.mxu0 0
        %796 = vmatprep.subr.bf16.mxu0 0
        %797 = vmatpush1.bf16.msra.mxu0 0
        %798 = vmatprep.subr.bf16.mxu0 0
        %799 = vmatpush1.bf16.msra.mxu0 0
        %800 = vmatprep.subr.bf16.mxu0 0
        %801 = vmatpush1.bf16.msra.mxu0 0
        %802 = vmatprep.mubr.bf16.mxu0 0
        %803 = vmatmul.mubr.bf16.gmra.mrb[0].mxu0 %v682
        %v804 = vpop.f32.mrb[0].mxu0
        %v805 = vadd.f32 %v628, %v804
        %v806 = vpop.f32.mrb[0].mxu0
        %v807 = vadd.f32 %v630, %v806
        %v808 = vpop.f32.mrb[0].mxu0
        %v809 = vadd.f32 %v632, %v808
        %v810 = vpop.f32.mrb[0].mxu0
        %v811 = vadd.f32 %v634, %v810
        %812 = vmatprep.mubr.bf16.mxu0 0
        %813 = vmatmul.mubr.bf16.gmra.mrb[0].mxu0 %v683
        %v814 = vpop.f32.mrb[0].mxu0
        %v815 = vadd.f32 %v638, %v814
        %v816 = vpop.f32.mrb[0].mxu0
        %v817 = vadd.f32 %v640, %v816
        %v818 = vpop.f32.mrb[0].mxu0
        %v819 = vadd.f32 %v642, %v818
        %v820 = vpop.f32.mrb[0].mxu0
        %v821 = vadd.f32 %v644, %v820
        %822 = vmatprep.mubr.bf16.mxu0 0
        %823 = vmatmul.mubr.bf16.gmra.mrb[0].mxu0 %v684
        %v824 = vpop.f32.mrb[0].mxu0
        %v825 = vadd.f32 %v648, %v824
        %v826 = vpop.f32.mrb[0].mxu0
        %v827 = vadd.f32 %v650, %v826
        %v828 = vpop.f32.mrb[0].mxu0
        %v829 = vadd.f32 %v652, %v828
        %v830 = vpop.f32.mrb[0].mxu0
        %v831 = vadd.f32 %v654, %v830
        %832 = vmatprep.mubr.bf16.mxu0 0
        %833 = vmatmul.mubr.bf16.gmra.mrb[0].mxu0 %v685
        %v834 = vpop.f32.mrb[0].mxu0
        %v835 = vadd.f32 %v658, %v834
        %v836 = vpop.f32.mrb[0].mxu0
        %v837 = vadd.f32 %v660, %v836
        %v838 = vpop.f32.mrb[0].mxu0
        %v839 = vadd.f32 %v662, %v838
        %v840 = vpop.f32.mrb[0].mxu0
        %v841 = vadd.f32 %v664, %v840
        %842 = vdwg.mxu0
        %v843 = vld [vmem:[#allocation2] sm:$0xe]
        %v844 = vld [vmem:[#allocation2 + $0x8] sm:$0xe]
        %v845 = vld [vmem:[#allocation2 + $0x10] sm:$0xe]
        %v846 = vld [vmem:[#allocation2 + $0x18] sm:$0xe]
        %v847 = vld [vmem:[#allocation2 + $0x20] sm:$0xe]
        %v848 = vld [vmem:[#allocation2 + $0x28] sm:$0xe]
        %v849 = vld [vmem:[#allocation2 + $0x30] sm:$0xe]
        %v850 = vld [vmem:[#allocation2 + $0x38] sm:$0xe]
        %v851 = vld [vmem:[%s1 + $0x100] sm:$0xff]
        %v852 = vld [vmem:[%s1 + $0x108] sm:$0xff]
        %v853 = vld [vmem:[%s1 + $0x110] sm:$0xff]
        %v854 = vld [vmem:[%s1 + $0x118] sm:$0xff]
        %v855 = vld [vmem:[%s1 + $0x120] sm:$0xff]
        %v856 = vld [vmem:[%s1 + $0x128] sm:$0xff]
        %v857 = vld [vmem:[%s1 + $0x130] sm:$0xff]
        %v858 = vld [vmem:[%s1 + $0x138] sm:$0xff]
        %v859 = vld [vmem:[%s1 + $0x140] sm:$0xff]
        %v860 = vld [vmem:[%s1 + $0x148] sm:$0xff]
        %v861 = vld [vmem:[%s1 + $0x150] sm:$0xff]
        %v862 = vld [vmem:[%s1 + $0x158] sm:$0xff]
        %v863 = vld [vmem:[%s1 + $0x160] sm:$0xff]
        %v864 = vld [vmem:[%s1 + $0x168] sm:$0xff]
        %v865 = vld [vmem:[%s1 + $0x170] sm:$0xff]
        %v866 = vld [vmem:[%s1 + $0x178] sm:$0xff]
        %vm883 = vcmask 1042432
        %vm884 = vcmask 1046532
        %vm885 = vmor %vm883, %vm884
        %v886 = vrot.slane %v843, 5
        %v887 = vrot.slane %v886, 4
        %v888 = vrot.slane %v358, 5
        %v889 = vsel %vm885, %v887, %v888
        %v890 = vrot.slane %v844, 5
        %v891 = vrot.slane %v890, 4
        %v892 = vrot.slane %v359, 5
        %v893 = vsel %vm885, %v891, %v892
        %v894 = vrot.slane %v845, 5
        %v895 = vrot.slane %v894, 4
        %v896 = vrot.slane %v360, 5
        %v897 = vsel %vm885, %v895, %v896
        %v898 = vrot.slane %v846, 5
        %v899 = vrot.slane %v898, 4
        %v900 = vrot.slane %v361, 5
        %v901 = vsel %vm885, %v899, %v900
        %v902 = vrot.slane %v847, 5
        %v903 = vrot.slane %v902, 4
        %v904 = vrot.slane %v362, 5
        %v905 = vsel %vm885, %v903, %v904
        %v906 = vrot.slane %v848, 5
        %v907 = vrot.slane %v906, 4
        %v908 = vrot.slane %v363, 5
        %v909 = vsel %vm885, %v907, %v908
        %v910 = vrot.slane %v849, 5
        %v911 = vrot.slane %v910, 4
        %v912 = vrot.slane %v364, 5
        %v913 = vsel %vm885, %v911, %v912
        %v914 = vrot.slane %v850, 5
        %v915 = vrot.slane %v914, 4
        %v916 = vrot.slane %v365, 5
        %v917 = vsel %vm885, %v915, %v916
        %v918 = vunpack.c.l.b16 %v889
        %v919 = vunpack.c.l.b16 %v893
        %v920 = vunpack.c.l.b16 %v897
        %v921 = vunpack.c.l.b16 %v901
        %v922 = vunpack.c.l.b16 %v905
        %v923 = vunpack.c.l.b16 %v909
        %v924 = vunpack.c.l.b16 %v913
        %v925 = vunpack.c.l.b16 %v917
        %v926 = vpack.c.b16 %v919, %v918
        %v927 = vpack.c.b16 %v921, %v920
        %v928 = vpack.c.b16 %v923, %v922
        %v929 = vpack.c.b16 %v925, %v924
        %v950 = vunpack.c.l.b16 %v851
        %v951 = vunpack.c.h.b16 %v851
        %v952 = vunpack.c.l.b16 %v852
        %v953 = vunpack.c.h.b16 %v852
        %v954 = vunpack.c.l.b16 %v853
        %v955 = vunpack.c.h.b16 %v853
        %v956 = vunpack.c.l.b16 %v854
        %v957 = vunpack.c.h.b16 %v854
        %v958 = vunpack.c.l.b16 %v855
        %v959 = vunpack.c.h.b16 %v855
        %v960 = vunpack.c.l.b16 %v856
        %v961 = vunpack.c.h.b16 %v856
        %v962 = vunpack.c.l.b16 %v857
        %v963 = vunpack.c.h.b16 %v857
        %v964 = vunpack.c.l.b16 %v858
        %v965 = vunpack.c.h.b16 %v858
        %v966 = vunpack.c.l.b16 %v859
        %v967 = vunpack.c.h.b16 %v859
        %v968 = vunpack.c.l.b16 %v860
        %v969 = vunpack.c.h.b16 %v860
        %v970 = vunpack.c.l.b16 %v861
        %v971 = vunpack.c.h.b16 %v861
        %v972 = vunpack.c.l.b16 %v862
        %v973 = vunpack.c.h.b16 %v862
        %v974 = vunpack.c.l.b16 %v863
        %v975 = vunpack.c.h.b16 %v863
        %v976 = vunpack.c.l.b16 %v864
        %v977 = vunpack.c.h.b16 %v864
        %v978 = vunpack.c.l.b16 %v865
        %v979 = vunpack.c.h.b16 %v865
        %v980 = vunpack.c.l.b16 %v866
        %v981 = vunpack.c.h.b16 %v866
        %v982 = vpack.c.b16 %v952, %v950
        %v983 = vpack.c.b16 %v953, %v951
        %v984 = vpack.c.b16 %v956, %v954
        %v985 = vpack.c.b16 %v957, %v955
        %v986 = vpack.c.b16 %v960, %v958
        %v987 = vpack.c.b16 %v961, %v959
        %v988 = vpack.c.b16 %v964, %v962
        %v989 = vpack.c.b16 %v965, %v963
        %v990 = vpack.c.b16 %v968, %v966
        %v991 = vpack.c.b16 %v969, %v967
        %v992 = vpack.c.b16 %v972, %v970
        %v993 = vpack.c.b16 %v973, %v971
        %v994 = vpack.c.b16 %v976, %v974
        %v995 = vpack.c.b16 %v977, %v975
        %v996 = vpack.c.b16 %v980, %v978
        %v997 = vpack.c.b16 %v981, %v979
        %1014 = vmatprep.subr.bf16.mxu0 %v983
        %1015 = vmatpush1.bf16.msra.mxu0 %v982
        %1016 = vmatprep.subr.bf16.mxu0 %v985
        %1017 = vmatpush1.bf16.msra.mxu0 %v984
        %1018 = vmatprep.subr.bf16.mxu0 %v987
        %1019 = vmatpush1.bf16.msra.mxu0 %v986
        %1020 = vmatprep.subr.bf16.mxu0 %v989
        %1021 = vmatpush1.bf16.msra.mxu0 %v988
        %1022 = vmatprep.subr.bf16.mxu0 %v991
        %1023 = vmatpush1.bf16.msra.mxu0 %v990
        %1024 = vmatprep.subr.bf16.mxu0 %v993
        %1025 = vmatpush1.bf16.msra.mxu0 %v992
        %1026 = vmatprep.subr.bf16.mxu0 %v995
        %1027 = vmatpush1.bf16.msra.mxu0 %v994
        %1028 = vmatprep.subr.bf16.mxu0 %v997
        %1029 = vmatpush1.bf16.msra.mxu0 %v996
        %1030 = vmatprep.subr.bf16.mxu0 0
        %1031 = vmatpush1.bf16.msra.mxu0 0
        %1032 = vmatprep.subr.bf16.mxu0 0
        %1033 = vmatpush1.bf16.msra.mxu0 0
        %1034 = vmatprep.subr.bf16.mxu0 0
        %1035 = vmatpush1.bf16.msra.mxu0 0
        %1036 = vmatprep.subr.bf16.mxu0 0
        %1037 = vmatpush1.bf16.msra.mxu0 0
        %1038 = vmatprep.subr.bf16.mxu0 0
        %1039 = vmatpush1.bf16.msra.mxu0 0
        %1040 = vmatprep.subr.bf16.mxu0 0
        %1041 = vmatpush1.bf16.msra.mxu0 0
        %1042 = vmatprep.subr.bf16.mxu0 0
        %1043 = vmatpush1.bf16.msra.mxu0 0
        %1044 = vmatprep.subr.bf16.mxu0 0
        %1045 = vmatpush1.bf16.msra.mxu0 0
        %1046 = vmatprep.mubr.bf16.mxu0 0
        %1047 = vmatmul.mubr.bf16.gmra.mrb[0].mxu0 %v926
        %v1048 = vpop.f32.mrb[0].mxu0
        %v1049 = vadd.f32 0.0, %v1048
        %v1050 = vpop.f32.mrb[0].mxu0
        %v1051 = vadd.f32 0.0, %v1050
        %v1052 = vpop.f32.mrb[0].mxu0
        %v1053 = vadd.f32 0.0, %v1052
        %v1054 = vpop.f32.mrb[0].mxu0
        %v1055 = vadd.f32 0.0, %v1054
        %1056 = vmatprep.mubr.bf16.mxu0 0
        %1057 = vmatmul.mubr.bf16.gmra.mrb[0].mxu0 %v927
        %v1058 = vpop.f32.mrb[0].mxu0
        %v1059 = vadd.f32 0.0, %v1058
        %v1060 = vpop.f32.mrb[0].mxu0
        %v1061 = vadd.f32 0.0, %v1060
        %v1062 = vpop.f32.mrb[0].mxu0
        %v1063 = vadd.f32 0.0, %v1062
        %v1064 = vpop.f32.mrb[0].mxu0
        %v1065 = vadd.f32 0.0, %v1064
        %1066 = vmatprep.mubr.bf16.mxu0 0
        %1067 = vmatmul.mubr.bf16.gmra.mrb[0].mxu0 %v928
        %v1068 = vpop.f32.mrb[0].mxu0
        %v1069 = vadd.f32 0.0, %v1068
        %v1070 = vpop.f32.mrb[0].mxu0
        %v1071 = vadd.f32 0.0, %v1070
        %v1072 = vpop.f32.mrb[0].mxu0
        %v1073 = vadd.f32 0.0, %v1072
        %v1074 = vpop.f32.mrb[0].mxu0
        %v1075 = vadd.f32 0.0, %v1074
        %1076 = vmatprep.mubr.bf16.mxu0 0
        %1077 = vmatmul.mubr.bf16.gmra.mrb[0].mxu0 %v929
        %v1078 = vpop.f32.mrb[0].mxu0
        %v1079 = vadd.f32 0.0, %v1078
        %v1080 = vpop.f32.mrb[0].mxu0
        %v1081 = vadd.f32 0.0, %v1080
        %v1082 = vpop.f32.mrb[0].mxu0
        %v1083 = vadd.f32 0.0, %v1082
        %v1084 = vpop.f32.mrb[0].mxu0
        %v1085 = vadd.f32 0.0, %v1084
        %1086 = vdwg.mxu0
        %v1087 = vadd.f32 %v805, %v1049
        %v1088 = vadd.f32 %v807, %v1051
        %v1089 = vadd.f32 %v809, %v1053
        %v1090 = vadd.f32 %v811, %v1055
        %v1091 = vadd.f32 %v815, %v1059
        %v1092 = vadd.f32 %v817, %v1061
        %v1093 = vadd.f32 %v819, %v1063
        %v1094 = vadd.f32 %v821, %v1065
        %v1095 = vadd.f32 %v825, %v1069
        %v1096 = vadd.f32 %v827, %v1071
        %v1097 = vadd.f32 %v829, %v1073
        %v1098 = vadd.f32 %v831, %v1075
        %v1099 = vadd.f32 %v835, %v1079
        %v1100 = vadd.f32 %v837, %v1081
        %v1101 = vadd.f32 %v839, %v1083
        %v1102 = vadd.f32 %v841, %v1085
        %v1103 = vld [vmem:[%s278] sm:$0xf]
        %v1104 = vld [vmem:[%s278 + $0x8] sm:$0xf]
        %v1105 = vld [vmem:[%s278 + $0x10] sm:$0xf]
        %v1106 = vld [vmem:[%s278 + $0x18] sm:$0xf]
        %v1107 = vld [vmem:[%s278 + $0x20] sm:$0xf]
        %v1108 = vld [vmem:[%s278 + $0x28] sm:$0xf]
        %v1109 = vld [vmem:[%s278 + $0x30] sm:$0xf]
        %v1110 = vld [vmem:[%s278 + $0x38] sm:$0xf]
        %v1111 = vld [vmem:[%s1 + $0x180] sm:$0xff]
        %v1112 = vld [vmem:[%s1 + $0x188] sm:$0xff]
        %v1113 = vld [vmem:[%s1 + $0x190] sm:$0xff]
        %v1114 = vld [vmem:[%s1 + $0x198] sm:$0xff]
        %v1115 = vld [vmem:[%s1 + $0x1a0] sm:$0xff]
        %v1116 = vld [vmem:[%s1 + $0x1a8] sm:$0xff]
        %v1117 = vld [vmem:[%s1 + $0x1b0] sm:$0xff]
        %v1118 = vld [vmem:[%s1 + $0x1b8] sm:$0xff]
        %v1119 = vld [vmem:[%s1 + $0x1c0] sm:$0xff]
        %v1120 = vld [vmem:[%s1 + $0x1c8] sm:$0xff]
        %v1121 = vld [vmem:[%s1 + $0x1d0] sm:$0xff]
        %v1122 = vld [vmem:[%s1 + $0x1d8] sm:$0xff]
        %v1123 = vld [vmem:[%s1 + $0x1e0] sm:$0xff]
        %v1124 = vld [vmem:[%s1 + $0x1e8] sm:$0xff]
        %v1125 = vld [vmem:[%s1 + $0x1f0] sm:$0xff]
        %v1126 = vld [vmem:[%s1 + $0x1f8] sm:$0xff]
        %v1135 = vunpack.c.l.b16 %v1103
        %v1136 = vunpack.c.l.b16 %v1104
        %v1137 = vunpack.c.l.b16 %v1105
        %v1138 = vunpack.c.l.b16 %v1106
        %v1139 = vunpack.c.l.b16 %v1107
        %v1140 = vunpack.c.l.b16 %v1108
        %v1141 = vunpack.c.l.b16 %v1109
        %v1142 = vunpack.c.l.b16 %v1110
        %v1143 = vpack.c.b16 %v1136, %v1135
        %v1144 = vpack.c.b16 %v1138, %v1137
        %v1145 = vpack.c.b16 %v1140, %v1139
        %v1146 = vpack.c.b16 %v1142, %v1141
        %v1167 = vunpack.c.l.b16 %v1111
        %v1168 = vunpack.c.h.b16 %v1111
        %v1169 = vunpack.c.l.b16 %v1112
        %v1170 = vunpack.c.h.b16 %v1112
        %v1171 = vunpack.c.l.b16 %v1113
        %v1172 = vunpack.c.h.b16 %v1113
        %v1173 = vunpack.c.l.b16 %v1114
        %v1174 = vunpack.c.h.b16 %v1114
        %v1175 = vunpack.c.l.b16 %v1115
        %v1176 = vunpack.c.h.b16 %v1115
        %v1177 = vunpack.c.l.b16 %v1116
        %v1178 = vunpack.c.h.b16 %v1116
        %v1179 = vunpack.c.l.b16 %v1117
        %v1180 = vunpack.c.h.b16 %v1117
        %v1181 = vunpack.c.l.b16 %v1118
        %v1182 = vunpack.c.h.b16 %v1118
        %v1183 = vunpack.c.l.b16 %v1119
        %v1184 = vunpack.c.h.b16 %v1119
        %v1185 = vunpack.c.l.b16 %v1120
        %v1186 = vunpack.c.h.b16 %v1120
        %v1187 = vunpack.c.l.b16 %v1121
        %v1188 = vunpack.c.h.b16 %v1121
        %v1189 = vunpack.c.l.b16 %v1122
        %v1190 = vunpack.c.h.b16 %v1122
        %v1191 = vunpack.c.l.b16 %v1123
        %v1192 = vunpack.c.h.b16 %v1123
        %v1193 = vunpack.c.l.b16 %v1124
        %v1194 = vunpack.c.h.b16 %v1124
        %v1195 = vunpack.c.l.b16 %v1125
        %v1196 = vunpack.c.h.b16 %v1125
        %v1197 = vunpack.c.l.b16 %v1126
        %v1198 = vunpack.c.h.b16 %v1126
        %v1199 = vpack.c.b16 %v1169, %v1167
        %v1200 = vpack.c.b16 %v1170, %v1168
        %v1201 = vpack.c.b16 %v1173, %v1171
        %v1202 = vpack.c.b16 %v1174, %v1172
        %v1203 = vpack.c.b16 %v1177, %v1175
        %v1204 = vpack.c.b16 %v1178, %v1176
        %v1205 = vpack.c.b16 %v1181, %v1179
        %v1206 = vpack.c.b16 %v1182, %v1180
        %v1207 = vpack.c.b16 %v1185, %v1183
        %v1208 = vpack.c.b16 %v1186, %v1184
        %v1209 = vpack.c.b16 %v1189, %v1187
        %v1210 = vpack.c.b16 %v1190, %v1188
        %v1211 = vpack.c.b16 %v1193, %v1191
        %v1212 = vpack.c.b16 %v1194, %v1192
        %v1213 = vpack.c.b16 %v1197, %v1195
        %v1214 = vpack.c.b16 %v1198, %v1196
        %1231 = vmatprep.subr.bf16.mxu0 %v1200
        %1232 = vmatpush1.bf16.msra.mxu0 %v1199
        %1233 = vmatprep.subr.bf16.mxu0 %v1202
        %1234 = vmatpush1.bf16.msra.mxu0 %v1201
        %1235 = vmatprep.subr.bf16.mxu0 %v1204
        %1236 = vmatpush1.bf16.msra.mxu0 %v1203
        %1237 = vmatprep.subr.bf16.mxu0 %v1206
        %1238 = vmatpush1.bf16.msra.mxu0 %v1205
        %1239 = vmatprep.subr.bf16.mxu0 %v1208
        %1240 = vmatpush1.bf16.msra.mxu0 %v1207
        %1241 = vmatprep.subr.bf16.mxu0 %v1210
        %1242 = vmatpush1.bf16.msra.mxu0 %v1209
        %1243 = vmatprep.subr.bf16.mxu0 %v1212
        %1244 = vmatpush1.bf16.msra.mxu0 %v1211
        %1245 = vmatprep.subr.bf16.mxu0 %v1214
        %1246 = vmatpush1.bf16.msra.mxu0 %v1213
        %1247 = vmatprep.subr.bf16.mxu0 0
        %1248 = vmatpush1.bf16.msra.mxu0 0
        %1249 = vmatprep.subr.bf16.mxu0 0
        %1250 = vmatpush1.bf16.msra.mxu0 0
        %1251 = vmatprep.subr.bf16.mxu0 0
        %1252 = vmatpush1.bf16.msra.mxu0 0
        %1253 = vmatprep.subr.bf16.mxu0 0
        %1254 = vmatpush1.bf16.msra.mxu0 0
        %1255 = vmatprep.subr.bf16.mxu0 0
        %1256 = vmatpush1.bf16.msra.mxu0 0
        %1257 = vmatprep.subr.bf16.mxu0 0
        %1258 = vmatpush1.bf16.msra.mxu0 0
        %1259 = vmatprep.subr.bf16.mxu0 0
        %1260 = vmatpush1.bf16.msra.mxu0 0
        %1261 = vmatprep.subr.bf16.mxu0 0
        %1262 = vmatpush1.bf16.msra.mxu0 0
        %1263 = vmatprep.mubr.bf16.mxu0 0
        %1264 = vmatmul.mubr.bf16.gmra.mrb[0].mxu0 %v1143
        %v1265 = vpop.f32.mrb[0].mxu0
        %v1266 = vadd.f32 0.0, %v1265
        %v1267 = vpop.f32.mrb[0].mxu0
        %v1268 = vadd.f32 0.0, %v1267
        %v1269 = vpop.f32.mrb[0].mxu0
        %v1270 = vadd.f32 0.0, %v1269
        %v1271 = vpop.f32.mrb[0].mxu0
        %v1272 = vadd.f32 0.0, %v1271
        %1273 = vmatprep.mubr.bf16.mxu0 0
        %1274 = vmatmul.mubr.bf16.gmra.mrb[0].mxu0 %v1144
        %v1275 = vpop.f32.mrb[0].mxu0
        %v1276 = vadd.f32 0.0, %v1275
        %v1277 = vpop.f32.mrb[0].mxu0
        %v1278 = vadd.f32 0.0, %v1277
        %v1279 = vpop.f32.mrb[0].mxu0
        %v1280 = vadd.f32 0.0, %v1279
        %v1281 = vpop.f32.mrb[0].mxu0
        %v1282 = vadd.f32 0.0, %v1281
        %1283 = vmatprep.mubr.bf16.mxu0 0
        %1284 = vmatmul.mubr.bf16.gmra.mrb[0].mxu0 %v1145
        %v1285 = vpop.f32.mrb[0].mxu0
        %v1286 = vadd.f32 0.0, %v1285
        %v1287 = vpop.f32.mrb[0].mxu0
        %v1288 = vadd.f32 0.0, %v1287
        %v1289 = vpop.f32.mrb[0].mxu0
        %v1290 = vadd.f32 0.0, %v1289
        %v1291 = vpop.f32.mrb[0].mxu0
        %v1292 = vadd.f32 0.0, %v1291
        %1293 = vmatprep.mubr.bf16.mxu0 0
        %1294 = vmatmul.mubr.bf16.gmra.mrb[0].mxu0 %v1146
        %v1295 = vpop.f32.mrb[0].mxu0
        %v1296 = vadd.f32 0.0, %v1295
        %v1297 = vpop.f32.mrb[0].mxu0
        %v1298 = vadd.f32 0.0, %v1297
        %v1299 = vpop.f32.mrb[0].mxu0
        %v1300 = vadd.f32 0.0, %v1299
        %v1301 = vpop.f32.mrb[0].mxu0
        %v1302 = vadd.f32 0.0, %v1301
        %1303 = vdwg.mxu0
        %v1304 = vadd.f32 %v1087, %v1266
        %v1305 = vadd.f32 %v1088, %v1268
        %v1306 = vadd.f32 %v1089, %v1270
        %v1307 = vadd.f32 %v1090, %v1272
        %v1308 = vadd.f32 %v1091, %v1276
        %v1309 = vadd.f32 %v1092, %v1278
        %v1310 = vadd.f32 %v1093, %v1280
        %v1311 = vadd.f32 %v1094, %v1282
        %v1312 = vadd.f32 %v1095, %v1286
        %v1313 = vadd.f32 %v1096, %v1288
        %v1314 = vadd.f32 %v1097, %v1290
        %v1315 = vadd.f32 %v1098, %v1292
        %v1316 = vadd.f32 %v1099, %v1296
        %v1317 = vadd.f32 %v1100, %v1298
        %v1318 = vadd.f32 %v1101, %v1300
        %v1319 = vadd.f32 %v1102, %v1302
        %v1320 = vld [vmem:[%s278] sm:$0xf]
        %v1321 = vld [vmem:[%s278 + $0x4] sm:$0x1]
        %v1322 = vld [vmem:[%s278 + $0x8] sm:$0xf]
        %v1323 = vld [vmem:[%s278 + $0xc] sm:$0x1]
        %v1324 = vld [vmem:[%s278 + $0x10] sm:$0xf]
        %v1325 = vld [vmem:[%s278 + $0x14] sm:$0x1]
        %v1326 = vld [vmem:[%s278 + $0x18] sm:$0xf]
        %v1327 = vld [vmem:[%s278 + $0x1c] sm:$0x1]
        %v1328 = vld [vmem:[%s278 + $0x20] sm:$0xf]
        %v1329 = vld [vmem:[%s278 + $0x24] sm:$0x1]
        %v1330 = vld [vmem:[%s278 + $0x28] sm:$0xf]
        %v1331 = vld [vmem:[%s278 + $0x2c] sm:$0x1]
        %v1332 = vld [vmem:[%s278 + $0x30] sm:$0xf]
        %v1333 = vld [vmem:[%s278 + $0x34] sm:$0x1]
        %v1334 = vld [vmem:[%s278 + $0x38] sm:$0xf]
        %v1335 = vld [vmem:[%s278 + $0x3c] sm:$0x1]
        %v1336 = vld [vmem:[%s1 + $0x200] sm:$0xff]
        %v1337 = vld [vmem:[%s1 + $0x208] sm:$0xff]
        %v1338 = vld [vmem:[%s1 + $0x210] sm:$0xff]
        %v1339 = vld [vmem:[%s1 + $0x218] sm:$0xff]
        %v1340 = vld [vmem:[%s1 + $0x220] sm:$0xff]
        %v1341 = vld [vmem:[%s1 + $0x228] sm:$0xff]
        %v1342 = vld [vmem:[%s1 + $0x230] sm:$0xff]
        %v1343 = vld [vmem:[%s1 + $0x238] sm:$0xff]
        %v1344 = vld [vmem:[%s1 + $0x240] sm:$0xff]
        %v1345 = vld [vmem:[%s1 + $0x248] sm:$0xff]
        %v1346 = vld [vmem:[%s1 + $0x250] sm:$0xff]
        %v1347 = vld [vmem:[%s1 + $0x258] sm:$0xff]
        %v1348 = vld [vmem:[%s1 + $0x260] sm:$0xff]
        %v1349 = vld [vmem:[%s1 + $0x268] sm:$0xff]
        %v1350 = vld [vmem:[%s1 + $0x270] sm:$0xff]
        %v1351 = vld [vmem:[%s1 + $0x278] sm:$0xff]
        %v1353 = vshrl.u32 %v1320, 16
        %v1355 = vrot.slane %v1353, 4
        %v1356 = vshll.u32 %v1320, 16
        %v1358 = vrot.slane %v1356, 5
        %v1359 = vor.u32 %v1355, %v1358
        %v1360 = vrot.slane %v1359, 4
        %v1362 = vshll.u32 %v1321, 16
        %v1364 = vrot.slane %v1362, 5
        %v1365 = vsel %vm384, %v1360, %v1364
        %v1367 = vshrl.u32 %v1322, 16
        %v1369 = vrot.slane %v1367, 4
        %v1370 = vshll.u32 %v1322, 16
        %v1372 = vrot.slane %v1370, 5
        %v1373 = vor.u32 %v1369, %v1372
        %v1374 = vrot.slane %v1373, 4
        %v1376 = vshll.u32 %v1323, 16
        %v1378 = vrot.slane %v1376, 5
        %v1379 = vsel %vm384, %v1374, %v1378
        %v1381 = vshrl.u32 %v1324, 16
        %v1383 = vrot.slane %v1381, 4
        %v1384 = vshll.u32 %v1324, 16
        %v1386 = vrot.slane %v1384, 5
        %v1387 = vor.u32 %v1383, %v1386
        %v1388 = vrot.slane %v1387, 4
        %v1390 = vshll.u32 %v1325, 16
        %v1392 = vrot.slane %v1390, 5
        %v1393 = vsel %vm384, %v1388, %v1392
        %v1395 = vshrl.u32 %v1326, 16
        %v1397 = vrot.slane %v1395, 4
        %v1398 = vshll.u32 %v1326, 16
        %v1400 = vrot.slane %v1398, 5
        %v1401 = vor.u32 %v1397, %v1400
        %v1402 = vrot.slane %v1401, 4
        %v1404 = vshll.u32 %v1327, 16
        %v1406 = vrot.slane %v1404, 5
        %v1407 = vsel %vm384, %v1402, %v1406
        %v1409 = vshrl.u32 %v1328, 16
        %v1411 = vrot.slane %v1409, 4
        %v1412 = vshll.u32 %v1328, 16
        %v1414 = vrot.slane %v1412, 5
        %v1415 = vor.u32 %v1411, %v1414
        %v1416 = vrot.slane %v1415, 4
        %v1418 = vshll.u32 %v1329, 16
        %v1420 = vrot.slane %v1418, 5
        %v1421 = vsel %vm384, %v1416, %v1420
        %v1423 = vshrl.u32 %v1330, 16
        %v1425 = vrot.slane %v1423, 4
        %v1426 = vshll.u32 %v1330, 16
        %v1428 = vrot.slane %v1426, 5
        %v1429 = vor.u32 %v1425, %v1428
        %v1430 = vrot.slane %v1429, 4
        %v1432 = vshll.u32 %v1331, 16
        %v1434 = vrot.slane %v1432, 5
        %v1435 = vsel %vm384, %v1430, %v1434
        %v1437 = vshrl.u32 %v1332, 16
        %v1439 = vrot.slane %v1437, 4
        %v1440 = vshll.u32 %v1332, 16
        %v1442 = vrot.slane %v1440, 5
        %v1443 = vor.u32 %v1439, %v1442
        %v1444 = vrot.slane %v1443, 4
        %v1446 = vshll.u32 %v1333, 16
        %v1448 = vrot.slane %v1446, 5
        %v1449 = vsel %vm384, %v1444, %v1448
        %v1451 = vshrl.u32 %v1334, 16
        %v1453 = vrot.slane %v1451, 4
        %v1454 = vshll.u32 %v1334, 16
        %v1456 = vrot.slane %v1454, 5
        %v1457 = vor.u32 %v1453, %v1456
        %v1458 = vrot.slane %v1457, 4
        %v1460 = vshll.u32 %v1335, 16
        %v1462 = vrot.slane %v1460, 5
        %v1463 = vsel %vm384, %v1458, %v1462
        %v1464 = vunpack.c.l.b16 %v1365
        %v1465 = vunpack.c.l.b16 %v1379
        %v1466 = vunpack.c.l.b16 %v1393
        %v1467 = vunpack.c.l.b16 %v1407
        %v1468 = vunpack.c.l.b16 %v1421
        %v1469 = vunpack.c.l.b16 %v1435
        %v1470 = vunpack.c.l.b16 %v1449
        %v1471 = vunpack.c.l.b16 %v1463
        %v1472 = vpack.c.b16 %v1465, %v1464
        %v1473 = vpack.c.b16 %v1467, %v1466
        %v1474 = vpack.c.b16 %v1469, %v1468
        %v1475 = vpack.c.b16 %v1471, %v1470
        %v1496 = vunpack.c.l.b16 %v1336
        %v1497 = vunpack.c.h.b16 %v1336
        %v1498 = vunpack.c.l.b16 %v1337
        %v1499 = vunpack.c.h.b16 %v1337
        %v1500 = vunpack.c.l.b16 %v1338
        %v1501 = vunpack.c.h.b16 %v1338
        %v1502 = vunpack.c.l.b16 %v1339
        %v1503 = vunpack.c.h.b16 %v1339
        %v1504 = vunpack.c.l.b16 %v1340
        %v1505 = vunpack.c.h.b16 %v1340
        %v1506 = vunpack.c.l.b16 %v1341
        %v1507 = vunpack.c.h.b16 %v1341
        %v1508 = vunpack.c.l.b16 %v1342
        %v1509 = vunpack.c.h.b16 %v1342
        %v1510 = vunpack.c.l.b16 %v1343
        %v1511 = vunpack.c.h.b16 %v1343
        %v1512 = vunpack.c.l.b16 %v1344
        %v1513 = vunpack.c.h.b16 %v1344
        %v1514 = vunpack.c.l.b16 %v1345
        %v1515 = vunpack.c.h.b16 %v1345
        %v1516 = vunpack.c.l.b16 %v1346
        %v1517 = vunpack.c.h.b16 %v1346
        %v1518 = vunpack.c.l.b16 %v1347
        %v1519 = vunpack.c.h.b16 %v1347
        %v1520 = vunpack.c.l.b16 %v1348
        %v1521 = vunpack.c.h.b16 %v1348
        %v1522 = vunpack.c.l.b16 %v1349
        %v1523 = vunpack.c.h.b16 %v1349
        %v1524 = vunpack.c.l.b16 %v1350
        %v1525 = vunpack.c.h.b16 %v1350
        %v1526 = vunpack.c.l.b16 %v1351
        %v1527 = vunpack.c.h.b16 %v1351
        %v1528 = vpack.c.b16 %v1498, %v1496
        %v1529 = vpack.c.b16 %v1499, %v1497
        %v1530 = vpack.c.b16 %v1502, %v1500
        %v1531 = vpack.c.b16 %v1503, %v1501
        %v1532 = vpack.c.b16 %v1506, %v1504
        %v1533 = vpack.c.b16 %v1507, %v1505
        %v1534 = vpack.c.b16 %v1510, %v1508
        %v1535 = vpack.c.b16 %v1511, %v1509
        %v1536 = vpack.c.b16 %v1514, %v1512
        %v1537 = vpack.c.b16 %v1515, %v1513
        %v1538 = vpack.c.b16 %v1518, %v1516
        %v1539 = vpack.c.b16 %v1519, %v1517
        %v1540 = vpack.c.b16 %v1522, %v1520
        %v1541 = vpack.c.b16 %v1523, %v1521
        %v1542 = vpack.c.b16 %v1526, %v1524
        %v1543 = vpack.c.b16 %v1527, %v1525
        %1560 = vmatprep.subr.bf16.mxu0 %v1529
        %1561 = vmatpush1.bf16.msra.mxu0 %v1528
        %1562 = vmatprep.subr.bf16.mxu0 %v1531
        %1563 = vmatpush1.bf16.msra.mxu0 %v1530
        %1564 = vmatprep.subr.bf16.mxu0 %v1533
        %1565 = vmatpush1.bf16.msra.mxu0 %v1532
        %1566 = vmatprep.subr.bf16.mxu0 %v1535
        %1567 = vmatpush1.bf16.msra.mxu0 %v1534
        %1568 = vmatprep.subr.bf16.mxu0 %v1537
        %1569 = vmatpush1.bf16.msra.mxu0 %v1536
        %1570 = vmatprep.subr.bf16.mxu0 %v1539
        %1571 = vmatpush1.bf16.msra.mxu0 %v1538
        %1572 = vmatprep.subr.bf16.mxu0 %v1541
        %1573 = vmatpush1.bf16.msra.mxu0 %v1540
        %1574 = vmatprep.subr.bf16.mxu0 %v1543
        %1575 = vmatpush1.bf16.msra.mxu0 %v1542
        %1576 = vmatprep.subr.bf16.mxu0 0
        %1577 = vmatpush1.bf16.msra.mxu0 0
        %1578 = vmatprep.subr.bf16.mxu0 0
        %1579 = vmatpush1.bf16.msra.mxu0 0
        %1580 = vmatprep.subr.bf16.mxu0 0
        %1581 = vmatpush1.bf16.msra.mxu0 0
        %1582 = vmatprep.subr.bf16.mxu0 0
        %1583 = vmatpush1.bf16.msra.mxu0 0
        %1584 = vmatprep.subr.bf16.mxu0 0
        %1585 = vmatpush1.bf16.msra.mxu0 0
        %1586 = vmatprep.subr.bf16.mxu0 0
        %1587 = vmatpush1.bf16.msra.mxu0 0
        %1588 = vmatprep.subr.bf16.mxu0 0
        %1589 = vmatpush1.bf16.msra.mxu0 0
        %1590 = vmatprep.subr.bf16.mxu0 0
        %1591 = vmatpush1.bf16.msra.mxu0 0
        %1592 = vmatprep.mubr.bf16.mxu0 0
        %1593 = vmatmul.mubr.bf16.gmra.mrb[0].mxu0 %v1472
        %v1594 = vpop.f32.mrb[0].mxu0
        %v1595 = vadd.f32 0.0, %v1594
        %v1596 = vpop.f32.mrb[0].mxu0
        %v1597 = vadd.f32 0.0, %v1596
        %v1598 = vpop.f32.mrb[0].mxu0
        %v1599 = vadd.f32 0.0, %v1598
        %v1600 = vpop.f32.mrb[0].mxu0
        %v1601 = vadd.f32 0.0, %v1600
        %1602 = vmatprep.mubr.bf16.mxu0 0
        %1603 = vmatmul.mubr.bf16.gmra.mrb[0].mxu0 %v1473
        %v1604 = vpop.f32.mrb[0].mxu0
        %v1605 = vadd.f32 0.0, %v1604
        %v1606 = vpop.f32.mrb[0].mxu0
        %v1607 = vadd.f32 0.0, %v1606
        %v1608 = vpop.f32.mrb[0].mxu0
        %v1609 = vadd.f32 0.0, %v1608
        %v1610 = vpop.f32.mrb[0].mxu0
        %v1611 = vadd.f32 0.0, %v1610
        %1612 = vmatprep.mubr.bf16.mxu0 0
        %1613 = vmatmul.mubr.bf16.gmra.mrb[0].mxu0 %v1474
        %v1614 = vpop.f32.mrb[0].mxu0
        %v1615 = vadd.f32 0.0, %v1614
        %v1616 = vpop.f32.mrb[0].mxu0
        %v1617 = vadd.f32 0.0, %v1616
        %v1618 = vpop.f32.mrb[0].mxu0
        %v1619 = vadd.f32 0.0, %v1618
        %v1620 = vpop.f32.mrb[0].mxu0
        %v1621 = vadd.f32 0.0, %v1620
        %1622 = vmatprep.mubr.bf16.mxu0 0
        %1623 = vmatmul.mubr.bf16.gmra.mrb[0].mxu0 %v1475
        %v1624 = vpop.f32.mrb[0].mxu0
        %v1625 = vadd.f32 0.0, %v1624
        %v1626 = vpop.f32.mrb[0].mxu0
        %v1627 = vadd.f32 0.0, %v1626
        %v1628 = vpop.f32.mrb[0].mxu0
        %v1629 = vadd.f32 0.0, %v1628
        %v1630 = vpop.f32.mrb[0].mxu0
        %v1631 = vadd.f32 0.0, %v1630
        %1632 = vdwg.mxu0
        %v1633 = vadd.f32 %v1304, %v1595
        %v1634 = vadd.f32 %v1305, %v1597
        %v1635 = vadd.f32 %v1306, %v1599
        %v1636 = vadd.f32 %v1307, %v1601
        %v1637 = vadd.f32 %v1308, %v1605
        %v1638 = vadd.f32 %v1309, %v1607
        %v1639 = vadd.f32 %v1310, %v1609
        %v1640 = vadd.f32 %v1311, %v1611
        %v1641 = vadd.f32 %v1312, %v1615
        %v1642 = vadd.f32 %v1313, %v1617
        %v1643 = vadd.f32 %v1314, %v1619
        %v1644 = vadd.f32 %v1315, %v1621
        %v1645 = vadd.f32 %v1316, %v1625
        %v1646 = vadd.f32 %v1317, %v1627
        %v1647 = vadd.f32 %v1318, %v1629
        %v1648 = vadd.f32 %v1319, %v1631
        %v1649 = vld [vmem:[%s278] sm:$0xe]
        %v1650 = vld [vmem:[%s278 + $0x8] sm:$0xe]
        %v1651 = vld [vmem:[%s278 + $0x10] sm:$0xe]
        %v1652 = vld [vmem:[%s278 + $0x18] sm:$0xe]
        %v1653 = vld [vmem:[%s278 + $0x20] sm:$0xe]
        %v1654 = vld [vmem:[%s278 + $0x28] sm:$0xe]
        %v1655 = vld [vmem:[%s278 + $0x30] sm:$0xe]
        %v1656 = vld [vmem:[%s278 + $0x38] sm:$0xe]
        %v1657 = vld [vmem:[%s1 + $0x280] sm:$0xff]
        %v1658 = vld [vmem:[%s1 + $0x288] sm:$0xff]
        %v1659 = vld [vmem:[%s1 + $0x290] sm:$0xff]
        %v1660 = vld [vmem:[%s1 + $0x298] sm:$0xff]
        %v1661 = vld [vmem:[%s1 + $0x2a0] sm:$0xff]
        %v1662 = vld [vmem:[%s1 + $0x2a8] sm:$0xff]
        %v1663 = vld [vmem:[%s1 + $0x2b0] sm:$0xff]
        %v1664 = vld [vmem:[%s1 + $0x2b8] sm:$0xff]
        %v1665 = vld [vmem:[%s1 + $0x2c0] sm:$0xff]
        %v1666 = vld [vmem:[%s1 + $0x2c8] sm:$0xff]
        %v1667 = vld [vmem:[%s1 + $0x2d0] sm:$0xff]
        %v1668 = vld [vmem:[%s1 + $0x2d8] sm:$0xff]
        %v1669 = vld [vmem:[%s1 + $0x2e0] sm:$0xff]
        %v1670 = vld [vmem:[%s1 + $0x2e8] sm:$0xff]
        %v1671 = vld [vmem:[%s1 + $0x2f0] sm:$0xff]
        %v1672 = vld [vmem:[%s1 + $0x2f8] sm:$0xff]
        %v1689 = vrot.slane %v1649, 5
        %v1690 = vrot.slane %v1689, 4
        %v1691 = vrot.slane %v1321, 5
        %v1692 = vsel %vm885, %v1690, %v1691
        %v1693 = vrot.slane %v1650, 5
        %v1694 = vrot.slane %v1693, 4
        %v1695 = vrot.slane %v1323, 5
        %v1696 = vsel %vm885, %v1694, %v1695
        %v1697 = vrot.slane %v1651, 5
        %v1698 = vrot.slane %v1697, 4
        %v1699 = vrot.slane %v1325, 5
        %v1700 = vsel %vm885, %v1698, %v1699
        %v1701 = vrot.slane %v1652, 5
        %v1702 = vrot.slane %v1701, 4
        %v1703 = vrot.slane %v1327, 5
        %v1704 = vsel %vm885, %v1702, %v1703
        %v1705 = vrot.slane %v1653, 5
        %v1706 = vrot.slane %v1705, 4
        %v1707 = vrot.slane %v1329, 5
        %v1708 = vsel %vm885, %v1706, %v1707
        %v1709 = vrot.slane %v1654, 5
        %v1710 = vrot.slane %v1709, 4
        %v1711 = vrot.slane %v1331, 5
        %v1712 = vsel %vm885, %v1710, %v1711
        %v1713 = vrot.slane %v1655, 5
        %v1714 = vrot.slane %v1713, 4
        %v1715 = vrot.slane %v1333, 5
        %v1716 = vsel %vm885, %v1714, %v1715
        %v1717 = vrot.slane %v1656, 5
        %v1718 = vrot.slane %v1717, 4
        %v1719 = vrot.slane %v1335, 5
        %v1720 = vsel %vm885, %v1718, %v1719
        %v1721 = vunpack.c.l.b16 %v1692
        %v1722 = vunpack.c.l.b16 %v1696
        %v1723 = vunpack.c.l.b16 %v1700
        %v1724 = vunpack.c.l.b16 %v1704
        %v1725 = vunpack.c.l.b16 %v1708
        %v1726 = vunpack.c.l.b16 %v1712
        %v1727 = vunpack.c.l.b16 %v1716
        %v1728 = vunpack.c.l.b16 %v1720
        %v1729 = vpack.c.b16 %v1722, %v1721
        %v1730 = vpack.c.b16 %v1724, %v1723
        %v1731 = vpack.c.b16 %v1726, %v1725
        %v1732 = vpack.c.b16 %v1728, %v1727
        %v1753 = vunpack.c.l.b16 %v1657
        %v1754 = vunpack.c.h.b16 %v1657
        %v1755 = vunpack.c.l.b16 %v1658
        %v1756 = vunpack.c.h.b16 %v1658
        %v1757 = vunpack.c.l.b16 %v1659
        %v1758 = vunpack.c.h.b16 %v1659
        %v1759 = vunpack.c.l.b16 %v1660
        %v1760 = vunpack.c.h.b16 %v1660
        %v1761 = vunpack.c.l.b16 %v1661
        %v1762 = vunpack.c.h.b16 %v1661
        %v1763 = vunpack.c.l.b16 %v1662
        %v1764 = vunpack.c.h.b16 %v1662
        %v1765 = vunpack.c.l.b16 %v1663
        %v1766 = vunpack.c.h.b16 %v1663
        %v1767 = vunpack.c.l.b16 %v1664
        %v1768 = vunpack.c.h.b16 %v1664
        %v1769 = vunpack.c.l.b16 %v1665
        %v1770 = vunpack.c.h.b16 %v1665
        %v1771 = vunpack.c.l.b16 %v1666
        %v1772 = vunpack.c.h.b16 %v1666
        %v1773 = vunpack.c.l.b16 %v1667
        %v1774 = vunpack.c.h.b16 %v1667
        %v1775 = vunpack.c.l.b16 %v1668
        %v1776 = vunpack.c.h.b16 %v1668
        %v1777 = vunpack.c.l.b16 %v1669
        %v1778 = vunpack.c.h.b16 %v1669
        %v1779 = vunpack.c.l.b16 %v1670
        %v1780 = vunpack.c.h.b16 %v1670
        %v1781 = vunpack.c.l.b16 %v1671
        %v1782 = vunpack.c.h.b16 %v1671
        %v1783 = vunpack.c.l.b16 %v1672
        %v1784 = vunpack.c.h.b16 %v1672
        %v1785 = vpack.c.b16 %v1755, %v1753
        %v1786 = vpack.c.b16 %v1756, %v1754
        %v1787 = vpack.c.b16 %v1759, %v1757
        %v1788 = vpack.c.b16 %v1760, %v1758
        %v1789 = vpack.c.b16 %v1763, %v1761
        %v1790 = vpack.c.b16 %v1764, %v1762
        %v1791 = vpack.c.b16 %v1767, %v1765
        %v1792 = vpack.c.b16 %v1768, %v1766
        %v1793 = vpack.c.b16 %v1771, %v1769
        %v1794 = vpack.c.b16 %v1772, %v1770
        %v1795 = vpack.c.b16 %v1775, %v1773
        %v1796 = vpack.c.b16 %v1776, %v1774
        %v1797 = vpack.c.b16 %v1779, %v1777
        %v1798 = vpack.c.b16 %v1780, %v1778
        %v1799 = vpack.c.b16 %v1783, %v1781
        %v1800 = vpack.c.b16 %v1784, %v1782
        %1817 = vmatprep.subr.bf16.mxu0 %v1786
        %1818 = vmatpush1.bf16.msra.mxu0 %v1785
        %1819 = vmatprep.subr.bf16.mxu0 %v1788
        %1820 = vmatpush1.bf16.msra.mxu0 %v1787
        %1821 = vmatprep.subr.bf16.mxu0 %v1790
        %1822 = vmatpush1.bf16.msra.mxu0 %v1789
        %1823 = vmatprep.subr.bf16.mxu0 %v1792
        %1824 = vmatpush1.bf16.msra.mxu0 %v1791
        %1825 = vmatprep.subr.bf16.mxu0 %v1794
        %1826 = vmatpush1.bf16.msra.mxu0 %v1793
        %1827 = vmatprep.subr.bf16.mxu0 %v1796
        %1828 = vmatpush1.bf16.msra.mxu0 %v1795
        %1829 = vmatprep.subr.bf16.mxu0 %v1798
        %1830 = vmatpush1.bf16.msra.mxu0 %v1797
        %1831 = vmatprep.subr.bf16.mxu0 %v1800
        %1832 = vmatpush1.bf16.msra.mxu0 %v1799
        %1833 = vmatprep.subr.bf16.mxu0 0
        %1834 = vmatpush1.bf16.msra.mxu0 0
        %1835 = vmatprep.subr.bf16.mxu0 0
        %1836 = vmatpush1.bf16.msra.mxu0 0
        %1837 = vmatprep.subr.bf16.mxu0 0
        %1838 = vmatpush1.bf16.msra.mxu0 0
        %1839 = vmatprep.subr.bf16.mxu0 0
        %1840 = vmatpush1.bf16.msra.mxu0 0
        %1841 = vmatprep.subr.bf16.mxu0 0
        %1842 = vmatpush1.bf16.msra.mxu0 0
        %1843 = vmatprep.subr.bf16.mxu0 0
        %1844 = vmatpush1.bf16.msra.mxu0 0
        %1845 = vmatprep.subr.bf16.mxu0 0
        %1846 = vmatpush1.bf16.msra.mxu0 0
        %1847 = vmatprep.subr.bf16.mxu0 0
        %1848 = vmatpush1.bf16.msra.mxu0 0
        %1849 = vmatprep.mubr.bf16.mxu0 0
        %1850 = vmatmul.mubr.bf16.gmra.mrb[0].mxu0 %v1729
        %v1851 = vpop.f32.mrb[0].mxu0
        %v1852 = vadd.f32 0.0, %v1851
        %v1853 = vpop.f32.mrb[0].mxu0
        %v1854 = vadd.f32 0.0, %v1853
        %v1855 = vpop.f32.mrb[0].mxu0
        %v1856 = vadd.f32 0.0, %v1855
        %v1857 = vpop.f32.mrb[0].mxu0
        %v1858 = vadd.f32 0.0, %v1857
        %1859 = vmatprep.mubr.bf16.mxu0 0
        %1860 = vmatmul.mubr.bf16.gmra.mrb[0].mxu0 %v1730
        %v1861 = vpop.f32.mrb[0].mxu0
        %v1862 = vadd.f32 0.0, %v1861
        %v1863 = vpop.f32.mrb[0].mxu0
        %v1864 = vadd.f32 0.0, %v1863
        %v1865 = vpop.f32.mrb[0].mxu0
        %v1866 = vadd.f32 0.0, %v1865
        %v1867 = vpop.f32.mrb[0].mxu0
        %v1868 = vadd.f32 0.0, %v1867
        %1869 = vmatprep.mubr.bf16.mxu0 0
        %1870 = vmatmul.mubr.bf16.gmra.mrb[0].mxu0 %v1731
        %v1871 = vpop.f32.mrb[0].mxu0
        %v1872 = vadd.f32 0.0, %v1871
        %v1873 = vpop.f32.mrb[0].mxu0
        %v1874 = vadd.f32 0.0, %v1873
        %v1875 = vpop.f32.mrb[0].mxu0
        %v1876 = vadd.f32 0.0, %v1875
        %v1877 = vpop.f32.mrb[0].mxu0
        %v1878 = vadd.f32 0.0, %v1877
        %1879 = vmatprep.mubr.bf16.mxu0 0
        %1880 = vmatmul.mubr.bf16.gmra.mrb[0].mxu0 %v1732
        %v1881 = vpop.f32.mrb[0].mxu0
        %v1882 = vadd.f32 0.0, %v1881
        %v1883 = vpop.f32.mrb[0].mxu0
        %v1884 = vadd.f32 0.0, %v1883
        %v1885 = vpop.f32.mrb[0].mxu0
        %v1886 = vadd.f32 0.0, %v1885
        %v1887 = vpop.f32.mrb[0].mxu0
        %v1888 = vadd.f32 0.0, %v1887
        %1889 = vdwg.mxu0
        %v1890 = vadd.f32 %v1633, %v1852
        %v1891 = vadd.f32 %v1634, %v1854
        %v1892 = vadd.f32 %v1635, %v1856
        %v1893 = vadd.f32 %v1636, %v1858
        %v1894 = vadd.f32 %v1637, %v1862
        %v1895 = vadd.f32 %v1638, %v1864
        %v1896 = vadd.f32 %v1639, %v1866
        %v1897 = vadd.f32 %v1640, %v1868
        %v1898 = vadd.f32 %v1641, %v1872
        %v1899 = vadd.f32 %v1642, %v1874
        %v1900 = vadd.f32 %v1643, %v1876
        %v1901 = vadd.f32 %v1644, %v1878
        %v1902 = vadd.f32 %v1645, %v1882
        %v1903 = vadd.f32 %v1646, %v1884
        %v1904 = vadd.f32 %v1647, %v1886
        %v1905 = vadd.f32 %v1648, %v1888
        %s1906 = scalar_lea.vmem [#allocation2], 16
        %v1907 = vld [vmem:[%s1906] sm:$0xf]
        %v1908 = vld [vmem:[%s1906 + $0x8] sm:$0xf]
        %v1909 = vld [vmem:[%s1906 + $0x10] sm:$0xf]
        %v1910 = vld [vmem:[%s1906 + $0x18] sm:$0xf]
        %v1911 = vld [vmem:[%s1906 + $0x20] sm:$0xf]
        %v1912 = vld [vmem:[%s1906 + $0x28] sm:$0xf]
        %v1913 = vld [vmem:[%s1906 + $0x30] sm:$0xf]
        %v1914 = vld [vmem:[%s1906 + $0x38] sm:$0xf]
        %v1915 = vld [vmem:[%s1 + $0x300] sm:$0xff]
        %v1916 = vld [vmem:[%s1 + $0x308] sm:$0xff]
        %v1917 = vld [vmem:[%s1 + $0x310] sm:$0xff]
        %v1918 = vld [vmem:[%s1 + $0x318] sm:$0xff]
        %v1919 = vld [vmem:[%s1 + $0x320] sm:$0xff]
        %v1920 = vld [vmem:[%s1 + $0x328] sm:$0xff]
        %v1921 = vld [vmem:[%s1 + $0x330] sm:$0xff]
        %v1922 = vld [vmem:[%s1 + $0x338] sm:$0xff]
        %v1923 = vld [vmem:[%s1 + $0x340] sm:$0xff]
        %v1924 = vld [vmem:[%s1 + $0x348] sm:$0xff]
        %v1925 = vld [vmem:[%s1 + $0x350] sm:$0xff]
        %v1926 = vld [vmem:[%s1 + $0x358] sm:$0xff]
        %v1927 = vld [vmem:[%s1 + $0x360] sm:$0xff]
        %v1928 = vld [vmem:[%s1 + $0x368] sm:$0xff]
        %v1929 = vld [vmem:[%s1 + $0x370] sm:$0xff]
        %v1930 = vld [vmem:[%s1 + $0x378] sm:$0xff]
        %v1939 = vunpack.c.l.b16 %v1907
        %v1940 = vunpack.c.l.b16 %v1908
        %v1941 = vunpack.c.l.b16 %v1909
        %v1942 = vunpack.c.l.b16 %v1910
        %v1943 = vunpack.c.l.b16 %v1911
        %v1944 = vunpack.c.l.b16 %v1912
        %v1945 = vunpack.c.l.b16 %v1913
        %v1946 = vunpack.c.l.b16 %v1914
        %v1947 = vpack.c.b16 %v1940, %v1939
        %v1948 = vpack.c.b16 %v1942, %v1941
        %v1949 = vpack.c.b16 %v1944, %v1943
        %v1950 = vpack.c.b16 %v1946, %v1945
        %v1971 = vunpack.c.l.b16 %v1915
        %v1972 = vunpack.c.h.b16 %v1915
        %v1973 = vunpack.c.l.b16 %v1916
        %v1974 = vunpack.c.h.b16 %v1916
        %v1975 = vunpack.c.l.b16 %v1917
        %v1976 = vunpack.c.h.b16 %v1917
        %v1977 = vunpack.c.l.b16 %v1918
        %v1978 = vunpack.c.h.b16 %v1918
        %v1979 = vunpack.c.l.b16 %v1919
        %v1980 = vunpack.c.h.b16 %v1919
        %v1981 = vunpack.c.l.b16 %v1920
        %v1982 = vunpack.c.h.b16 %v1920
        %v1983 = vunpack.c.l.b16 %v1921
        %v1984 = vunpack.c.h.b16 %v1921
        %v1985 = vunpack.c.l.b16 %v1922
        %v1986 = vunpack.c.h.b16 %v1922
        %v1987 = vunpack.c.l.b16 %v1923
        %v1988 = vunpack.c.h.b16 %v1923
        %v1989 = vunpack.c.l.b16 %v1924
        %v1990 = vunpack.c.h.b16 %v1924
        %v1991 = vunpack.c.l.b16 %v1925
        %v1992 = vunpack.c.h.b16 %v1925
        %v1993 = vunpack.c.l.b16 %v1926
        %v1994 = vunpack.c.h.b16 %v1926
        %v1995 = vunpack.c.l.b16 %v1927
        %v1996 = vunpack.c.h.b16 %v1927
        %v1997 = vunpack.c.l.b16 %v1928
        %v1998 = vunpack.c.h.b16 %v1928
        %v1999 = vunpack.c.l.b16 %v1929
        %v2000 = vunpack.c.h.b16 %v1929
        %v2001 = vunpack.c.l.b16 %v1930
        %v2002 = vunpack.c.h.b16 %v1930
        %v2003 = vpack.c.b16 %v1973, %v1971
        %v2004 = vpack.c.b16 %v1974, %v1972
        %v2005 = vpack.c.b16 %v1977, %v1975
        %v2006 = vpack.c.b16 %v1978, %v1976
        %v2007 = vpack.c.b16 %v1981, %v1979
        %v2008 = vpack.c.b16 %v1982, %v1980
        %v2009 = vpack.c.b16 %v1985, %v1983
        %v2010 = vpack.c.b16 %v1986, %v1984
        %v2011 = vpack.c.b16 %v1989, %v1987
        %v2012 = vpack.c.b16 %v1990, %v1988
        %v2013 = vpack.c.b16 %v1993, %v1991
        %v2014 = vpack.c.b16 %v1994, %v1992
        %v2015 = vpack.c.b16 %v1997, %v1995
        %v2016 = vpack.c.b16 %v1998, %v1996
        %v2017 = vpack.c.b16 %v2001, %v1999
        %v2018 = vpack.c.b16 %v2002, %v2000
        %2035 = vmatprep.subr.bf16.mxu0 %v2004
        %2036 = vmatpush1.bf16.msra.mxu0 %v2003
        %2037 = vmatprep.subr.bf16.mxu0 %v2006
        %2038 = vmatpush1.bf16.msra.mxu0 %v2005
        %2039 = vmatprep.subr.bf16.mxu0 %v2008
        %2040 = vmatpush1.bf16.msra.mxu0 %v2007
        %2041 = vmatprep.subr.bf16.mxu0 %v2010
        %2042 = vmatpush1.bf16.msra.mxu0 %v2009
        %2043 = vmatprep.subr.bf16.mxu0 %v2012
        %2044 = vmatpush1.bf16.msra.mxu0 %v2011
        %2045 = vmatprep.subr.bf16.mxu0 %v2014
        %2046 = vmatpush1.bf16.msra.mxu0 %v2013
        %2047 = vmatprep.subr.bf16.mxu0 %v2016
        %2048 = vmatpush1.bf16.msra.mxu0 %v2015
        %2049 = vmatprep.subr.bf16.mxu0 %v2018
        %2050 = vmatpush1.bf16.msra.mxu0 %v2017
        %2051 = vmatprep.subr.bf16.mxu0 0
        %2052 = vmatpush1.bf16.msra.mxu0 0
        %2053 = vmatprep.subr.bf16.mxu0 0
        %2054 = vmatpush1.bf16.msra.mxu0 0
        %2055 = vmatprep.subr.bf16.mxu0 0
        %2056 = vmatpush1.bf16.msra.mxu0 0
        %2057 = vmatprep.subr.bf16.mxu0 0
        %2058 = vmatpush1.bf16.msra.mxu0 0
        %2059 = vmatprep.subr.bf16.mxu0 0
        %2060 = vmatpush1.bf16.msra.mxu0 0
        %2061 = vmatprep.subr.bf16.mxu0 0
        %2062 = vmatpush1.bf16.msra.mxu0 0
        %2063 = vmatprep.subr.bf16.mxu0 0
        %2064 = vmatpush1.bf16.msra.mxu0 0
        %2065 = vmatprep.subr.bf16.mxu0 0
        %2066 = vmatpush1.bf16.msra.mxu0 0
        %2067 = vmatprep.mubr.bf16.mxu0 0
        %2068 = vmatmul.mubr.bf16.gmra.mrb[0].mxu0 %v1947
        %v2069 = vpop.f32.mrb[0].mxu0
        %v2070 = vadd.f32 0.0, %v2069
        %v2071 = vpop.f32.mrb[0].mxu0
        %v2072 = vadd.f32 0.0, %v2071
        %v2073 = vpop.f32.mrb[0].mxu0
        %v2074 = vadd.f32 0.0, %v2073
        %v2075 = vpop.f32.mrb[0].mxu0
        %v2076 = vadd.f32 0.0, %v2075
        %2077 = vmatprep.mubr.bf16.mxu0 0
        %2078 = vmatmul.mubr.bf16.gmra.mrb[0].mxu0 %v1948
        %v2079 = vpop.f32.mrb[0].mxu0
        %v2080 = vadd.f32 0.0, %v2079
        %v2081 = vpop.f32.mrb[0].mxu0
        %v2082 = vadd.f32 0.0, %v2081
        %v2083 = vpop.f32.mrb[0].mxu0
        %v2084 = vadd.f32 0.0, %v2083
        %v2085 = vpop.f32.mrb[0].mxu0
        %v2086 = vadd.f32 0.0, %v2085
        %2087 = vmatprep.mubr.bf16.mxu0 0
        %2088 = vmatmul.mubr.bf16.gmra.mrb[0].mxu0 %v1949
        %v2089 = vpop.f32.mrb[0].mxu0
        %v2090 = vadd.f32 0.0, %v2089
        %v2091 = vpop.f32.mrb[0].mxu0
        %v2092 = vadd.f32 0.0, %v2091
        %v2093 = vpop.f32.mrb[0].mxu0
        %v2094 = vadd.f32 0.0, %v2093
        %v2095 = vpop.f32.mrb[0].mxu0
        %v2096 = vadd.f32 0.0, %v2095
        %2097 = vmatprep.mubr.bf16.mxu0 0
        %2098 = vmatmul.mubr.bf16.gmra.mrb[0].mxu0 %v1950
        %v2099 = vpop.f32.mrb[0].mxu0
        %v2100 = vadd.f32 0.0, %v2099
        %v2101 = vpop.f32.mrb[0].mxu0
        %v2102 = vadd.f32 0.0, %v2101
        %v2103 = vpop.f32.mrb[0].mxu0
        %v2104 = vadd.f32 0.0, %v2103
        %v2105 = vpop.f32.mrb[0].mxu0
        %v2106 = vadd.f32 0.0, %v2105
        %2107 = vdwg.mxu0
        %v2108 = vadd.f32 %v1890, %v2070
        %v2109 = vadd.f32 %v1891, %v2072
        %v2110 = vadd.f32 %v1892, %v2074
        %v2111 = vadd.f32 %v1893, %v2076
        %v2112 = vadd.f32 %v1894, %v2080
        %v2113 = vadd.f32 %v1895, %v2082
        %v2114 = vadd.f32 %v1896, %v2084
        %v2115 = vadd.f32 %v1897, %v2086
        %v2116 = vadd.f32 %v1898, %v2090
        %v2117 = vadd.f32 %v1899, %v2092
        %v2118 = vadd.f32 %v1900, %v2094
        %v2119 = vadd.f32 %v1901, %v2096
        %v2120 = vadd.f32 %v1902, %v2100
        %v2121 = vadd.f32 %v1903, %v2102
        %v2122 = vadd.f32 %v1904, %v2104
        %v2123 = vadd.f32 %v1905, %v2106
        %v2124 = vld [vmem:[%s1906] sm:$0xf]
        %v2125 = vld [vmem:[%s1906 + $0x4] sm:$0x1]
        %v2126 = vld [vmem:[%s1906 + $0x8] sm:$0xf]
        %v2127 = vld [vmem:[%s1906 + $0xc] sm:$0x1]
        %v2128 = vld [vmem:[%s1906 + $0x10] sm:$0xf]
        %v2129 = vld [vmem:[%s1906 + $0x14] sm:$0x1]
        %v2130 = vld [vmem:[%s1906 + $0x18] sm:$0xf]
        %v2131 = vld [vmem:[%s1906 + $0x1c] sm:$0x1]
        %v2132 = vld [vmem:[%s1906 + $0x20] sm:$0xf]
        %v2133 = vld [vmem:[%s1906 + $0x24] sm:$0x1]
        %v2134 = vld [vmem:[%s1906 + $0x28] sm:$0xf]
        %v2135 = vld [vmem:[%s1906 + $0x2c] sm:$0x1]
        %v2136 = vld [vmem:[%s1906 + $0x30] sm:$0xf]
        %v2137 = vld [vmem:[%s1906 + $0x34] sm:$0x1]
        %v2138 = vld [vmem:[%s1906 + $0x38] sm:$0xf]
        %v2139 = vld [vmem:[%s1906 + $0x3c] sm:$0x1]
        %v2140 = vld [vmem:[%s1 + $0x380] sm:$0xff]
        %v2141 = vld [vmem:[%s1 + $0x388] sm:$0xff]
        %v2142 = vld [vmem:[%s1 + $0x390] sm:$0xff]
        %v2143 = vld [vmem:[%s1 + $0x398] sm:$0xff]
        %v2144 = vld [vmem:[%s1 + $0x3a0] sm:$0xff]
        %v2145 = vld [vmem:[%s1 + $0x3a8] sm:$0xff]
        %v2146 = vld [vmem:[%s1 + $0x3b0] sm:$0xff]
        %v2147 = vld [vmem:[%s1 + $0x3b8] sm:$0xff]
        %v2148 = vld [vmem:[%s1 + $0x3c0] sm:$0xff]
        %v2149 = vld [vmem:[%s1 + $0x3c8] sm:$0xff]
        %v2150 = vld [vmem:[%s1 + $0x3d0] sm:$0xff]
        %v2151 = vld [vmem:[%s1 + $0x3d8] sm:$0xff]
        %v2152 = vld [vmem:[%s1 + $0x3e0] sm:$0xff]
        %v2153 = vld [vmem:[%s1 + $0x3e8] sm:$0xff]
        %v2154 = vld [vmem:[%s1 + $0x3f0] sm:$0xff]
        %v2155 = vld [vmem:[%s1 + $0x3f8] sm:$0xff]
        %v2157 = vshrl.u32 %v2124, 16
        %v2159 = vrot.slane %v2157, 4
        %v2160 = vshll.u32 %v2124, 16
        %v2162 = vrot.slane %v2160, 5
        %v2163 = vor.u32 %v2159, %v2162
        %v2164 = vrot.slane %v2163, 4
        %v2166 = vshll.u32 %v2125, 16
        %v2168 = vrot.slane %v2166, 5
        %v2169 = vsel %vm384, %v2164, %v2168
        %v2171 = vshrl.u32 %v2126, 16
        %v2173 = vrot.slane %v2171, 4
        %v2174 = vshll.u32 %v2126, 16
        %v2176 = vrot.slane %v2174, 5
        %v2177 = vor.u32 %v2173, %v2176
        %v2178 = vrot.slane %v2177, 4
        %v2180 = vshll.u32 %v2127, 16
        %v2182 = vrot.slane %v2180, 5
        %v2183 = vsel %vm384, %v2178, %v2182
        %v2185 = vshrl.u32 %v2128, 16
        %v2187 = vrot.slane %v2185, 4
        %v2188 = vshll.u32 %v2128, 16
        %v2190 = vrot.slane %v2188, 5
        %v2191 = vor.u32 %v2187, %v2190
        %v2192 = vrot.slane %v2191, 4
        %v2194 = vshll.u32 %v2129, 16
        %v2196 = vrot.slane %v2194, 5
        %v2197 = vsel %vm384, %v2192, %v2196
        %v2199 = vshrl.u32 %v2130, 16
        %v2201 = vrot.slane %v2199, 4
        %v2202 = vshll.u32 %v2130, 16
        %v2204 = vrot.slane %v2202, 5
        %v2205 = vor.u32 %v2201, %v2204
        %v2206 = vrot.slane %v2205, 4
        %v2208 = vshll.u32 %v2131, 16
        %v2210 = vrot.slane %v2208, 5
        %v2211 = vsel %vm384, %v2206, %v2210
        %v2213 = vshrl.u32 %v2132, 16
        %v2215 = vrot.slane %v2213, 4
        %v2216 = vshll.u32 %v2132, 16
        %v2218 = vrot.slane %v2216, 5
        %v2219 = vor.u32 %v2215, %v2218
        %v2220 = vrot.slane %v2219, 4
        %v2222 = vshll.u32 %v2133, 16
        %v2224 = vrot.slane %v2222, 5
        %v2225 = vsel %vm384, %v2220, %v2224
        %v2227 = vshrl.u32 %v2134, 16
        %v2229 = vrot.slane %v2227, 4
        %v2230 = vshll.u32 %v2134, 16
        %v2232 = vrot.slane %v2230, 5
        %v2233 = vor.u32 %v2229, %v2232
        %v2234 = vrot.slane %v2233, 4
        %v2236 = vshll.u32 %v2135, 16
        %v2238 = vrot.slane %v2236, 5
        %v2239 = vsel %vm384, %v2234, %v2238
        %v2241 = vshrl.u32 %v2136, 16
        %v2243 = vrot.slane %v2241, 4
        %v2244 = vshll.u32 %v2136, 16
        %v2246 = vrot.slane %v2244, 5
        %v2247 = vor.u32 %v2243, %v2246
        %v2248 = vrot.slane %v2247, 4
        %v2250 = vshll.u32 %v2137, 16
        %v2252 = vrot.slane %v2250, 5
        %v2253 = vsel %vm384, %v2248, %v2252
        %v2255 = vshrl.u32 %v2138, 16
        %v2257 = vrot.slane %v2255, 4
        %v2258 = vshll.u32 %v2138, 16
        %v2260 = vrot.slane %v2258, 5
        %v2261 = vor.u32 %v2257, %v2260
        %v2262 = vrot.slane %v2261, 4
        %v2264 = vshll.u32 %v2139, 16
        %v2266 = vrot.slane %v2264, 5
        %v2267 = vsel %vm384, %v2262, %v2266
        %v2268 = vunpack.c.l.b16 %v2169
        %v2269 = vunpack.c.l.b16 %v2183
        %v2270 = vunpack.c.l.b16 %v2197
        %v2271 = vunpack.c.l.b16 %v2211
        %v2272 = vunpack.c.l.b16 %v2225
        %v2273 = vunpack.c.l.b16 %v2239
        %v2274 = vunpack.c.l.b16 %v2253
        %v2275 = vunpack.c.l.b16 %v2267
        %v2276 = vpack.c.b16 %v2269, %v2268
        %v2277 = vpack.c.b16 %v2271, %v2270
        %v2278 = vpack.c.b16 %v2273, %v2272
        %v2279 = vpack.c.b16 %v2275, %v2274
        %v2300 = vunpack.c.l.b16 %v2140
        %v2301 = vunpack.c.h.b16 %v2140
        %v2302 = vunpack.c.l.b16 %v2141
        %v2303 = vunpack.c.h.b16 %v2141
        %v2304 = vunpack.c.l.b16 %v2142
        %v2305 = vunpack.c.h.b16 %v2142
        %v2306 = vunpack.c.l.b16 %v2143
        %v2307 = vunpack.c.h.b16 %v2143
        %v2308 = vunpack.c.l.b16 %v2144
        %v2309 = vunpack.c.h.b16 %v2144
        %v2310 = vunpack.c.l.b16 %v2145
        %v2311 = vunpack.c.h.b16 %v2145
        %v2312 = vunpack.c.l.b16 %v2146
        %v2313 = vunpack.c.h.b16 %v2146
        %v2314 = vunpack.c.l.b16 %v2147
        %v2315 = vunpack.c.h.b16 %v2147
        %v2316 = vunpack.c.l.b16 %v2148
        %v2317 = vunpack.c.h.b16 %v2148
        %v2318 = vunpack.c.l.b16 %v2149
        %v2319 = vunpack.c.h.b16 %v2149
        %v2320 = vunpack.c.l.b16 %v2150
        %v2321 = vunpack.c.h.b16 %v2150
        %v2322 = vunpack.c.l.b16 %v2151
        %v2323 = vunpack.c.h.b16 %v2151
        %v2324 = vunpack.c.l.b16 %v2152
        %v2325 = vunpack.c.h.b16 %v2152
        %v2326 = vunpack.c.l.b16 %v2153
        %v2327 = vunpack.c.h.b16 %v2153
        %v2328 = vunpack.c.l.b16 %v2154
        %v2329 = vunpack.c.h.b16 %v2154
        %v2330 = vunpack.c.l.b16 %v2155
        %v2331 = vunpack.c.h.b16 %v2155
        %v2332 = vpack.c.b16 %v2302, %v2300
        %v2333 = vpack.c.b16 %v2303, %v2301
        %v2334 = vpack.c.b16 %v2306, %v2304
        %v2335 = vpack.c.b16 %v2307, %v2305
        %v2336 = vpack.c.b16 %v2310, %v2308
        %v2337 = vpack.c.b16 %v2311, %v2309
        %v2338 = vpack.c.b16 %v2314, %v2312
        %v2339 = vpack.c.b16 %v2315, %v2313
        %v2340 = vpack.c.b16 %v2318, %v2316
        %v2341 = vpack.c.b16 %v2319, %v2317
        %v2342 = vpack.c.b16 %v2322, %v2320
        %v2343 = vpack.c.b16 %v2323, %v2321
        %v2344 = vpack.c.b16 %v2326, %v2324
        %v2345 = vpack.c.b16 %v2327, %v2325
        %v2346 = vpack.c.b16 %v2330, %v2328
        %v2347 = vpack.c.b16 %v2331, %v2329
        %2364 = vmatprep.subr.bf16.mxu0 %v2333
        %2365 = vmatpush1.bf16.msra.mxu0 %v2332
        %2366 = vmatprep.subr.bf16.mxu0 %v2335
        %2367 = vmatpush1.bf16.msra.mxu0 %v2334
        %2368 = vmatprep.subr.bf16.mxu0 %v2337
        %2369 = vmatpush1.bf16.msra.mxu0 %v2336
        %2370 = vmatprep.subr.bf16.mxu0 %v2339
        %2371 = vmatpush1.bf16.msra.mxu0 %v2338
        %2372 = vmatprep.subr.bf16.mxu0 %v2341
        %2373 = vmatpush1.bf16.msra.mxu0 %v2340
        %2374 = vmatprep.subr.bf16.mxu0 %v2343
        %2375 = vmatpush1.bf16.msra.mxu0 %v2342
        %2376 = vmatprep.subr.bf16.mxu0 %v2345
        %2377 = vmatpush1.bf16.msra.mxu0 %v2344
        %2378 = vmatprep.subr.bf16.mxu0 %v2347
        %2379 = vmatpush1.bf16.msra.mxu0 %v2346
        %2380 = vmatprep.subr.bf16.mxu0 0
        %2381 = vmatpush1.bf16.msra.mxu0 0
        %2382 = vmatprep.subr.bf16.mxu0 0
        %2383 = vmatpush1.bf16.msra.mxu0 0
        %2384 = vmatprep.subr.bf16.mxu0 0
        %2385 = vmatpush1.bf16.msra.mxu0 0
        %2386 = vmatprep.subr.bf16.mxu0 0
        %2387 = vmatpush1.bf16.msra.mxu0 0
        %2388 = vmatprep.subr.bf16.mxu0 0
        %2389 = vmatpush1.bf16.msra.mxu0 0
        %2390 = vmatprep.subr.bf16.mxu0 0
        %2391 = vmatpush1.bf16.msra.mxu0 0
        %2392 = vmatprep.subr.bf16.mxu0 0
        %2393 = vmatpush1.bf16.msra.mxu0 0
        %2394 = vmatprep.subr.bf16.mxu0 0
        %2395 = vmatpush1.bf16.msra.mxu0 0
        %2396 = vmatprep.mubr.bf16.mxu0 0
        %2397 = vmatmul.mubr.bf16.gmra.mrb[0].mxu0 %v2276
        %v2398 = vpop.f32.mrb[0].mxu0
        %v2399 = vadd.f32 0.0, %v2398
        %v2400 = vpop.f32.mrb[0].mxu0
        %v2401 = vadd.f32 0.0, %v2400
        %v2402 = vpop.f32.mrb[0].mxu0
        %v2403 = vadd.f32 0.0, %v2402
        %v2404 = vpop.f32.mrb[0].mxu0
        %v2405 = vadd.f32 0.0, %v2404
        %2406 = vmatprep.mubr.bf16.mxu0 0
        %2407 = vmatmul.mubr.bf16.gmra.mrb[0].mxu0 %v2277
        %v2408 = vpop.f32.mrb[0].mxu0
        %v2409 = vadd.f32 0.0, %v2408
        %v2410 = vpop.f32.mrb[0].mxu0
        %v2411 = vadd.f32 0.0, %v2410
        %v2412 = vpop.f32.mrb[0].mxu0
        %v2413 = vadd.f32 0.0, %v2412
        %v2414 = vpop.f32.mrb[0].mxu0
        %v2415 = vadd.f32 0.0, %v2414
        %2416 = vmatprep.mubr.bf16.mxu0 0
        %2417 = vmatmul.mubr.bf16.gmra.mrb[0].mxu0 %v2278
        %v2418 = vpop.f32.mrb[0].mxu0
        %v2419 = vadd.f32 0.0, %v2418
        %v2420 = vpop.f32.mrb[0].mxu0
        %v2421 = vadd.f32 0.0, %v2420
        %v2422 = vpop.f32.mrb[0].mxu0
        %v2423 = vadd.f32 0.0, %v2422
        %v2424 = vpop.f32.mrb[0].mxu0
        %v2425 = vadd.f32 0.0, %v2424
        %2426 = vmatprep.mubr.bf16.mxu0 0
        %2427 = vmatmul.mubr.bf16.gmra.mrb[0].mxu0 %v2279
        %v2428 = vpop.f32.mrb[0].mxu0
        %v2429 = vadd.f32 0.0, %v2428
        %v2430 = vpop.f32.mrb[0].mxu0
        %v2431 = vadd.f32 0.0, %v2430
        %v2432 = vpop.f32.mrb[0].mxu0
        %v2433 = vadd.f32 0.0, %v2432
        %v2434 = vpop.f32.mrb[0].mxu0
        %v2435 = vadd.f32 0.0, %v2434
        %2436 = vdwg.mxu0
        %v2437 = vadd.f32 %v2108, %v2399
        %v2438 = vadd.f32 %v2109, %v2401
        %v2439 = vadd.f32 %v2110, %v2403
        %v2440 = vadd.f32 %v2111, %v2405
        %v2441 = vadd.f32 %v2112, %v2409
        %v2442 = vadd.f32 %v2113, %v2411
        %v2443 = vadd.f32 %v2114, %v2413
        %v2444 = vadd.f32 %v2115, %v2415
        %v2445 = vadd.f32 %v2116, %v2419
        %v2446 = vadd.f32 %v2117, %v2421
        %v2447 = vadd.f32 %v2118, %v2423
        %v2448 = vadd.f32 %v2119, %v2425
        %v2449 = vadd.f32 %v2120, %v2429
        %v2450 = vadd.f32 %v2121, %v2431
        %v2451 = vadd.f32 %v2122, %v2433
        %v2452 = vadd.f32 %v2123, %v2435
        %v2453 = vld [vmem:[%s1906] sm:$0xe]
        %v2454 = vld [vmem:[%s1906 + $0x8] sm:$0xe]
        %v2455 = vld [vmem:[%s1906 + $0x10] sm:$0xe]
        %v2456 = vld [vmem:[%s1906 + $0x18] sm:$0xe]
        %v2457 = vld [vmem:[%s1906 + $0x20] sm:$0xe]
        %v2458 = vld [vmem:[%s1906 + $0x28] sm:$0xe]
        %v2459 = vld [vmem:[%s1906 + $0x30] sm:$0xe]
        %v2460 = vld [vmem:[%s1906 + $0x38] sm:$0xe]
        %v2461 = vld [vmem:[%s1 + $0x400] sm:$0xff]
        %v2462 = vld [vmem:[%s1 + $0x408] sm:$0xff]
        %v2463 = vld [vmem:[%s1 + $0x410] sm:$0xff]
        %v2464 = vld [vmem:[%s1 + $0x418] sm:$0xff]
        %v2465 = vld [vmem:[%s1 + $0x420] sm:$0xff]
        %v2466 = vld [vmem:[%s1 + $0x428] sm:$0xff]
        %v2467 = vld [vmem:[%s1 + $0x430] sm:$0xff]
        %v2468 = vld [vmem:[%s1 + $0x438] sm:$0xff]
        %v2469 = vld [vmem:[%s1 + $0x440] sm:$0xff]
        %v2470 = vld [vmem:[%s1 + $0x448] sm:$0xff]
        %v2471 = vld [vmem:[%s1 + $0x450] sm:$0xff]
        %v2472 = vld [vmem:[%s1 + $0x458] sm:$0xff]
        %v2473 = vld [vmem:[%s1 + $0x460] sm:$0xff]
        %v2474 = vld [vmem:[%s1 + $0x468] sm:$0xff]
        %v2475 = vld [vmem:[%s1 + $0x470] sm:$0xff]
        %v2476 = vld [vmem:[%s1 + $0x478] sm:$0xff]
        %v2493 = vrot.slane %v2453, 5
        %v2494 = vrot.slane %v2493, 4
        %v2495 = vrot.slane %v2125, 5
        %v2496 = vsel %vm885, %v2494, %v2495
        %v2497 = vrot.slane %v2454, 5
        %v2498 = vrot.slane %v2497, 4
        %v2499 = vrot.slane %v2127, 5
        %v2500 = vsel %vm885, %v2498, %v2499
        %v2501 = vrot.slane %v2455, 5
        %v2502 = vrot.slane %v2501, 4
        %v2503 = vrot.slane %v2129, 5
        %v2504 = vsel %vm885, %v2502, %v2503
        %v2505 = vrot.slane %v2456, 5
        %v2506 = vrot.slane %v2505, 4
        %v2507 = vrot.slane %v2131, 5
        %v2508 = vsel %vm885, %v2506, %v2507
        %v2509 = vrot.slane %v2457, 5
        %v2510 = vrot.slane %v2509, 4
        %v2511 = vrot.slane %v2133, 5
        %v2512 = vsel %vm885, %v2510, %v2511
        %v2513 = vrot.slane %v2458, 5
        %v2514 = vrot.slane %v2513, 4
        %v2515 = vrot.slane %v2135, 5
        %v2516 = vsel %vm885, %v2514, %v2515
        %v2517 = vrot.slane %v2459, 5
        %v2518 = vrot.slane %v2517, 4
        %v2519 = vrot.slane %v2137, 5
        %v2520 = vsel %vm885, %v2518, %v2519
        %v2521 = vrot.slane %v2460, 5
        %v2522 = vrot.slane %v2521, 4
        %v2523 = vrot.slane %v2139, 5
        %v2524 = vsel %vm885, %v2522, %v2523
        %v2525 = vunpack.c.l.b16 %v2496
        %v2526 = vunpack.c.l.b16 %v2500
        %v2527 = vunpack.c.l.b16 %v2504
        %v2528 = vunpack.c.l.b16 %v2508
        %v2529 = vunpack.c.l.b16 %v2512
        %v2530 = vunpack.c.l.b16 %v2516
        %v2531 = vunpack.c.l.b16 %v2520
        %v2532 = vunpack.c.l.b16 %v2524
        %v2533 = vpack.c.b16 %v2526, %v2525
        %v2534 = vpack.c.b16 %v2528, %v2527
        %v2535 = vpack.c.b16 %v2530, %v2529
        %v2536 = vpack.c.b16 %v2532, %v2531
        %v2557 = vunpack.c.l.b16 %v2461
        %v2558 = vunpack.c.h.b16 %v2461
        %v2559 = vunpack.c.l.b16 %v2462
        %v2560 = vunpack.c.h.b16 %v2462
        %v2561 = vunpack.c.l.b16 %v2463
        %v2562 = vunpack.c.h.b16 %v2463
        %v2563 = vunpack.c.l.b16 %v2464
        %v2564 = vunpack.c.h.b16 %v2464
        %v2565 = vunpack.c.l.b16 %v2465
        %v2566 = vunpack.c.h.b16 %v2465
        %v2567 = vunpack.c.l.b16 %v2466
        %v2568 = vunpack.c.h.b16 %v2466
        %v2569 = vunpack.c.l.b16 %v2467
        %v2570 = vunpack.c.h.b16 %v2467
        %v2571 = vunpack.c.l.b16 %v2468
        %v2572 = vunpack.c.h.b16 %v2468
        %v2573 = vunpack.c.l.b16 %v2469
        %v2574 = vunpack.c.h.b16 %v2469
        %v2575 = vunpack.c.l.b16 %v2470
        %v2576 = vunpack.c.h.b16 %v2470
        %v2577 = vunpack.c.l.b16 %v2471
        %v2578 = vunpack.c.h.b16 %v2471
        %v2579 = vunpack.c.l.b16 %v2472
        %v2580 = vunpack.c.h.b16 %v2472
        %v2581 = vunpack.c.l.b16 %v2473
        %v2582 = vunpack.c.h.b16 %v2473
        %v2583 = vunpack.c.l.b16 %v2474
        %v2584 = vunpack.c.h.b16 %v2474
        %v2585 = vunpack.c.l.b16 %v2475
        %v2586 = vunpack.c.h.b16 %v2475
        %v2587 = vunpack.c.l.b16 %v2476
        %v2588 = vunpack.c.h.b16 %v2476
        %v2589 = vpack.c.b16 %v2559, %v2557
        %v2590 = vpack.c.b16 %v2560, %v2558
        %v2591 = vpack.c.b16 %v2563, %v2561
        %v2592 = vpack.c.b16 %v2564, %v2562
        %v2593 = vpack.c.b16 %v2567, %v2565
        %v2594 = vpack.c.b16 %v2568, %v2566
        %v2595 = vpack.c.b16 %v2571, %v2569
        %v2596 = vpack.c.b16 %v2572, %v2570
        %v2597 = vpack.c.b16 %v2575, %v2573
        %v2598 = vpack.c.b16 %v2576, %v2574
        %v2599 = vpack.c.b16 %v2579, %v2577
        %v2600 = vpack.c.b16 %v2580, %v2578
        %v2601 = vpack.c.b16 %v2583, %v2581
        %v2602 = vpack.c.b16 %v2584, %v2582
        %v2603 = vpack.c.b16 %v2587, %v2585
        %v2604 = vpack.c.b16 %v2588, %v2586
        %2621 = vmatprep.subr.bf16.mxu0 %v2590
        %2622 = vmatpush1.bf16.msra.mxu0 %v2589
        %2623 = vmatprep.subr.bf16.mxu0 %v2592
        %2624 = vmatpush1.bf16.msra.mxu0 %v2591
        %2625 = vmatprep.subr.bf16.mxu0 %v2594
        %2626 = vmatpush1.bf16.msra.mxu0 %v2593
        %2627 = vmatprep.subr.bf16.mxu0 %v2596
        %2628 = vmatpush1.bf16.msra.mxu0 %v2595
        %2629 = vmatprep.subr.bf16.mxu0 %v2598
        %2630 = vmatpush1.bf16.msra.mxu0 %v2597
        %2631 = vmatprep.subr.bf16.mxu0 %v2600
        %2632 = vmatpush1.bf16.msra.mxu0 %v2599
        %2633 = vmatprep.subr.bf16.mxu0 %v2602
        %2634 = vmatpush1.bf16.msra.mxu0 %v2601
        %2635 = vmatprep.subr.bf16.mxu0 %v2604
        %2636 = vmatpush1.bf16.msra.mxu0 %v2603
        %2637 = vmatprep.subr.bf16.mxu0 0
        %2638 = vmatpush1.bf16.msra.mxu0 0
        %2639 = vmatprep.subr.bf16.mxu0 0
        %2640 = vmatpush1.bf16.msra.mxu0 0
        %2641 = vmatprep.subr.bf16.mxu0 0
        %2642 = vmatpush1.bf16.msra.mxu0 0
        %2643 = vmatprep.subr.bf16.mxu0 0
        %2644 = vmatpush1.bf16.msra.mxu0 0
        %2645 = vmatprep.subr.bf16.mxu0 0
        %2646 = vmatpush1.bf16.msra.mxu0 0
        %2647 = vmatprep.subr.bf16.mxu0 0
        %2648 = vmatpush1.bf16.msra.mxu0 0
        %2649 = vmatprep.subr.bf16.mxu0 0
        %2650 = vmatpush1.bf16.msra.mxu0 0
        %2651 = vmatprep.subr.bf16.mxu0 0
        %2652 = vmatpush1.bf16.msra.mxu0 0
        %2653 = vmatprep.mubr.bf16.mxu0 0
        %2654 = vmatmul.mubr.bf16.gmra.mrb[0].mxu0 %v2533
        %v2655 = vpop.f32.mrb[0].mxu0
        %v2656 = vadd.f32 0.0, %v2655
        %v2657 = vpop.f32.mrb[0].mxu0
        %v2658 = vadd.f32 0.0, %v2657
        %v2659 = vpop.f32.mrb[0].mxu0
        %v2660 = vadd.f32 0.0, %v2659
        %v2661 = vpop.f32.mrb[0].mxu0
        %v2662 = vadd.f32 0.0, %v2661
        %2663 = vmatprep.mubr.bf16.mxu0 0
        %2664 = vmatmul.mubr.bf16.gmra.mrb[0].mxu0 %v2534
        %v2665 = vpop.f32.mrb[0].mxu0
        %v2666 = vadd.f32 0.0, %v2665
        %v2667 = vpop.f32.mrb[0].mxu0
        %v2668 = vadd.f32 0.0, %v2667
        %v2669 = vpop.f32.mrb[0].mxu0
        %v2670 = vadd.f32 0.0, %v2669
        %v2671 = vpop.f32.mrb[0].mxu0
        %v2672 = vadd.f32 0.0, %v2671
        %2673 = vmatprep.mubr.bf16.mxu0 0
        %2674 = vmatmul.mubr.bf16.gmra.mrb[0].mxu0 %v2535
        %v2675 = vpop.f32.mrb[0].mxu0
        %v2676 = vadd.f32 0.0, %v2675
        %v2677 = vpop.f32.mrb[0].mxu0
        %v2678 = vadd.f32 0.0, %v2677
        %v2679 = vpop.f32.mrb[0].mxu0
        %v2680 = vadd.f32 0.0, %v2679
        %v2681 = vpop.f32.mrb[0].mxu0
        %v2682 = vadd.f32 0.0, %v2681
        %2683 = vmatprep.mubr.bf16.mxu0 0
        %2684 = vmatmul.mubr.bf16.gmra.mrb[0].mxu0 %v2536
        %v2685 = vpop.f32.mrb[0].mxu0
        %v2686 = vadd.f32 0.0, %v2685
        %v2687 = vpop.f32.mrb[0].mxu0
        %v2688 = vadd.f32 0.0, %v2687
        %v2689 = vpop.f32.mrb[0].mxu0
        %v2690 = vadd.f32 0.0, %v2689
        %v2691 = vpop.f32.mrb[0].mxu0
        %v2692 = vadd.f32 0.0, %v2691
        %2693 = vdwg.mxu0
        %v2694 = vadd.f32 %v2437, %v2656
        %v2695 = vadd.f32 %v2438, %v2658
        %v2696 = vadd.f32 %v2439, %v2660
        %v2697 = vadd.f32 %v2440, %v2662
        %v2698 = vadd.f32 %v2441, %v2666
        %v2699 = vadd.f32 %v2442, %v2668
        %v2700 = vadd.f32 %v2443, %v2670
        %v2701 = vadd.f32 %v2444, %v2672
        %v2702 = vadd.f32 %v2445, %v2676
        %v2703 = vadd.f32 %v2446, %v2678
        %v2704 = vadd.f32 %v2447, %v2680
        %v2705 = vadd.f32 %v2448, %v2682
        %v2706 = vadd.f32 %v2449, %v2686
        %v2707 = vadd.f32 %v2450, %v2688
        %v2708 = vadd.f32 %v2451, %v2690
        %v2709 = vadd.f32 %v2452, %v2692
        %v2711 = vlaneseq
        %v2712 = vshrl.u32 %v2711, 7
        %v2713 = vsub.s32 0, %v2712
        %v2714 = vrot.slane %v333, %v2713
        %v2715 = vlaneseq
        %v2716 = vshrl.u32 %v2715, 7
        %v2717 = vsub.s32 1, %v2716
        %v2718 = vrot.slane %v333, %v2717
        %v2721 = vadd.f32 %v2694, %v2714
        %v2722 = vadd.f32 %v2695, %v2718
        %v2723 = vadd.f32 %v2696, %v2714
        %v2724 = vadd.f32 %v2697, %v2718
        %v2725 = vadd.f32 %v2698, %v2714
        %v2726 = vadd.f32 %v2699, %v2718
        %v2727 = vadd.f32 %v2700, %v2714
        %v2728 = vadd.f32 %v2701, %v2718
        %v2729 = vadd.f32 %v2702, %v2714
        %v2730 = vadd.f32 %v2703, %v2718
        %v2731 = vadd.f32 %v2704, %v2714
        %v2732 = vadd.f32 %v2705, %v2718
        %v2733 = vadd.f32 %v2706, %v2714
        %v2734 = vadd.f32 %v2707, %v2718
        %v2735 = vadd.f32 %v2708, %v2714
        %v2736 = vadd.f32 %v2709, %v2718
        %vm2737 = vcmp.ge.f32.partialorder %v2721, 0.0
        %vm2738 = vcmp.ge.f32.partialorder %v2722, 0.0
        %vm2739 = vcmp.ge.f32.partialorder %v2723, 0.0
        %vm2740 = vcmp.ge.f32.partialorder %v2724, 0.0
        %vm2741 = vcmp.ge.f32.partialorder %v2725, 0.0
        %vm2742 = vcmp.ge.f32.partialorder %v2726, 0.0
        %vm2743 = vcmp.ge.f32.partialorder %v2727, 0.0
        %vm2744 = vcmp.ge.f32.partialorder %v2728, 0.0
        %vm2745 = vcmp.ge.f32.partialorder %v2729, 0.0
        %vm2746 = vcmp.ge.f32.partialorder %v2730, 0.0
        %vm2747 = vcmp.ge.f32.partialorder %v2731, 0.0
        %vm2748 = vcmp.ge.f32.partialorder %v2732, 0.0
        %vm2749 = vcmp.ge.f32.partialorder %v2733, 0.0
        %vm2750 = vcmp.ge.f32.partialorder %v2734, 0.0
        %vm2751 = vcmp.ge.f32.partialorder %v2735, 0.0
        %vm2752 = vcmp.ge.f32.partialorder %v2736, 0.0
        %v2753 = vmul.f32 %v2721, 0.01
        %v2754 = vmul.f32 %v2722, 0.01
        %v2755 = vmul.f32 %v2723, 0.01
        %v2756 = vmul.f32 %v2724, 0.01
        %v2757 = vmul.f32 %v2725, 0.01
        %v2758 = vmul.f32 %v2726, 0.01
        %v2759 = vmul.f32 %v2727, 0.01
        %v2760 = vmul.f32 %v2728, 0.01
        %v2761 = vmul.f32 %v2729, 0.01
        %v2762 = vmul.f32 %v2730, 0.01
        %v2763 = vmul.f32 %v2731, 0.01
        %v2764 = vmul.f32 %v2732, 0.01
        %v2765 = vmul.f32 %v2733, 0.01
        %v2766 = vmul.f32 %v2734, 0.01
        %v2767 = vmul.f32 %v2735, 0.01
        %v2768 = vmul.f32 %v2736, 0.01
        %v2769 = vsel %vm2737, %v2721, %v2753
        %v2770 = vsel %vm2738, %v2722, %v2754
        %v2771 = vsel %vm2739, %v2723, %v2755
        %v2772 = vsel %vm2740, %v2724, %v2756
        %v2773 = vsel %vm2741, %v2725, %v2757
        %v2774 = vsel %vm2742, %v2726, %v2758
        %v2775 = vsel %vm2743, %v2727, %v2759
        %v2776 = vsel %vm2744, %v2728, %v2760
        %v2777 = vsel %vm2745, %v2729, %v2761
        %v2778 = vsel %vm2746, %v2730, %v2762
        %v2779 = vsel %vm2747, %v2731, %v2763
        %v2780 = vsel %vm2748, %v2732, %v2764
        %v2781 = vsel %vm2749, %v2733, %v2765
        %v2782 = vsel %vm2750, %v2734, %v2766
        %v2783 = vsel %vm2751, %v2735, %v2767
        %v2784 = vsel %vm2752, %v2736, %v2768
        %2785 = vst [vmem:[%s163] sm:$0xff] %v2769
        %2786 = vst [vmem:[%s163 + $0x8] sm:$0xff] %v2770
        %2787 = vst [vmem:[%s163 + $0x10] sm:$0xff] %v2771
        %2788 = vst [vmem:[%s163 + $0x18] sm:$0xff] %v2772
        %2789 = vst [vmem:[%s163 + $0x20] sm:$0xff] %v2773
        %2790 = vst [vmem:[%s163 + $0x28] sm:$0xff] %v2774
        %2791 = vst [vmem:[%s163 + $0x30] sm:$0xff] %v2775
        %2792 = vst [vmem:[%s163 + $0x38] sm:$0xff] %v2776
        %2793 = vst [vmem:[%s163 + $0x40] sm:$0xff] %v2777
        %2794 = vst [vmem:[%s163 + $0x48] sm:$0xff] %v2778
        %2795 = vst [vmem:[%s163 + $0x50] sm:$0xff] %v2779
        %2796 = vst [vmem:[%s163 + $0x58] sm:$0xff] %v2780
        %2797 = vst [vmem:[%s163 + $0x60] sm:$0xff] %v2781
        %2798 = vst [vmem:[%s163 + $0x68] sm:$0xff] %v2782
        %2799 = vst [vmem:[%s163 + $0x70] sm:$0xff] %v2783
        %2800 = vst [vmem:[%s163 + $0x78] sm:$0xff] %v2784
        %s2801 = sand.u32 %s93, 1
        %s2802 = scalar_lea.sflag [#allocation4], %s2801
        %s2803 = sand.u32 %s93, 1
        %s2804 = smul.addr %s2803, 128
        %s2805 = scalar_lea.vmem [#allocation3], %s2804
        // Predicated region
        $region33: #{convnet_forward.7} parent=31 // pred_check
          %p2806 = pneg %p103
        $region34: #{convnet_forward.7} parent=31 // pred_check_branch
          %2808 = sbr.rel (%p2806) target = $region36
        $region35: #{convnet_forward.7} parent=31 // pred_region
          %s2810 = ssub.s32 2048, 2048
          %2811 = vsyncadd %s2802, %s2810
          %s2812 = smul.addr %s17, 16
          %s2813 = smul.addr %s2812, 128
          %s2814 = scalar_lea.hbm %s3, %s2813
          %s2815 = sshll.u32 %s2805, 4
          %s2816 = int_to_ptr.vmem [resolvable:$true] %s2815
          %2821 = dma.vmem_to_hbm [thread:$0]  %s2816, 2048, %s2814, %s2802, 256, 256, 16
        $region36: #{convnet_forward.7} parent=31 // pred_fallthru
          _
      $region32: #{convnet_forward.7} parent=5 // pred_fallthru
        _
      %p2822 = scmp.le.s32.totalorder 2, %s12
      // Predicated region
      $region37: #{convnet_forward.7} parent=5 // pred_check
        %p2823 = pneg %p2822
      $region38: #{convnet_forward.7} parent=5 // pred_check_branch
        %2825 = sbr.rel (%p2823) target = $region40
      $region39: #{convnet_forward.7} parent=5 // pred_region
        %s2826 = ssub.s32 %s12, 2
        // Predicated region
        $region41: #{convnet_forward.7} parent=39 // pred_check
          %p2827 = pneg %p109
        $region42: #{convnet_forward.7} parent=39 // pred_check_branch
          %2829 = sbr.rel (%p2827) target = $region44
        $region43: #{convnet_forward.7} parent=39 // pred_region
          %s2830 = sand.u32 %s94, 1
          %s2831 = scalar_lea.sflag [#allocation4], %s2830
          %s2832 = sand.u32 %s94, 1
          %s2833 = smul.addr %s2832, 128
          %s2834 = scalar_lea.vmem [#allocation3], %s2833
          %2835 = dma.done %s2831, 2048
        $region44: #{convnet_forward.7} parent=39 // pred_fallthru
          _
      $region40: #{convnet_forward.7} parent=5 // pred_fallthru
        _
    $region6: #{convnet_forward.7} parent=1 // loop_footer
      %s16 = sadd.s32 1, %s12
    $region7: #{convnet_forward.7} parent=1 // loop_footer_branch
      %11 = sbr.rel target = $region3
    $region8: #{convnet_forward.7} parent=1 // loop_exit
      _
    %2836 = vsyncpa [#allocation4], 1
    %s2837 = scalar_lea.sflag [#allocation4], 1
    %2838 = vsyncpa %s2837, 1

// kernel: convnet_forward.4
$region0: #{convnet_forward.4}
  #allocation0 [shape = 'u32[]', space=smem, size = 0x4, offset = 0x4, fixed_abs, tag = 'smem constant byte address 0x4 - core index']
  #allocation1 [shape = 'u32[144,128]{1,0:T(1,128)}', space=vmem, size = 0x12000, scoped, tag = 'internal scratch']
  #allocation2 [shape = 'bf16[18,18,16]{2,1,0:T(8,128)(2,1)}', space=vmem, size = 0x1b000, scoped, tag = 'scratch operand']
  %s0 = inlined_call_operand.vmem [shape: f32[2,16,16,16], index: 0, kind: input, shape index: {}]
  %s1 = inlined_call_operand.vmem [shape: bf16[144,128], index: 1, kind: input, shape index: {}]
  %s2 = inlined_call_operand.vmem [shape: f32[1,128], index: 2, kind: input, shape index: {}]
  %s3 = inlined_call_operand.vmem [shape: bf16[2,16,16,128], index: 3, kind: output, shape index: {}]
  %s4 = sld [smem:[#allocation0]]
  $region45: #{convnet_forward.4} parent=0
    _
  %s6 = ssub.s32 1, %s4
  %s7 = scalar_select 0, %s6, %s4
  loop: start=0, step=1, limit=4
  $region2: #{convnet_forward.4} parent=0 // loop_pre_header
    _
  $region3: #{convnet_forward.4} parent=0 // loop_header
    %s9 = sphi 0, %s13
    %p10 = scmp.ge.s32.totalorder %s9, 4
    %s19 = sphi 0, %s21
    %s22 = sphi 0, %s19
    %s23 = sphi 0, %s22
    %s39 = sphi 0, %s23
    %s43 = sphi 0, %s43
    %s45 = sphi 0, %s43
    %s46 = sphi 0, %s45
    %s60 = sphi 0, %s46
    %s64 = sphi 0, %s64
    %s66 = sphi 0, %s64
    %s67 = sphi 0, %s66
    %s81 = sphi 0, %s67
    %s87 = sphi 0, %s89
    %s90 = sphi 0, %s87
    %s91 = sphi 0, %s90
    %s107 = sphi 0, %s91
  $region4: #{convnet_forward.4} parent=0 // loop_header_branch
    %12 = sbr.rel (%p10) target = $region8
  $region5: #{convnet_forward.4} parent=0 // loop_body
    %s14 = ssub.s32 %s9, 1
    %s15 = ssub.s32 %s9, 2
    %s16 = sadd.s32 %s9, 1
    %s17 = ssub.s32 %s9, %s16
    %p18 = scmp.eq.s32.totalorder %s17, 0
    %s20 = sadd.s32 %s19, 1
    %s21 = scalar_select %p18, %s19, %s20
    %p24 = pneg %p18
    %p25 = scmp.eq.s32.totalorder %s9, 1
    %p26 = por %p24, %p25
    %p27 = scmp.ne.s32.totalorder %s19, %s22
    %p28 = scmp.eq.s32.totalorder %s9, 0
    %p29 = por %p27, %p28
    %p30 = scmp.ne.s32.totalorder %s19, %s22
    %p31 = scmp.eq.s32.totalorder %s14, 1
    %p32 = por %p30, %p31
    %p33 = scmp.ne.s32.totalorder %s22, %s23
    %p34 = scmp.eq.s32.totalorder %s14, 0
    %p35 = por %p33, %p34
    %p36 = scmp.ne.s32.totalorder %s22, %s23
    %p37 = scmp.eq.s32.totalorder %s15, 1
    %p38 = por %p36, %p37
    %p40 = scmp.ne.s32.totalorder %s23, %s39
    %p41 = scmp.eq.s32.totalorder %s15, 0
    %p42 = por %p40, %p41
    %s44 = sadd.s32 %s43, 1
    %p47 = scmp.eq.s32.totalorder %s9, 1
    %p48 = scmp.ne.s32.totalorder %s43, %s45
    %p49 = scmp.eq.s32.totalorder %s9, 0
    %p50 = por %p48, %p49
    %p51 = scmp.ne.s32.totalorder %s43, %s45
    %p52 = scmp.eq.s32.totalorder %s14, 1
    %p53 = por %p51, %p52
    %p54 = scmp.ne.s32.totalorder %s45, %s46
    %p55 = scmp.eq.s32.totalorder %s14, 0
    %p56 = por %p54, %p55
    %p57 = scmp.ne.s32.totalorder %s45, %s46
    %p58 = scmp.eq.s32.totalorder %s15, 1
    %p59 = por %p57, %p58
    %p61 = scmp.ne.s32.totalorder %s46, %s60
    %p62 = scmp.eq.s32.totalorder %s15, 0
    %p63 = por %p61, %p62
    %s65 = sadd.s32 %s64, 1
    %p68 = scmp.eq.s32.totalorder %s9, 1
    %p69 = scmp.ne.s32.totalorder %s64, %s66
    %p70 = scmp.eq.s32.totalorder %s9, 0
    %p71 = por %p69, %p70
    %p72 = scmp.ne.s32.totalorder %s64, %s66
    %p73 = scmp.eq.s32.totalorder %s14, 1
    %p74 = por %p72, %p73
    %p75 = scmp.ne.s32.totalorder %s66, %s67
    %p76 = scmp.eq.s32.totalorder %s14, 0
    %p77 = por %p75, %p76
    %p78 = scmp.ne.s32.totalorder %s66, %s67
    %p79 = scmp.eq.s32.totalorder %s15, 1
    %p80 = por %p78, %p79
    %p82 = scmp.ne.s32.totalorder %s67, %s81
    %p83 = scmp.eq.s32.totalorder %s15, 0
    %p84 = por %p82, %p83
    %s85 = ssub.s32 %s9, %s16
    %p86 = scmp.eq.s32.totalorder %s85, 0
    %s88 = sadd.s32 %s87, 1
    %s89 = scalar_select %p86, %s87, %s88
    %p92 = pneg %p86
    %p93 = scmp.eq.s32.totalorder %s9, 1
    %p94 = por %p92, %p93
    %p95 = scmp.ne.s32.totalorder %s87, %s90
    %p96 = scmp.eq.s32.totalorder %s9, 0
    %p97 = por %p95, %p96
    %p98 = scmp.ne.s32.totalorder %s87, %s90
    %p99 = scmp.eq.s32.totalorder %s14, 1
    %p100 = por %p98, %p99
    %p101 = scmp.ne.s32.totalorder %s90, %s91
    %p102 = scmp.eq.s32.totalorder %s14, 0
    %p103 = por %p101, %p102
    %p104 = scmp.ne.s32.totalorder %s90, %s91
    %p105 = scmp.eq.s32.totalorder %s15, 1
    %p106 = por %p104, %p105
    %p108 = scmp.ne.s32.totalorder %s91, %s107
    %p109 = scmp.eq.s32.totalorder %s15, 0
    %p110 = por %p108, %p109
    %p111 = scmp.le.s32.totalorder 1, %s9
    %p112 = scmp.lt.s32.totalorder %s9, 3
    %p113 = pnand %p111, %p112
    %p114 = pneg %p113
    // Predicated region
    $region9: #{convnet_forward.4} parent=5 // pred_check
      _
    $region10: #{convnet_forward.4} parent=5 // pred_check_branch
      %116 = sbr.rel (%p113) target = $region12
    $region11: #{convnet_forward.4} parent=5 // pred_region
      %s117 = ssub.s32 %s9, 1
      // Predicated region
      $region13: #{convnet_forward.4} parent=11 // pred_check
        %p118 = pneg %p56
      $region14: #{convnet_forward.4} parent=11 // pred_check_branch
        %120 = sbr.rel (%p118) target = $region16
      $region15: #{convnet_forward.4} parent=11 // pred_region
        _
      $region16: #{convnet_forward.4} parent=11 // pred_fallthru
        _
      // Predicated region
      $region17: #{convnet_forward.4} parent=11 // pred_check
        %p121 = pneg %p77
      $region18: #{convnet_forward.4} parent=11 // pred_check_branch
        %123 = sbr.rel (%p121) target = $region20
      $region19: #{convnet_forward.4} parent=11 // pred_region
        _
      $region20: #{convnet_forward.4} parent=11 // pred_fallthru
        _
    $region12: #{convnet_forward.4} parent=5 // pred_fallthru
      _
    %p124 = scmp.lt.s32.totalorder %s9, 2
    // Predicated region
    $region21: #{convnet_forward.4} parent=5 // pred_check
      %p125 = pneg %p124
    $region22: #{convnet_forward.4} parent=5 // pred_check_branch
      %127 = sbr.rel (%p125) target = $region24
    $region23: #{convnet_forward.4} parent=5 // pred_region
      // Predicated region
      $region25: #{convnet_forward.4} parent=23 // pred_check
        %p128 = pneg %p29
      $region26: #{convnet_forward.4} parent=23 // pred_check_branch
        %130 = sbr.rel (%p128) target = $region28
      $region27: #{convnet_forward.4} parent=23 // pred_region
        %p131 = scmp.lt.s32.totalorder %s9, 1
        %s132 = scalar_select %p131, %s9, 1
        %s133 = smul.addr %s132, 32
        %s134 = smul.addr %s133, 8
        %s135 = scalar_lea.vmem %s0, %s134
      $region28: #{convnet_forward.4} parent=23 // pred_fallthru
        _
    $region24: #{convnet_forward.4} parent=5 // pred_fallthru
      _
    %p136 = scmp.le.s32.totalorder 1, %s9
    %p137 = scmp.lt.s32.totalorder %s9, 3
    %p138 = pnand %p136, %p137
    %p139 = pneg %p138
    // Predicated region
    $region29: #{convnet_forward.4} parent=5 // pred_check
      _
    $region30: #{convnet_forward.4} parent=5 // pred_check_branch
      %141 = sbr.rel (%p138) target = $region32
    $region31: #{convnet_forward.4} parent=5 // pred_region
      %s142 = ssub.s32 %s9, 1
      %p143 = scmp.lt.s32.totalorder %s14, 1
      %s144 = scalar_select %p143, %s14, 1
      %s145 = smul.addr %s144, 32
      %s146 = smul.addr %s145, 8
      %s147 = scalar_lea.vmem %s0, %s146
      %p148 = pneg %p35
      %p149 = pneg %p32
      %p150 = pneg %p56
      %p151 = pneg %p53
      %p152 = pneg %p77
      %p153 = pneg %p74
      %p154 = pneg %p103
      %p155 = pneg %p100
      %p156 = scmp.lt.s32.totalorder %s14, 1
      %s157 = scalar_select %p156, %s14, 1
      %s158 = smul.addr %s157, 32
      %s159 = smul.addr %s158, 4
      %s160 = scalar_lea.vmem %s3, %s159
      %p161 = scmp.lt.s32.totalorder %s14, 1
      %s162 = scalar_select %p161, %s14, 1
      %s163 = smul.addr %s162, 32
      %s164 = smul.addr %s163, 8
      %s165 = scalar_lea.vmem %s0, %s164
      %p166 = scmp.lt.s32.totalorder %s14, 1
      %s167 = scalar_select %p166, %s14, 1
      %s168 = smul.addr %s167, 32
      %s169 = smul.addr %s168, 4
      %s170 = scalar_lea.vmem %s3, %s169
      %vm172 = vcmask 125952
      %173 = vst.msk [vmem:[#allocation2] sm:$0xf] %vm172, 0
      %174 = vst.msk [vmem:[#allocation2 + $0x4] sm:$0xf] %vm172, 0
      %vm175 = vcmask 122880
      %176 = vst.msk [vmem:[#allocation2 + $0x8] sm:$0x1] %vm175, 0
      %177 = vst.msk [vmem:[#allocation2 + $0xc] sm:$0xf] %vm172, 0
      %178 = vst.msk [vmem:[#allocation2 + $0x10] sm:$0xf] %vm172, 0
      %179 = vst.msk [vmem:[#allocation2 + $0x14] sm:$0x1] %vm175, 0
      %180 = vst.msk [vmem:[#allocation2 + $0x18] sm:$0xf] %vm172, 0
      %181 = vst.msk [vmem:[#allocation2 + $0x1c] sm:$0xf] %vm172, 0
      %182 = vst.msk [vmem:[#allocation2 + $0x20] sm:$0x1] %vm175, 0
      %183 = vst.msk [vmem:[#allocation2 + $0x24] sm:$0xf] %vm172, 0
      %184 = vst.msk [vmem:[#allocation2 + $0x28] sm:$0xf] %vm172, 0
      %185 = vst.msk [vmem:[#allocation2 + $0x2c] sm:$0x1] %vm175, 0
      %186 = vst.msk [vmem:[#allocation2 + $0x30] sm:$0xf] %vm172, 0
      %187 = vst.msk [vmem:[#allocation2 + $0x34] sm:$0xf] %vm172, 0
      %188 = vst.msk [vmem:[#allocation2 + $0x38] sm:$0x1] %vm175, 0
      %189 = vst.msk [vmem:[#allocation2 + $0x3c] sm:$0xf] %vm172, 0
      %190 = vst.msk [vmem:[#allocation2 + $0x40] sm:$0xf] %vm172, 0
      %191 = vst.msk [vmem:[#allocation2 + $0x44] sm:$0x1] %vm175, 0
      %192 = vst.msk [vmem:[#allocation2 + $0x48] sm:$0xf] %vm172, 0
      %193 = vst.msk [vmem:[#allocation2 + $0x4c] sm:$0xf] %vm172, 0
      %194 = vst.msk [vmem:[#allocation2 + $0x50] sm:$0x1] %vm175, 0
      %195 = vst.msk [vmem:[#allocation2 + $0x54] sm:$0xf] %vm172, 0
      %196 = vst.msk [vmem:[#allocation2 + $0x58] sm:$0xf] %vm172, 0
      %197 = vst.msk [vmem:[#allocation2 + $0x5c] sm:$0x1] %vm175, 0
      %198 = vst.msk [vmem:[#allocation2 + $0x60] sm:$0xf] %vm172, 0
      %199 = vst.msk [vmem:[#allocation2 + $0x64] sm:$0xf] %vm172, 0
      %200 = vst.msk [vmem:[#allocation2 + $0x68] sm:$0x1] %vm175, 0
      %201 = vst.msk [vmem:[#allocation2 + $0x6c] sm:$0xf] %vm172, 0
      %202 = vst.msk [vmem:[#allocation2 + $0x70] sm:$0xf] %vm172, 0
      %203 = vst.msk [vmem:[#allocation2 + $0x74] sm:$0x1] %vm175, 0
      %204 = vst.msk [vmem:[#allocation2 + $0x78] sm:$0xf] %vm172, 0
      %205 = vst.msk [vmem:[#allocation2 + $0x7c] sm:$0xf] %vm172, 0
      %206 = vst.msk [vmem:[#allocation2 + $0x80] sm:$0x1] %vm175, 0
      %207 = vst.msk [vmem:[#allocation2 + $0x84] sm:$0xf] %vm172, 0
      %208 = vst.msk [vmem:[#allocation2 + $0x88] sm:$0xf] %vm172, 0
      %209 = vst.msk [vmem:[#allocation2 + $0x8c] sm:$0x1] %vm175, 0
      %210 = vst.msk [vmem:[#allocation2 + $0x90] sm:$0xf] %vm172, 0
      %211 = vst.msk [vmem:[#allocation2 + $0x94] sm:$0xf] %vm172, 0
      %212 = vst.msk [vmem:[#allocation2 + $0x98] sm:$0x1] %vm175, 0
      %213 = vst.msk [vmem:[#allocation2 + $0x9c] sm:$0xf] %vm172, 0
      %214 = vst.msk [vmem:[#allocation2 + $0xa0] sm:$0xf] %vm172, 0
      %215 = vst.msk [vmem:[#allocation2 + $0xa4] sm:$0x1] %vm175, 0
      %216 = vst.msk [vmem:[#allocation2 + $0xa8] sm:$0xf] %vm172, 0
      %217 = vst.msk [vmem:[#allocation2 + $0xac] sm:$0xf] %vm172, 0
      %218 = vst.msk [vmem:[#allocation2 + $0xb0] sm:$0x1] %vm175, 0
      %219 = vst.msk [vmem:[#allocation2 + $0xb4] sm:$0xf] %vm172, 0
      %220 = vst.msk [vmem:[#allocation2 + $0xb8] sm:$0xf] %vm172, 0
      %221 = vst.msk [vmem:[#allocation2 + $0xbc] sm:$0x1] %vm175, 0
      %222 = vst.msk [vmem:[#allocation2 + $0xc0] sm:$0xf] %vm172, 0
      %223 = vst.msk [vmem:[#allocation2 + $0xc4] sm:$0xf] %vm172, 0
      %224 = vst.msk [vmem:[#allocation2 + $0xc8] sm:$0x1] %vm175, 0
      %225 = vst.msk [vmem:[#allocation2 + $0xcc] sm:$0xf] %vm172, 0
      %226 = vst.msk [vmem:[#allocation2 + $0xd0] sm:$0xf] %vm172, 0
      %227 = vst.msk [vmem:[#allocation2 + $0xd4] sm:$0x1] %vm175, 0
      %v228 = vld [vmem:[%s165] sm:$0xff]
      %v229 = vld [vmem:[%s165 + $0x8] sm:$0xff]
      %v230 = vld [vmem:[%s165 + $0x10] sm:$0xff]
      %v231 = vld [vmem:[%s165 + $0x18] sm:$0xff]
      %v232 = vld [vmem:[%s165 + $0x20] sm:$0xff]
      %v233 = vld [vmem:[%s165 + $0x28] sm:$0xff]
      %v234 = vld [vmem:[%s165 + $0x30] sm:$0xff]
      %v235 = vld [vmem:[%s165 + $0x38] sm:$0xff]
      %v236 = vld [vmem:[%s165 + $0x40] sm:$0xff]
      %v237 = vld [vmem:[%s165 + $0x48] sm:$0xff]
      %v238 = vld [vmem:[%s165 + $0x50] sm:$0xff]
      %v239 = vld [vmem:[%s165 + $0x58] sm:$0xff]
      %v240 = vld [vmem:[%s165 + $0x60] sm:$0xff]
      %v241 = vld [vmem:[%s165 + $0x68] sm:$0xff]
      %v242 = vld [vmem:[%s165 + $0x70] sm:$0xff]
      %v243 = vld [vmem:[%s165 + $0x78] sm:$0xff]
      %v244 = vld [vmem:[%s165 + $0x80] sm:$0xff]
      %v245 = vld [vmem:[%s165 + $0x88] sm:$0xff]
      %v246 = vld [vmem:[%s165 + $0x90] sm:$0xff]
      %v247 = vld [vmem:[%s165 + $0x98] sm:$0xff]
      %v248 = vld [vmem:[%s165 + $0xa0] sm:$0xff]
      %v249 = vld [vmem:[%s165 + $0xa8] sm:$0xff]
      %v250 = vld [vmem:[%s165 + $0xb0] sm:$0xff]
      %v251 = vld [vmem:[%s165 + $0xb8] sm:$0xff]
      %v252 = vld [vmem:[%s165 + $0xc0] sm:$0xff]
      %v253 = vld [vmem:[%s165 + $0xc8] sm:$0xff]
      %v254 = vld [vmem:[%s165 + $0xd0] sm:$0xff]
      %v255 = vld [vmem:[%s165 + $0xd8] sm:$0xff]
      %v256 = vld [vmem:[%s165 + $0xe0] sm:$0xff]
      %v257 = vld [vmem:[%s165 + $0xe8] sm:$0xff]
      %v258 = vld [vmem:[%s165 + $0xf0] sm:$0xff]
      %v259 = vld [vmem:[%s165 + $0xf8] sm:$0xff]
      %v260 = vpack.c.bf16 %v229, %v228
      %v261 = vpack.c.bf16 %v231, %v230
      %v262 = vpack.c.bf16 %v233, %v232
      %v263 = vpack.c.bf16 %v235, %v234
      %v264 = vpack.c.bf16 %v237, %v236
      %v265 = vpack.c.bf16 %v239, %v238
      %v266 = vpack.c.bf16 %v241, %v240
      %v267 = vpack.c.bf16 %v243, %v242
      %v268 = vpack.c.bf16 %v245, %v244
      %v269 = vpack.c.bf16 %v247, %v246
      %v270 = vpack.c.bf16 %v249, %v248
      %v271 = vpack.c.bf16 %v251, %v250
      %v272 = vpack.c.bf16 %v253, %v252
      %v273 = vpack.c.bf16 %v255, %v254
      %v274 = vpack.c.bf16 %v257, %v256
      %v275 = vpack.c.bf16 %v259, %v258
      %v292 = vunpack.c.l.b16 %v260
      %v293 = vunpack.c.h.b16 %v260
      %v294 = vunpack.c.l.b16 %v261
      %v295 = vunpack.c.h.b16 %v261
      %v296 = vunpack.c.l.b16 %v262
      %v297 = vunpack.c.h.b16 %v262
      %v298 = vunpack.c.l.b16 %v263
      %v299 = vunpack.c.h.b16 %v263
      %v300 = vunpack.c.l.b16 %v264
      %v301 = vunpack.c.h.b16 %v264
      %v302 = vunpack.c.l.b16 %v265
      %v303 = vunpack.c.h.b16 %v265
      %v304 = vunpack.c.l.b16 %v266
      %v305 = vunpack.c.h.b16 %v266
      %v306 = vunpack.c.l.b16 %v267
      %v307 = vunpack.c.h.b16 %v267
      %v308 = vunpack.c.l.b16 %v268
      %v309 = vunpack.c.h.b16 %v268
      %v310 = vunpack.c.l.b16 %v269
      %v311 = vunpack.c.h.b16 %v269
      %v312 = vunpack.c.l.b16 %v270
      %v313 = vunpack.c.h.b16 %v270
      %v314 = vunpack.c.l.b16 %v271
      %v315 = vunpack.c.h.b16 %v271
      %v316 = vunpack.c.l.b16 %v272
      %v317 = vunpack.c.h.b16 %v272
      %v318 = vunpack.c.l.b16 %v273
      %v319 = vunpack.c.h.b16 %v273
      %v320 = vunpack.c.l.b16 %v274
      %v321 = vunpack.c.h.b16 %v274
      %v322 = vunpack.c.l.b16 %v275
      %v323 = vunpack.c.h.b16 %v275
      %v324 = vpack.c.b16 %v292, %v292
      %v325 = vpack.c.b16 %v293, %v293
      %v326 = vpack.c.b16 %v294, %v294
      %v327 = vpack.c.b16 %v295, %v295
      %v328 = vpack.c.b16 %v296, %v296
      %v329 = vpack.c.b16 %v297, %v297
      %v330 = vpack.c.b16 %v298, %v298
      %v331 = vpack.c.b16 %v299, %v299
      %v332 = vpack.c.b16 %v300, %v300
      %v333 = vpack.c.b16 %v301, %v301
      %v334 = vpack.c.b16 %v302, %v302
      %v335 = vpack.c.b16 %v303, %v303
      %v336 = vpack.c.b16 %v304, %v304
      %v337 = vpack.c.b16 %v305, %v305
      %v338 = vpack.c.b16 %v306, %v306
      %v339 = vpack.c.b16 %v307, %v307
      %v340 = vpack.c.b16 %v308, %v308
      %v341 = vpack.c.b16 %v309, %v309
      %v342 = vpack.c.b16 %v310, %v310
      %v343 = vpack.c.b16 %v311, %v311
      %v344 = vpack.c.b16 %v312, %v312
      %v345 = vpack.c.b16 %v313, %v313
      %v346 = vpack.c.b16 %v314, %v314
      %v347 = vpack.c.b16 %v315, %v315
      %v348 = vpack.c.b16 %v316, %v316
      %v349 = vpack.c.b16 %v317, %v317
      %v350 = vpack.c.b16 %v318, %v318
      %v351 = vpack.c.b16 %v319, %v319
      %v352 = vpack.c.b16 %v320, %v320
      %v353 = vpack.c.b16 %v321, %v321
      %v354 = vpack.c.b16 %v322, %v322
      %v355 = vpack.c.b16 %v323, %v323
      %vm356 = vsmask.f32 256
      %vm357 = vsmask.f32 4368
      %vm358 = vmor %vm356, %vm357
      %v360 = vshrl.u32 %v324, 16
      %v362 = vrot.slane %v360, 7
      %v363 = vshll.u32 %v324, 16
      %v365 = vor.u32 %v362, %v363
      %v366 = vrot.slane %v362, 4
      %v368 = vshrl.u32 %v325, 16
      %v370 = vrot.slane %v368, 7
      %v371 = vshll.u32 %v325, 16
      %v373 = vor.u32 %v370, %v371
      %v374 = vsel %vm358, %v366, %v373
      %v375 = vrot.slane %v370, 4
      %v377 = vshrl.u32 %v326, 16
      %v379 = vrot.slane %v377, 7
      %v380 = vshll.u32 %v326, 16
      %v382 = vor.u32 %v379, %v380
      %v383 = vrot.slane %v379, 4
      %v385 = vshrl.u32 %v327, 16
      %v387 = vrot.slane %v385, 7
      %v388 = vshll.u32 %v327, 16
      %v390 = vor.u32 %v387, %v388
      %v391 = vsel %vm358, %v383, %v390
      %v392 = vrot.slane %v387, 4
      %v394 = vshrl.u32 %v328, 16
      %v396 = vrot.slane %v394, 7
      %v397 = vshll.u32 %v328, 16
      %v399 = vor.u32 %v396, %v397
      %v400 = vrot.slane %v396, 4
      %v402 = vshrl.u32 %v329, 16
      %v404 = vrot.slane %v402, 7
      %v405 = vshll.u32 %v329, 16
      %v407 = vor.u32 %v404, %v405
      %v408 = vsel %vm358, %v400, %v407
      %v409 = vrot.slane %v404, 4
      %v411 = vshrl.u32 %v330, 16
      %v413 = vrot.slane %v411, 7
      %v414 = vshll.u32 %v330, 16
      %v416 = vor.u32 %v413, %v414
      %v417 = vrot.slane %v413, 4
      %v419 = vshrl.u32 %v331, 16
      %v421 = vrot.slane %v419, 7
      %v422 = vshll.u32 %v331, 16
      %v424 = vor.u32 %v421, %v422
      %v425 = vsel %vm358, %v417, %v424
      %v426 = vrot.slane %v421, 4
      %v428 = vshrl.u32 %v332, 16
      %v430 = vrot.slane %v428, 7
      %v431 = vshll.u32 %v332, 16
      %v433 = vor.u32 %v430, %v431
      %v434 = vrot.slane %v430, 4
      %v436 = vshrl.u32 %v333, 16
      %v438 = vrot.slane %v436, 7
      %v439 = vshll.u32 %v333, 16
      %v441 = vor.u32 %v438, %v439
      %v442 = vsel %vm358, %v434, %v441
      %v443 = vrot.slane %v438, 4
      %v445 = vshrl.u32 %v334, 16
      %v447 = vrot.slane %v445, 7
      %v448 = vshll.u32 %v334, 16
      %v450 = vor.u32 %v447, %v448
      %v451 = vrot.slane %v447, 4
      %v453 = vshrl.u32 %v335, 16
      %v455 = vrot.slane %v453, 7
      %v456 = vshll.u32 %v335, 16
      %v458 = vor.u32 %v455, %v456
      %v459 = vsel %vm358, %v451, %v458
      %v460 = vrot.slane %v455, 4
      %v462 = vshrl.u32 %v336, 16
      %v464 = vrot.slane %v462, 7
      %v465 = vshll.u32 %v336, 16
      %v467 = vor.u32 %v464, %v465
      %v468 = vrot.slane %v464, 4
      %v470 = vshrl.u32 %v337, 16
      %v472 = vrot.slane %v470, 7
      %v473 = vshll.u32 %v337, 16
      %v475 = vor.u32 %v472, %v473
      %v476 = vsel %vm358, %v468, %v475
      %v477 = vrot.slane %v472, 4
      %v479 = vshrl.u32 %v338, 16
      %v481 = vrot.slane %v479, 7
      %v482 = vshll.u32 %v338, 16
      %v484 = vor.u32 %v481, %v482
      %v485 = vrot.slane %v481, 4
      %v487 = vshrl.u32 %v339, 16
      %v489 = vrot.slane %v487, 7
      %v490 = vshll.u32 %v339, 16
      %v492 = vor.u32 %v489, %v490
      %v493 = vsel %vm358, %v485, %v492
      %v494 = vrot.slane %v489, 4
      %v496 = vshrl.u32 %v340, 16
      %v498 = vrot.slane %v496, 7
      %v499 = vshll.u32 %v340, 16
      %v501 = vor.u32 %v498, %v499
      %v502 = vrot.slane %v498, 4
      %v504 = vshrl.u32 %v341, 16
      %v506 = vrot.slane %v504, 7
      %v507 = vshll.u32 %v341, 16
      %v509 = vor.u32 %v506, %v507
      %v510 = vsel %vm358, %v502, %v509
      %v511 = vrot.slane %v506, 4
      %v513 = vshrl.u32 %v342, 16
      %v515 = vrot.slane %v513, 7
      %v516 = vshll.u32 %v342, 16
      %v518 = vor.u32 %v515, %v516
      %v519 = vrot.slane %v515, 4
      %v521 = vshrl.u32 %v343, 16
      %v523 = vrot.slane %v521, 7
      %v524 = vshll.u32 %v343, 16
      %v526 = vor.u32 %v523, %v524
      %v527 = vsel %vm358, %v519, %v526
      %v528 = vrot.slane %v523, 4
      %v530 = vshrl.u32 %v344, 16
      %v532 = vrot.slane %v530, 7
      %v533 = vshll.u32 %v344, 16
      %v535 = vor.u32 %v532, %v533
      %v536 = vrot.slane %v532, 4
      %v538 = vshrl.u32 %v345, 16
      %v540 = vrot.slane %v538, 7
      %v541 = vshll.u32 %v345, 16
      %v543 = vor.u32 %v540, %v541
      %v544 = vsel %vm358, %v536, %v543
      %v545 = vrot.slane %v540, 4
      %v547 = vshrl.u32 %v346, 16
      %v549 = vrot.slane %v547, 7
      %v550 = vshll.u32 %v346, 16
      %v552 = vor.u32 %v549, %v550
      %v553 = vrot.slane %v549, 4
      %v555 = vshrl.u32 %v347, 16
      %v557 = vrot.slane %v555, 7
      %v558 = vshll.u32 %v347, 16
      %v560 = vor.u32 %v557, %v558
      %v561 = vsel %vm358, %v553, %v560
      %v562 = vrot.slane %v557, 4
      %v564 = vshrl.u32 %v348, 16
      %v566 = vrot.slane %v564, 7
      %v567 = vshll.u32 %v348, 16
      %v569 = vor.u32 %v566, %v567
      %v570 = vrot.slane %v566, 4
      %v572 = vshrl.u32 %v349, 16
      %v574 = vrot.slane %v572, 7
      %v575 = vshll.u32 %v349, 16
      %v577 = vor.u32 %v574, %v575
      %v578 = vsel %vm358, %v570, %v577
      %v579 = vrot.slane %v574, 4
      %v581 = vshrl.u32 %v350, 16
      %v583 = vrot.slane %v581, 7
      %v584 = vshll.u32 %v350, 16
      %v586 = vor.u32 %v583, %v584
      %v587 = vrot.slane %v583, 4
      %v589 = vshrl.u32 %v351, 16
      %v591 = vrot.slane %v589, 7
      %v592 = vshll.u32 %v351, 16
      %v594 = vor.u32 %v591, %v592
      %v595 = vsel %vm358, %v587, %v594
      %v596 = vrot.slane %v591, 4
      %v598 = vshrl.u32 %v352, 16
      %v600 = vrot.slane %v598, 7
      %v601 = vshll.u32 %v352, 16
      %v603 = vor.u32 %v600, %v601
      %v604 = vrot.slane %v600, 4
      %v606 = vshrl.u32 %v353, 16
      %v608 = vrot.slane %v606, 7
      %v609 = vshll.u32 %v353, 16
      %v611 = vor.u32 %v608, %v609
      %v612 = vsel %vm358, %v604, %v611
      %v613 = vrot.slane %v608, 4
      %v615 = vshrl.u32 %v354, 16
      %v617 = vrot.slane %v615, 7
      %v618 = vshll.u32 %v354, 16
      %v620 = vor.u32 %v617, %v618
      %v621 = vrot.slane %v617, 4
      %v623 = vshrl.u32 %v355, 16
      %v625 = vrot.slane %v623, 7
      %v626 = vshll.u32 %v355, 16
      %v628 = vor.u32 %v625, %v626
      %v629 = vsel %vm358, %v621, %v628
      %v630 = vrot.slane %v625, 4
      %s679 = scalar_lea.vmem [#allocation2], 12
      %vm680 = vcmask 125952
      %vm681 = vsmask.f32 7938
      %vm682 = vmand %vm680, %vm681
      %v683 = vld [vmem:[%s679] sm:$0xf]
      %v684 = vsel %vm682, %v365, %v683
      %685 = vst [vmem:[%s679] sm:$0xf] %v684
      %686 = vst.msk [vmem:[%s679 + $0x4] sm:$0xf] %vm172, %v374
      %vm687 = vcmask 122880
      %vm688 = vmand %vm687, %vm356
      %v689 = vld [vmem:[%s679 + $0x8] sm:$0x1]
      %v690 = vsel %vm688, %v375, %v689
      %691 = vst [vmem:[%s679 + $0x8] sm:$0x1] %v690
      %v692 = vld [vmem:[%s679 + $0xc] sm:$0xf]
      %v693 = vsel %vm682, %v382, %v692
      %694 = vst [vmem:[%s679 + $0xc] sm:$0xf] %v693
      %695 = vst.msk [vmem:[%s679 + $0x10] sm:$0xf] %vm172, %v391
      %v696 = vld [vmem:[%s679 + $0x14] sm:$0x1]
      %v697 = vsel %vm688, %v392, %v696
      %698 = vst [vmem:[%s679 + $0x14] sm:$0x1] %v697
      %v699 = vld [vmem:[%s679 + $0x18] sm:$0xf]
      %v700 = vsel %vm682, %v399, %v699
      %701 = vst [vmem:[%s679 + $0x18] sm:$0xf] %v700
      %702 = vst.msk [vmem:[%s679 + $0x1c] sm:$0xf] %vm172, %v408
      %v703 = vld [vmem:[%s679 + $0x20] sm:$0x1]
      %v704 = vsel %vm688, %v409, %v703
      %705 = vst [vmem:[%s679 + $0x20] sm:$0x1] %v704
      %v706 = vld [vmem:[%s679 + $0x24] sm:$0xf]
      %v707 = vsel %vm682, %v416, %v706
      %708 = vst [vmem:[%s679 + $0x24] sm:$0xf] %v707
      %709 = vst.msk [vmem:[%s679 + $0x28] sm:$0xf] %vm172, %v425
      %v710 = vld [vmem:[%s679 + $0x2c] sm:$0x1]
      %v711 = vsel %vm688, %v426, %v710
      %712 = vst [vmem:[%s679 + $0x2c] sm:$0x1] %v711
      %v713 = vld [vmem:[%s679 + $0x30] sm:$0xf]
      %v714 = vsel %vm682, %v433, %v713
      %715 = vst [vmem:[%s679 + $0x30] sm:$0xf] %v714
      %716 = vst.msk [vmem:[%s679 + $0x34] sm:$0xf] %vm172, %v442
      %v717 = vld [vmem:[%s679 + $0x38] sm:$0x1]
      %v718 = vsel %vm688, %v443, %v717
      %719 = vst [vmem:[%s679 + $0x38] sm:$0x1] %v718
      %v720 = vld [vmem:[%s679 + $0x3c] sm:$0xf]
      %v721 = vsel %vm682, %v450, %v720
      %722 = vst [vmem:[%s679 + $0x3c] sm:$0xf] %v721
      %723 = vst.msk [vmem:[%s679 + $0x40] sm:$0xf] %vm172, %v459
      %v724 = vld [vmem:[%s679 + $0x44] sm:$0x1]
      %v725 = vsel %vm688, %v460, %v724
      %726 = vst [vmem:[%s679 + $0x44] sm:$0x1] %v725
      %v727 = vld [vmem:[%s679 + $0x48] sm:$0xf]
      %v728 = vsel %vm682, %v467, %v727
      %729 = vst [vmem:[%s679 + $0x48] sm:$0xf] %v728
      %730 = vst.msk [vmem:[%s679 + $0x4c] sm:$0xf] %vm172, %v476
      %v731 = vld [vmem:[%s679 + $0x50] sm:$0x1]
      %v732 = vsel %vm688, %v477, %v731
      %733 = vst [vmem:[%s679 + $0x50] sm:$0x1] %v732
      %v734 = vld [vmem:[%s679 + $0x54] sm:$0xf]
      %v735 = vsel %vm682, %v484, %v734
      %736 = vst [vmem:[%s679 + $0x54] sm:$0xf] %v735
      %737 = vst.msk [vmem:[%s679 + $0x58] sm:$0xf] %vm172, %v493
      %v738 = vld [vmem:[%s679 + $0x5c] sm:$0x1]
      %v739 = vsel %vm688, %v494, %v738
      %740 = vst [vmem:[%s679 + $0x5c] sm:$0x1] %v739
      %v741 = vld [vmem:[%s679 + $0x60] sm:$0xf]
      %v742 = vsel %vm682, %v501, %v741
      %743 = vst [vmem:[%s679 + $0x60] sm:$0xf] %v742
      %744 = vst.msk [vmem:[%s679 + $0x64] sm:$0xf] %vm172, %v510
      %v745 = vld [vmem:[%s679 + $0x68] sm:$0x1]
      %v746 = vsel %vm688, %v511, %v745
      %747 = vst [vmem:[%s679 + $0x68] sm:$0x1] %v746
      %v748 = vld [vmem:[%s679 + $0x6c] sm:$0xf]
      %v749 = vsel %vm682, %v518, %v748
      %750 = vst [vmem:[%s679 + $0x6c] sm:$0xf] %v749
      %751 = vst.msk [vmem:[%s679 + $0x70] sm:$0xf] %vm172, %v527
      %v752 = vld [vmem:[%s679 + $0x74] sm:$0x1]
      %v753 = vsel %vm688, %v528, %v752
      %754 = vst [vmem:[%s679 + $0x74] sm:$0x1] %v753
      %v755 = vld [vmem:[%s679 + $0x78] sm:$0xf]
      %v756 = vsel %vm682, %v535, %v755
      %757 = vst [vmem:[%s679 + $0x78] sm:$0xf] %v756
      %758 = vst.msk [vmem:[%s679 + $0x7c] sm:$0xf] %vm172, %v544
      %v759 = vld [vmem:[%s679 + $0x80] sm:$0x1]
      %v760 = vsel %vm688, %v545, %v759
      %761 = vst [vmem:[%s679 + $0x80] sm:$0x1] %v760
      %v762 = vld [vmem:[%s679 + $0x84] sm:$0xf]
      %v763 = vsel %vm682, %v552, %v762
      %764 = vst [vmem:[%s679 + $0x84] sm:$0xf] %v763
      %765 = vst.msk [vmem:[%s679 + $0x88] sm:$0xf] %vm172, %v561
      %v766 = vld [vmem:[%s679 + $0x8c] sm:$0x1]
      %v767 = vsel %vm688, %v562, %v766
      %768 = vst [vmem:[%s679 + $0x8c] sm:$0x1] %v767
      %v769 = vld [vmem:[%s679 + $0x90] sm:$0xf]
      %v770 = vsel %vm682, %v569, %v769
      %771 = vst [vmem:[%s679 + $0x90] sm:$0xf] %v770
      %772 = vst.msk [vmem:[%s679 + $0x94] sm:$0xf] %vm172, %v578
      %v773 = vld [vmem:[%s679 + $0x98] sm:$0x1]
      %v774 = vsel %vm688, %v579, %v773
      %775 = vst [vmem:[%s679 + $0x98] sm:$0x1] %v774
      %v776 = vld [vmem:[%s679 + $0x9c] sm:$0xf]
      %v777 = vsel %vm682, %v586, %v776
      %778 = vst [vmem:[%s679 + $0x9c] sm:$0xf] %v777
      %779 = vst.msk [vmem:[%s679 + $0xa0] sm:$0xf] %vm172, %v595
      %v780 = vld [vmem:[%s679 + $0xa4] sm:$0x1]
      %v781 = vsel %vm688, %v596, %v780
      %782 = vst [vmem:[%s679 + $0xa4] sm:$0x1] %v781
      %v783 = vld [vmem:[%s679 + $0xa8] sm:$0xf]
      %v784 = vsel %vm682, %v603, %v783
      %785 = vst [vmem:[%s679 + $0xa8] sm:$0xf] %v784
      %786 = vst.msk [vmem:[%s679 + $0xac] sm:$0xf] %vm172, %v612
      %v787 = vld [vmem:[%s679 + $0xb0] sm:$0x1]
      %v788 = vsel %vm688, %v613, %v787
      %789 = vst [vmem:[%s679 + $0xb0] sm:$0x1] %v788
      %v790 = vld [vmem:[%s679 + $0xb4] sm:$0xf]
      %v791 = vsel %vm682, %v620, %v790
      %792 = vst [vmem:[%s679 + $0xb4] sm:$0xf] %v791
      %793 = vst.msk [vmem:[%s679 + $0xb8] sm:$0xf] %vm172, %v629
      %v794 = vld [vmem:[%s679 + $0xbc] sm:$0x1]
      %v795 = vsel %vm688, %v630, %v794
      %796 = vst [vmem:[%s679 + $0xbc] sm:$0x1] %v795
      %v797 = vld [vmem:[%s2] sm:$0x1]
      %v798 = vld [vmem:[#allocation2] sm:$0xf]
      %v799 = vld [vmem:[#allocation2 + $0x4] sm:$0xf]
      %v800 = vld [vmem:[#allocation2 + $0xc] sm:$0xf]
      %v801 = vld [vmem:[#allocation2 + $0x10] sm:$0xf]
      %v802 = vld [vmem:[#allocation2 + $0x18] sm:$0xf]
      %v803 = vld [vmem:[#allocation2 + $0x1c] sm:$0xf]
      %v804 = vld [vmem:[#allocation2 + $0x24] sm:$0xf]
      %v805 = vld [vmem:[#allocation2 + $0x28] sm:$0xf]
      %v806 = vld [vmem:[#allocation2 + $0x30] sm:$0xf]
      %v807 = vld [vmem:[#allocation2 + $0x34] sm:$0xf]
      %v808 = vld [vmem:[#allocation2 + $0x3c] sm:$0xf]
      %v809 = vld [vmem:[#allocation2 + $0x40] sm:$0xf]
      %v810 = vld [vmem:[#allocation2 + $0x48] sm:$0xf]
      %v811 = vld [vmem:[#allocation2 + $0x4c] sm:$0xf]
      %v812 = vld [vmem:[#allocation2 + $0x54] sm:$0xf]
      %v813 = vld [vmem:[#allocation2 + $0x58] sm:$0xf]
      %v814 = vld [vmem:[%s1] sm:$0xf]
      %v815 = vld [vmem:[%s1 + $0x4] sm:$0xf]
      %v816 = vld [vmem:[#allocation2 + $0x8] sm:$0x1]
      %v817 = vld [vmem:[#allocation2 + $0x14] sm:$0x1]
      %v818 = vld [vmem:[#allocation2 + $0x20] sm:$0x1]
      %v819 = vld [vmem:[#allocation2 + $0x2c] sm:$0x1]
      %v820 = vld [vmem:[#allocation2 + $0x38] sm:$0x1]
      %v821 = vld [vmem:[#allocation2 + $0x44] sm:$0x1]
      %v822 = vld [vmem:[#allocation2 + $0x50] sm:$0x1]
      %v823 = vld [vmem:[#allocation2 + $0x5c] sm:$0x1]
      %v824 = vld [vmem:[%s1 + $0x8] sm:$0xf]
      %v825 = vld [vmem:[%s1 + $0xc] sm:$0xf]
      %vm826 = vsmask.f32 3328
      %vm827 = vsmask.f32 7440
      %vm828 = vmor %vm826, %vm827
      %v830 = vshrl.u32 %v798, 16
      %v832 = vrot.slane %v830, 4
      %v833 = vshll.u32 %v798, 16
      %v835 = vrot.slane %v833, 5
      %v836 = vor.u32 %v832, %v835
      %v837 = vrot.slane %v836, 4
      %v839 = vshll.u32 %v799, 16
      %v841 = vrot.slane %v839, 5
      %v842 = vsel %vm828, %v837, %v841
      %v843 = vshrl.u32 %v799, 16
      %v845 = vrot.slane %v843, 4
      %v846 = vor.u32 %v845, %v841
      %v847 = vrot.slane %v846, 4
      %v849 = vshll.u32 %v816, 16
      %v851 = vrot.slane %v849, 5
      %v852 = vsel %vm828, %v847, %v851
      %v854 = vshrl.u32 %v800, 16
      %v856 = vrot.slane %v854, 4
      %v857 = vshll.u32 %v800, 16
      %v859 = vrot.slane %v857, 5
      %v860 = vor.u32 %v856, %v859
      %v861 = vrot.slane %v860, 4
      %v863 = vshll.u32 %v801, 16
      %v865 = vrot.slane %v863, 5
      %v866 = vsel %vm828, %v861, %v865
      %v867 = vshrl.u32 %v801, 16
      %v869 = vrot.slane %v867, 4
      %v870 = vor.u32 %v869, %v865
      %v871 = vrot.slane %v870, 4
      %v873 = vshll.u32 %v817, 16
      %v875 = vrot.slane %v873, 5
      %v876 = vsel %vm828, %v871, %v875
      %v878 = vshrl.u32 %v802, 16
      %v880 = vrot.slane %v878, 4
      %v881 = vshll.u32 %v802, 16
      %v883 = vrot.slane %v881, 5
      %v884 = vor.u32 %v880, %v883
      %v885 = vrot.slane %v884, 4
      %v887 = vshll.u32 %v803, 16
      %v889 = vrot.slane %v887, 5
      %v890 = vsel %vm828, %v885, %v889
      %v891 = vshrl.u32 %v803, 16
      %v893 = vrot.slane %v891, 4
      %v894 = vor.u32 %v893, %v889
      %v895 = vrot.slane %v894, 4
      %v897 = vshll.u32 %v818, 16
      %v899 = vrot.slane %v897, 5
      %v900 = vsel %vm828, %v895, %v899
      %v902 = vshrl.u32 %v804, 16
      %v904 = vrot.slane %v902, 4
      %v905 = vshll.u32 %v804, 16
      %v907 = vrot.slane %v905, 5
      %v908 = vor.u32 %v904, %v907
      %v909 = vrot.slane %v908, 4
      %v911 = vshll.u32 %v805, 16
      %v913 = vrot.slane %v911, 5
      %v914 = vsel %vm828, %v909, %v913
      %v915 = vshrl.u32 %v805, 16
      %v917 = vrot.slane %v915, 4
      %v918 = vor.u32 %v917, %v913
      %v919 = vrot.slane %v918, 4
      %v921 = vshll.u32 %v819, 16
      %v923 = vrot.slane %v921, 5
      %v924 = vsel %vm828, %v919, %v923
      %v926 = vshrl.u32 %v806, 16
      %v928 = vrot.slane %v926, 4
      %v929 = vshll.u32 %v806, 16
      %v931 = vrot.slane %v929, 5
      %v932 = vor.u32 %v928, %v931
      %v933 = vrot.slane %v932, 4
      %v935 = vshll.u32 %v807, 16
      %v937 = vrot.slane %v935, 5
      %v938 = vsel %vm828, %v933, %v937
      %v939 = vshrl.u32 %v807, 16
      %v941 = vrot.slane %v939, 4
      %v942 = vor.u32 %v941, %v937
      %v943 = vrot.slane %v942, 4
      %v945 = vshll.u32 %v820, 16
      %v947 = vrot.slane %v945, 5
      %v948 = vsel %vm828, %v943, %v947
      %v950 = vshrl.u32 %v808, 16
      %v952 = vrot.slane %v950, 4
      %v953 = vshll.u32 %v808, 16
      %v955 = vrot.slane %v953, 5
      %v956 = vor.u32 %v952, %v955
      %v957 = vrot.slane %v956, 4
      %v959 = vshll.u32 %v809, 16
      %v961 = vrot.slane %v959, 5
      %v962 = vsel %vm828, %v957, %v961
      %v963 = vshrl.u32 %v809, 16
      %v965 = vrot.slane %v963, 4
      %v966 = vor.u32 %v965, %v961
      %v967 = vrot.slane %v966, 4
      %v969 = vshll.u32 %v821, 16
      %v971 = vrot.slane %v969, 5
      %v972 = vsel %vm828, %v967, %v971
      %v974 = vshrl.u32 %v810, 16
      %v976 = vrot.slane %v974, 4
      %v977 = vshll.u32 %v810, 16
      %v979 = vrot.slane %v977, 5
      %v980 = vor.u32 %v976, %v979
      %v981 = vrot.slane %v980, 4
      %v983 = vshll.u32 %v811, 16
      %v985 = vrot.slane %v983, 5
      %v986 = vsel %vm828, %v981, %v985
      %v987 = vshrl.u32 %v811, 16
      %v989 = vrot.slane %v987, 4
      %v990 = vor.u32 %v989, %v985
      %v991 = vrot.slane %v990, 4
      %v993 = vshll.u32 %v822, 16
      %v995 = vrot.slane %v993, 5
      %v996 = vsel %vm828, %v991, %v995
      %v998 = vshrl.u32 %v812, 16
      %v1000 = vrot.slane %v998, 4
      %v1001 = vshll.u32 %v812, 16
      %v1003 = vrot.slane %v1001, 5
      %v1004 = vor.u32 %v1000, %v1003
      %v1005 = vrot.slane %v1004, 4
      %v1007 = vshll.u32 %v813, 16
      %v1009 = vrot.slane %v1007, 5
      %v1010 = vsel %vm828, %v1005, %v1009
      %v1011 = vshrl.u32 %v813, 16
      %v1013 = vrot.slane %v1011, 4
      %v1014 = vor.u32 %v1013, %v1009
      %v1015 = vrot.slane %v1014, 4
      %v1017 = vshll.u32 %v823, 16
      %v1019 = vrot.slane %v1017, 5
      %v1020 = vsel %vm828, %v1015, %v1019
      %v1021 = vunpack.c.l.b16 %v842
      %v1022 = vunpack.c.l.b16 %v852
      %v1023 = vunpack.c.l.b16 %v866
      %v1024 = vunpack.c.l.b16 %v876
      %v1025 = vunpack.c.l.b16 %v890
      %v1026 = vunpack.c.l.b16 %v900
      %v1027 = vunpack.c.l.b16 %v914
      %v1028 = vunpack.c.l.b16 %v924
      %v1029 = vunpack.c.l.b16 %v938
      %v1030 = vunpack.c.l.b16 %v948
      %v1031 = vunpack.c.l.b16 %v962
      %v1032 = vunpack.c.l.b16 %v972
      %v1033 = vunpack.c.l.b16 %v986
      %v1034 = vunpack.c.l.b16 %v996
      %v1035 = vunpack.c.l.b16 %v1010
      %v1036 = vunpack.c.l.b16 %v1020
      %v1037 = vpack.c.b16 %v1022, %v1021
      %v1038 = vpack.c.b16 %v1024, %v1023
      %v1039 = vpack.c.b16 %v1026, %v1025
      %v1040 = vpack.c.b16 %v1028, %v1027
      %v1041 = vpack.c.b16 %v1030, %v1029
      %v1042 = vpack.c.b16 %v1032, %v1031
      %v1043 = vpack.c.b16 %v1034, %v1033
      %v1044 = vpack.c.b16 %v1036, %v1035
      %v1047 = vunpack.c.l.b16 %v824
      %v1048 = vunpack.c.l.b16 %v825
      %v1049 = vpack.c.b16 %v1048, %v1047
      %vm1051 = vcmask 130048
      %v1053 = vsel %vm1051, %v1037, 0
      %v1056 = vsel %vm1051, %v1038, 0
      %v1059 = vsel %vm1051, %v1039, 0
      %v1062 = vsel %vm1051, %v1040, 0
      %v1065 = vsel %vm1051, %v1041, 0
      %v1068 = vsel %vm1051, %v1042, 0
      %v1071 = vsel %vm1051, %v1043, 0
      %v1074 = vsel %vm1051, %v1044, 0
      %1076 = vmatprep.subr.bf16.mxu0 0
      %1077 = vmatpush1.bf16.msra.mxu0 %v1049
      %1078 = vmatprep.subr.bf16.mxu0 0
      %1079 = vmatpush1.bf16.msra.mxu0 0
      %1080 = vmatprep.subr.bf16.mxu0 0
      %1081 = vmatpush1.bf16.msra.mxu0 0
      %1082 = vmatprep.subr.bf16.mxu0 0
      %1083 = vmatpush1.bf16.msra.mxu0 0
      %1084 = vmatprep.subr.bf16.mxu0 0
      %1085 = vmatpush1.bf16.msra.mxu0 0
      %1086 = vmatprep.subr.bf16.mxu0 0
      %1087 = vmatpush1.bf16.msra.mxu0 0
      %1088 = vmatprep.subr.bf16.mxu0 0
      %1089 = vmatpush1.bf16.msra.mxu0 0
      %1090 = vmatprep.subr.bf16.mxu0 0
      %1091 = vmatpush1.bf16.msra.mxu0 0
      %1092 = vmatprep.subr.bf16.mxu0 0
      %1093 = vmatpush1.bf16.msra.mxu0 0
      %1094 = vmatprep.subr.bf16.mxu0 0
      %1095 = vmatpush1.bf16.msra.mxu0 0
      %1096 = vmatprep.subr.bf16.mxu0 0
      %1097 = vmatpush1.bf16.msra.mxu0 0
      %1098 = vmatprep.subr.bf16.mxu0 0
      %1099 = vmatpush1.bf16.msra.mxu0 0
      %1100 = vmatprep.subr.bf16.mxu0 0
      %1101 = vmatpush1.bf16.msra.mxu0 0
      %1102 = vmatprep.subr.bf16.mxu0 0
      %1103 = vmatpush1.bf16.msra.mxu0 0
      %1104 = vmatprep.subr.bf16.mxu0 0
      %1105 = vmatpush1.bf16.msra.mxu0 0
      %1106 = vmatprep.subr.bf16.mxu0 0
      %1107 = vmatpush1.bf16.msra.mxu0 0
      %1108 = vmatprep.mubr.bf16.mxu0 0
      %1109 = vmatmul.mubr.bf16.gmra.mrb[0].mxu0 %v1053
      %v1110 = vpop.f32.mrb[0].mxu0
      %v1111 = vadd.f32 0.0, %v1110
      %v1112 = vpop.f32.mrb[0].mxu0
      %v1113 = vpop.f32.mrb[0].mxu0
      %v1114 = vadd.f32 0.0, %v1113
      %v1115 = vpop.f32.mrb[0].mxu0
      %1116 = vmatprep.mubr.bf16.mxu0 0
      %1117 = vmatmul.mubr.bf16.gmra.mrb[0].mxu0 %v1056
      %v1118 = vpop.f32.mrb[0].mxu0
      %v1119 = vadd.f32 0.0, %v1118
      %v1120 = vpop.f32.mrb[0].mxu0
      %v1121 = vpop.f32.mrb[0].mxu0
      %v1122 = vadd.f32 0.0, %v1121
      %v1123 = vpop.f32.mrb[0].mxu0
      %1124 = vmatprep.mubr.bf16.mxu0 0
      %1125 = vmatmul.mubr.bf16.gmra.mrb[0].mxu0 %v1059
      %v1126 = vpop.f32.mrb[0].mxu0
      %v1127 = vadd.f32 0.0, %v1126
      %v1128 = vpop.f32.mrb[0].mxu0
      %v1129 = vpop.f32.mrb[0].mxu0
      %v1130 = vadd.f32 0.0, %v1129
      %v1131 = vpop.f32.mrb[0].mxu0
      %1132 = vmatprep.mubr.bf16.mxu0 0
      %1133 = vmatmul.mubr.bf16.gmra.mrb[0].mxu0 %v1062
      %v1134 = vpop.f32.mrb[0].mxu0
      %v1135 = vadd.f32 0.0, %v1134
      %v1136 = vpop.f32.mrb[0].mxu0
      %v1137 = vpop.f32.mrb[0].mxu0
      %v1138 = vadd.f32 0.0, %v1137
      %v1139 = vpop.f32.mrb[0].mxu0
      %1140 = vmatprep.mubr.bf16.mxu0 0
      %1141 = vmatmul.mubr.bf16.gmra.mrb[0].mxu0 %v1065
      %v1142 = vpop.f32.mrb[0].mxu0
      %v1143 = vadd.f32 0.0, %v1142
      %v1144 = vpop.f32.mrb[0].mxu0
      %v1145 = vpop.f32.mrb[0].mxu0
      %v1146 = vadd.f32 0.0, %v1145
      %v1147 = vpop.f32.mrb[0].mxu0
      %1148 = vmatprep.mubr.bf16.mxu0 0
      %1149 = vmatmul.mubr.bf16.gmra.mrb[0].mxu0 %v1068
      %v1150 = vpop.f32.mrb[0].mxu0
      %v1151 = vadd.f32 0.0, %v1150
      %v1152 = vpop.f32.mrb[0].mxu0
      %v1153 = vpop.f32.mrb[0].mxu0
      %v1154 = vadd.f32 0.0, %v1153
      %v1155 = vpop.f32.mrb[0].mxu0
      %1156 = vmatprep.mubr.bf16.mxu0 0
      %1157 = vmatmul.mubr.bf16.gmra.mrb[0].mxu0 %v1071
      %v1158 = vpop.f32.mrb[0].mxu0
      %v1159 = vadd.f32 0.0, %v1158
      %v1160 = vpop.f32.mrb[0].mxu0
      %v1161 = vpop.f32.mrb[0].mxu0
      %v1162 = vadd.f32 0.0, %v1161
      %v1163 = vpop.f32.mrb[0].mxu0
      %1164 = vmatprep.mubr.bf16.mxu0 0
      %1165 = vmatmul.mubr.bf16.gmra.mrb[0].mxu0 %v1074
      %v1166 = vpop.f32.mrb[0].mxu0
      %v1167 = vadd.f32 0.0, %v1166
      %v1168 = vpop.f32.mrb[0].mxu0
      %v1169 = vpop.f32.mrb[0].mxu0
      %v1170 = vadd.f32 0.0, %v1169
      %v1171 = vpop.f32.mrb[0].mxu0
      %1172 = vdwg.mxu0
      %v1189 = vunpack.c.l.b16 %v798
      %v1190 = vunpack.c.l.b16 %v799
      %v1191 = vunpack.c.l.b16 %v800
      %v1192 = vunpack.c.l.b16 %v801
      %v1193 = vunpack.c.l.b16 %v802
      %v1194 = vunpack.c.l.b16 %v803
      %v1195 = vunpack.c.l.b16 %v804
      %v1196 = vunpack.c.l.b16 %v805
      %v1197 = vunpack.c.l.b16 %v806
      %v1198 = vunpack.c.l.b16 %v807
      %v1199 = vunpack.c.l.b16 %v808
      %v1200 = vunpack.c.l.b16 %v809
      %v1201 = vunpack.c.l.b16 %v810
      %v1202 = vunpack.c.l.b16 %v811
      %v1203 = vunpack.c.l.b16 %v812
      %v1204 = vunpack.c.l.b16 %v813
      %v1205 = vpack.c.b16 %v1190, %v1189
      %v1206 = vpack.c.b16 %v1192, %v1191
      %v1207 = vpack.c.b16 %v1194, %v1193
      %v1208 = vpack.c.b16 %v1196, %v1195
      %v1209 = vpack.c.b16 %v1198, %v1197
      %v1210 = vpack.c.b16 %v1200, %v1199
      %v1211 = vpack.c.b16 %v1202, %v1201
      %v1212 = vpack.c.b16 %v1204, %v1203
      %v1215 = vunpack.c.l.b16 %v814
      %v1216 = vunpack.c.l.b16 %v815
      %v1217 = vpack.c.b16 %v1216, %v1215
      %v1220 = vsel %vm1051, %v1205, 0
      %v1223 = vsel %vm1051, %v1206, 0
      %v1226 = vsel %vm1051, %v1207, 0
      %v1229 = vsel %vm1051, %v1208, 0
      %v1232 = vsel %vm1051, %v1209, 0
      %v1235 = vsel %vm1051, %v1210, 0
      %v1238 = vsel %vm1051, %v1211, 0
      %v1241 = vsel %vm1051, %v1212, 0
      %1243 = vmatprep.subr.bf16.mxu0 0
      %1244 = vmatpush1.bf16.msra.mxu0 %v1217
      %1245 = vmatprep.subr.bf16.mxu0 0
      %1246 = vmatpush1.bf16.msra.mxu0 0
      %1247 = vmatprep.subr.bf16.mxu0 0
      %1248 = vmatpush1.bf16.msra.mxu0 0
      %1249 = vmatprep.subr.bf16.mxu0 0
      %1250 = vmatpush1.bf16.msra.mxu0 0
      %1251 = vmatprep.subr.bf16.mxu0 0
      %1252 = vmatpush1.bf16.msra.mxu0 0
      %1253 = vmatprep.subr.bf16.mxu0 0
      %1254 = vmatpush1.bf16.msra.mxu0 0
      %1255 = vmatprep.subr.bf16.mxu0 0
      %1256 = vmatpush1.bf16.msra.mxu0 0
      %1257 = vmatprep.subr.bf16.mxu0 0
      %1258 = vmatpush1.bf16.msra.mxu0 0
      %1259 = vmatprep.subr.bf16.mxu0 0
      %1260 = vmatpush1.bf16.msra.mxu0 0
      %1261 = vmatprep.subr.bf16.mxu0 0
      %1262 = vmatpush1.bf16.msra.mxu0 0
      %1263 = vmatprep.subr.bf16.mxu0 0
      %1264 = vmatpush1.bf16.msra.mxu0 0
      %1265 = vmatprep.subr.bf16.mxu0 0
      %1266 = vmatpush1.bf16.msra.mxu0 0
      %1267 = vmatprep.subr.bf16.mxu0 0
      %1268 = vmatpush1.bf16.msra.mxu0 0
      %1269 = vmatprep.subr.bf16.mxu0 0
      %1270 = vmatpush1.bf16.msra.mxu0 0
      %1271 = vmatprep.subr.bf16.mxu0 0
      %1272 = vmatpush1.bf16.msra.mxu0 0
      %1273 = vmatprep.subr.bf16.mxu0 0
      %1274 = vmatpush1.bf16.msra.mxu0 0
      %1275 = vmatprep.mubr.bf16.mxu0 0
      %1276 = vmatmul.mubr.bf16.gmra.mrb[0].mxu0 %v1220
      %v1277 = vpop.f32.mrb[0].mxu0
      %v1278 = vadd.f32 %v1111, %v1277
      %v1279 = vpop.f32.mrb[0].mxu0
      %v1280 = vpop.f32.mrb[0].mxu0
      %v1281 = vadd.f32 %v1114, %v1280
      %v1282 = vpop.f32.mrb[0].mxu0
      %1283 = vmatprep.mubr.bf16.mxu0 0
      %1284 = vmatmul.mubr.bf16.gmra.mrb[0].mxu0 %v1223
      %v1285 = vpop.f32.mrb[0].mxu0
      %v1286 = vadd.f32 %v1119, %v1285
      %v1287 = vpop.f32.mrb[0].mxu0
      %v1288 = vpop.f32.mrb[0].mxu0
      %v1289 = vadd.f32 %v1122, %v1288
      %v1290 = vpop.f32.mrb[0].mxu0
      %1291 = vmatprep.mubr.bf16.mxu0 0
      %1292 = vmatmul.mubr.bf16.gmra.mrb[0].mxu0 %v1226
      %v1293 = vpop.f32.mrb[0].mxu0
      %v1294 = vadd.f32 %v1127, %v1293
      %v1295 = vpop.f32.mrb[0].mxu0
      %v1296 = vpop.f32.mrb[0].mxu0
      %v1297 = vadd.f32 %v1130, %v1296
      %v1298 = vpop.f32.mrb[0].mxu0
      %1299 = vmatprep.mubr.bf16.mxu0 0
      %1300 = vmatmul.mubr.bf16.gmra.mrb[0].mxu0 %v1229
      %v1301 = vpop.f32.mrb[0].mxu0
      %v1302 = vadd.f32 %v1135, %v1301
      %v1303 = vpop.f32.mrb[0].mxu0
      %v1304 = vpop.f32.mrb[0].mxu0
      %v1305 = vadd.f32 %v1138, %v1304
      %v1306 = vpop.f32.mrb[0].mxu0
      %1307 = vmatprep.mubr.bf16.mxu0 0
      %1308 = vmatmul.mubr.bf16.gmra.mrb[0].mxu0 %v1232
      %v1309 = vpop.f32.mrb[0].mxu0
      %v1310 = vadd.f32 %v1143, %v1309
      %v1311 = vpop.f32.mrb[0].mxu0
      %v1312 = vpop.f32.mrb[0].mxu0
      %v1313 = vadd.f32 %v1146, %v1312
      %v1314 = vpop.f32.mrb[0].mxu0
      %1315 = vmatprep.mubr.bf16.mxu0 0
      %1316 = vmatmul.mubr.bf16.gmra.mrb[0].mxu0 %v1235
      %v1317 = vpop.f32.mrb[0].mxu0
      %v1318 = vadd.f32 %v1151, %v1317
      %v1319 = vpop.f32.mrb[0].mxu0
      %v1320 = vpop.f32.mrb[0].mxu0
      %v1321 = vadd.f32 %v1154, %v1320
      %v1322 = vpop.f32.mrb[0].mxu0
      %1323 = vmatprep.mubr.bf16.mxu0 0
      %1324 = vmatmul.mubr.bf16.gmra.mrb[0].mxu0 %v1238
      %v1325 = vpop.f32.mrb[0].mxu0
      %v1326 = vadd.f32 %v1159, %v1325
      %v1327 = vpop.f32.mrb[0].mxu0
      %v1328 = vpop.f32.mrb[0].mxu0
      %v1329 = vadd.f32 %v1162, %v1328
      %v1330 = vpop.f32.mrb[0].mxu0
      %1331 = vmatprep.mubr.bf16.mxu0 0
      %1332 = vmatmul.mubr.bf16.gmra.mrb[0].mxu0 %v1241
      %v1333 = vpop.f32.mrb[0].mxu0
      %v1334 = vadd.f32 %v1167, %v1333
      %v1335 = vpop.f32.mrb[0].mxu0
      %v1336 = vpop.f32.mrb[0].mxu0
      %v1337 = vadd.f32 %v1170, %v1336
      %v1338 = vpop.f32.mrb[0].mxu0
      %1339 = vdwg.mxu0
      %v1340 = vld [vmem:[#allocation2] sm:$0xe]
      %v1341 = vld [vmem:[#allocation2 + $0xc] sm:$0xe]
      %v1342 = vld [vmem:[#allocation2 + $0x18] sm:$0xe]
      %v1343 = vld [vmem:[#allocation2 + $0x24] sm:$0xe]
      %v1344 = vld [vmem:[#allocation2 + $0x30] sm:$0xe]
      %v1345 = vld [vmem:[#allocation2 + $0x3c] sm:$0xe]
      %v1346 = vld [vmem:[#allocation2 + $0x48] sm:$0xe]
      %v1347 = vld [vmem:[#allocation2 + $0x54] sm:$0xe]
      %v1348 = vld [vmem:[%s1 + $0x10] sm:$0xf]
      %v1349 = vld [vmem:[%s1 + $0x14] sm:$0xf]
      %vm1366 = vcmask 1042432
      %vm1367 = vcmask 1046532
      %vm1368 = vmor %vm1366, %vm1367
      %v1369 = vrot.slane %v1340, 5
      %v1370 = vrot.slane %v1369, 4
      %v1371 = vrot.slane %v799, 5
      %v1372 = vsel %vm1368, %v1370, %v1371
      %v1373 = vrot.slane %v1371, 4
      %v1374 = vrot.slane %v816, 5
      %v1375 = vsel %vm1368, %v1373, %v1374
      %v1376 = vrot.slane %v1341, 5
      %v1377 = vrot.slane %v1376, 4
      %v1378 = vrot.slane %v801, 5
      %v1379 = vsel %vm1368, %v1377, %v1378
      %v1380 = vrot.slane %v1378, 4
      %v1381 = vrot.slane %v817, 5
      %v1382 = vsel %vm1368, %v1380, %v1381
      %v1383 = vrot.slane %v1342, 5
      %v1384 = vrot.slane %v1383, 4
      %v1385 = vrot.slane %v803, 5
      %v1386 = vsel %vm1368, %v1384, %v1385
      %v1387 = vrot.slane %v1385, 4
      %v1388 = vrot.slane %v818, 5
      %v1389 = vsel %vm1368, %v1387, %v1388
      %v1390 = vrot.slane %v1343, 5
      %v1391 = vrot.slane %v1390, 4
      %v1392 = vrot.slane %v805, 5
      %v1393 = vsel %vm1368, %v1391, %v1392
      %v1394 = vrot.slane %v1392, 4
      %v1395 = vrot.slane %v819, 5
      %v1396 = vsel %vm1368, %v1394, %v1395
      %v1397 = vrot.slane %v1344, 5
      %v1398 = vrot.slane %v1397, 4
      %v1399 = vrot.slane %v807, 5
      %v1400 = vsel %vm1368, %v1398, %v1399
      %v1401 = vrot.slane %v1399, 4
      %v1402 = vrot.slane %v820, 5
      %v1403 = vsel %vm1368, %v1401, %v1402
      %v1404 = vrot.slane %v1345, 5
      %v1405 = vrot.slane %v1404, 4
      %v1406 = vrot.slane %v809, 5
      %v1407 = vsel %vm1368, %v1405, %v1406
      %v1408 = vrot.slane %v1406, 4
      %v1409 = vrot.slane %v821, 5
      %v1410 = vsel %vm1368, %v1408, %v1409
      %v1411 = vrot.slane %v1346, 5
      %v1412 = vrot.slane %v1411, 4
      %v1413 = vrot.slane %v811, 5
      %v1414 = vsel %vm1368, %v1412, %v1413
      %v1415 = vrot.slane %v1413, 4
      %v1416 = vrot.slane %v822, 5
      %v1417 = vsel %vm1368, %v1415, %v1416
      %v1418 = vrot.slane %v1347, 5
      %v1419 = vrot.slane %v1418, 4
      %v1420 = vrot.slane %v813, 5
      %v1421 = vsel %vm1368, %v1419, %v1420
      %v1422 = vrot.slane %v1420, 4
      %v1423 = vrot.slane %v823, 5
      %v1424 = vsel %vm1368, %v1422, %v1423
      %v1425 = vunpack.c.l.b16 %v1372
      %v1426 = vunpack.c.l.b16 %v1375
      %v1427 = vunpack.c.l.b16 %v1379
      %v1428 = vunpack.c.l.b16 %v1382
      %v1429 = vunpack.c.l.b16 %v1386
      %v1430 = vunpack.c.l.b16 %v1389
      %v1431 = vunpack.c.l.b16 %v1393
      %v1432 = vunpack.c.l.b16 %v1396
      %v1433 = vunpack.c.l.b16 %v1400
      %v1434 = vunpack.c.l.b16 %v1403
      %v1435 = vunpack.c.l.b16 %v1407
      %v1436 = vunpack.c.l.b16 %v1410
      %v1437 = vunpack.c.l.b16 %v1414
      %v1438 = vunpack.c.l.b16 %v1417
      %v1439 = vunpack.c.l.b16 %v1421
      %v1440 = vunpack.c.l.b16 %v1424
      %v1441 = vpack.c.b16 %v1426, %v1425
      %v1442 = vpack.c.b16 %v1428, %v1427
      %v1443 = vpack.c.b16 %v1430, %v1429
      %v1444 = vpack.c.b16 %v1432, %v1431
      %v1445 = vpack.c.b16 %v1434, %v1433
      %v1446 = vpack.c.b16 %v1436, %v1435
      %v1447 = vpack.c.b16 %v1438, %v1437
      %v1448 = vpack.c.b16 %v1440, %v1439
      %v1451 = vunpack.c.l.b16 %v1348
      %v1452 = vunpack.c.l.b16 %v1349
      %v1453 = vpack.c.b16 %v1452, %v1451
      %v1456 = vsel %vm1051, %v1441, 0
      %v1459 = vsel %vm1051, %v1442, 0
      %v1462 = vsel %vm1051, %v1443, 0
      %v1465 = vsel %vm1051, %v1444, 0
      %v1468 = vsel %vm1051, %v1445, 0
      %v1471 = vsel %vm1051, %v1446, 0
      %v1474 = vsel %vm1051, %v1447, 0
      %v1477 = vsel %vm1051, %v1448, 0
      %1479 = vmatprep.subr.bf16.mxu0 0
      %1480 = vmatpush1.bf16.msra.mxu0 %v1453
      %1481 = vmatprep.subr.bf16.mxu0 0
      %1482 = vmatpush1.bf16.msra.mxu0 0
      %1483 = vmatprep.subr.bf16.mxu0 0
      %1484 = vmatpush1.bf16.msra.mxu0 0
      %1485 = vmatprep.subr.bf16.mxu0 0
      %1486 = vmatpush1.bf16.msra.mxu0 0
      %1487 = vmatprep.subr.bf16.mxu0 0
      %1488 = vmatpush1.bf16.msra.mxu0 0
      %1489 = vmatprep.subr.bf16.mxu0 0
      %1490 = vmatpush1.bf16.msra.mxu0 0
      %1491 = vmatprep.subr.bf16.mxu0 0
      %1492 = vmatpush1.bf16.msra.mxu0 0
      %1493 = vmatprep.subr.bf16.mxu0 0
      %1494 = vmatpush1.bf16.msra.mxu0 0
      %1495 = vmatprep.subr.bf16.mxu0 0
      %1496 = vmatpush1.bf16.msra.mxu0 0
      %1497 = vmatprep.subr.bf16.mxu0 0
      %1498 = vmatpush1.bf16.msra.mxu0 0
      %1499 = vmatprep.subr.bf16.mxu0 0
      %1500 = vmatpush1.bf16.msra.mxu0 0
      %1501 = vmatprep.subr.bf16.mxu0 0
      %1502 = vmatpush1.bf16.msra.mxu0 0
      %1503 = vmatprep.subr.bf16.mxu0 0
      %1504 = vmatpush1.bf16.msra.mxu0 0
      %1505 = vmatprep.subr.bf16.mxu0 0
      %1506 = vmatpush1.bf16.msra.mxu0 0
      %1507 = vmatprep.subr.bf16.mxu0 0
      %1508 = vmatpush1.bf16.msra.mxu0 0
      %1509 = vmatprep.subr.bf16.mxu0 0
      %1510 = vmatpush1.bf16.msra.mxu0 0
      %1511 = vmatprep.mubr.bf16.mxu0 0
      %1512 = vmatmul.mubr.bf16.gmra.mrb[0].mxu0 %v1456
      %v1513 = vpop.f32.mrb[0].mxu0
      %v1514 = vadd.f32 0.0, %v1513
      %v1515 = vpop.f32.mrb[0].mxu0
      %v1516 = vpop.f32.mrb[0].mxu0
      %v1517 = vadd.f32 0.0, %v1516
      %v1518 = vpop.f32.mrb[0].mxu0
      %1519 = vmatprep.mubr.bf16.mxu0 0
      %1520 = vmatmul.mubr.bf16.gmra.mrb[0].mxu0 %v1459
      %v1521 = vpop.f32.mrb[0].mxu0
      %v1522 = vadd.f32 0.0, %v1521
      %v1523 = vpop.f32.mrb[0].mxu0
      %v1524 = vpop.f32.mrb[0].mxu0
      %v1525 = vadd.f32 0.0, %v1524
      %v1526 = vpop.f32.mrb[0].mxu0
      %1527 = vmatprep.mubr.bf16.mxu0 0
      %1528 = vmatmul.mubr.bf16.gmra.mrb[0].mxu0 %v1462
      %v1529 = vpop.f32.mrb[0].mxu0
      %v1530 = vadd.f32 0.0, %v1529
      %v1531 = vpop.f32.mrb[0].mxu0
      %v1532 = vpop.f32.mrb[0].mxu0
      %v1533 = vadd.f32 0.0, %v1532
      %v1534 = vpop.f32.mrb[0].mxu0
      %1535 = vmatprep.mubr.bf16.mxu0 0
      %1536 = vmatmul.mubr.bf16.gmra.mrb[0].mxu0 %v1465
      %v1537 = vpop.f32.mrb[0].mxu0
      %v1538 = vadd.f32 0.0, %v1537
      %v1539 = vpop.f32.mrb[0].mxu0
      %v1540 = vpop.f32.mrb[0].mxu0
      %v1541 = vadd.f32 0.0, %v1540
      %v1542 = vpop.f32.mrb[0].mxu0
      %1543 = vmatprep.mubr.bf16.mxu0 0
      %1544 = vmatmul.mubr.bf16.gmra.mrb[0].mxu0 %v1468
      %v1545 = vpop.f32.mrb[0].mxu0
      %v1546 = vadd.f32 0.0, %v1545
      %v1547 = vpop.f32.mrb[0].mxu0
      %v1548 = vpop.f32.mrb[0].mxu0
      %v1549 = vadd.f32 0.0, %v1548
      %v1550 = vpop.f32.mrb[0].mxu0
      %1551 = vmatprep.mubr.bf16.mxu0 0
      %1552 = vmatmul.mubr.bf16.gmra.mrb[0].mxu0 %v1471
      %v1553 = vpop.f32.mrb[0].mxu0
      %v1554 = vadd.f32 0.0, %v1553
      %v1555 = vpop.f32.mrb[0].mxu0
      %v1556 = vpop.f32.mrb[0].mxu0
      %v1557 = vadd.f32 0.0, %v1556
      %v1558 = vpop.f32.mrb[0].mxu0
      %1559 = vmatprep.mubr.bf16.mxu0 0
      %1560 = vmatmul.mubr.bf16.gmra.mrb[0].mxu0 %v1474
      %v1561 = vpop.f32.mrb[0].mxu0
      %v1562 = vadd.f32 0.0, %v1561
      %v1563 = vpop.f32.mrb[0].mxu0
      %v1564 = vpop.f32.mrb[0].mxu0
      %v1565 = vadd.f32 0.0, %v1564
      %v1566 = vpop.f32.mrb[0].mxu0
      %1567 = vmatprep.mubr.bf16.mxu0 0
      %1568 = vmatmul.mubr.bf16.gmra.mrb[0].mxu0 %v1477
      %v1569 = vpop.f32.mrb[0].mxu0
      %v1570 = vadd.f32 0.0, %v1569
      %v1571 = vpop.f32.mrb[0].mxu0
      %v1572 = vpop.f32.mrb[0].mxu0
      %v1573 = vadd.f32 0.0, %v1572
      %v1574 = vpop.f32.mrb[0].mxu0
      %1575 = vdwg.mxu0
      %v1576 = vadd.f32 %v1278, %v1514
      %v1577 = vadd.f32 %v1281, %v1517
      %v1578 = vadd.f32 %v1286, %v1522
      %v1579 = vadd.f32 %v1289, %v1525
      %v1580 = vadd.f32 %v1294, %v1530
      %v1581 = vadd.f32 %v1297, %v1533
      %v1582 = vadd.f32 %v1302, %v1538
      %v1583 = vadd.f32 %v1305, %v1541
      %v1584 = vadd.f32 %v1310, %v1546
      %v1585 = vadd.f32 %v1313, %v1549
      %v1586 = vadd.f32 %v1318, %v1554
      %v1587 = vadd.f32 %v1321, %v1557
      %v1588 = vadd.f32 %v1326, %v1562
      %v1589 = vadd.f32 %v1329, %v1565
      %v1590 = vadd.f32 %v1334, %v1570
      %v1591 = vadd.f32 %v1337, %v1573
      %v1592 = vld [vmem:[%s679] sm:$0xf]
      %v1593 = vld [vmem:[%s679 + $0x4] sm:$0xf]
      %v1594 = vld [vmem:[%s679 + $0xc] sm:$0xf]
      %v1595 = vld [vmem:[%s679 + $0x10] sm:$0xf]
      %v1596 = vld [vmem:[%s679 + $0x18] sm:$0xf]
      %v1597 = vld [vmem:[%s679 + $0x1c] sm:$0xf]
      %v1598 = vld [vmem:[%s679 + $0x24] sm:$0xf]
      %v1599 = vld [vmem:[%s679 + $0x28] sm:$0xf]
      %v1600 = vld [vmem:[%s679 + $0x30] sm:$0xf]
      %v1601 = vld [vmem:[%s679 + $0x34] sm:$0xf]
      %v1602 = vld [vmem:[%s679 + $0x3c] sm:$0xf]
      %v1603 = vld [vmem:[%s679 + $0x40] sm:$0xf]
      %v1604 = vld [vmem:[%s679 + $0x48] sm:$0xf]
      %v1605 = vld [vmem:[%s679 + $0x4c] sm:$0xf]
      %v1606 = vld [vmem:[%s679 + $0x54] sm:$0xf]
      %v1607 = vld [vmem:[%s679 + $0x58] sm:$0xf]
      %v1608 = vld [vmem:[%s1 + $0x18] sm:$0xf]
      %v1609 = vld [vmem:[%s1 + $0x1c] sm:$0xf]
      %v1626 = vunpack.c.l.b16 %v1592
      %v1627 = vunpack.c.l.b16 %v1593
      %v1628 = vunpack.c.l.b16 %v1594
      %v1629 = vunpack.c.l.b16 %v1595
      %v1630 = vunpack.c.l.b16 %v1596
      %v1631 = vunpack.c.l.b16 %v1597
      %v1632 = vunpack.c.l.b16 %v1598
      %v1633 = vunpack.c.l.b16 %v1599
      %v1634 = vunpack.c.l.b16 %v1600
      %v1635 = vunpack.c.l.b16 %v1601
      %v1636 = vunpack.c.l.b16 %v1602
      %v1637 = vunpack.c.l.b16 %v1603
      %v1638 = vunpack.c.l.b16 %v1604
      %v1639 = vunpack.c.l.b16 %v1605
      %v1640 = vunpack.c.l.b16 %v1606
      %v1641 = vunpack.c.l.b16 %v1607
      %v1642 = vpack.c.b16 %v1627, %v1626
      %v1643 = vpack.c.b16 %v1629, %v1628
      %v1644 = vpack.c.b16 %v1631, %v1630
      %v1645 = vpack.c.b16 %v1633, %v1632
      %v1646 = vpack.c.b16 %v1635, %v1634
      %v1647 = vpack.c.b16 %v1637, %v1636
      %v1648 = vpack.c.b16 %v1639, %v1638
      %v1649 = vpack.c.b16 %v1641, %v1640
      %v1652 = vunpack.c.l.b16 %v1608
      %v1653 = vunpack.c.l.b16 %v1609
      %v1654 = vpack.c.b16 %v1653, %v1652
      %v1657 = vsel %vm1051, %v1642, 0
      %v1660 = vsel %vm1051, %v1643, 0
      %v1663 = vsel %vm1051, %v1644, 0
      %v1666 = vsel %vm1051, %v1645, 0
      %v1669 = vsel %vm1051, %v1646, 0
      %v1672 = vsel %vm1051, %v1647, 0
      %v1675 = vsel %vm1051, %v1648, 0
      %v1678 = vsel %vm1051, %v1649, 0
      %1680 = vmatprep.subr.bf16.mxu0 0
      %1681 = vmatpush1.bf16.msra.mxu0 %v1654
      %1682 = vmatprep.subr.bf16.mxu0 0
      %1683 = vmatpush1.bf16.msra.mxu0 0
      %1684 = vmatprep.subr.bf16.mxu0 0
      %1685 = vmatpush1.bf16.msra.mxu0 0
      %1686 = vmatprep.subr.bf16.mxu0 0
      %1687 = vmatpush1.bf16.msra.mxu0 0
      %1688 = vmatprep.subr.bf16.mxu0 0
      %1689 = vmatpush1.bf16.msra.mxu0 0
      %1690 = vmatprep.subr.bf16.mxu0 0
      %1691 = vmatpush1.bf16.msra.mxu0 0
      %1692 = vmatprep.subr.bf16.mxu0 0
      %1693 = vmatpush1.bf16.msra.mxu0 0
      %1694 = vmatprep.subr.bf16.mxu0 0
      %1695 = vmatpush1.bf16.msra.mxu0 0
      %1696 = vmatprep.subr.bf16.mxu0 0
      %1697 = vmatpush1.bf16.msra.mxu0 0
      %1698 = vmatprep.subr.bf16.mxu0 0
      %1699 = vmatpush1.bf16.msra.mxu0 0
      %1700 = vmatprep.subr.bf16.mxu0 0
      %1701 = vmatpush1.bf16.msra.mxu0 0
      %1702 = vmatprep.subr.bf16.mxu0 0
      %1703 = vmatpush1.bf16.msra.mxu0 0
      %1704 = vmatprep.subr.bf16.mxu0 0
      %1705 = vmatpush1.bf16.msra.mxu0 0
      %1706 = vmatprep.subr.bf16.mxu0 0
      %1707 = vmatpush1.bf16.msra.mxu0 0
      %1708 = vmatprep.subr.bf16.mxu0 0
      %1709 = vmatpush1.bf16.msra.mxu0 0
      %1710 = vmatprep.subr.bf16.mxu0 0
      %1711 = vmatpush1.bf16.msra.mxu0 0
      %1712 = vmatprep.mubr.bf16.mxu0 0
      %1713 = vmatmul.mubr.bf16.gmra.mrb[0].mxu0 %v1657
      %v1714 = vpop.f32.mrb[0].mxu0
      %v1715 = vadd.f32 0.0, %v1714
      %v1716 = vpop.f32.mrb[0].mxu0
      %v1717 = vpop.f32.mrb[0].mxu0
      %v1718 = vadd.f32 0.0, %v1717
      %v1719 = vpop.f32.mrb[0].mxu0
      %1720 = vmatprep.mubr.bf16.mxu0 0
      %1721 = vmatmul.mubr.bf16.gmra.mrb[0].mxu0 %v1660
      %v1722 = vpop.f32.mrb[0].mxu0
      %v1723 = vadd.f32 0.0, %v1722
      %v1724 = vpop.f32.mrb[0].mxu0
      %v1725 = vpop.f32.mrb[0].mxu0
      %v1726 = vadd.f32 0.0, %v1725
      %v1727 = vpop.f32.mrb[0].mxu0
      %1728 = vmatprep.mubr.bf16.mxu0 0
      %1729 = vmatmul.mubr.bf16.gmra.mrb[0].mxu0 %v1663
      %v1730 = vpop.f32.mrb[0].mxu0
      %v1731 = vadd.f32 0.0, %v1730
      %v1732 = vpop.f32.mrb[0].mxu0
      %v1733 = vpop.f32.mrb[0].mxu0
      %v1734 = vadd.f32 0.0, %v1733
      %v1735 = vpop.f32.mrb[0].mxu0
      %1736 = vmatprep.mubr.bf16.mxu0 0
      %1737 = vmatmul.mubr.bf16.gmra.mrb[0].mxu0 %v1666
      %v1738 = vpop.f32.mrb[0].mxu0
      %v1739 = vadd.f32 0.0, %v1738
      %v1740 = vpop.f32.mrb[0].mxu0
      %v1741 = vpop.f32.mrb[0].mxu0
      %v1742 = vadd.f32 0.0, %v1741
      %v1743 = vpop.f32.mrb[0].mxu0
      %1744 = vmatprep.mubr.bf16.mxu0 0
      %1745 = vmatmul.mubr.bf16.gmra.mrb[0].mxu0 %v1669
      %v1746 = vpop.f32.mrb[0].mxu0
      %v1747 = vadd.f32 0.0, %v1746
      %v1748 = vpop.f32.mrb[0].mxu0
      %v1749 = vpop.f32.mrb[0].mxu0
      %v1750 = vadd.f32 0.0, %v1749
      %v1751 = vpop.f32.mrb[0].mxu0
      %1752 = vmatprep.mubr.bf16.mxu0 0
      %1753 = vmatmul.mubr.bf16.gmra.mrb[0].mxu0 %v1672
      %v1754 = vpop.f32.mrb[0].mxu0
      %v1755 = vadd.f32 0.0, %v1754
      %v1756 = vpop.f32.mrb[0].mxu0
      %v1757 = vpop.f32.mrb[0].mxu0
      %v1758 = vadd.f32 0.0, %v1757
      %v1759 = vpop.f32.mrb[0].mxu0
      %1760 = vmatprep.mubr.bf16.mxu0 0
      %1761 = vmatmul.mubr.bf16.gmra.mrb[0].mxu0 %v1675
      %v1762 = vpop.f32.mrb[0].mxu0
      %v1763 = vadd.f32 0.0, %v1762
      %v1764 = vpop.f32.mrb[0].mxu0
      %v1765 = vpop.f32.mrb[0].mxu0
      %v1766 = vadd.f32 0.0, %v1765
      %v1767 = vpop.f32.mrb[0].mxu0
      %1768 = vmatprep.mubr.bf16.mxu0 0
      %1769 = vmatmul.mubr.bf16.gmra.mrb[0].mxu0 %v1678
      %v1770 = vpop.f32.mrb[0].mxu0
      %v1771 = vadd.f32 0.0, %v1770
      %v1772 = vpop.f32.mrb[0].mxu0
      %v1773 = vpop.f32.mrb[0].mxu0
      %v1774 = vadd.f32 0.0, %v1773
      %v1775 = vpop.f32.mrb[0].mxu0
      %1776 = vdwg.mxu0
      %v1777 = vadd.f32 %v1576, %v1715
      %v1778 = vadd.f32 %v1577, %v1718
      %v1779 = vadd.f32 %v1578, %v1723
      %v1780 = vadd.f32 %v1579, %v1726
      %v1781 = vadd.f32 %v1580, %v1731
      %v1782 = vadd.f32 %v1581, %v1734
      %v1783 = vadd.f32 %v1582, %v1739
      %v1784 = vadd.f32 %v1583, %v1742
      %v1785 = vadd.f32 %v1584, %v1747
      %v1786 = vadd.f32 %v1585, %v1750
      %v1787 = vadd.f32 %v1586, %v1755
      %v1788 = vadd.f32 %v1587, %v1758
      %v1789 = vadd.f32 %v1588, %v1763
      %v1790 = vadd.f32 %v1589, %v1766
      %v1791 = vadd.f32 %v1590, %v1771
      %v1792 = vadd.f32 %v1591, %v1774
      %v1793 = vld [vmem:[%s679] sm:$0xf]
      %v1794 = vld [vmem:[%s679 + $0x4] sm:$0xf]
      %v1795 = vld [vmem:[%s679 + $0x8] sm:$0x1]
      %v1796 = vld [vmem:[%s679 + $0xc] sm:$0xf]
      %v1797 = vld [vmem:[%s679 + $0x10] sm:$0xf]
      %v1798 = vld [vmem:[%s679 + $0x14] sm:$0x1]
      %v1799 = vld [vmem:[%s679 + $0x18] sm:$0xf]
      %v1800 = vld [vmem:[%s679 + $0x1c] sm:$0xf]
      %v1801 = vld [vmem:[%s679 + $0x20] sm:$0x1]
      %v1802 = vld [vmem:[%s679 + $0x24] sm:$0xf]
      %v1803 = vld [vmem:[%s679 + $0x28] sm:$0xf]
      %v1804 = vld [vmem:[%s679 + $0x2c] sm:$0x1]
      %v1805 = vld [vmem:[%s679 + $0x30] sm:$0xf]
      %v1806 = vld [vmem:[%s679 + $0x34] sm:$0xf]
      %v1807 = vld [vmem:[%s679 + $0x38] sm:$0x1]
      %v1808 = vld [vmem:[%s679 + $0x3c] sm:$0xf]
      %v1809 = vld [vmem:[%s679 + $0x40] sm:$0xf]
      %v1810 = vld [vmem:[%s679 + $0x44] sm:$0x1]
      %v1811 = vld [vmem:[%s679 + $0x48] sm:$0xf]
      %v1812 = vld [vmem:[%s679 + $0x4c] sm:$0xf]
      %v1813 = vld [vmem:[%s679 + $0x50] sm:$0x1]
      %v1814 = vld [vmem:[%s679 + $0x54] sm:$0xf]
      %v1815 = vld [vmem:[%s679 + $0x58] sm:$0xf]
      %v1816 = vld [vmem:[%s679 + $0x5c] sm:$0x1]
      %v1817 = vld [vmem:[%s1 + $0x20] sm:$0xf]
      %v1818 = vld [vmem:[%s1 + $0x24] sm:$0xf]
      %v1820 = vshrl.u32 %v1793, 16
      %v1822 = vrot.slane %v1820, 4
      %v1823 = vshll.u32 %v1793, 16
      %v1825 = vrot.slane %v1823, 5
      %v1826 = vor.u32 %v1822, %v1825
      %v1827 = vrot.slane %v1826, 4
      %v1829 = vshll.u32 %v1794, 16
      %v1831 = vrot.slane %v1829, 5
      %v1832 = vsel %vm828, %v1827, %v1831
      %v1833 = vshrl.u32 %v1794, 16
      %v1835 = vrot.slane %v1833, 4
      %v1836 = vor.u32 %v1835, %v1831
      %v1837 = vrot.slane %v1836, 4
      %v1839 = vshll.u32 %v1795, 16
      %v1841 = vrot.slane %v1839, 5
      %v1842 = vsel %vm828, %v1837, %v1841
      %v1844 = vshrl.u32 %v1796, 16
      %v1846 = vrot.slane %v1844, 4
      %v1847 = vshll.u32 %v1796, 16
      %v1849 = vrot.slane %v1847, 5
      %v1850 = vor.u32 %v1846, %v1849
      %v1851 = vrot.slane %v1850, 4
      %v1853 = vshll.u32 %v1797, 16
      %v1855 = vrot.slane %v1853, 5
      %v1856 = vsel %vm828, %v1851, %v1855
      %v1857 = vshrl.u32 %v1797, 16
      %v1859 = vrot.slane %v1857, 4
      %v1860 = vor.u32 %v1859, %v1855
      %v1861 = vrot.slane %v1860, 4
      %v1863 = vshll.u32 %v1798, 16
      %v1865 = vrot.slane %v1863, 5
      %v1866 = vsel %vm828, %v1861, %v1865
      %v1868 = vshrl.u32 %v1799, 16
      %v1870 = vrot.slane %v1868, 4
      %v1871 = vshll.u32 %v1799, 16
      %v1873 = vrot.slane %v1871, 5
      %v1874 = vor.u32 %v1870, %v1873
      %v1875 = vrot.slane %v1874, 4
      %v1877 = vshll.u32 %v1800, 16
      %v1879 = vrot.slane %v1877, 5
      %v1880 = vsel %vm828, %v1875, %v1879
      %v1881 = vshrl.u32 %v1800, 16
      %v1883 = vrot.slane %v1881, 4
      %v1884 = vor.u32 %v1883, %v1879
      %v1885 = vrot.slane %v1884, 4
      %v1887 = vshll.u32 %v1801, 16
      %v1889 = vrot.slane %v1887, 5
      %v1890 = vsel %vm828, %v1885, %v1889
      %v1892 = vshrl.u32 %v1802, 16
      %v1894 = vrot.slane %v1892, 4
      %v1895 = vshll.u32 %v1802, 16
      %v1897 = vrot.slane %v1895, 5
      %v1898 = vor.u32 %v1894, %v1897
      %v1899 = vrot.slane %v1898, 4
      %v1901 = vshll.u32 %v1803, 16
      %v1903 = vrot.slane %v1901, 5
      %v1904 = vsel %vm828, %v1899, %v1903
      %v1905 = vshrl.u32 %v1803, 16
      %v1907 = vrot.slane %v1905, 4
      %v1908 = vor.u32 %v1907, %v1903
      %v1909 = vrot.slane %v1908, 4
      %v1911 = vshll.u32 %v1804, 16
      %v1913 = vrot.slane %v1911, 5
      %v1914 = vsel %vm828, %v1909, %v1913
      %v1916 = vshrl.u32 %v1805, 16
      %v1918 = vrot.slane %v1916, 4
      %v1919 = vshll.u32 %v1805, 16
      %v1921 = vrot.slane %v1919, 5
      %v1922 = vor.u32 %v1918, %v1921
      %v1923 = vrot.slane %v1922, 4
      %v1925 = vshll.u32 %v1806, 16
      %v1927 = vrot.slane %v1925, 5
      %v1928 = vsel %vm828, %v1923, %v1927
      %v1929 = vshrl.u32 %v1806, 16
      %v1931 = vrot.slane %v1929, 4
      %v1932 = vor.u32 %v1931, %v1927
      %v1933 = vrot.slane %v1932, 4
      %v1935 = vshll.u32 %v1807, 16
      %v1937 = vrot.slane %v1935, 5
      %v1938 = vsel %vm828, %v1933, %v1937
      %v1940 = vshrl.u32 %v1808, 16
      %v1942 = vrot.slane %v1940, 4
      %v1943 = vshll.u32 %v1808, 16
      %v1945 = vrot.slane %v1943, 5
      %v1946 = vor.u32 %v1942, %v1945
      %v1947 = vrot.slane %v1946, 4
      %v1949 = vshll.u32 %v1809, 16
      %v1951 = vrot.slane %v1949, 5
      %v1952 = vsel %vm828, %v1947, %v1951
      %v1953 = vshrl.u32 %v1809, 16
      %v1955 = vrot.slane %v1953, 4
      %v1956 = vor.u32 %v1955, %v1951
      %v1957 = vrot.slane %v1956, 4
      %v1959 = vshll.u32 %v1810, 16
      %v1961 = vrot.slane %v1959, 5
      %v1962 = vsel %vm828, %v1957, %v1961
      %v1964 = vshrl.u32 %v1811, 16
      %v1966 = vrot.slane %v1964, 4
      %v1967 = vshll.u32 %v1811, 16
      %v1969 = vrot.slane %v1967, 5
      %v1970 = vor.u32 %v1966, %v1969
      %v1971 = vrot.slane %v1970, 4
      %v1973 = vshll.u32 %v1812, 16
      %v1975 = vrot.slane %v1973, 5
      %v1976 = vsel %vm828, %v1971, %v1975
      %v1977 = vshrl.u32 %v1812, 16
      %v1979 = vrot.slane %v1977, 4
      %v1980 = vor.u32 %v1979, %v1975
      %v1981 = vrot.slane %v1980, 4
      %v1983 = vshll.u32 %v1813, 16
      %v1985 = vrot.slane %v1983, 5
      %v1986 = vsel %vm828, %v1981, %v1985
      %v1988 = vshrl.u32 %v1814, 16
      %v1990 = vrot.slane %v1988, 4
      %v1991 = vshll.u32 %v1814, 16
      %v1993 = vrot.slane %v1991, 5
      %v1994 = vor.u32 %v1990, %v1993
      %v1995 = vrot.slane %v1994, 4
      %v1997 = vshll.u32 %v1815, 16
      %v1999 = vrot.slane %v1997, 5
      %v2000 = vsel %vm828, %v1995, %v1999
      %v2001 = vshrl.u32 %v1815, 16
      %v2003 = vrot.slane %v2001, 4
      %v2004 = vor.u32 %v2003, %v1999
      %v2005 = vrot.slane %v2004, 4
      %v2007 = vshll.u32 %v1816, 16
      %v2009 = vrot.slane %v2007, 5
      %v2010 = vsel %vm828, %v2005, %v2009
      %v2011 = vunpack.c.l.b16 %v1832
      %v2012 = vunpack.c.l.b16 %v1842
      %v2013 = vunpack.c.l.b16 %v1856
      %v2014 = vunpack.c.l.b16 %v1866
      %v2015 = vunpack.c.l.b16 %v1880
      %v2016 = vunpack.c.l.b16 %v1890
      %v2017 = vunpack.c.l.b16 %v1904
      %v2018 = vunpack.c.l.b16 %v1914
      %v2019 = vunpack.c.l.b16 %v1928
      %v2020 = vunpack.c.l.b16 %v1938
      %v2021 = vunpack.c.l.b16 %v1952
      %v2022 = vunpack.c.l.b16 %v1962
      %v2023 = vunpack.c.l.b16 %v1976
      %v2024 = vunpack.c.l.b16 %v1986
      %v2025 = vunpack.c.l.b16 %v2000
      %v2026 = vunpack.c.l.b16 %v2010
      %v2027 = vpack.c.b16 %v2012, %v2011
      %v2028 = vpack.c.b16 %v2014, %v2013
      %v2029 = vpack.c.b16 %v2016, %v2015
      %v2030 = vpack.c.b16 %v2018, %v2017
      %v2031 = vpack.c.b16 %v2020, %v2019
      %v2032 = vpack.c.b16 %v2022, %v2021
      %v2033 = vpack.c.b16 %v2024, %v2023
      %v2034 = vpack.c.b16 %v2026, %v2025
      %v2037 = vunpack.c.l.b16 %v1817
      %v2038 = vunpack.c.l.b16 %v1818
      %v2039 = vpack.c.b16 %v2038, %v2037
      %v2042 = vsel %vm1051, %v2027, 0
      %v2045 = vsel %vm1051, %v2028, 0
      %v2048 = vsel %vm1051, %v2029, 0
      %v2051 = vsel %vm1051, %v2030, 0
      %v2054 = vsel %vm1051, %v2031, 0
      %v2057 = vsel %vm1051, %v2032, 0
      %v2060 = vsel %vm1051, %v2033, 0
      %v2063 = vsel %vm1051, %v2034, 0
      %2065 = vmatprep.subr.bf16.mxu0 0
      %2066 = vmatpush1.bf16.msra.mxu0 %v2039
      %2067 = vmatprep.subr.bf16.mxu0 0
      %2068 = vmatpush1.bf16.msra.mxu0 0
      %2069 = vmatprep.subr.bf16.mxu0 0
      %2070 = vmatpush1.bf16.msra.mxu0 0
      %2071 = vmatprep.subr.bf16.mxu0 0
      %2072 = vmatpush1.bf16.msra.mxu0 0
      %2073 = vmatprep.subr.bf16.mxu0 0
      %2074 = vmatpush1.bf16.msra.mxu0 0
      %2075 = vmatprep.subr.bf16.mxu0 0
      %2076 = vmatpush1.bf16.msra.mxu0 0
      %2077 = vmatprep.subr.bf16.mxu0 0
      %2078 = vmatpush1.bf16.msra.mxu0 0
      %2079 = vmatprep.subr.bf16.mxu0 0
      %2080 = vmatpush1.bf16.msra.mxu0 0
      %2081 = vmatprep.subr.bf16.mxu0 0
      %2082 = vmatpush1.bf16.msra.mxu0 0
      %2083 = vmatprep.subr.bf16.mxu0 0
      %2084 = vmatpush1.bf16.msra.mxu0 0
      %2085 = vmatprep.subr.bf16.mxu0 0
      %2086 = vmatpush1.bf16.msra.mxu0 0
      %2087 = vmatprep.subr.bf16.mxu0 0
      %2088 = vmatpush1.bf16.msra.mxu0 0
      %2089 = vmatprep.subr.bf16.mxu0 0
      %2090 = vmatpush1.bf16.msra.mxu0 0
      %2091 = vmatprep.subr.bf16.mxu0 0
      %2092 = vmatpush1.bf16.msra.mxu0 0
      %2093 = vmatprep.subr.bf16.mxu0 0
      %2094 = vmatpush1.bf16.msra.mxu0 0
      %2095 = vmatprep.subr.bf16.mxu0 0
      %2096 = vmatpush1.bf16.msra.mxu0 0
      %2097 = vmatprep.mubr.bf16.mxu0 0
      %2098 = vmatmul.mubr.bf16.gmra.mrb[0].mxu0 %v2042
      %v2099 = vpop.f32.mrb[0].mxu0
      %v2100 = vadd.f32 0.0, %v2099
      %v2101 = vpop.f32.mrb[0].mxu0
      %v2102 = vpop.f32.mrb[0].mxu0
      %v2103 = vadd.f32 0.0, %v2102
      %v2104 = vpop.f32.mrb[0].mxu0
      %2105 = vmatprep.mubr.bf16.mxu0 0
      %2106 = vmatmul.mubr.bf16.gmra.mrb[0].mxu0 %v2045
      %v2107 = vpop.f32.mrb[0].mxu0
      %v2108 = vadd.f32 0.0, %v2107
      %v2109 = vpop.f32.mrb[0].mxu0
      %v2110 = vpop.f32.mrb[0].mxu0
      %v2111 = vadd.f32 0.0, %v2110
      %v2112 = vpop.f32.mrb[0].mxu0
      %2113 = vmatprep.mubr.bf16.mxu0 0
      %2114 = vmatmul.mubr.bf16.gmra.mrb[0].mxu0 %v2048
      %v2115 = vpop.f32.mrb[0].mxu0
      %v2116 = vadd.f32 0.0, %v2115
      %v2117 = vpop.f32.mrb[0].mxu0
      %v2118 = vpop.f32.mrb[0].mxu0
      %v2119 = vadd.f32 0.0, %v2118
      %v2120 = vpop.f32.mrb[0].mxu0
      %2121 = vmatprep.mubr.bf16.mxu0 0
      %2122 = vmatmul.mubr.bf16.gmra.mrb[0].mxu0 %v2051
      %v2123 = vpop.f32.mrb[0].mxu0
      %v2124 = vadd.f32 0.0, %v2123
      %v2125 = vpop.f32.mrb[0].mxu0
      %v2126 = vpop.f32.mrb[0].mxu0
      %v2127 = vadd.f32 0.0, %v2126
      %v2128 = vpop.f32.mrb[0].mxu0
      %2129 = vmatprep.mubr.bf16.mxu0 0
      %2130 = vmatmul.mubr.bf16.gmra.mrb[0].mxu0 %v2054
      %v2131 = vpop.f32.mrb[0].mxu0
      %v2132 = vadd.f32 0.0, %v2131
      %v2133 = vpop.f32.mrb[0].mxu0
      %v2134 = vpop.f32.mrb[0].mxu0
      %v2135 = vadd.f32 0.0, %v2134
      %v2136 = vpop.f32.mrb[0].mxu0
      %2137 = vmatprep.mubr.bf16.mxu0 0
      %2138 = vmatmul.mubr.bf16.gmra.mrb[0].mxu0 %v2057
      %v2139 = vpop.f32.mrb[0].mxu0
      %v2140 = vadd.f32 0.0, %v2139
      %v2141 = vpop.f32.mrb[0].mxu0
      %v2142 = vpop.f32.mrb[0].mxu0
      %v2143 = vadd.f32 0.0, %v2142
      %v2144 = vpop.f32.mrb[0].mxu0
      %2145 = vmatprep.mubr.bf16.mxu0 0
      %2146 = vmatmul.mubr.bf16.gmra.mrb[0].mxu0 %v2060
      %v2147 = vpop.f32.mrb[0].mxu0
      %v2148 = vadd.f32 0.0, %v2147
      %v2149 = vpop.f32.mrb[0].mxu0
      %v2150 = vpop.f32.mrb[0].mxu0
      %v2151 = vadd.f32 0.0, %v2150
      %v2152 = vpop.f32.mrb[0].mxu0
      %2153 = vmatprep.mubr.bf16.mxu0 0
      %2154 = vmatmul.mubr.bf16.gmra.mrb[0].mxu0 %v2063
      %v2155 = vpop.f32.mrb[0].mxu0
      %v2156 = vadd.f32 0.0, %v2155
      %v2157 = vpop.f32.mrb[0].mxu0
      %v2158 = vpop.f32.mrb[0].mxu0
      %v2159 = vadd.f32 0.0, %v2158
      %v2160 = vpop.f32.mrb[0].mxu0
      %2161 = vdwg.mxu0
      %v2162 = vadd.f32 %v1777, %v2100
      %v2163 = vadd.f32 %v1778, %v2103
      %v2164 = vadd.f32 %v1779, %v2108
      %v2165 = vadd.f32 %v1780, %v2111
      %v2166 = vadd.f32 %v1781, %v2116
      %v2167 = vadd.f32 %v1782, %v2119
      %v2168 = vadd.f32 %v1783, %v2124
      %v2169 = vadd.f32 %v1784, %v2127
      %v2170 = vadd.f32 %v1785, %v2132
      %v2171 = vadd.f32 %v1786, %v2135
      %v2172 = vadd.f32 %v1787, %v2140
      %v2173 = vadd.f32 %v1788, %v2143
      %v2174 = vadd.f32 %v1789, %v2148
      %v2175 = vadd.f32 %v1790, %v2151
      %v2176 = vadd.f32 %v1791, %v2156
      %v2177 = vadd.f32 %v1792, %v2159
      %v2178 = vld [vmem:[%s679] sm:$0xe]
      %v2179 = vld [vmem:[%s679 + $0xc] sm:$0xe]
      %v2180 = vld [vmem:[%s679 + $0x18] sm:$0xe]
      %v2181 = vld [vmem:[%s679 + $0x24] sm:$0xe]
      %v2182 = vld [vmem:[%s679 + $0x30] sm:$0xe]
      %v2183 = vld [vmem:[%s679 + $0x3c] sm:$0xe]
      %v2184 = vld [vmem:[%s679 + $0x48] sm:$0xe]
      %v2185 = vld [vmem:[%s679 + $0x54] sm:$0xe]
      %v2186 = vld [vmem:[%s1 + $0x28] sm:$0xf]
      %v2187 = vld [vmem:[%s1 + $0x2c] sm:$0xf]
      %v2212 = vrot.slane %v2178, 5
      %v2213 = vrot.slane %v2212, 4
      %v2214 = vrot.slane %v1794, 5
      %v2215 = vsel %vm1368, %v2213, %v2214
      %v2216 = vrot.slane %v2214, 4
      %v2217 = vrot.slane %v1795, 5
      %v2218 = vsel %vm1368, %v2216, %v2217
      %v2219 = vrot.slane %v2179, 5
      %v2220 = vrot.slane %v2219, 4
      %v2221 = vrot.slane %v1797, 5
      %v2222 = vsel %vm1368, %v2220, %v2221
      %v2223 = vrot.slane %v2221, 4
      %v2224 = vrot.slane %v1798, 5
      %v2225 = vsel %vm1368, %v2223, %v2224
      %v2226 = vrot.slane %v2180, 5
      %v2227 = vrot.slane %v2226, 4
      %v2228 = vrot.slane %v1800, 5
      %v2229 = vsel %vm1368, %v2227, %v2228
      %v2230 = vrot.slane %v2228, 4
      %v2231 = vrot.slane %v1801, 5
      %v2232 = vsel %vm1368, %v2230, %v2231
      %v2233 = vrot.slane %v2181, 5
      %v2234 = vrot.slane %v2233, 4
      %v2235 = vrot.slane %v1803, 5
      %v2236 = vsel %vm1368, %v2234, %v2235
      %v2237 = vrot.slane %v2235, 4
      %v2238 = vrot.slane %v1804, 5
      %v2239 = vsel %vm1368, %v2237, %v2238
      %v2240 = vrot.slane %v2182, 5
      %v2241 = vrot.slane %v2240, 4
      %v2242 = vrot.slane %v1806, 5
      %v2243 = vsel %vm1368, %v2241, %v2242
      %v2244 = vrot.slane %v2242, 4
      %v2245 = vrot.slane %v1807, 5
      %v2246 = vsel %vm1368, %v2244, %v2245
      %v2247 = vrot.slane %v2183, 5
      %v2248 = vrot.slane %v2247, 4
      %v2249 = vrot.slane %v1809, 5
      %v2250 = vsel %vm1368, %v2248, %v2249
      %v2251 = vrot.slane %v2249, 4
      %v2252 = vrot.slane %v1810, 5
      %v2253 = vsel %vm1368, %v2251, %v2252
      %v2254 = vrot.slane %v2184, 5
      %v2255 = vrot.slane %v2254, 4
      %v2256 = vrot.slane %v1812, 5
      %v2257 = vsel %vm1368, %v2255, %v2256
      %v2258 = vrot.slane %v2256, 4
      %v2259 = vrot.slane %v1813, 5
      %v2260 = vsel %vm1368, %v2258, %v2259
      %v2261 = vrot.slane %v2185, 5
      %v2262 = vrot.slane %v2261, 4
      %v2263 = vrot.slane %v1815, 5
      %v2264 = vsel %vm1368, %v2262, %v2263
      %v2265 = vrot.slane %v2263, 4
      %v2266 = vrot.slane %v1816, 5
      %v2267 = vsel %vm1368, %v2265, %v2266
      %v2268 = vunpack.c.l.b16 %v2215
      %v2269 = vunpack.c.l.b16 %v2218
      %v2270 = vunpack.c.l.b16 %v2222
      %v2271 = vunpack.c.l.b16 %v2225
      %v2272 = vunpack.c.l.b16 %v2229
      %v2273 = vunpack.c.l.b16 %v2232
      %v2274 = vunpack.c.l.b16 %v2236
      %v2275 = vunpack.c.l.b16 %v2239
      %v2276 = vunpack.c.l.b16 %v2243
      %v2277 = vunpack.c.l.b16 %v2246
      %v2278 = vunpack.c.l.b16 %v2250
      %v2279 = vunpack.c.l.b16 %v2253
      %v2280 = vunpack.c.l.b16 %v2257
      %v2281 = vunpack.c.l.b16 %v2260
      %v2282 = vunpack.c.l.b16 %v2264
      %v2283 = vunpack.c.l.b16 %v2267
      %v2284 = vpack.c.b16 %v2269, %v2268
      %v2285 = vpack.c.b16 %v2271, %v2270
      %v2286 = vpack.c.b16 %v2273, %v2272
      %v2287 = vpack.c.b16 %v2275, %v2274
      %v2288 = vpack.c.b16 %v2277, %v2276
      %v2289 = vpack.c.b16 %v2279, %v2278
      %v2290 = vpack.c.b16 %v2281, %v2280
      %v2291 = vpack.c.b16 %v2283, %v2282
      %v2294 = vunpack.c.l.b16 %v2186
      %v2295 = vunpack.c.l.b16 %v2187
      %v2296 = vpack.c.b16 %v2295, %v2294
      %v2299 = vsel %vm1051, %v2284, 0
      %v2302 = vsel %vm1051, %v2285, 0
      %v2305 = vsel %vm1051, %v2286, 0
      %v2308 = vsel %vm1051, %v2287, 0
      %v2311 = vsel %vm1051, %v2288, 0
      %v2314 = vsel %vm1051, %v2289, 0
      %v2317 = vsel %vm1051, %v2290, 0
      %v2320 = vsel %vm1051, %v2291, 0
      %2322 = vmatprep.subr.bf16.mxu0 0
      %2323 = vmatpush1.bf16.msra.mxu0 %v2296
      %2324 = vmatprep.subr.bf16.mxu0 0
      %2325 = vmatpush1.bf16.msra.mxu0 0
      %2326 = vmatprep.subr.bf16.mxu0 0
      %2327 = vmatpush1.bf16.msra.mxu0 0
      %2328 = vmatprep.subr.bf16.mxu0 0
      %2329 = vmatpush1.bf16.msra.mxu0 0
      %2330 = vmatprep.subr.bf16.mxu0 0
      %2331 = vmatpush1.bf16.msra.mxu0 0
      %2332 = vmatprep.subr.bf16.mxu0 0
      %2333 = vmatpush1.bf16.msra.mxu0 0
      %2334 = vmatprep.subr.bf16.mxu0 0
      %2335 = vmatpush1.bf16.msra.mxu0 0
      %2336 = vmatprep.subr.bf16.mxu0 0
      %2337 = vmatpush1.bf16.msra.mxu0 0
      %2338 = vmatprep.subr.bf16.mxu0 0
      %2339 = vmatpush1.bf16.msra.mxu0 0
      %2340 = vmatprep.subr.bf16.mxu0 0
      %2341 = vmatpush1.bf16.msra.mxu0 0
      %2342 = vmatprep.subr.bf16.mxu0 0
      %2343 = vmatpush1.bf16.msra.mxu0 0
      %2344 = vmatprep.subr.bf16.mxu0 0
      %2345 = vmatpush1.bf16.msra.mxu0 0
      %2346 = vmatprep.subr.bf16.mxu0 0
      %2347 = vmatpush1.bf16.msra.mxu0 0
      %2348 = vmatprep.subr.bf16.mxu0 0
      %2349 = vmatpush1.bf16.msra.mxu0 0
      %2350 = vmatprep.subr.bf16.mxu0 0
      %2351 = vmatpush1.bf16.msra.mxu0 0
      %2352 = vmatprep.subr.bf16.mxu0 0
      %2353 = vmatpush1.bf16.msra.mxu0 0
      %2354 = vmatprep.mubr.bf16.mxu0 0
      %2355 = vmatmul.mubr.bf16.gmra.mrb[0].mxu0 %v2299
      %v2356 = vpop.f32.mrb[0].mxu0
      %v2357 = vadd.f32 0.0, %v2356
      %v2358 = vpop.f32.mrb[0].mxu0
      %v2359 = vpop.f32.mrb[0].mxu0
      %v2360 = vadd.f32 0.0, %v2359
      %v2361 = vpop.f32.mrb[0].mxu0
      %2362 = vmatprep.mubr.bf16.mxu0 0
      %2363 = vmatmul.mubr.bf16.gmra.mrb[0].mxu0 %v2302
      %v2364 = vpop.f32.mrb[0].mxu0
      %v2365 = vadd.f32 0.0, %v2364
      %v2366 = vpop.f32.mrb[0].mxu0
      %v2367 = vpop.f32.mrb[0].mxu0
      %v2368 = vadd.f32 0.0, %v2367
      %v2369 = vpop.f32.mrb[0].mxu0
      %2370 = vmatprep.mubr.bf16.mxu0 0
      %2371 = vmatmul.mubr.bf16.gmra.mrb[0].mxu0 %v2305
      %v2372 = vpop.f32.mrb[0].mxu0
      %v2373 = vadd.f32 0.0, %v2372
      %v2374 = vpop.f32.mrb[0].mxu0
      %v2375 = vpop.f32.mrb[0].mxu0
      %v2376 = vadd.f32 0.0, %v2375
      %v2377 = vpop.f32.mrb[0].mxu0
      %2378 = vmatprep.mubr.bf16.mxu0 0
      %2379 = vmatmul.mubr.bf16.gmra.mrb[0].mxu0 %v2308
      %v2380 = vpop.f32.mrb[0].mxu0
      %v2381 = vadd.f32 0.0, %v2380
      %v2382 = vpop.f32.mrb[0].mxu0
      %v2383 = vpop.f32.mrb[0].mxu0
      %v2384 = vadd.f32 0.0, %v2383
      %v2385 = vpop.f32.mrb[0].mxu0
      %2386 = vmatprep.mubr.bf16.mxu0 0
      %2387 = vmatmul.mubr.bf16.gmra.mrb[0].mxu0 %v2311
      %v2388 = vpop.f32.mrb[0].mxu0
      %v2389 = vadd.f32 0.0, %v2388
      %v2390 = vpop.f32.mrb[0].mxu0
      %v2391 = vpop.f32.mrb[0].mxu0
      %v2392 = vadd.f32 0.0, %v2391
      %v2393 = vpop.f32.mrb[0].mxu0
      %2394 = vmatprep.mubr.bf16.mxu0 0
      %2395 = vmatmul.mubr.bf16.gmra.mrb[0].mxu0 %v2314
      %v2396 = vpop.f32.mrb[0].mxu0
      %v2397 = vadd.f32 0.0, %v2396
      %v2398 = vpop.f32.mrb[0].mxu0
      %v2399 = vpop.f32.mrb[0].mxu0
      %v2400 = vadd.f32 0.0, %v2399
      %v2401 = vpop.f32.mrb[0].mxu0
      %2402 = vmatprep.mubr.bf16.mxu0 0
      %2403 = vmatmul.mubr.bf16.gmra.mrb[0].mxu0 %v2317
      %v2404 = vpop.f32.mrb[0].mxu0
      %v2405 = vadd.f32 0.0, %v2404
      %v2406 = vpop.f32.mrb[0].mxu0
      %v2407 = vpop.f32.mrb[0].mxu0
      %v2408 = vadd.f32 0.0, %v2407
      %v2409 = vpop.f32.mrb[0].mxu0
      %2410 = vmatprep.mubr.bf16.mxu0 0
      %2411 = vmatmul.mubr.bf16.gmra.mrb[0].mxu0 %v2320
      %v2412 = vpop.f32.mrb[0].mxu0
      %v2413 = vadd.f32 0.0, %v2412
      %v2414 = vpop.f32.mrb[0].mxu0
      %v2415 = vpop.f32.mrb[0].mxu0
      %v2416 = vadd.f32 0.0, %v2415
      %v2417 = vpop.f32.mrb[0].mxu0
      %2418 = vdwg.mxu0
      %v2419 = vadd.f32 %v2162, %v2357
      %v2420 = vadd.f32 %v2163, %v2360
      %v2421 = vadd.f32 %v2164, %v2365
      %v2422 = vadd.f32 %v2165, %v2368
      %v2423 = vadd.f32 %v2166, %v2373
      %v2424 = vadd.f32 %v2167, %v2376
      %v2425 = vadd.f32 %v2168, %v2381
      %v2426 = vadd.f32 %v2169, %v2384
      %v2427 = vadd.f32 %v2170, %v2389
      %v2428 = vadd.f32 %v2171, %v2392
      %v2429 = vadd.f32 %v2172, %v2397
      %v2430 = vadd.f32 %v2173, %v2400
      %v2431 = vadd.f32 %v2174, %v2405
      %v2432 = vadd.f32 %v2175, %v2408
      %v2433 = vadd.f32 %v2176, %v2413
      %v2434 = vadd.f32 %v2177, %v2416
      %s2435 = scalar_lea.vmem [#allocation2], 24
      %v2436 = vld [vmem:[%s2435] sm:$0xf]
      %v2437 = vld [vmem:[%s2435 + $0x4] sm:$0xf]
      %v2438 = vld [vmem:[%s2435 + $0xc] sm:$0xf]
      %v2439 = vld [vmem:[%s2435 + $0x10] sm:$0xf]
      %v2440 = vld [vmem:[%s2435 + $0x18] sm:$0xf]
      %v2441 = vld [vmem:[%s2435 + $0x1c] sm:$0xf]
      %v2442 = vld [vmem:[%s2435 + $0x24] sm:$0xf]
      %v2443 = vld [vmem:[%s2435 + $0x28] sm:$0xf]
      %v2444 = vld [vmem:[%s2435 + $0x30] sm:$0xf]
      %v2445 = vld [vmem:[%s2435 + $0x34] sm:$0xf]
      %v2446 = vld [vmem:[%s2435 + $0x3c] sm:$0xf]
      %v2447 = vld [vmem:[%s2435 + $0x40] sm:$0xf]
      %v2448 = vld [vmem:[%s2435 + $0x48] sm:$0xf]
      %v2449 = vld [vmem:[%s2435 + $0x4c] sm:$0xf]
      %v2450 = vld [vmem:[%s2435 + $0x54] sm:$0xf]
      %v2451 = vld [vmem:[%s2435 + $0x58] sm:$0xf]
      %v2452 = vld [vmem:[%s1 + $0x30] sm:$0xf]
      %v2453 = vld [vmem:[%s1 + $0x34] sm:$0xf]
      %v2470 = vunpack.c.l.b16 %v2436
      %v2471 = vunpack.c.l.b16 %v2437
      %v2472 = vunpack.c.l.b16 %v2438
      %v2473 = vunpack.c.l.b16 %v2439
      %v2474 = vunpack.c.l.b16 %v2440
      %v2475 = vunpack.c.l.b16 %v2441
      %v2476 = vunpack.c.l.b16 %v2442
      %v2477 = vunpack.c.l.b16 %v2443
      %v2478 = vunpack.c.l.b16 %v2444
      %v2479 = vunpack.c.l.b16 %v2445
      %v2480 = vunpack.c.l.b16 %v2446
      %v2481 = vunpack.c.l.b16 %v2447
      %v2482 = vunpack.c.l.b16 %v2448
      %v2483 = vunpack.c.l.b16 %v2449
      %v2484 = vunpack.c.l.b16 %v2450
      %v2485 = vunpack.c.l.b16 %v2451
      %v2486 = vpack.c.b16 %v2471, %v2470
      %v2487 = vpack.c.b16 %v2473, %v2472
      %v2488 = vpack.c.b16 %v2475, %v2474
      %v2489 = vpack.c.b16 %v2477, %v2476
      %v2490 = vpack.c.b16 %v2479, %v2478
      %v2491 = vpack.c.b16 %v2481, %v2480
      %v2492 = vpack.c.b16 %v2483, %v2482
      %v2493 = vpack.c.b16 %v2485, %v2484
      %v2496 = vunpack.c.l.b16 %v2452
      %v2497 = vunpack.c.l.b16 %v2453
      %v2498 = vpack.c.b16 %v2497, %v2496
      %v2501 = vsel %vm1051, %v2486, 0
      %v2504 = vsel %vm1051, %v2487, 0
      %v2507 = vsel %vm1051, %v2488, 0
      %v2510 = vsel %vm1051, %v2489, 0
      %v2513 = vsel %vm1051, %v2490, 0
      %v2516 = vsel %vm1051, %v2491, 0
      %v2519 = vsel %vm1051, %v2492, 0
      %v2522 = vsel %vm1051, %v2493, 0
      %2524 = vmatprep.subr.bf16.mxu0 0
      %2525 = vmatpush1.bf16.msra.mxu0 %v2498
      %2526 = vmatprep.subr.bf16.mxu0 0
      %2527 = vmatpush1.bf16.msra.mxu0 0
      %2528 = vmatprep.subr.bf16.mxu0 0
      %2529 = vmatpush1.bf16.msra.mxu0 0
      %2530 = vmatprep.subr.bf16.mxu0 0
      %2531 = vmatpush1.bf16.msra.mxu0 0
      %2532 = vmatprep.subr.bf16.mxu0 0
      %2533 = vmatpush1.bf16.msra.mxu0 0
      %2534 = vmatprep.subr.bf16.mxu0 0
      %2535 = vmatpush1.bf16.msra.mxu0 0
      %2536 = vmatprep.subr.bf16.mxu0 0
      %2537 = vmatpush1.bf16.msra.mxu0 0
      %2538 = vmatprep.subr.bf16.mxu0 0
      %2539 = vmatpush1.bf16.msra.mxu0 0
      %2540 = vmatprep.subr.bf16.mxu0 0
      %2541 = vmatpush1.bf16.msra.mxu0 0
      %2542 = vmatprep.subr.bf16.mxu0 0
      %2543 = vmatpush1.bf16.msra.mxu0 0
      %2544 = vmatprep.subr.bf16.mxu0 0
      %2545 = vmatpush1.bf16.msra.mxu0 0
      %2546 = vmatprep.subr.bf16.mxu0 0
      %2547 = vmatpush1.bf16.msra.mxu0 0
      %2548 = vmatprep.subr.bf16.mxu0 0
      %2549 = vmatpush1.bf16.msra.mxu0 0
      %2550 = vmatprep.subr.bf16.mxu0 0
      %2551 = vmatpush1.bf16.msra.mxu0 0
      %2552 = vmatprep.subr.bf16.mxu0 0
      %2553 = vmatpush1.bf16.msra.mxu0 0
      %2554 = vmatprep.subr.bf16.mxu0 0
      %2555 = vmatpush1.bf16.msra.mxu0 0
      %2556 = vmatprep.mubr.bf16.mxu0 0
      %2557 = vmatmul.mubr.bf16.gmra.mrb[0].mxu0 %v2501
      %v2558 = vpop.f32.mrb[0].mxu0
      %v2559 = vadd.f32 0.0, %v2558
      %v2560 = vpop.f32.mrb[0].mxu0
      %v2561 = vpop.f32.mrb[0].mxu0
      %v2562 = vadd.f32 0.0, %v2561
      %v2563 = vpop.f32.mrb[0].mxu0
      %2564 = vmatprep.mubr.bf16.mxu0 0
      %2565 = vmatmul.mubr.bf16.gmra.mrb[0].mxu0 %v2504
      %v2566 = vpop.f32.mrb[0].mxu0
      %v2567 = vadd.f32 0.0, %v2566
      %v2568 = vpop.f32.mrb[0].mxu0
      %v2569 = vpop.f32.mrb[0].mxu0
      %v2570 = vadd.f32 0.0, %v2569
      %v2571 = vpop.f32.mrb[0].mxu0
      %2572 = vmatprep.mubr.bf16.mxu0 0
      %2573 = vmatmul.mubr.bf16.gmra.mrb[0].mxu0 %v2507
      %v2574 = vpop.f32.mrb[0].mxu0
      %v2575 = vadd.f32 0.0, %v2574
      %v2576 = vpop.f32.mrb[0].mxu0
      %v2577 = vpop.f32.mrb[0].mxu0
      %v2578 = vadd.f32 0.0, %v2577
      %v2579 = vpop.f32.mrb[0].mxu0
      %2580 = vmatprep.mubr.bf16.mxu0 0
      %2581 = vmatmul.mubr.bf16.gmra.mrb[0].mxu0 %v2510
      %v2582 = vpop.f32.mrb[0].mxu0
      %v2583 = vadd.f32 0.0, %v2582
      %v2584 = vpop.f32.mrb[0].mxu0
      %v2585 = vpop.f32.mrb[0].mxu0
      %v2586 = vadd.f32 0.0, %v2585
      %v2587 = vpop.f32.mrb[0].mxu0
      %2588 = vmatprep.mubr.bf16.mxu0 0
      %2589 = vmatmul.mubr.bf16.gmra.mrb[0].mxu0 %v2513
      %v2590 = vpop.f32.mrb[0].mxu0
      %v2591 = vadd.f32 0.0, %v2590
      %v2592 = vpop.f32.mrb[0].mxu0
      %v2593 = vpop.f32.mrb[0].mxu0
      %v2594 = vadd.f32 0.0, %v2593
      %v2595 = vpop.f32.mrb[0].mxu0
      %2596 = vmatprep.mubr.bf16.mxu0 0
      %2597 = vmatmul.mubr.bf16.gmra.mrb[0].mxu0 %v2516
      %v2598 = vpop.f32.mrb[0].mxu0
      %v2599 = vadd.f32 0.0, %v2598
      %v2600 = vpop.f32.mrb[0].mxu0
      %v2601 = vpop.f32.mrb[0].mxu0
      %v2602 = vadd.f32 0.0, %v2601
      %v2603 = vpop.f32.mrb[0].mxu0
      %2604 = vmatprep.mubr.bf16.mxu0 0
      %2605 = vmatmul.mubr.bf16.gmra.mrb[0].mxu0 %v2519
      %v2606 = vpop.f32.mrb[0].mxu0
      %v2607 = vadd.f32 0.0, %v2606
      %v2608 = vpop.f32.mrb[0].mxu0
      %v2609 = vpop.f32.mrb[0].mxu0
      %v2610 = vadd.f32 0.0, %v2609
      %v2611 = vpop.f32.mrb[0].mxu0
      %2612 = vmatprep.mubr.bf16.mxu0 0
      %2613 = vmatmul.mubr.bf16.gmra.mrb[0].mxu0 %v2522
      %v2614 = vpop.f32.mrb[0].mxu0
      %v2615 = vadd.f32 0.0, %v2614
      %v2616 = vpop.f32.mrb[0].mxu0
      %v2617 = vpop.f32.mrb[0].mxu0
      %v2618 = vadd.f32 0.0, %v2617
      %v2619 = vpop.f32.mrb[0].mxu0
      %2620 = vdwg.mxu0
      %v2621 = vadd.f32 %v2419, %v2559
      %v2622 = vadd.f32 %v2420, %v2562
      %v2623 = vadd.f32 %v2421, %v2567
      %v2624 = vadd.f32 %v2422, %v2570
      %v2625 = vadd.f32 %v2423, %v2575
      %v2626 = vadd.f32 %v2424, %v2578
      %v2627 = vadd.f32 %v2425, %v2583
      %v2628 = vadd.f32 %v2426, %v2586
      %v2629 = vadd.f32 %v2427, %v2591
      %v2630 = vadd.f32 %v2428, %v2594
      %v2631 = vadd.f32 %v2429, %v2599
      %v2632 = vadd.f32 %v2430, %v2602
      %v2633 = vadd.f32 %v2431, %v2607
      %v2634 = vadd.f32 %v2432, %v2610
      %v2635 = vadd.f32 %v2433, %v2615
      %v2636 = vadd.f32 %v2434, %v2618
      %v2637 = vld [vmem:[%s2435] sm:$0xf]
      %v2638 = vld [vmem:[%s2435 + $0x4] sm:$0xf]
      %v2639 = vld [vmem:[%s2435 + $0x8] sm:$0x1]
      %v2640 = vld [vmem:[%s2435 + $0xc] sm:$0xf]
      %v2641 = vld [vmem:[%s2435 + $0x10] sm:$0xf]
      %v2642 = vld [vmem:[%s2435 + $0x14] sm:$0x1]
      %v2643 = vld [vmem:[%s2435 + $0x18] sm:$0xf]
      %v2644 = vld [vmem:[%s2435 + $0x1c] sm:$0xf]
      %v2645 = vld [vmem:[%s2435 + $0x20] sm:$0x1]
      %v2646 = vld [vmem:[%s2435 + $0x24] sm:$0xf]
      %v2647 = vld [vmem:[%s2435 + $0x28] sm:$0xf]
      %v2648 = vld [vmem:[%s2435 + $0x2c] sm:$0x1]
      %v2649 = vld [vmem:[%s2435 + $0x30] sm:$0xf]
      %v2650 = vld [vmem:[%s2435 + $0x34] sm:$0xf]
      %v2651 = vld [vmem:[%s2435 + $0x38] sm:$0x1]
      %v2652 = vld [vmem:[%s2435 + $0x3c] sm:$0xf]
      %v2653 = vld [vmem:[%s2435 + $0x40] sm:$0xf]
      %v2654 = vld [vmem:[%s2435 + $0x44] sm:$0x1]
      %v2655 = vld [vmem:[%s2435 + $0x48] sm:$0xf]
      %v2656 = vld [vmem:[%s2435 + $0x4c] sm:$0xf]
      %v2657 = vld [vmem:[%s2435 + $0x50] sm:$0x1]
      %v2658 = vld [vmem:[%s2435 + $0x54] sm:$0xf]
      %v2659 = vld [vmem:[%s2435 + $0x58] sm:$0xf]
      %v2660 = vld [vmem:[%s2435 + $0x5c] sm:$0x1]
      %v2661 = vld [vmem:[%s1 + $0x38] sm:$0xf]
      %v2662 = vld [vmem:[%s1 + $0x3c] sm:$0xf]
      %v2664 = vshrl.u32 %v2637, 16
      %v2666 = vrot.slane %v2664, 4
      %v2667 = vshll.u32 %v2637, 16
      %v2669 = vrot.slane %v2667, 5
      %v2670 = vor.u32 %v2666, %v2669
      %v2671 = vrot.slane %v2670, 4
      %v2673 = vshll.u32 %v2638, 16
      %v2675 = vrot.slane %v2673, 5
      %v2676 = vsel %vm828, %v2671, %v2675
      %v2677 = vshrl.u32 %v2638, 16
      %v2679 = vrot.slane %v2677, 4
      %v2680 = vor.u32 %v2679, %v2675
      %v2681 = vrot.slane %v2680, 4
      %v2683 = vshll.u32 %v2639, 16
      %v2685 = vrot.slane %v2683, 5
      %v2686 = vsel %vm828, %v2681, %v2685
      %v2688 = vshrl.u32 %v2640, 16
      %v2690 = vrot.slane %v2688, 4
      %v2691 = vshll.u32 %v2640, 16
      %v2693 = vrot.slane %v2691, 5
      %v2694 = vor.u32 %v2690, %v2693
      %v2695 = vrot.slane %v2694, 4
      %v2697 = vshll.u32 %v2641, 16
      %v2699 = vrot.slane %v2697, 5
      %v2700 = vsel %vm828, %v2695, %v2699
      %v2701 = vshrl.u32 %v2641, 16
      %v2703 = vrot.slane %v2701, 4
      %v2704 = vor.u32 %v2703, %v2699
      %v2705 = vrot.slane %v2704, 4
      %v2707 = vshll.u32 %v2642, 16
      %v2709 = vrot.slane %v2707, 5
      %v2710 = vsel %vm828, %v2705, %v2709
      %v2712 = vshrl.u32 %v2643, 16
      %v2714 = vrot.slane %v2712, 4
      %v2715 = vshll.u32 %v2643, 16
      %v2717 = vrot.slane %v2715, 5
      %v2718 = vor.u32 %v2714, %v2717
      %v2719 = vrot.slane %v2718, 4
      %v2721 = vshll.u32 %v2644, 16
      %v2723 = vrot.slane %v2721, 5
      %v2724 = vsel %vm828, %v2719, %v2723
      %v2725 = vshrl.u32 %v2644, 16
      %v2727 = vrot.slane %v2725, 4
      %v2728 = vor.u32 %v2727, %v2723
      %v2729 = vrot.slane %v2728, 4
      %v2731 = vshll.u32 %v2645, 16
      %v2733 = vrot.slane %v2731, 5
      %v2734 = vsel %vm828, %v2729, %v2733
      %v2736 = vshrl.u32 %v2646, 16
      %v2738 = vrot.slane %v2736, 4
      %v2739 = vshll.u32 %v2646, 16
      %v2741 = vrot.slane %v2739, 5
      %v2742 = vor.u32 %v2738, %v2741
      %v2743 = vrot.slane %v2742, 4
      %v2745 = vshll.u32 %v2647, 16
      %v2747 = vrot.slane %v2745, 5
      %v2748 = vsel %vm828, %v2743, %v2747
      %v2749 = vshrl.u32 %v2647, 16
      %v2751 = vrot.slane %v2749, 4
      %v2752 = vor.u32 %v2751, %v2747
      %v2753 = vrot.slane %v2752, 4
      %v2755 = vshll.u32 %v2648, 16
      %v2757 = vrot.slane %v2755, 5
      %v2758 = vsel %vm828, %v2753, %v2757
      %v2760 = vshrl.u32 %v2649, 16
      %v2762 = vrot.slane %v2760, 4
      %v2763 = vshll.u32 %v2649, 16
      %v2765 = vrot.slane %v2763, 5
      %v2766 = vor.u32 %v2762, %v2765
      %v2767 = vrot.slane %v2766, 4
      %v2769 = vshll.u32 %v2650, 16
      %v2771 = vrot.slane %v2769, 5
      %v2772 = vsel %vm828, %v2767, %v2771
      %v2773 = vshrl.u32 %v2650, 16
      %v2775 = vrot.slane %v2773, 4
      %v2776 = vor.u32 %v2775, %v2771
      %v2777 = vrot.slane %v2776, 4
      %v2779 = vshll.u32 %v2651, 16
      %v2781 = vrot.slane %v2779, 5
      %v2782 = vsel %vm828, %v2777, %v2781
      %v2784 = vshrl.u32 %v2652, 16
      %v2786 = vrot.slane %v2784, 4
      %v2787 = vshll.u32 %v2652, 16
      %v2789 = vrot.slane %v2787, 5
      %v2790 = vor.u32 %v2786, %v2789
      %v2791 = vrot.slane %v2790, 4
      %v2793 = vshll.u32 %v2653, 16
      %v2795 = vrot.slane %v2793, 5
      %v2796 = vsel %vm828, %v2791, %v2795
      %v2797 = vshrl.u32 %v2653, 16
      %v2799 = vrot.slane %v2797, 4
      %v2800 = vor.u32 %v2799, %v2795
      %v2801 = vrot.slane %v2800, 4
      %v2803 = vshll.u32 %v2654, 16
      %v2805 = vrot.slane %v2803, 5
      %v2806 = vsel %vm828, %v2801, %v2805
      %v2808 = vshrl.u32 %v2655, 16
      %v2810 = vrot.slane %v2808, 4
      %v2811 = vshll.u32 %v2655, 16
      %v2813 = vrot.slane %v2811, 5
      %v2814 = vor.u32 %v2810, %v2813
      %v2815 = vrot.slane %v2814, 4
      %v2817 = vshll.u32 %v2656, 16
      %v2819 = vrot.slane %v2817, 5
      %v2820 = vsel %vm828, %v2815, %v2819
      %v2821 = vshrl.u32 %v2656, 16
      %v2823 = vrot.slane %v2821, 4
      %v2824 = vor.u32 %v2823, %v2819
      %v2825 = vrot.slane %v2824, 4
      %v2827 = vshll.u32 %v2657, 16
      %v2829 = vrot.slane %v2827, 5
      %v2830 = vsel %vm828, %v2825, %v2829
      %v2832 = vshrl.u32 %v2658, 16
      %v2834 = vrot.slane %v2832, 4
      %v2835 = vshll.u32 %v2658, 16
      %v2837 = vrot.slane %v2835, 5
      %v2838 = vor.u32 %v2834, %v2837
      %v2839 = vrot.slane %v2838, 4
      %v2841 = vshll.u32 %v2659, 16
      %v2843 = vrot.slane %v2841, 5
      %v2844 = vsel %vm828, %v2839, %v2843
      %v2845 = vshrl.u32 %v2659, 16
      %v2847 = vrot.slane %v2845, 4
      %v2848 = vor.u32 %v2847, %v2843
      %v2849 = vrot.slane %v2848, 4
      %v2851 = vshll.u32 %v2660, 16
      %v2853 = vrot.slane %v2851, 5
      %v2854 = vsel %vm828, %v2849, %v2853
      %v2855 = vunpack.c.l.b16 %v2676
      %v2856 = vunpack.c.l.b16 %v2686
      %v2857 = vunpack.c.l.b16 %v2700
      %v2858 = vunpack.c.l.b16 %v2710
      %v2859 = vunpack.c.l.b16 %v2724
      %v2860 = vunpack.c.l.b16 %v2734
      %v2861 = vunpack.c.l.b16 %v2748
      %v2862 = vunpack.c.l.b16 %v2758
      %v2863 = vunpack.c.l.b16 %v2772
      %v2864 = vunpack.c.l.b16 %v2782
      %v2865 = vunpack.c.l.b16 %v2796
      %v2866 = vunpack.c.l.b16 %v2806
      %v2867 = vunpack.c.l.b16 %v2820
      %v2868 = vunpack.c.l.b16 %v2830
      %v2869 = vunpack.c.l.b16 %v2844
      %v2870 = vunpack.c.l.b16 %v2854
      %v2871 = vpack.c.b16 %v2856, %v2855
      %v2872 = vpack.c.b16 %v2858, %v2857
      %v2873 = vpack.c.b16 %v2860, %v2859
      %v2874 = vpack.c.b16 %v2862, %v2861
      %v2875 = vpack.c.b16 %v2864, %v2863
      %v2876 = vpack.c.b16 %v2866, %v2865
      %v2877 = vpack.c.b16 %v2868, %v2867
      %v2878 = vpack.c.b16 %v2870, %v2869
      %v2881 = vunpack.c.l.b16 %v2661
      %v2882 = vunpack.c.l.b16 %v2662
      %v2883 = vpack.c.b16 %v2882, %v2881
      %v2886 = vsel %vm1051, %v2871, 0
      %v2889 = vsel %vm1051, %v2872, 0
      %v2892 = vsel %vm1051, %v2873, 0
      %v2895 = vsel %vm1051, %v2874, 0
      %v2898 = vsel %vm1051, %v2875, 0
      %v2901 = vsel %vm1051, %v2876, 0
      %v2904 = vsel %vm1051, %v2877, 0
      %v2907 = vsel %vm1051, %v2878, 0
      %2909 = vmatprep.subr.bf16.mxu0 0
      %2910 = vmatpush1.bf16.msra.mxu0 %v2883
      %2911 = vmatprep.subr.bf16.mxu0 0
      %2912 = vmatpush1.bf16.msra.mxu0 0
      %2913 = vmatprep.subr.bf16.mxu0 0
      %2914 = vmatpush1.bf16.msra.mxu0 0
      %2915 = vmatprep.subr.bf16.mxu0 0
      %2916 = vmatpush1.bf16.msra.mxu0 0
      %2917 = vmatprep.subr.bf16.mxu0 0
      %2918 = vmatpush1.bf16.msra.mxu0 0
      %2919 = vmatprep.subr.bf16.mxu0 0
      %2920 = vmatpush1.bf16.msra.mxu0 0
      %2921 = vmatprep.subr.bf16.mxu0 0
      %2922 = vmatpush1.bf16.msra.mxu0 0
      %2923 = vmatprep.subr.bf16.mxu0 0
      %2924 = vmatpush1.bf16.msra.mxu0 0
      %2925 = vmatprep.subr.bf16.mxu0 0
      %2926 = vmatpush1.bf16.msra.mxu0 0
      %2927 = vmatprep.subr.bf16.mxu0 0
      %2928 = vmatpush1.bf16.msra.mxu0 0
      %2929 = vmatprep.subr.bf16.mxu0 0
      %2930 = vmatpush1.bf16.msra.mxu0 0
      %2931 = vmatprep.subr.bf16.mxu0 0
      %2932 = vmatpush1.bf16.msra.mxu0 0
      %2933 = vmatprep.subr.bf16.mxu0 0
      %2934 = vmatpush1.bf16.msra.mxu0 0
      %2935 = vmatprep.subr.bf16.mxu0 0
      %2936 = vmatpush1.bf16.msra.mxu0 0
      %2937 = vmatprep.subr.bf16.mxu0 0
      %2938 = vmatpush1.bf16.msra.mxu0 0
      %2939 = vmatprep.subr.bf16.mxu0 0
      %2940 = vmatpush1.bf16.msra.mxu0 0
      %2941 = vmatprep.mubr.bf16.mxu0 0
      %2942 = vmatmul.mubr.bf16.gmra.mrb[0].mxu0 %v2886
      %v2943 = vpop.f32.mrb[0].mxu0
      %v2944 = vadd.f32 0.0, %v2943
      %v2945 = vpop.f32.mrb[0].mxu0
      %v2946 = vpop.f32.mrb[0].mxu0
      %v2947 = vadd.f32 0.0, %v2946
      %v2948 = vpop.f32.mrb[0].mxu0
      %2949 = vmatprep.mubr.bf16.mxu0 0
      %2950 = vmatmul.mubr.bf16.gmra.mrb[0].mxu0 %v2889
      %v2951 = vpop.f32.mrb[0].mxu0
      %v2952 = vadd.f32 0.0, %v2951
      %v2953 = vpop.f32.mrb[0].mxu0
      %v2954 = vpop.f32.mrb[0].mxu0
      %v2955 = vadd.f32 0.0, %v2954
      %v2956 = vpop.f32.mrb[0].mxu0
      %2957 = vmatprep.mubr.bf16.mxu0 0
      %2958 = vmatmul.mubr.bf16.gmra.mrb[0].mxu0 %v2892
      %v2959 = vpop.f32.mrb[0].mxu0
      %v2960 = vadd.f32 0.0, %v2959
      %v2961 = vpop.f32.mrb[0].mxu0
      %v2962 = vpop.f32.mrb[0].mxu0
      %v2963 = vadd.f32 0.0, %v2962
      %v2964 = vpop.f32.mrb[0].mxu0
      %2965 = vmatprep.mubr.bf16.mxu0 0
      %2966 = vmatmul.mubr.bf16.gmra.mrb[0].mxu0 %v2895
      %v2967 = vpop.f32.mrb[0].mxu0
      %v2968 = vadd.f32 0.0, %v2967
      %v2969 = vpop.f32.mrb[0].mxu0
      %v2970 = vpop.f32.mrb[0].mxu0
      %v2971 = vadd.f32 0.0, %v2970
      %v2972 = vpop.f32.mrb[0].mxu0
      %2973 = vmatprep.mubr.bf16.mxu0 0
      %2974 = vmatmul.mubr.bf16.gmra.mrb[0].mxu0 %v2898
      %v2975 = vpop.f32.mrb[0].mxu0
      %v2976 = vadd.f32 0.0, %v2975
      %v2977 = vpop.f32.mrb[0].mxu0
      %v2978 = vpop.f32.mrb[0].mxu0
      %v2979 = vadd.f32 0.0, %v2978
      %v2980 = vpop.f32.mrb[0].mxu0
      %2981 = vmatprep.mubr.bf16.mxu0 0
      %2982 = vmatmul.mubr.bf16.gmra.mrb[0].mxu0 %v2901
      %v2983 = vpop.f32.mrb[0].mxu0
      %v2984 = vadd.f32 0.0, %v2983
      %v2985 = vpop.f32.mrb[0].mxu0
      %v2986 = vpop.f32.mrb[0].mxu0
      %v2987 = vadd.f32 0.0, %v2986
      %v2988 = vpop.f32.mrb[0].mxu0
      %2989 = vmatprep.mubr.bf16.mxu0 0
      %2990 = vmatmul.mubr.bf16.gmra.mrb[0].mxu0 %v2904
      %v2991 = vpop.f32.mrb[0].mxu0
      %v2992 = vadd.f32 0.0, %v2991
      %v2993 = vpop.f32.mrb[0].mxu0
      %v2994 = vpop.f32.mrb[0].mxu0
      %v2995 = vadd.f32 0.0, %v2994
      %v2996 = vpop.f32.mrb[0].mxu0
      %2997 = vmatprep.mubr.bf16.mxu0 0
      %2998 = vmatmul.mubr.bf16.gmra.mrb[0].mxu0 %v2907
      %v2999 = vpop.f32.mrb[0].mxu0
      %v3000 = vadd.f32 0.0, %v2999
      %v3001 = vpop.f32.mrb[0].mxu0
      %v3002 = vpop.f32.mrb[0].mxu0
      %v3003 = vadd.f32 0.0, %v3002
      %v3004 = vpop.f32.mrb[0].mxu0
      %3005 = vdwg.mxu0
      %v3006 = vadd.f32 %v2621, %v2944
      %v3007 = vadd.f32 %v2622, %v2947
      %v3008 = vadd.f32 %v2623, %v2952
      %v3009 = vadd.f32 %v2624, %v2955
      %v3010 = vadd.f32 %v2625, %v2960
      %v3011 = vadd.f32 %v2626, %v2963
      %v3012 = vadd.f32 %v2627, %v2968
      %v3013 = vadd.f32 %v2628, %v2971
      %v3014 = vadd.f32 %v2629, %v2976
      %v3015 = vadd.f32 %v2630, %v2979
      %v3016 = vadd.f32 %v2631, %v2984
      %v3017 = vadd.f32 %v2632, %v2987
      %v3018 = vadd.f32 %v2633, %v2992
      %v3019 = vadd.f32 %v2634, %v2995
      %v3020 = vadd.f32 %v2635, %v3000
      %v3021 = vadd.f32 %v2636, %v3003
      %v3022 = vld [vmem:[%s2435] sm:$0xe]
      %v3023 = vld [vmem:[%s2435 + $0xc] sm:$0xe]
      %v3024 = vld [vmem:[%s2435 + $0x18] sm:$0xe]
      %v3025 = vld [vmem:[%s2435 + $0x24] sm:$0xe]
      %v3026 = vld [vmem:[%s2435 + $0x30] sm:$0xe]
      %v3027 = vld [vmem:[%s2435 + $0x3c] sm:$0xe]
      %v3028 = vld [vmem:[%s2435 + $0x48] sm:$0xe]
      %v3029 = vld [vmem:[%s2435 + $0x54] sm:$0xe]
      %v3030 = vld [vmem:[%s1 + $0x40] sm:$0xf]
      %v3031 = vld [vmem:[%s1 + $0x44] sm:$0xf]
      %v3056 = vrot.slane %v3022, 5
      %v3057 = vrot.slane %v3056, 4
      %v3058 = vrot.slane %v2638, 5
      %v3059 = vsel %vm1368, %v3057, %v3058
      %v3060 = vrot.slane %v3058, 4
      %v3061 = vrot.slane %v2639, 5
      %v3062 = vsel %vm1368, %v3060, %v3061
      %v3063 = vrot.slane %v3023, 5
      %v3064 = vrot.slane %v3063, 4
      %v3065 = vrot.slane %v2641, 5
      %v3066 = vsel %vm1368, %v3064, %v3065
      %v3067 = vrot.slane %v3065, 4
      %v3068 = vrot.slane %v2642, 5
      %v3069 = vsel %vm1368, %v3067, %v3068
      %v3070 = vrot.slane %v3024, 5
      %v3071 = vrot.slane %v3070, 4
      %v3072 = vrot.slane %v2644, 5
      %v3073 = vsel %vm1368, %v3071, %v3072
      %v3074 = vrot.slane %v3072, 4
      %v3075 = vrot.slane %v2645, 5
      %v3076 = vsel %vm1368, %v3074, %v3075
      %v3077 = vrot.slane %v3025, 5
      %v3078 = vrot.slane %v3077, 4
      %v3079 = vrot.slane %v2647, 5
      %v3080 = vsel %vm1368, %v3078, %v3079
      %v3081 = vrot.slane %v3079, 4
      %v3082 = vrot.slane %v2648, 5
      %v3083 = vsel %vm1368, %v3081, %v3082
      %v3084 = vrot.slane %v3026, 5
      %v3085 = vrot.slane %v3084, 4
      %v3086 = vrot.slane %v2650, 5
      %v3087 = vsel %vm1368, %v3085, %v3086
      %v3088 = vrot.slane %v3086, 4
      %v3089 = vrot.slane %v2651, 5
      %v3090 = vsel %vm1368, %v3088, %v3089
      %v3091 = vrot.slane %v3027, 5
      %v3092 = vrot.slane %v3091, 4
      %v3093 = vrot.slane %v2653, 5
      %v3094 = vsel %vm1368, %v3092, %v3093
      %v3095 = vrot.slane %v3093, 4
      %v3096 = vrot.slane %v2654, 5
      %v3097 = vsel %vm1368, %v3095, %v3096
      %v3098 = vrot.slane %v3028, 5
      %v3099 = vrot.slane %v3098, 4
      %v3100 = vrot.slane %v2656, 5
      %v3101 = vsel %vm1368, %v3099, %v3100
      %v3102 = vrot.slane %v3100, 4
      %v3103 = vrot.slane %v2657, 5
      %v3104 = vsel %vm1368, %v3102, %v3103
      %v3105 = vrot.slane %v3029, 5
      %v3106 = vrot.slane %v3105, 4
      %v3107 = vrot.slane %v2659, 5
      %v3108 = vsel %vm1368, %v3106, %v3107
      %v3109 = vrot.slane %v3107, 4
      %v3110 = vrot.slane %v2660, 5
      %v3111 = vsel %vm1368, %v3109, %v3110
      %v3112 = vunpack.c.l.b16 %v3059
      %v3113 = vunpack.c.l.b16 %v3062
      %v3114 = vunpack.c.l.b16 %v3066
      %v3115 = vunpack.c.l.b16 %v3069
      %v3116 = vunpack.c.l.b16 %v3073
      %v3117 = vunpack.c.l.b16 %v3076
      %v3118 = vunpack.c.l.b16 %v3080
      %v3119 = vunpack.c.l.b16 %v3083
      %v3120 = vunpack.c.l.b16 %v3087
      %v3121 = vunpack.c.l.b16 %v3090
      %v3122 = vunpack.c.l.b16 %v3094
      %v3123 = vunpack.c.l.b16 %v3097
      %v3124 = vunpack.c.l.b16 %v3101
      %v3125 = vunpack.c.l.b16 %v3104
      %v3126 = vunpack.c.l.b16 %v3108
      %v3127 = vunpack.c.l.b16 %v3111
      %v3128 = vpack.c.b16 %v3113, %v3112
      %v3129 = vpack.c.b16 %v3115, %v3114
      %v3130 = vpack.c.b16 %v3117, %v3116
      %v3131 = vpack.c.b16 %v3119, %v3118
      %v3132 = vpack.c.b16 %v3121, %v3120
      %v3133 = vpack.c.b16 %v3123, %v3122
      %v3134 = vpack.c.b16 %v3125, %v3124
      %v3135 = vpack.c.b16 %v3127, %v3126
      %v3138 = vunpack.c.l.b16 %v3030
      %v3139 = vunpack.c.l.b16 %v3031
      %v3140 = vpack.c.b16 %v3139, %v3138
      %v3143 = vsel %vm1051, %v3128, 0
      %v3146 = vsel %vm1051, %v3129, 0
      %v3149 = vsel %vm1051, %v3130, 0
      %v3152 = vsel %vm1051, %v3131, 0
      %v3155 = vsel %vm1051, %v3132, 0
      %v3158 = vsel %vm1051, %v3133, 0
      %v3161 = vsel %vm1051, %v3134, 0
      %v3164 = vsel %vm1051, %v3135, 0
      %3166 = vmatprep.subr.bf16.mxu0 0
      %3167 = vmatpush1.bf16.msra.mxu0 %v3140
      %3168 = vmatprep.subr.bf16.mxu0 0
      %3169 = vmatpush1.bf16.msra.mxu0 0
      %3170 = vmatprep.subr.bf16.mxu0 0
      %3171 = vmatpush1.bf16.msra.mxu0 0
      %3172 = vmatprep.subr.bf16.mxu0 0
      %3173 = vmatpush1.bf16.msra.mxu0 0
      %3174 = vmatprep.subr.bf16.mxu0 0
      %3175 = vmatpush1.bf16.msra.mxu0 0
      %3176 = vmatprep.subr.bf16.mxu0 0
      %3177 = vmatpush1.bf16.msra.mxu0 0
      %3178 = vmatprep.subr.bf16.mxu0 0
      %3179 = vmatpush1.bf16.msra.mxu0 0
      %3180 = vmatprep.subr.bf16.mxu0 0
      %3181 = vmatpush1.bf16.msra.mxu0 0
      %3182 = vmatprep.subr.bf16.mxu0 0
      %3183 = vmatpush1.bf16.msra.mxu0 0
      %3184 = vmatprep.subr.bf16.mxu0 0
      %3185 = vmatpush1.bf16.msra.mxu0 0
      %3186 = vmatprep.subr.bf16.mxu0 0
      %3187 = vmatpush1.bf16.msra.mxu0 0
      %3188 = vmatprep.subr.bf16.mxu0 0
      %3189 = vmatpush1.bf16.msra.mxu0 0
      %3190 = vmatprep.subr.bf16.mxu0 0
      %3191 = vmatpush1.bf16.msra.mxu0 0
      %3192 = vmatprep.subr.bf16.mxu0 0
      %3193 = vmatpush1.bf16.msra.mxu0 0
      %3194 = vmatprep.subr.bf16.mxu0 0
      %3195 = vmatpush1.bf16.msra.mxu0 0
      %3196 = vmatprep.subr.bf16.mxu0 0
      %3197 = vmatpush1.bf16.msra.mxu0 0
      %3198 = vmatprep.mubr.bf16.mxu0 0
      %3199 = vmatmul.mubr.bf16.gmra.mrb[0].mxu0 %v3143
      %v3200 = vpop.f32.mrb[0].mxu0
      %v3201 = vadd.f32 0.0, %v3200
      %v3202 = vpop.f32.mrb[0].mxu0
      %v3203 = vpop.f32.mrb[0].mxu0
      %v3204 = vadd.f32 0.0, %v3203
      %v3205 = vpop.f32.mrb[0].mxu0
      %3206 = vmatprep.mubr.bf16.mxu0 0
      %3207 = vmatmul.mubr.bf16.gmra.mrb[0].mxu0 %v3146
      %v3208 = vpop.f32.mrb[0].mxu0
      %v3209 = vadd.f32 0.0, %v3208
      %v3210 = vpop.f32.mrb[0].mxu0
      %v3211 = vpop.f32.mrb[0].mxu0
      %v3212 = vadd.f32 0.0, %v3211
      %v3213 = vpop.f32.mrb[0].mxu0
      %3214 = vmatprep.mubr.bf16.mxu0 0
      %3215 = vmatmul.mubr.bf16.gmra.mrb[0].mxu0 %v3149
      %v3216 = vpop.f32.mrb[0].mxu0
      %v3217 = vadd.f32 0.0, %v3216
      %v3218 = vpop.f32.mrb[0].mxu0
      %v3219 = vpop.f32.mrb[0].mxu0
      %v3220 = vadd.f32 0.0, %v3219
      %v3221 = vpop.f32.mrb[0].mxu0
      %3222 = vmatprep.mubr.bf16.mxu0 0
      %3223 = vmatmul.mubr.bf16.gmra.mrb[0].mxu0 %v3152
      %v3224 = vpop.f32.mrb[0].mxu0
      %v3225 = vadd.f32 0.0, %v3224
      %v3226 = vpop.f32.mrb[0].mxu0
      %v3227 = vpop.f32.mrb[0].mxu0
      %v3228 = vadd.f32 0.0, %v3227
      %v3229 = vpop.f32.mrb[0].mxu0
      %3230 = vmatprep.mubr.bf16.mxu0 0
      %3231 = vmatmul.mubr.bf16.gmra.mrb[0].mxu0 %v3155
      %v3232 = vpop.f32.mrb[0].mxu0
      %v3233 = vadd.f32 0.0, %v3232
      %v3234 = vpop.f32.mrb[0].mxu0
      %v3235 = vpop.f32.mrb[0].mxu0
      %v3236 = vadd.f32 0.0, %v3235
      %v3237 = vpop.f32.mrb[0].mxu0
      %3238 = vmatprep.mubr.bf16.mxu0 0
      %3239 = vmatmul.mubr.bf16.gmra.mrb[0].mxu0 %v3158
      %v3240 = vpop.f32.mrb[0].mxu0
      %v3241 = vadd.f32 0.0, %v3240
      %v3242 = vpop.f32.mrb[0].mxu0
      %v3243 = vpop.f32.mrb[0].mxu0
      %v3244 = vadd.f32 0.0, %v3243
      %v3245 = vpop.f32.mrb[0].mxu0
      %3246 = vmatprep.mubr.bf16.mxu0 0
      %3247 = vmatmul.mubr.bf16.gmra.mrb[0].mxu0 %v3161
      %v3248 = vpop.f32.mrb[0].mxu0
      %v3249 = vadd.f32 0.0, %v3248
      %v3250 = vpop.f32.mrb[0].mxu0
      %v3251 = vpop.f32.mrb[0].mxu0
      %v3252 = vadd.f32 0.0, %v3251
      %v3253 = vpop.f32.mrb[0].mxu0
      %3254 = vmatprep.mubr.bf16.mxu0 0
      %3255 = vmatmul.mubr.bf16.gmra.mrb[0].mxu0 %v3164
      %v3256 = vpop.f32.mrb[0].mxu0
      %v3257 = vadd.f32 0.0, %v3256
      %v3258 = vpop.f32.mrb[0].mxu0
      %v3259 = vpop.f32.mrb[0].mxu0
      %v3260 = vadd.f32 0.0, %v3259
      %v3261 = vpop.f32.mrb[0].mxu0
      %3262 = vdwg.mxu0
      %v3263 = vadd.f32 %v3006, %v3201
      %v3264 = vadd.f32 %v3007, %v3204
      %v3265 = vadd.f32 %v3008, %v3209
      %v3266 = vadd.f32 %v3009, %v3212
      %v3267 = vadd.f32 %v3010, %v3217
      %v3268 = vadd.f32 %v3011, %v3220
      %v3269 = vadd.f32 %v3012, %v3225
      %v3270 = vadd.f32 %v3013, %v3228
      %v3271 = vadd.f32 %v3014, %v3233
      %v3272 = vadd.f32 %v3015, %v3236
      %v3273 = vadd.f32 %v3016, %v3241
      %v3274 = vadd.f32 %v3017, %v3244
      %v3275 = vadd.f32 %v3018, %v3249
      %v3276 = vadd.f32 %v3019, %v3252
      %v3277 = vadd.f32 %v3020, %v3257
      %v3278 = vadd.f32 %v3021, %v3260
      %v3280 = vlaneseq
      %v3281 = vshrl.u32 %v3280, 7
      %v3282 = vsub.s32 0, %v3281
      %v3283 = vrot.slane %v797, %v3282
      %v3285 = vadd.f32 %v3263, %v3283
      %v3286 = vadd.f32 %v3264, %v3283
      %v3287 = vadd.f32 %v3265, %v3283
      %v3288 = vadd.f32 %v3266, %v3283
      %v3289 = vadd.f32 %v3267, %v3283
      %v3290 = vadd.f32 %v3268, %v3283
      %v3291 = vadd.f32 %v3269, %v3283
      %v3292 = vadd.f32 %v3270, %v3283
      %v3293 = vadd.f32 %v3271, %v3283
      %v3294 = vadd.f32 %v3272, %v3283
      %v3295 = vadd.f32 %v3273, %v3283
      %v3296 = vadd.f32 %v3274, %v3283
      %v3297 = vadd.f32 %v3275, %v3283
      %v3298 = vadd.f32 %v3276, %v3283
      %v3299 = vadd.f32 %v3277, %v3283
      %v3300 = vadd.f32 %v3278, %v3283
      %vm3301 = vcmp.ge.f32.partialorder %v3285, 0.0
      %vm3302 = vcmp.ge.f32.partialorder %v3286, 0.0
      %vm3303 = vcmp.ge.f32.partialorder %v3287, 0.0
      %vm3304 = vcmp.ge.f32.partialorder %v3288, 0.0
      %vm3305 = vcmp.ge.f32.partialorder %v3289, 0.0
      %vm3306 = vcmp.ge.f32.partialorder %v3290, 0.0
      %vm3307 = vcmp.ge.f32.partialorder %v3291, 0.0
      %vm3308 = vcmp.ge.f32.partialorder %v3292, 0.0
      %vm3309 = vcmp.ge.f32.partialorder %v3293, 0.0
      %vm3310 = vcmp.ge.f32.partialorder %v3294, 0.0
      %vm3311 = vcmp.ge.f32.partialorder %v3295, 0.0
      %vm3312 = vcmp.ge.f32.partialorder %v3296, 0.0
      %vm3313 = vcmp.ge.f32.partialorder %v3297, 0.0
      %vm3314 = vcmp.ge.f32.partialorder %v3298, 0.0
      %vm3315 = vcmp.ge.f32.partialorder %v3299, 0.0
      %vm3316 = vcmp.ge.f32.partialorder %v3300, 0.0
      %v3317 = vmul.f32 %v3285, 0.01
      %v3318 = vmul.f32 %v3286, 0.01
      %v3319 = vmul.f32 %v3287, 0.01
      %v3320 = vmul.f32 %v3288, 0.01
      %v3321 = vmul.f32 %v3289, 0.01
      %v3322 = vmul.f32 %v3290, 0.01
      %v3323 = vmul.f32 %v3291, 0.01
      %v3324 = vmul.f32 %v3292, 0.01
      %v3325 = vmul.f32 %v3293, 0.01
      %v3326 = vmul.f32 %v3294, 0.01
      %v3327 = vmul.f32 %v3295, 0.01
      %v3328 = vmul.f32 %v3296, 0.01
      %v3329 = vmul.f32 %v3297, 0.01
      %v3330 = vmul.f32 %v3298, 0.01
      %v3331 = vmul.f32 %v3299, 0.01
      %v3332 = vmul.f32 %v3300, 0.01
      %v3333 = vsel %vm3301, %v3285, %v3317
      %v3334 = vsel %vm3302, %v3286, %v3318
      %v3335 = vsel %vm3303, %v3287, %v3319
      %v3336 = vsel %vm3304, %v3288, %v3320
      %v3337 = vsel %vm3305, %v3289, %v3321
      %v3338 = vsel %vm3306, %v3290, %v3322
      %v3339 = vsel %vm3307, %v3291, %v3323
      %v3340 = vsel %vm3308, %v3292, %v3324
      %v3341 = vsel %vm3309, %v3293, %v3325
      %v3342 = vsel %vm3310, %v3294, %v3326
      %v3343 = vsel %vm3311, %v3295, %v3327
      %v3344 = vsel %vm3312, %v3296, %v3328
      %v3345 = vsel %vm3313, %v3297, %v3329
      %v3346 = vsel %vm3314, %v3298, %v3330
      %v3347 = vsel %vm3315, %v3299, %v3331
      %v3348 = vsel %vm3316, %v3300, %v3332
      %v3349 = vpack.c.bf16 %v3334, %v3333
      %v3350 = vpack.c.bf16 %v3336, %v3335
      %v3351 = vpack.c.bf16 %v3338, %v3337
      %v3352 = vpack.c.bf16 %v3340, %v3339
      %v3353 = vpack.c.bf16 %v3342, %v3341
      %v3354 = vpack.c.bf16 %v3344, %v3343
      %v3355 = vpack.c.bf16 %v3346, %v3345
      %v3356 = vpack.c.bf16 %v3348, %v3347
      %v3365 = vunpack.c.l.b16 %v3349
      %v3366 = vunpack.c.h.b16 %v3349
      %v3367 = vunpack.c.l.b16 %v3350
      %v3368 = vunpack.c.h.b16 %v3350
      %v3369 = vunpack.c.l.b16 %v3351
      %v3370 = vunpack.c.h.b16 %v3351
      %v3371 = vunpack.c.l.b16 %v3352
      %v3372 = vunpack.c.h.b16 %v3352
      %v3373 = vunpack.c.l.b16 %v3353
      %v3374 = vunpack.c.h.b16 %v3353
      %v3375 = vunpack.c.l.b16 %v3354
      %v3376 = vunpack.c.h.b16 %v3354
      %v3377 = vunpack.c.l.b16 %v3355
      %v3378 = vunpack.c.h.b16 %v3355
      %v3379 = vunpack.c.l.b16 %v3356
      %v3380 = vunpack.c.h.b16 %v3356
      %v3381 = vpack.c.b16 %v3365, %v3365
      %v3382 = vpack.c.b16 %v3366, %v3366
      %v3383 = vpack.c.b16 %v3367, %v3367
      %v3384 = vpack.c.b16 %v3368, %v3368
      %v3385 = vpack.c.b16 %v3369, %v3369
      %v3386 = vpack.c.b16 %v3370, %v3370
      %v3387 = vpack.c.b16 %v3371, %v3371
      %v3388 = vpack.c.b16 %v3372, %v3372
      %v3389 = vpack.c.b16 %v3373, %v3373
      %v3390 = vpack.c.b16 %v3374, %v3374
      %v3391 = vpack.c.b16 %v3375, %v3375
      %v3392 = vpack.c.b16 %v3376, %v3376
      %v3393 = vpack.c.b16 %v3377, %v3377
      %v3394 = vpack.c.b16 %v3378, %v3378
      %v3395 = vpack.c.b16 %v3379, %v3379
      %v3396 = vpack.c.b16 %v3380, %v3380
      %3413 = vst [vmem:[%s170] sm:$0xf] %v3381
      %3414 = vst [vmem:[%s170 + $0x4] sm:$0xf] %v3382
      %3415 = vst [vmem:[%s170 + $0x8] sm:$0xf] %v3383
      %3416 = vst [vmem:[%s170 + $0xc] sm:$0xf] %v3384
      %3417 = vst [vmem:[%s170 + $0x10] sm:$0xf] %v3385
      %3418 = vst [vmem:[%s170 + $0x14] sm:$0xf] %v3386
      %3419 = vst [vmem:[%s170 + $0x18] sm:$0xf] %v3387
      %3420 = vst [vmem:[%s170 + $0x1c] sm:$0xf] %v3388
      %3421 = vst [vmem:[%s170 + $0x20] sm:$0xf] %v3389
      %3422 = vst [vmem:[%s170 + $0x24] sm:$0xf] %v3390
      %3423 = vst [vmem:[%s170 + $0x28] sm:$0xf] %v3391
      %3424 = vst [vmem:[%s170 + $0x2c] sm:$0xf] %v3392
      %3425 = vst [vmem:[%s170 + $0x30] sm:$0xf] %v3393
      %3426 = vst [vmem:[%s170 + $0x34] sm:$0xf] %v3394
      %3427 = vst [vmem:[%s170 + $0x38] sm:$0xf] %v3395
      %3428 = vst [vmem:[%s170 + $0x3c] sm:$0xf] %v3396
      %s3429 = scalar_lea.vmem [#allocation2], 96
      %v3430 = vld [vmem:[%s3429] sm:$0xf]
      %v3431 = vld [vmem:[%s3429 + $0x4] sm:$0xf]
      %v3432 = vld [vmem:[%s3429 + $0xc] sm:$0xf]
      %v3433 = vld [vmem:[%s3429 + $0x10] sm:$0xf]
      %v3434 = vld [vmem:[%s3429 + $0x18] sm:$0xf]
      %v3435 = vld [vmem:[%s3429 + $0x1c] sm:$0xf]
      %v3436 = vld [vmem:[%s3429 + $0x24] sm:$0xf]
      %v3437 = vld [vmem:[%s3429 + $0x28] sm:$0xf]
      %v3438 = vld [vmem:[%s3429 + $0x30] sm:$0xf]
      %v3439 = vld [vmem:[%s3429 + $0x34] sm:$0xf]
      %v3440 = vld [vmem:[%s3429 + $0x3c] sm:$0xf]
      %v3441 = vld [vmem:[%s3429 + $0x40] sm:$0xf]
      %v3442 = vld [vmem:[%s3429 + $0x48] sm:$0xf]
      %v3443 = vld [vmem:[%s3429 + $0x4c] sm:$0xf]
      %v3444 = vld [vmem:[%s3429 + $0x54] sm:$0xf]
      %v3445 = vld [vmem:[%s3429 + $0x58] sm:$0xf]
      %v3446 = vld [vmem:[%s1] sm:$0xf]
      %v3447 = vld [vmem:[%s1 + $0x4] sm:$0xf]
      %v3448 = vld [vmem:[%s3429 + $0x8] sm:$0x1]
      %v3449 = vld [vmem:[%s3429 + $0x14] sm:$0x1]
      %v3450 = vld [vmem:[%s3429 + $0x20] sm:$0x1]
      %v3451 = vld [vmem:[%s3429 + $0x2c] sm:$0x1]
      %v3452 = vld [vmem:[%s3429 + $0x38] sm:$0x1]
      %v3453 = vld [vmem:[%s3429 + $0x44] sm:$0x1]
      %v3454 = vld [vmem:[%s3429 + $0x50] sm:$0x1]
      %v3455 = vld [vmem:[%s3429 + $0x5c] sm:$0x1]
      %v3456 = vld [vmem:[%s1 + $0x8] sm:$0xf]
      %v3457 = vld [vmem:[%s1 + $0xc] sm:$0xf]
      %v3459 = vshrl.u32 %v3430, 16
      %v3461 = vrot.slane %v3459, 4
      %v3462 = vshll.u32 %v3430, 16
      %v3464 = vrot.slane %v3462, 5
      %v3465 = vor.u32 %v3461, %v3464
      %v3466 = vrot.slane %v3465, 4
      %v3468 = vshll.u32 %v3431, 16
      %v3470 = vrot.slane %v3468, 5
      %v3471 = vsel %vm828, %v3466, %v3470
      %v3472 = vshrl.u32 %v3431, 16
      %v3474 = vrot.slane %v3472, 4
      %v3475 = vor.u32 %v3474, %v3470
      %v3476 = vrot.slane %v3475, 4
      %v3478 = vshll.u32 %v3448, 16
      %v3480 = vrot.slane %v3478, 5
      %v3481 = vsel %vm828, %v3476, %v3480
      %v3483 = vshrl.u32 %v3432, 16
      %v3485 = vrot.slane %v3483, 4
      %v3486 = vshll.u32 %v3432, 16
      %v3488 = vrot.slane %v3486, 5
      %v3489 = vor.u32 %v3485, %v3488
      %v3490 = vrot.slane %v3489, 4
      %v3492 = vshll.u32 %v3433, 16
      %v3494 = vrot.slane %v3492, 5
      %v3495 = vsel %vm828, %v3490, %v3494
      %v3496 = vshrl.u32 %v3433, 16
      %v3498 = vrot.slane %v3496, 4
      %v3499 = vor.u32 %v3498, %v3494
      %v3500 = vrot.slane %v3499, 4
      %v3502 = vshll.u32 %v3449, 16
      %v3504 = vrot.slane %v3502, 5
      %v3505 = vsel %vm828, %v3500, %v3504
      %v3507 = vshrl.u32 %v3434, 16
      %v3509 = vrot.slane %v3507, 4
      %v3510 = vshll.u32 %v3434, 16
      %v3512 = vrot.slane %v3510, 5
      %v3513 = vor.u32 %v3509, %v3512
      %v3514 = vrot.slane %v3513, 4
      %v3516 = vshll.u32 %v3435, 16
      %v3518 = vrot.slane %v3516, 5
      %v3519 = vsel %vm828, %v3514, %v3518
      %v3520 = vshrl.u32 %v3435, 16
      %v3522 = vrot.slane %v3520, 4
      %v3523 = vor.u32 %v3522, %v3518
      %v3524 = vrot.slane %v3523, 4
      %v3526 = vshll.u32 %v3450, 16
      %v3528 = vrot.slane %v3526, 5
      %v3529 = vsel %vm828, %v3524, %v3528
      %v3531 = vshrl.u32 %v3436, 16
      %v3533 = vrot.slane %v3531, 4
      %v3534 = vshll.u32 %v3436, 16
      %v3536 = vrot.slane %v3534, 5
      %v3537 = vor.u32 %v3533, %v3536
      %v3538 = vrot.slane %v3537, 4
      %v3540 = vshll.u32 %v3437, 16
      %v3542 = vrot.slane %v3540, 5
      %v3543 = vsel %vm828, %v3538, %v3542
      %v3544 = vshrl.u32 %v3437, 16
      %v3546 = vrot.slane %v3544, 4
      %v3547 = vor.u32 %v3546, %v3542
      %v3548 = vrot.slane %v3547, 4
      %v3550 = vshll.u32 %v3451, 16
      %v3552 = vrot.slane %v3550, 5
      %v3553 = vsel %vm828, %v3548, %v3552
      %v3555 = vshrl.u32 %v3438, 16
      %v3557 = vrot.slane %v3555, 4
      %v3558 = vshll.u32 %v3438, 16
      %v3560 = vrot.slane %v3558, 5
      %v3561 = vor.u32 %v3557, %v3560
      %v3562 = vrot.slane %v3561, 4
      %v3564 = vshll.u32 %v3439, 16
      %v3566 = vrot.slane %v3564, 5
      %v3567 = vsel %vm828, %v3562, %v3566
      %v3568 = vshrl.u32 %v3439, 16
      %v3570 = vrot.slane %v3568, 4
      %v3571 = vor.u32 %v3570, %v3566
      %v3572 = vrot.slane %v3571, 4
      %v3574 = vshll.u32 %v3452, 16
      %v3576 = vrot.slane %v3574, 5
      %v3577 = vsel %vm828, %v3572, %v3576
      %v3579 = vshrl.u32 %v3440, 16
      %v3581 = vrot.slane %v3579, 4
      %v3582 = vshll.u32 %v3440, 16
      %v3584 = vrot.slane %v3582, 5
      %v3585 = vor.u32 %v3581, %v3584
      %v3586 = vrot.slane %v3585, 4
      %v3588 = vshll.u32 %v3441, 16
      %v3590 = vrot.slane %v3588, 5
      %v3591 = vsel %vm828, %v3586, %v3590
      %v3592 = vshrl.u32 %v3441, 16
      %v3594 = vrot.slane %v3592, 4
      %v3595 = vor.u32 %v3594, %v3590
      %v3596 = vrot.slane %v3595, 4
      %v3598 = vshll.u32 %v3453, 16
      %v3600 = vrot.slane %v3598, 5
      %v3601 = vsel %vm828, %v3596, %v3600
      %v3603 = vshrl.u32 %v3442, 16
      %v3605 = vrot.slane %v3603, 4
      %v3606 = vshll.u32 %v3442, 16
      %v3608 = vrot.slane %v3606, 5
      %v3609 = vor.u32 %v3605, %v3608
      %v3610 = vrot.slane %v3609, 4
      %v3612 = vshll.u32 %v3443, 16
      %v3614 = vrot.slane %v3612, 5
      %v3615 = vsel %vm828, %v3610, %v3614
      %v3616 = vshrl.u32 %v3443, 16
      %v3618 = vrot.slane %v3616, 4
      %v3619 = vor.u32 %v3618, %v3614
      %v3620 = vrot.slane %v3619, 4
      %v3622 = vshll.u32 %v3454, 16
      %v3624 = vrot.slane %v3622, 5
      %v3625 = vsel %vm828, %v3620, %v3624
      %v3627 = vshrl.u32 %v3444, 16
      %v3629 = vrot.slane %v3627, 4
      %v3630 = vshll.u32 %v3444, 16
      %v3632 = vrot.slane %v3630, 5
      %v3633 = vor.u32 %v3629, %v3632
      %v3634 = vrot.slane %v3633, 4
      %v3636 = vshll.u32 %v3445, 16
      %v3638 = vrot.slane %v3636, 5
      %v3639 = vsel %vm828, %v3634, %v3638
      %v3640 = vshrl.u32 %v3445, 16
      %v3642 = vrot.slane %v3640, 4
      %v3643 = vor.u32 %v3642, %v3638
      %v3644 = vrot.slane %v3643, 4
      %v3646 = vshll.u32 %v3455, 16
      %v3648 = vrot.slane %v3646, 5
      %v3649 = vsel %vm828, %v3644, %v3648
      %v3650 = vunpack.c.l.b16 %v3471
      %v3651 = vunpack.c.l.b16 %v3481
      %v3652 = vunpack.c.l.b16 %v3495
      %v3653 = vunpack.c.l.b16 %v3505
      %v3654 = vunpack.c.l.b16 %v3519
      %v3655 = vunpack.c.l.b16 %v3529
      %v3656 = vunpack.c.l.b16 %v3543
      %v3657 = vunpack.c.l.b16 %v3553
      %v3658 = vunpack.c.l.b16 %v3567
      %v3659 = vunpack.c.l.b16 %v3577
      %v3660 = vunpack.c.l.b16 %v3591
      %v3661 = vunpack.c.l.b16 %v3601
      %v3662 = vunpack.c.l.b16 %v3615
      %v3663 = vunpack.c.l.b16 %v3625
      %v3664 = vunpack.c.l.b16 %v3639
      %v3665 = vunpack.c.l.b16 %v3649
      %v3666 = vpack.c.b16 %v3651, %v3650
      %v3667 = vpack.c.b16 %v3653, %v3652
      %v3668 = vpack.c.b16 %v3655, %v3654
      %v3669 = vpack.c.b16 %v3657, %v3656
      %v3670 = vpack.c.b16 %v3659, %v3658
      %v3671 = vpack.c.b16 %v3661, %v3660
      %v3672 = vpack.c.b16 %v3663, %v3662
      %v3673 = vpack.c.b16 %v3665, %v3664
      %v3676 = vunpack.c.l.b16 %v3456
      %v3677 = vunpack.c.l.b16 %v3457
      %v3678 = vpack.c.b16 %v3677, %v3676
      %v3681 = vsel %vm1051, %v3666, 0
      %v3684 = vsel %vm1051, %v3667, 0
      %v3687 = vsel %vm1051, %v3668, 0
      %v3690 = vsel %vm1051, %v3669, 0
      %v3693 = vsel %vm1051, %v3670, 0
      %v3696 = vsel %vm1051, %v3671, 0
      %v3699 = vsel %vm1051, %v3672, 0
      %v3702 = vsel %vm1051, %v3673, 0
      %3704 = vmatprep.subr.bf16.mxu0 0
      %3705 = vmatpush1.bf16.msra.mxu0 %v3678
      %3706 = vmatprep.subr.bf16.mxu0 0
      %3707 = vmatpush1.bf16.msra.mxu0 0
      %3708 = vmatprep.subr.bf16.mxu0 0
      %3709 = vmatpush1.bf16.msra.mxu0 0
      %3710 = vmatprep.subr.bf16.mxu0 0
      %3711 = vmatpush1.bf16.msra.mxu0 0
      %3712 = vmatprep.subr.bf16.mxu0 0
      %3713 = vmatpush1.bf16.msra.mxu0 0
      %3714 = vmatprep.subr.bf16.mxu0 0
      %3715 = vmatpush1.bf16.msra.mxu0 0
      %3716 = vmatprep.subr.bf16.mxu0 0
      %3717 = vmatpush1.bf16.msra.mxu0 0
      %3718 = vmatprep.subr.bf16.mxu0 0
      %3719 = vmatpush1.bf16.msra.mxu0 0
      %3720 = vmatprep.subr.bf16.mxu0 0
      %3721 = vmatpush1.bf16.msra.mxu0 0
      %3722 = vmatprep.subr.bf16.mxu0 0
      %3723 = vmatpush1.bf16.msra.mxu0 0
      %3724 = vmatprep.subr.bf16.mxu0 0
      %3725 = vmatpush1.bf16.msra.mxu0 0
      %3726 = vmatprep.subr.bf16.mxu0 0
      %3727 = vmatpush1.bf16.msra.mxu0 0
      %3728 = vmatprep.subr.bf16.mxu0 0
      %3729 = vmatpush1.bf16.msra.mxu0 0
      %3730 = vmatprep.subr.bf16.mxu0 0
      %3731 = vmatpush1.bf16.msra.mxu0 0
      %3732 = vmatprep.subr.bf16.mxu0 0
      %3733 = vmatpush1.bf16.msra.mxu0 0
      %3734 = vmatprep.subr.bf16.mxu0 0
      %3735 = vmatpush1.bf16.msra.mxu0 0
      %3736 = vmatprep.mubr.bf16.mxu0 0
      %3737 = vmatmul.mubr.bf16.gmra.mrb[0].mxu0 %v3681
      %v3738 = vpop.f32.mrb[0].mxu0
      %v3739 = vadd.f32 0.0, %v3738
      %v3740 = vpop.f32.mrb[0].mxu0
      %v3741 = vpop.f32.mrb[0].mxu0
      %v3742 = vadd.f32 0.0, %v3741
      %v3743 = vpop.f32.mrb[0].mxu0
      %3744 = vmatprep.mubr.bf16.mxu0 0
      %3745 = vmatmul.mubr.bf16.gmra.mrb[0].mxu0 %v3684
      %v3746 = vpop.f32.mrb[0].mxu0
      %v3747 = vadd.f32 0.0, %v3746
      %v3748 = vpop.f32.mrb[0].mxu0
      %v3749 = vpop.f32.mrb[0].mxu0
      %v3750 = vadd.f32 0.0, %v3749
      %v3751 = vpop.f32.mrb[0].mxu0
      %3752 = vmatprep.mubr.bf16.mxu0 0
      %3753 = vmatmul.mubr.bf16.gmra.mrb[0].mxu0 %v3687
      %v3754 = vpop.f32.mrb[0].mxu0
      %v3755 = vadd.f32 0.0, %v3754
      %v3756 = vpop.f32.mrb[0].mxu0
      %v3757 = vpop.f32.mrb[0].mxu0
      %v3758 = vadd.f32 0.0, %v3757
      %v3759 = vpop.f32.mrb[0].mxu0
      %3760 = vmatprep.mubr.bf16.mxu0 0
      %3761 = vmatmul.mubr.bf16.gmra.mrb[0].mxu0 %v3690
      %v3762 = vpop.f32.mrb[0].mxu0
      %v3763 = vadd.f32 0.0, %v3762
      %v3764 = vpop.f32.mrb[0].mxu0
      %v3765 = vpop.f32.mrb[0].mxu0
      %v3766 = vadd.f32 0.0, %v3765
      %v3767 = vpop.f32.mrb[0].mxu0
      %3768 = vmatprep.mubr.bf16.mxu0 0
      %3769 = vmatmul.mubr.bf16.gmra.mrb[0].mxu0 %v3693
      %v3770 = vpop.f32.mrb[0].mxu0
      %v3771 = vadd.f32 0.0, %v3770
      %v3772 = vpop.f32.mrb[0].mxu0
      %v3773 = vpop.f32.mrb[0].mxu0
      %v3774 = vadd.f32 0.0, %v3773
      %v3775 = vpop.f32.mrb[0].mxu0
      %3776 = vmatprep.mubr.bf16.mxu0 0
      %3777 = vmatmul.mubr.bf16.gmra.mrb[0].mxu0 %v3696
      %v3778 = vpop.f32.mrb[0].mxu0
      %v3779 = vadd.f32 0.0, %v3778
      %v3780 = vpop.f32.mrb[0].mxu0
      %v3781 = vpop.f32.mrb[0].mxu0
      %v3782 = vadd.f32 0.0, %v3781
      %v3783 = vpop.f32.mrb[0].mxu0
      %3784 = vmatprep.mubr.bf16.mxu0 0
      %3785 = vmatmul.mubr.bf16.gmra.mrb[0].mxu0 %v3699
      %v3786 = vpop.f32.mrb[0].mxu0
      %v3787 = vadd.f32 0.0, %v3786
      %v3788 = vpop.f32.mrb[0].mxu0
      %v3789 = vpop.f32.mrb[0].mxu0
      %v3790 = vadd.f32 0.0, %v3789
      %v3791 = vpop.f32.mrb[0].mxu0
      %3792 = vmatprep.mubr.bf16.mxu0 0
      %3793 = vmatmul.mubr.bf16.gmra.mrb[0].mxu0 %v3702
      %v3794 = vpop.f32.mrb[0].mxu0
      %v3795 = vadd.f32 0.0, %v3794
      %v3796 = vpop.f32.mrb[0].mxu0
      %v3797 = vpop.f32.mrb[0].mxu0
      %v3798 = vadd.f32 0.0, %v3797
      %v3799 = vpop.f32.mrb[0].mxu0
      %3800 = vdwg.mxu0
      %v3817 = vunpack.c.l.b16 %v3430
      %v3818 = vunpack.c.l.b16 %v3431
      %v3819 = vunpack.c.l.b16 %v3432
      %v3820 = vunpack.c.l.b16 %v3433
      %v3821 = vunpack.c.l.b16 %v3434
      %v3822 = vunpack.c.l.b16 %v3435
      %v3823 = vunpack.c.l.b16 %v3436
      %v3824 = vunpack.c.l.b16 %v3437
      %v3825 = vunpack.c.l.b16 %v3438
      %v3826 = vunpack.c.l.b16 %v3439
      %v3827 = vunpack.c.l.b16 %v3440
      %v3828 = vunpack.c.l.b16 %v3441
      %v3829 = vunpack.c.l.b16 %v3442
      %v3830 = vunpack.c.l.b16 %v3443
      %v3831 = vunpack.c.l.b16 %v3444
      %v3832 = vunpack.c.l.b16 %v3445
      %v3833 = vpack.c.b16 %v3818, %v3817
      %v3834 = vpack.c.b16 %v3820, %v3819
      %v3835 = vpack.c.b16 %v3822, %v3821
      %v3836 = vpack.c.b16 %v3824, %v3823
      %v3837 = vpack.c.b16 %v3826, %v3825
      %v3838 = vpack.c.b16 %v3828, %v3827
      %v3839 = vpack.c.b16 %v3830, %v3829
      %v3840 = vpack.c.b16 %v3832, %v3831
      %v3843 = vunpack.c.l.b16 %v3446
      %v3844 = vunpack.c.l.b16 %v3447
      %v3845 = vpack.c.b16 %v3844, %v3843
      %v3848 = vsel %vm1051, %v3833, 0
      %v3851 = vsel %vm1051, %v3834, 0
      %v3854 = vsel %vm1051, %v3835, 0
      %v3857 = vsel %vm1051, %v3836, 0
      %v3860 = vsel %vm1051, %v3837, 0
      %v3863 = vsel %vm1051, %v3838, 0
      %v3866 = vsel %vm1051, %v3839, 0
      %v3869 = vsel %vm1051, %v3840, 0
      %3871 = vmatprep.subr.bf16.mxu0 0
      %3872 = vmatpush1.bf16.msra.mxu0 %v3845
      %3873 = vmatprep.subr.bf16.mxu0 0
      %3874 = vmatpush1.bf16.msra.mxu0 0
      %3875 = vmatprep.subr.bf16.mxu0 0
      %3876 = vmatpush1.bf16.msra.mxu0 0
      %3877 = vmatprep.subr.bf16.mxu0 0
      %3878 = vmatpush1.bf16.msra.mxu0 0
      %3879 = vmatprep.subr.bf16.mxu0 0
      %3880 = vmatpush1.bf16.msra.mxu0 0
      %3881 = vmatprep.subr.bf16.mxu0 0
      %3882 = vmatpush1.bf16.msra.mxu0 0
      %3883 = vmatprep.subr.bf16.mxu0 0
      %3884 = vmatpush1.bf16.msra.mxu0 0
      %3885 = vmatprep.subr.bf16.mxu0 0
      %3886 = vmatpush1.bf16.msra.mxu0 0
      %3887 = vmatprep.subr.bf16.mxu0 0
      %3888 = vmatpush1.bf16.msra.mxu0 0
      %3889 = vmatprep.subr.bf16.mxu0 0
      %3890 = vmatpush1.bf16.msra.mxu0 0
      %3891 = vmatprep.subr.bf16.mxu0 0
      %3892 = vmatpush1.bf16.msra.mxu0 0
      %3893 = vmatprep.subr.bf16.mxu0 0
      %3894 = vmatpush1.bf16.msra.mxu0 0
      %3895 = vmatprep.subr.bf16.mxu0 0
      %3896 = vmatpush1.bf16.msra.mxu0 0
      %3897 = vmatprep.subr.bf16.mxu0 0
      %3898 = vmatpush1.bf16.msra.mxu0 0
      %3899 = vmatprep.subr.bf16.mxu0 0
      %3900 = vmatpush1.bf16.msra.mxu0 0
      %3901 = vmatprep.subr.bf16.mxu0 0
      %3902 = vmatpush1.bf16.msra.mxu0 0
      %3903 = vmatprep.mubr.bf16.mxu0 0
      %3904 = vmatmul.mubr.bf16.gmra.mrb[0].mxu0 %v3848
      %v3905 = vpop.f32.mrb[0].mxu0
      %v3906 = vadd.f32 %v3739, %v3905
      %v3907 = vpop.f32.mrb[0].mxu0
      %v3908 = vpop.f32.mrb[0].mxu0
      %v3909 = vadd.f32 %v3742, %v3908
      %v3910 = vpop.f32.mrb[0].mxu0
      %3911 = vmatprep.mubr.bf16.mxu0 0
      %3912 = vmatmul.mubr.bf16.gmra.mrb[0].mxu0 %v3851
      %v3913 = vpop.f32.mrb[0].mxu0
      %v3914 = vadd.f32 %v3747, %v3913
      %v3915 = vpop.f32.mrb[0].mxu0
      %v3916 = vpop.f32.mrb[0].mxu0
      %v3917 = vadd.f32 %v3750, %v3916
      %v3918 = vpop.f32.mrb[0].mxu0
      %3919 = vmatprep.mubr.bf16.mxu0 0
      %3920 = vmatmul.mubr.bf16.gmra.mrb[0].mxu0 %v3854
      %v3921 = vpop.f32.mrb[0].mxu0
      %v3922 = vadd.f32 %v3755, %v3921
      %v3923 = vpop.f32.mrb[0].mxu0
      %v3924 = vpop.f32.mrb[0].mxu0
      %v3925 = vadd.f32 %v3758, %v3924
      %v3926 = vpop.f32.mrb[0].mxu0
      %3927 = vmatprep.mubr.bf16.mxu0 0
      %3928 = vmatmul.mubr.bf16.gmra.mrb[0].mxu0 %v3857
      %v3929 = vpop.f32.mrb[0].mxu0
      %v3930 = vadd.f32 %v3763, %v3929
      %v3931 = vpop.f32.mrb[0].mxu0
      %v3932 = vpop.f32.mrb[0].mxu0
      %v3933 = vadd.f32 %v3766, %v3932
      %v3934 = vpop.f32.mrb[0].mxu0
      %3935 = vmatprep.mubr.bf16.mxu0 0
      %3936 = vmatmul.mubr.bf16.gmra.mrb[0].mxu0 %v3860
      %v3937 = vpop.f32.mrb[0].mxu0
      %v3938 = vadd.f32 %v3771, %v3937
      %v3939 = vpop.f32.mrb[0].mxu0
      %v3940 = vpop.f32.mrb[0].mxu0
      %v3941 = vadd.f32 %v3774, %v3940
      %v3942 = vpop.f32.mrb[0].mxu0
      %3943 = vmatprep.mubr.bf16.mxu0 0
      %3944 = vmatmul.mubr.bf16.gmra.mrb[0].mxu0 %v3863
      %v3945 = vpop.f32.mrb[0].mxu0
      %v3946 = vadd.f32 %v3779, %v3945
      %v3947 = vpop.f32.mrb[0].mxu0
      %v3948 = vpop.f32.mrb[0].mxu0
      %v3949 = vadd.f32 %v3782, %v3948
      %v3950 = vpop.f32.mrb[0].mxu0
      %3951 = vmatprep.mubr.bf16.mxu0 0
      %3952 = vmatmul.mubr.bf16.gmra.mrb[0].mxu0 %v3866
      %v3953 = vpop.f32.mrb[0].mxu0
      %v3954 = vadd.f32 %v3787, %v3953
      %v3955 = vpop.f32.mrb[0].mxu0
      %v3956 = vpop.f32.mrb[0].mxu0
      %v3957 = vadd.f32 %v3790, %v3956
      %v3958 = vpop.f32.mrb[0].mxu0
      %3959 = vmatprep.mubr.bf16.mxu0 0
      %3960 = vmatmul.mubr.bf16.gmra.mrb[0].mxu0 %v3869
      %v3961 = vpop.f32.mrb[0].mxu0
      %v3962 = vadd.f32 %v3795, %v3961
      %v3963 = vpop.f32.mrb[0].mxu0
      %v3964 = vpop.f32.mrb[0].mxu0
      %v3965 = vadd.f32 %v3798, %v3964
      %v3966 = vpop.f32.mrb[0].mxu0
      %3967 = vdwg.mxu0
      %v3968 = vld [vmem:[%s3429] sm:$0xe]
      %v3969 = vld [vmem:[%s3429 + $0xc] sm:$0xe]
      %v3970 = vld [vmem:[%s3429 + $0x18] sm:$0xe]
      %v3971 = vld [vmem:[%s3429 + $0x24] sm:$0xe]
      %v3972 = vld [vmem:[%s3429 + $0x30] sm:$0xe]
      %v3973 = vld [vmem:[%s3429 + $0x3c] sm:$0xe]
      %v3974 = vld [vmem:[%s3429 + $0x48] sm:$0xe]
      %v3975 = vld [vmem:[%s3429 + $0x54] sm:$0xe]
      %v3976 = vld [vmem:[%s1 + $0x10] sm:$0xf]
      %v3977 = vld [vmem:[%s1 + $0x14] sm:$0xf]
      %v3994 = vrot.slane %v3968, 5
      %v3995 = vrot.slane %v3994, 4
      %v3996 = vrot.slane %v3431, 5
      %v3997 = vsel %vm1368, %v3995, %v3996
      %v3998 = vrot.slane %v3996, 4
      %v3999 = vrot.slane %v3448, 5
      %v4000 = vsel %vm1368, %v3998, %v3999
      %v4001 = vrot.slane %v3969, 5
      %v4002 = vrot.slane %v4001, 4
      %v4003 = vrot.slane %v3433, 5
      %v4004 = vsel %vm1368, %v4002, %v4003
      %v4005 = vrot.slane %v4003, 4
      %v4006 = vrot.slane %v3449, 5
      %v4007 = vsel %vm1368, %v4005, %v4006
      %v4008 = vrot.slane %v3970, 5
      %v4009 = vrot.slane %v4008, 4
      %v4010 = vrot.slane %v3435, 5
      %v4011 = vsel %vm1368, %v4009, %v4010
      %v4012 = vrot.slane %v4010, 4
      %v4013 = vrot.slane %v3450, 5
      %v4014 = vsel %vm1368, %v4012, %v4013
      %v4015 = vrot.slane %v3971, 5
      %v4016 = vrot.slane %v4015, 4
      %v4017 = vrot.slane %v3437, 5
      %v4018 = vsel %vm1368, %v4016, %v4017
      %v4019 = vrot.slane %v4017, 4
      %v4020 = vrot.slane %v3451, 5
      %v4021 = vsel %vm1368, %v4019, %v4020
      %v4022 = vrot.slane %v3972, 5
      %v4023 = vrot.slane %v4022, 4
      %v4024 = vrot.slane %v3439, 5
      %v4025 = vsel %vm1368, %v4023, %v4024
      %v4026 = vrot.slane %v4024, 4
      %v4027 = vrot.slane %v3452, 5
      %v4028 = vsel %vm1368, %v4026, %v4027
      %v4029 = vrot.slane %v3973, 5
      %v4030 = vrot.slane %v4029, 4
      %v4031 = vrot.slane %v3441, 5
      %v4032 = vsel %vm1368, %v4030, %v4031
      %v4033 = vrot.slane %v4031, 4
      %v4034 = vrot.slane %v3453, 5
      %v4035 = vsel %vm1368, %v4033, %v4034
      %v4036 = vrot.slane %v3974, 5
      %v4037 = vrot.slane %v4036, 4
      %v4038 = vrot.slane %v3443, 5
      %v4039 = vsel %vm1368, %v4037, %v4038
      %v4040 = vrot.slane %v4038, 4
      %v4041 = vrot.slane %v3454, 5
      %v4042 = vsel %vm1368, %v4040, %v4041
      %v4043 = vrot.slane %v3975, 5
      %v4044 = vrot.slane %v4043, 4
      %v4045 = vrot.slane %v3445, 5
      %v4046 = vsel %vm1368, %v4044, %v4045
      %v4047 = vrot.slane %v4045, 4
      %v4048 = vrot.slane %v3455, 5
      %v4049 = vsel %vm1368, %v4047, %v4048
      %v4050 = vunpack.c.l.b16 %v3997
      %v4051 = vunpack.c.l.b16 %v4000
      %v4052 = vunpack.c.l.b16 %v4004
      %v4053 = vunpack.c.l.b16 %v4007
      %v4054 = vunpack.c.l.b16 %v4011
      %v4055 = vunpack.c.l.b16 %v4014
      %v4056 = vunpack.c.l.b16 %v4018
      %v4057 = vunpack.c.l.b16 %v4021
      %v4058 = vunpack.c.l.b16 %v4025
      %v4059 = vunpack.c.l.b16 %v4028
      %v4060 = vunpack.c.l.b16 %v4032
      %v4061 = vunpack.c.l.b16 %v4035
      %v4062 = vunpack.c.l.b16 %v4039
      %v4063 = vunpack.c.l.b16 %v4042
      %v4064 = vunpack.c.l.b16 %v4046
      %v4065 = vunpack.c.l.b16 %v4049
      %v4066 = vpack.c.b16 %v4051, %v4050
      %v4067 = vpack.c.b16 %v4053, %v4052
      %v4068 = vpack.c.b16 %v4055, %v4054
      %v4069 = vpack.c.b16 %v4057, %v4056
      %v4070 = vpack.c.b16 %v4059, %v4058
      %v4071 = vpack.c.b16 %v4061, %v4060
      %v4072 = vpack.c.b16 %v4063, %v4062
      %v4073 = vpack.c.b16 %v4065, %v4064
      %v4076 = vunpack.c.l.b16 %v3976
      %v4077 = vunpack.c.l.b16 %v3977
      %v4078 = vpack.c.b16 %v4077, %v4076
      %v4081 = vsel %vm1051, %v4066, 0
      %v4084 = vsel %vm1051, %v4067, 0
      %v4087 = vsel %vm1051, %v4068, 0
      %v4090 = vsel %vm1051, %v4069, 0
      %v4093 = vsel %vm1051, %v4070, 0
      %v4096 = vsel %vm1051, %v4071, 0
      %v4099 = vsel %vm1051, %v4072, 0
      %v4102 = vsel %vm1051, %v4073, 0
      %4104 = vmatprep.subr.bf16.mxu0 0
      %4105 = vmatpush1.bf16.msra.mxu0 %v4078
      %4106 = vmatprep.subr.bf16.mxu0 0
      %4107 = vmatpush1.bf16.msra.mxu0 0
      %4108 = vmatprep.subr.bf16.mxu0 0
      %4109 = vmatpush1.bf16.msra.mxu0 0
      %4110 = vmatprep.subr.bf16.mxu0 0
      %4111 = vmatpush1.bf16.msra.mxu0 0
      %4112 = vmatprep.subr.bf16.mxu0 0
      %4113 = vmatpush1.bf16.msra.mxu0 0
      %4114 = vmatprep.subr.bf16.mxu0 0
      %4115 = vmatpush1.bf16.msra.mxu0 0
      %4116 = vmatprep.subr.bf16.mxu0 0
      %4117 = vmatpush1.bf16.msra.mxu0 0
      %4118 = vmatprep.subr.bf16.mxu0 0
      %4119 = vmatpush1.bf16.msra.mxu0 0
      %4120 = vmatprep.subr.bf16.mxu0 0
      %4121 = vmatpush1.bf16.msra.mxu0 0
      %4122 = vmatprep.subr.bf16.mxu0 0
      %4123 = vmatpush1.bf16.msra.mxu0 0
      %4124 = vmatprep.subr.bf16.mxu0 0
      %4125 = vmatpush1.bf16.msra.mxu0 0
      %4126 = vmatprep.subr.bf16.mxu0 0
      %4127 = vmatpush1.bf16.msra.mxu0 0
      %4128 = vmatprep.subr.bf16.mxu0 0
      %4129 = vmatpush1.bf16.msra.mxu0 0
      %4130 = vmatprep.subr.bf16.mxu0 0
      %4131 = vmatpush1.bf16.msra.mxu0 0
      %4132 = vmatprep.subr.bf16.mxu0 0
      %4133 = vmatpush1.bf16.msra.mxu0 0
      %4134 = vmatprep.subr.bf16.mxu0 0
      %4135 = vmatpush1.bf16.msra.mxu0 0
      %4136 = vmatprep.mubr.bf16.mxu0 0
      %4137 = vmatmul.mubr.bf16.gmra.mrb[0].mxu0 %v4081
      %v4138 = vpop.f32.mrb[0].mxu0
      %v4139 = vadd.f32 0.0, %v4138
      %v4140 = vpop.f32.mrb[0].mxu0
      %v4141 = vpop.f32.mrb[0].mxu0
      %v4142 = vadd.f32 0.0, %v4141
      %v4143 = vpop.f32.mrb[0].mxu0
      %4144 = vmatprep.mubr.bf16.mxu0 0
      %4145 = vmatmul.mubr.bf16.gmra.mrb[0].mxu0 %v4084
      %v4146 = vpop.f32.mrb[0].mxu0
      %v4147 = vadd.f32 0.0, %v4146
      %v4148 = vpop.f32.mrb[0].mxu0
      %v4149 = vpop.f32.mrb[0].mxu0
      %v4150 = vadd.f32 0.0, %v4149
      %v4151 = vpop.f32.mrb[0].mxu0
      %4152 = vmatprep.mubr.bf16.mxu0 0
      %4153 = vmatmul.mubr.bf16.gmra.mrb[0].mxu0 %v4087
      %v4154 = vpop.f32.mrb[0].mxu0
      %v4155 = vadd.f32 0.0, %v4154
      %v4156 = vpop.f32.mrb[0].mxu0
      %v4157 = vpop.f32.mrb[0].mxu0
      %v4158 = vadd.f32 0.0, %v4157
      %v4159 = vpop.f32.mrb[0].mxu0
      %4160 = vmatprep.mubr.bf16.mxu0 0
      %4161 = vmatmul.mubr.bf16.gmra.mrb[0].mxu0 %v4090
      %v4162 = vpop.f32.mrb[0].mxu0
      %v4163 = vadd.f32 0.0, %v4162
      %v4164 = vpop.f32.mrb[0].mxu0
      %v4165 = vpop.f32.mrb[0].mxu0
      %v4166 = vadd.f32 0.0, %v4165
      %v4167 = vpop.f32.mrb[0].mxu0
      %4168 = vmatprep.mubr.bf16.mxu0 0
      %4169 = vmatmul.mubr.bf16.gmra.mrb[0].mxu0 %v4093
      %v4170 = vpop.f32.mrb[0].mxu0
      %v4171 = vadd.f32 0.0, %v4170
      %v4172 = vpop.f32.mrb[0].mxu0
      %v4173 = vpop.f32.mrb[0].mxu0
      %v4174 = vadd.f32 0.0, %v4173
      %v4175 = vpop.f32.mrb[0].mxu0
      %4176 = vmatprep.mubr.bf16.mxu0 0
      %4177 = vmatmul.mubr.bf16.gmra.mrb[0].mxu0 %v4096
      %v4178 = vpop.f32.mrb[0].mxu0
      %v4179 = vadd.f32 0.0, %v4178
      %v4180 = vpop.f32.mrb[0].mxu0
      %v4181 = vpop.f32.mrb[0].mxu0
      %v4182 = vadd.f32 0.0, %v4181
      %v4183 = vpop.f32.mrb[0].mxu0
      %4184 = vmatprep.mubr.bf16.mxu0 0
      %4185 = vmatmul.mubr.bf16.gmra.mrb[0].mxu0 %v4099
      %v4186 = vpop.f32.mrb[0].mxu0
      %v4187 = vadd.f32 0.0, %v4186
      %v4188 = vpop.f32.mrb[0].mxu0
      %v4189 = vpop.f32.mrb[0].mxu0
      %v4190 = vadd.f32 0.0, %v4189
      %v4191 = vpop.f32.mrb[0].mxu0
      %4192 = vmatprep.mubr.bf16.mxu0 0
      %4193 = vmatmul.mubr.bf16.gmra.mrb[0].mxu0 %v4102
      %v4194 = vpop.f32.mrb[0].mxu0
      %v4195 = vadd.f32 0.0, %v4194
      %v4196 = vpop.f32.mrb[0].mxu0
      %v4197 = vpop.f32.mrb[0].mxu0
      %v4198 = vadd.f32 0.0, %v4197
      %v4199 = vpop.f32.mrb[0].mxu0
      %4200 = vdwg.mxu0
      %v4201 = vadd.f32 %v3906, %v4139
      %v4202 = vadd.f32 %v3909, %v4142
      %v4203 = vadd.f32 %v3914, %v4147
      %v4204 = vadd.f32 %v3917, %v4150
      %v4205 = vadd.f32 %v3922, %v4155
      %v4206 = vadd.f32 %v3925, %v4158
      %v4207 = vadd.f32 %v3930, %v4163
      %v4208 = vadd.f32 %v3933, %v4166
      %v4209 = vadd.f32 %v3938, %v4171
      %v4210 = vadd.f32 %v3941, %v4174
      %v4211 = vadd.f32 %v3946, %v4179
      %v4212 = vadd.f32 %v3949, %v4182
      %v4213 = vadd.f32 %v3954, %v4187
      %v4214 = vadd.f32 %v3957, %v4190
      %v4215 = vadd.f32 %v3962, %v4195
      %v4216 = vadd.f32 %v3965, %v4198
      %s4217 = scalar_lea.vmem [#allocation2], 108
      %v4218 = vld [vmem:[%s4217] sm:$0xf]
      %v4219 = vld [vmem:[%s4217 + $0x4] sm:$0xf]
      %v4220 = vld [vmem:[%s4217 + $0xc] sm:$0xf]
      %v4221 = vld [vmem:[%s4217 + $0x10] sm:$0xf]
      %v4222 = vld [vmem:[%s4217 + $0x18] sm:$0xf]
      %v4223 = vld [vmem:[%s4217 + $0x1c] sm:$0xf]
      %v4224 = vld [vmem:[%s4217 + $0x24] sm:$0xf]
      %v4225 = vld [vmem:[%s4217 + $0x28] sm:$0xf]
      %v4226 = vld [vmem:[%s4217 + $0x30] sm:$0xf]
      %v4227 = vld [vmem:[%s4217 + $0x34] sm:$0xf]
      %v4228 = vld [vmem:[%s4217 + $0x3c] sm:$0xf]
      %v4229 = vld [vmem:[%s4217 + $0x40] sm:$0xf]
      %v4230 = vld [vmem:[%s4217 + $0x48] sm:$0xf]
      %v4231 = vld [vmem:[%s4217 + $0x4c] sm:$0xf]
      %v4232 = vld [vmem:[%s4217 + $0x54] sm:$0xf]
      %v4233 = vld [vmem:[%s4217 + $0x58] sm:$0xf]
      %v4234 = vld [vmem:[%s1 + $0x18] sm:$0xf]
      %v4235 = vld [vmem:[%s1 + $0x1c] sm:$0xf]
      %v4252 = vunpack.c.l.b16 %v4218
      %v4253 = vunpack.c.l.b16 %v4219
      %v4254 = vunpack.c.l.b16 %v4220
      %v4255 = vunpack.c.l.b16 %v4221
      %v4256 = vunpack.c.l.b16 %v4222
      %v4257 = vunpack.c.l.b16 %v4223
      %v4258 = vunpack.c.l.b16 %v4224
      %v4259 = vunpack.c.l.b16 %v4225
      %v4260 = vunpack.c.l.b16 %v4226
      %v4261 = vunpack.c.l.b16 %v4227
      %v4262 = vunpack.c.l.b16 %v4228
      %v4263 = vunpack.c.l.b16 %v4229
      %v4264 = vunpack.c.l.b16 %v4230
      %v4265 = vunpack.c.l.b16 %v4231
      %v4266 = vunpack.c.l.b16 %v4232
      %v4267 = vunpack.c.l.b16 %v4233
      %v4268 = vpack.c.b16 %v4253, %v4252
      %v4269 = vpack.c.b16 %v4255, %v4254
      %v4270 = vpack.c.b16 %v4257, %v4256
      %v4271 = vpack.c.b16 %v4259, %v4258
      %v4272 = vpack.c.b16 %v4261, %v4260
      %v4273 = vpack.c.b16 %v4263, %v4262
      %v4274 = vpack.c.b16 %v4265, %v4264
      %v4275 = vpack.c.b16 %v4267, %v4266
      %v4278 = vunpack.c.l.b16 %v4234
      %v4279 = vunpack.c.l.b16 %v4235
      %v4280 = vpack.c.b16 %v4279, %v4278
      %v4283 = vsel %vm1051, %v4268, 0
      %v4286 = vsel %vm1051, %v4269, 0
      %v4289 = vsel %vm1051, %v4270, 0
      %v4292 = vsel %vm1051, %v4271, 0
      %v4295 = vsel %vm1051, %v4272, 0
      %v4298 = vsel %vm1051, %v4273, 0
      %v4301 = vsel %vm1051, %v4274, 0
      %v4304 = vsel %vm1051, %v4275, 0
      %4306 = vmatprep.subr.bf16.mxu0 0
      %4307 = vmatpush1.bf16.msra.mxu0 %v4280
      %4308 = vmatprep.subr.bf16.mxu0 0
      %4309 = vmatpush1.bf16.msra.mxu0 0
      %4310 = vmatprep.subr.bf16.mxu0 0
      %4311 = vmatpush1.bf16.msra.mxu0 0
      %4312 = vmatprep.subr.bf16.mxu0 0
      %4313 = vmatpush1.bf16.msra.mxu0 0
      %4314 = vmatprep.subr.bf16.mxu0 0
      %4315 = vmatpush1.bf16.msra.mxu0 0
      %4316 = vmatprep.subr.bf16.mxu0 0
      %4317 = vmatpush1.bf16.msra.mxu0 0
      %4318 = vmatprep.subr.bf16.mxu0 0
      %4319 = vmatpush1.bf16.msra.mxu0 0
      %4320 = vmatprep.subr.bf16.mxu0 0
      %4321 = vmatpush1.bf16.msra.mxu0 0
      %4322 = vmatprep.subr.bf16.mxu0 0
      %4323 = vmatpush1.bf16.msra.mxu0 0
      %4324 = vmatprep.subr.bf16.mxu0 0
      %4325 = vmatpush1.bf16.msra.mxu0 0
      %4326 = vmatprep.subr.bf16.mxu0 0
      %4327 = vmatpush1.bf16.msra.mxu0 0
      %4328 = vmatprep.subr.bf16.mxu0 0
      %4329 = vmatpush1.bf16.msra.mxu0 0
      %4330 = vmatprep.subr.bf16.mxu0 0
      %4331 = vmatpush1.bf16.msra.mxu0 0
      %4332 = vmatprep.subr.bf16.mxu0 0
      %4333 = vmatpush1.bf16.msra.mxu0 0
      %4334 = vmatprep.subr.bf16.mxu0 0
      %4335 = vmatpush1.bf16.msra.mxu0 0
      %4336 = vmatprep.subr.bf16.mxu0 0
      %4337 = vmatpush1.bf16.msra.mxu0 0
      %4338 = vmatprep.mubr.bf16.mxu0 0
      %4339 = vmatmul.mubr.bf16.gmra.mrb[0].mxu0 %v4283
      %v4340 = vpop.f32.mrb[0].mxu0
      %v4341 = vadd.f32 0.0, %v4340
      %v4342 = vpop.f32.mrb[0].mxu0
      %v4343 = vpop.f32.mrb[0].mxu0
      %v4344 = vadd.f32 0.0, %v4343
      %v4345 = vpop.f32.mrb[0].mxu0
      %4346 = vmatprep.mubr.bf16.mxu0 0
      %4347 = vmatmul.mubr.bf16.gmra.mrb[0].mxu0 %v4286
      %v4348 = vpop.f32.mrb[0].mxu0
      %v4349 = vadd.f32 0.0, %v4348
      %v4350 = vpop.f32.mrb[0].mxu0
      %v4351 = vpop.f32.mrb[0].mxu0
      %v4352 = vadd.f32 0.0, %v4351
      %v4353 = vpop.f32.mrb[0].mxu0
      %4354 = vmatprep.mubr.bf16.mxu0 0
      %4355 = vmatmul.mubr.bf16.gmra.mrb[0].mxu0 %v4289
      %v4356 = vpop.f32.mrb[0].mxu0
      %v4357 = vadd.f32 0.0, %v4356
      %v4358 = vpop.f32.mrb[0].mxu0
      %v4359 = vpop.f32.mrb[0].mxu0
      %v4360 = vadd.f32 0.0, %v4359
      %v4361 = vpop.f32.mrb[0].mxu0
      %4362 = vmatprep.mubr.bf16.mxu0 0
      %4363 = vmatmul.mubr.bf16.gmra.mrb[0].mxu0 %v4292
      %v4364 = vpop.f32.mrb[0].mxu0
      %v4365 = vadd.f32 0.0, %v4364
      %v4366 = vpop.f32.mrb[0].mxu0
      %v4367 = vpop.f32.mrb[0].mxu0
      %v4368 = vadd.f32 0.0, %v4367
      %v4369 = vpop.f32.mrb[0].mxu0
      %4370 = vmatprep.mubr.bf16.mxu0 0
      %4371 = vmatmul.mubr.bf16.gmra.mrb[0].mxu0 %v4295
      %v4372 = vpop.f32.mrb[0].mxu0
      %v4373 = vadd.f32 0.0, %v4372
      %v4374 = vpop.f32.mrb[0].mxu0
      %v4375 = vpop.f32.mrb[0].mxu0
      %v4376 = vadd.f32 0.0, %v4375
      %v4377 = vpop.f32.mrb[0].mxu0
      %4378 = vmatprep.mubr.bf16.mxu0 0
      %4379 = vmatmul.mubr.bf16.gmra.mrb[0].mxu0 %v4298
      %v4380 = vpop.f32.mrb[0].mxu0
      %v4381 = vadd.f32 0.0, %v4380
      %v4382 = vpop.f32.mrb[0].mxu0
      %v4383 = vpop.f32.mrb[0].mxu0
      %v4384 = vadd.f32 0.0, %v4383
      %v4385 = vpop.f32.mrb[0].mxu0
      %4386 = vmatprep.mubr.bf16.mxu0 0
      %4387 = vmatmul.mubr.bf16.gmra.mrb[0].mxu0 %v4301
      %v4388 = vpop.f32.mrb[0].mxu0
      %v4389 = vadd.f32 0.0, %v4388
      %v4390 = vpop.f32.mrb[0].mxu0
      %v4391 = vpop.f32.mrb[0].mxu0
      %v4392 = vadd.f32 0.0, %v4391
      %v4393 = vpop.f32.mrb[0].mxu0
      %4394 = vmatprep.mubr.bf16.mxu0 0
      %4395 = vmatmul.mubr.bf16.gmra.mrb[0].mxu0 %v4304
      %v4396 = vpop.f32.mrb[0].mxu0
      %v4397 = vadd.f32 0.0, %v4396
      %v4398 = vpop.f32.mrb[0].mxu0
      %v4399 = vpop.f32.mrb[0].mxu0
      %v4400 = vadd.f32 0.0, %v4399
      %v4401 = vpop.f32.mrb[0].mxu0
      %4402 = vdwg.mxu0
      %v4403 = vadd.f32 %v4201, %v4341
      %v4404 = vadd.f32 %v4202, %v4344
      %v4405 = vadd.f32 %v4203, %v4349
      %v4406 = vadd.f32 %v4204, %v4352
      %v4407 = vadd.f32 %v4205, %v4357
      %v4408 = vadd.f32 %v4206, %v4360
      %v4409 = vadd.f32 %v4207, %v4365
      %v4410 = vadd.f32 %v4208, %v4368
      %v4411 = vadd.f32 %v4209, %v4373
      %v4412 = vadd.f32 %v4210, %v4376
      %v4413 = vadd.f32 %v4211, %v4381
      %v4414 = vadd.f32 %v4212, %v4384
      %v4415 = vadd.f32 %v4213, %v4389
      %v4416 = vadd.f32 %v4214, %v4392
      %v4417 = vadd.f32 %v4215, %v4397
      %v4418 = vadd.f32 %v4216, %v4400
      %v4419 = vld [vmem:[%s4217] sm:$0xf]
      %v4420 = vld [vmem:[%s4217 + $0x4] sm:$0xf]
      %v4421 = vld [vmem:[%s4217 + $0x8] sm:$0x1]
      %v4422 = vld [vmem:[%s4217 + $0xc] sm:$0xf]
      %v4423 = vld [vmem:[%s4217 + $0x10] sm:$0xf]
      %v4424 = vld [vmem:[%s4217 + $0x14] sm:$0x1]
      %v4425 = vld [vmem:[%s4217 + $0x18] sm:$0xf]
      %v4426 = vld [vmem:[%s4217 + $0x1c] sm:$0xf]
      %v4427 = vld [vmem:[%s4217 + $0x20] sm:$0x1]
      %v4428 = vld [vmem:[%s4217 + $0x24] sm:$0xf]
      %v4429 = vld [vmem:[%s4217 + $0x28] sm:$0xf]
      %v4430 = vld [vmem:[%s4217 + $0x2c] sm:$0x1]
      %v4431 = vld [vmem:[%s4217 + $0x30] sm:$0xf]
      %v4432 = vld [vmem:[%s4217 + $0x34] sm:$0xf]
      %v4433 = vld [vmem:[%s4217 + $0x38] sm:$0x1]
      %v4434 = vld [vmem:[%s4217 + $0x3c] sm:$0xf]
      %v4435 = vld [vmem:[%s4217 + $0x40] sm:$0xf]
      %v4436 = vld [vmem:[%s4217 + $0x44] sm:$0x1]
      %v4437 = vld [vmem:[%s4217 + $0x48] sm:$0xf]
      %v4438 = vld [vmem:[%s4217 + $0x4c] sm:$0xf]
      %v4439 = vld [vmem:[%s4217 + $0x50] sm:$0x1]
      %v4440 = vld [vmem:[%s4217 + $0x54] sm:$0xf]
      %v4441 = vld [vmem:[%s4217 + $0x58] sm:$0xf]
      %v4442 = vld [vmem:[%s4217 + $0x5c] sm:$0x1]
      %v4443 = vld [vmem:[%s1 + $0x20] sm:$0xf]
      %v4444 = vld [vmem:[%s1 + $0x24] sm:$0xf]
      %v4446 = vshrl.u32 %v4419, 16
      %v4448 = vrot.slane %v4446, 4
      %v4449 = vshll.u32 %v4419, 16
      %v4451 = vrot.slane %v4449, 5
      %v4452 = vor.u32 %v4448, %v4451
      %v4453 = vrot.slane %v4452, 4
      %v4455 = vshll.u32 %v4420, 16
      %v4457 = vrot.slane %v4455, 5
      %v4458 = vsel %vm828, %v4453, %v4457
      %v4459 = vshrl.u32 %v4420, 16
      %v4461 = vrot.slane %v4459, 4
      %v4462 = vor.u32 %v4461, %v4457
      %v4463 = vrot.slane %v4462, 4
      %v4465 = vshll.u32 %v4421, 16
      %v4467 = vrot.slane %v4465, 5
      %v4468 = vsel %vm828, %v4463, %v4467
      %v4470 = vshrl.u32 %v4422, 16
      %v4472 = vrot.slane %v4470, 4
      %v4473 = vshll.u32 %v4422, 16
      %v4475 = vrot.slane %v4473, 5
      %v4476 = vor.u32 %v4472, %v4475
      %v4477 = vrot.slane %v4476, 4
      %v4479 = vshll.u32 %v4423, 16
      %v4481 = vrot.slane %v4479, 5
      %v4482 = vsel %vm828, %v4477, %v4481
      %v4483 = vshrl.u32 %v4423, 16
      %v4485 = vrot.slane %v4483, 4
      %v4486 = vor.u32 %v4485, %v4481
      %v4487 = vrot.slane %v4486, 4
      %v4489 = vshll.u32 %v4424, 16
      %v4491 = vrot.slane %v4489, 5
      %v4492 = vsel %vm828, %v4487, %v4491
      %v4494 = vshrl.u32 %v4425, 16
      %v4496 = vrot.slane %v4494, 4
      %v4497 = vshll.u32 %v4425, 16
      %v4499 = vrot.slane %v4497, 5
      %v4500 = vor.u32 %v4496, %v4499
      %v4501 = vrot.slane %v4500, 4
      %v4503 = vshll.u32 %v4426, 16
      %v4505 = vrot.slane %v4503, 5
      %v4506 = vsel %vm828, %v4501, %v4505
      %v4507 = vshrl.u32 %v4426, 16
      %v4509 = vrot.slane %v4507, 4
      %v4510 = vor.u32 %v4509, %v4505
      %v4511 = vrot.slane %v4510, 4
      %v4513 = vshll.u32 %v4427, 16
      %v4515 = vrot.slane %v4513, 5
      %v4516 = vsel %vm828, %v4511, %v4515
      %v4518 = vshrl.u32 %v4428, 16
      %v4520 = vrot.slane %v4518, 4
      %v4521 = vshll.u32 %v4428, 16
      %v4523 = vrot.slane %v4521, 5
      %v4524 = vor.u32 %v4520, %v4523
      %v4525 = vrot.slane %v4524, 4
      %v4527 = vshll.u32 %v4429, 16
      %v4529 = vrot.slane %v4527, 5
      %v4530 = vsel %vm828, %v4525, %v4529
      %v4531 = vshrl.u32 %v4429, 16
      %v4533 = vrot.slane %v4531, 4
      %v4534 = vor.u32 %v4533, %v4529
      %v4535 = vrot.slane %v4534, 4
      %v4537 = vshll.u32 %v4430, 16
      %v4539 = vrot.slane %v4537, 5
      %v4540 = vsel %vm828, %v4535, %v4539
      %v4542 = vshrl.u32 %v4431, 16
      %v4544 = vrot.slane %v4542, 4
      %v4545 = vshll.u32 %v4431, 16
      %v4547 = vrot.slane %v4545, 5
      %v4548 = vor.u32 %v4544, %v4547
      %v4549 = vrot.slane %v4548, 4
      %v4551 = vshll.u32 %v4432, 16
      %v4553 = vrot.slane %v4551, 5
      %v4554 = vsel %vm828, %v4549, %v4553
      %v4555 = vshrl.u32 %v4432, 16
      %v4557 = vrot.slane %v4555, 4
      %v4558 = vor.u32 %v4557, %v4553
      %v4559 = vrot.slane %v4558, 4
      %v4561 = vshll.u32 %v4433, 16
      %v4563 = vrot.slane %v4561, 5
      %v4564 = vsel %vm828, %v4559, %v4563
      %v4566 = vshrl.u32 %v4434, 16
      %v4568 = vrot.slane %v4566, 4
      %v4569 = vshll.u32 %v4434, 16
      %v4571 = vrot.slane %v4569, 5
      %v4572 = vor.u32 %v4568, %v4571
      %v4573 = vrot.slane %v4572, 4
      %v4575 = vshll.u32 %v4435, 16
      %v4577 = vrot.slane %v4575, 5
      %v4578 = vsel %vm828, %v4573, %v4577
      %v4579 = vshrl.u32 %v4435, 16
      %v4581 = vrot.slane %v4579, 4
      %v4582 = vor.u32 %v4581, %v4577
      %v4583 = vrot.slane %v4582, 4
      %v4585 = vshll.u32 %v4436, 16
      %v4587 = vrot.slane %v4585, 5
      %v4588 = vsel %vm828, %v4583, %v4587
      %v4590 = vshrl.u32 %v4437, 16
      %v4592 = vrot.slane %v4590, 4
      %v4593 = vshll.u32 %v4437, 16
      %v4595 = vrot.slane %v4593, 5
      %v4596 = vor.u32 %v4592, %v4595
      %v4597 = vrot.slane %v4596, 4
      %v4599 = vshll.u32 %v4438, 16
      %v4601 = vrot.slane %v4599, 5
      %v4602 = vsel %vm828, %v4597, %v4601
      %v4603 = vshrl.u32 %v4438, 16
      %v4605 = vrot.slane %v4603, 4
      %v4606 = vor.u32 %v4605, %v4601
      %v4607 = vrot.slane %v4606, 4
      %v4609 = vshll.u32 %v4439, 16
      %v4611 = vrot.slane %v4609, 5
      %v4612 = vsel %vm828, %v4607, %v4611
      %v4614 = vshrl.u32 %v4440, 16
      %v4616 = vrot.slane %v4614, 4
      %v4617 = vshll.u32 %v4440, 16
      %v4619 = vrot.slane %v4617, 5
      %v4620 = vor.u32 %v4616, %v4619
      %v4621 = vrot.slane %v4620, 4
      %v4623 = vshll.u32 %v4441, 16
      %v4625 = vrot.slane %v4623, 5
      %v4626 = vsel %vm828, %v4621, %v4625
      %v4627 = vshrl.u32 %v4441, 16
      %v4629 = vrot.slane %v4627, 4
      %v4630 = vor.u32 %v4629, %v4625
      %v4631 = vrot.slane %v4630, 4
      %v4633 = vshll.u32 %v4442, 16
      %v4635 = vrot.slane %v4633, 5
      %v4636 = vsel %vm828, %v4631, %v4635
      %v4637 = vunpack.c.l.b16 %v4458
      %v4638 = vunpack.c.l.b16 %v4468
      %v4639 = vunpack.c.l.b16 %v4482
      %v4640 = vunpack.c.l.b16 %v4492
      %v4641 = vunpack.c.l.b16 %v4506
      %v4642 = vunpack.c.l.b16 %v4516
      %v4643 = vunpack.c.l.b16 %v4530
      %v4644 = vunpack.c.l.b16 %v4540
      %v4645 = vunpack.c.l.b16 %v4554
      %v4646 = vunpack.c.l.b16 %v4564
      %v4647 = vunpack.c.l.b16 %v4578
      %v4648 = vunpack.c.l.b16 %v4588
      %v4649 = vunpack.c.l.b16 %v4602
      %v4650 = vunpack.c.l.b16 %v4612
      %v4651 = vunpack.c.l.b16 %v4626
      %v4652 = vunpack.c.l.b16 %v4636
      %v4653 = vpack.c.b16 %v4638, %v4637
      %v4654 = vpack.c.b16 %v4640, %v4639
      %v4655 = vpack.c.b16 %v4642, %v4641
      %v4656 = vpack.c.b16 %v4644, %v4643
      %v4657 = vpack.c.b16 %v4646, %v4645
      %v4658 = vpack.c.b16 %v4648, %v4647
      %v4659 = vpack.c.b16 %v4650, %v4649
      %v4660 = vpack.c.b16 %v4652, %v4651
      %v4663 = vunpack.c.l.b16 %v4443
      %v4664 = vunpack.c.l.b16 %v4444
      %v4665 = vpack.c.b16 %v4664, %v4663
      %v4668 = vsel %vm1051, %v4653, 0
      %v4671 = vsel %vm1051, %v4654, 0
      %v4674 = vsel %vm1051, %v4655, 0
      %v4677 = vsel %vm1051, %v4656, 0
      %v4680 = vsel %vm1051, %v4657, 0
      %v4683 = vsel %vm1051, %v4658, 0
      %v4686 = vsel %vm1051, %v4659, 0
      %v4689 = vsel %vm1051, %v4660, 0
      %4691 = vmatprep.subr.bf16.mxu0 0
      %4692 = vmatpush1.bf16.msra.mxu0 %v4665
      %4693 = vmatprep.subr.bf16.mxu0 0
      %4694 = vmatpush1.bf16.msra.mxu0 0
      %4695 = vmatprep.subr.bf16.mxu0 0
      %4696 = vmatpush1.bf16.msra.mxu0 0
      %4697 = vmatprep.subr.bf16.mxu0 0
      %4698 = vmatpush1.bf16.msra.mxu0 0
      %4699 = vmatprep.subr.bf16.mxu0 0
      %4700 = vmatpush1.bf16.msra.mxu0 0
      %4701 = vmatprep.subr.bf16.mxu0 0
      %4702 = vmatpush1.bf16.msra.mxu0 0
      %4703 = vmatprep.subr.bf16.mxu0 0
      %4704 = vmatpush1.bf16.msra.mxu0 0
      %4705 = vmatprep.subr.bf16.mxu0 0
      %4706 = vmatpush1.bf16.msra.mxu0 0
      %4707 = vmatprep.subr.bf16.mxu0 0
      %4708 = vmatpush1.bf16.msra.mxu0 0
      %4709 = vmatprep.subr.bf16.mxu0 0
      %4710 = vmatpush1.bf16.msra.mxu0 0
      %4711 = vmatprep.subr.bf16.mxu0 0
      %4712 = vmatpush1.bf16.msra.mxu0 0
      %4713 = vmatprep.subr.bf16.mxu0 0
      %4714 = vmatpush1.bf16.msra.mxu0 0
      %4715 = vmatprep.subr.bf16.mxu0 0
      %4716 = vmatpush1.bf16.msra.mxu0 0
      %4717 = vmatprep.subr.bf16.mxu0 0
      %4718 = vmatpush1.bf16.msra.mxu0 0
      %4719 = vmatprep.subr.bf16.mxu0 0
      %4720 = vmatpush1.bf16.msra.mxu0 0
      %4721 = vmatprep.subr.bf16.mxu0 0
      %4722 = vmatpush1.bf16.msra.mxu0 0
      %4723 = vmatprep.mubr.bf16.mxu0 0
      %4724 = vmatmul.mubr.bf16.gmra.mrb[0].mxu0 %v4668
      %v4725 = vpop.f32.mrb[0].mxu0
      %v4726 = vadd.f32 0.0, %v4725
      %v4727 = vpop.f32.mrb[0].mxu0
      %v4728 = vpop.f32.mrb[0].mxu0
      %v4729 = vadd.f32 0.0, %v4728
      %v4730 = vpop.f32.mrb[0].mxu0
      %4731 = vmatprep.mubr.bf16.mxu0 0
      %4732 = vmatmul.mubr.bf16.gmra.mrb[0].mxu0 %v4671
      %v4733 = vpop.f32.mrb[0].mxu0
      %v4734 = vadd.f32 0.0, %v4733
      %v4735 = vpop.f32.mrb[0].mxu0
      %v4736 = vpop.f32.mrb[0].mxu0
      %v4737 = vadd.f32 0.0, %v4736
      %v4738 = vpop.f32.mrb[0].mxu0
      %4739 = vmatprep.mubr.bf16.mxu0 0
      %4740 = vmatmul.mubr.bf16.gmra.mrb[0].mxu0 %v4674
      %v4741 = vpop.f32.mrb[0].mxu0
      %v4742 = vadd.f32 0.0, %v4741
      %v4743 = vpop.f32.mrb[0].mxu0
      %v4744 = vpop.f32.mrb[0].mxu0
      %v4745 = vadd.f32 0.0, %v4744
      %v4746 = vpop.f32.mrb[0].mxu0
      %4747 = vmatprep.mubr.bf16.mxu0 0
      %4748 = vmatmul.mubr.bf16.gmra.mrb[0].mxu0 %v4677
      %v4749 = vpop.f32.mrb[0].mxu0
      %v4750 = vadd.f32 0.0, %v4749
      %v4751 = vpop.f32.mrb[0].mxu0
      %v4752 = vpop.f32.mrb[0].mxu0
      %v4753 = vadd.f32 0.0, %v4752
      %v4754 = vpop.f32.mrb[0].mxu0
      %4755 = vmatprep.mubr.bf16.mxu0 0
      %4756 = vmatmul.mubr.bf16.gmra.mrb[0].mxu0 %v4680
      %v4757 = vpop.f32.mrb[0].mxu0
      %v4758 = vadd.f32 0.0, %v4757
      %v4759 = vpop.f32.mrb[0].mxu0
      %v4760 = vpop.f32.mrb[0].mxu0
      %v4761 = vadd.f32 0.0, %v4760
      %v4762 = vpop.f32.mrb[0].mxu0
      %4763 = vmatprep.mubr.bf16.mxu0 0
      %4764 = vmatmul.mubr.bf16.gmra.mrb[0].mxu0 %v4683
      %v4765 = vpop.f32.mrb[0].mxu0
      %v4766 = vadd.f32 0.0, %v4765
      %v4767 = vpop.f32.mrb[0].mxu0
      %v4768 = vpop.f32.mrb[0].mxu0
      %v4769 = vadd.f32 0.0, %v4768
      %v4770 = vpop.f32.mrb[0].mxu0
      %4771 = vmatprep.mubr.bf16.mxu0 0
      %4772 = vmatmul.mubr.bf16.gmra.mrb[0].mxu0 %v4686
      %v4773 = vpop.f32.mrb[0].mxu0
      %v4774 = vadd.f32 0.0, %v4773
      %v4775 = vpop.f32.mrb[0].mxu0
      %v4776 = vpop.f32.mrb[0].mxu0
      %v4777 = vadd.f32 0.0, %v4776
      %v4778 = vpop.f32.mrb[0].mxu0
      %4779 = vmatprep.mubr.bf16.mxu0 0
      %4780 = vmatmul.mubr.bf16.gmra.mrb[0].mxu0 %v4689
      %v4781 = vpop.f32.mrb[0].mxu0
      %v4782 = vadd.f32 0.0, %v4781
      %v4783 = vpop.f32.mrb[0].mxu0
      %v4784 = vpop.f32.mrb[0].mxu0
      %v4785 = vadd.f32 0.0, %v4784
      %v4786 = vpop.f32.mrb[0].mxu0
      %4787 = vdwg.mxu0
      %v4788 = vadd.f32 %v4403, %v4726
      %v4789 = vadd.f32 %v4404, %v4729
      %v4790 = vadd.f32 %v4405, %v4734
      %v4791 = vadd.f32 %v4406, %v4737
      %v4792 = vadd.f32 %v4407, %v4742
      %v4793 = vadd.f32 %v4408, %v4745
      %v4794 = vadd.f32 %v4409, %v4750
      %v4795 = vadd.f32 %v4410, %v4753
      %v4796 = vadd.f32 %v4411, %v4758
      %v4797 = vadd.f32 %v4412, %v4761
      %v4798 = vadd.f32 %v4413, %v4766
      %v4799 = vadd.f32 %v4414, %v4769
      %v4800 = vadd.f32 %v4415, %v4774
      %v4801 = vadd.f32 %v4416, %v4777
      %v4802 = vadd.f32 %v4417, %v4782
      %v4803 = vadd.f32 %v4418, %v4785
      %v4804 = vld [vmem:[%s4217] sm:$0xe]
      %v4805 = vld [vmem:[%s4217 + $0xc] sm:$0xe]
      %v4806 = vld [vmem:[%s4217 + $0x18] sm:$0xe]
      %v4807 = vld [vmem:[%s4217 + $0x24] sm:$0xe]
      %v4808 = vld [vmem:[%s4217 + $0x30] sm:$0xe]
      %v4809 = vld [vmem:[%s4217 + $0x3c] sm:$0xe]
      %v4810 = vld [vmem:[%s4217 + $0x48] sm:$0xe]
      %v4811 = vld [vmem:[%s4217 + $0x54] sm:$0xe]
      %v4812 = vld [vmem:[%s1 + $0x28] sm:$0xf]
      %v4813 = vld [vmem:[%s1 + $0x2c] sm:$0xf]
      %v4838 = vrot.slane %v4804, 5
      %v4839 = vrot.slane %v4838, 4
      %v4840 = vrot.slane %v4420, 5
      %v4841 = vsel %vm1368, %v4839, %v4840
      %v4842 = vrot.slane %v4840, 4
      %v4843 = vrot.slane %v4421, 5
      %v4844 = vsel %vm1368, %v4842, %v4843
      %v4845 = vrot.slane %v4805, 5
      %v4846 = vrot.slane %v4845, 4
      %v4847 = vrot.slane %v4423, 5
      %v4848 = vsel %vm1368, %v4846, %v4847
      %v4849 = vrot.slane %v4847, 4
      %v4850 = vrot.slane %v4424, 5
      %v4851 = vsel %vm1368, %v4849, %v4850
      %v4852 = vrot.slane %v4806, 5
      %v4853 = vrot.slane %v4852, 4
      %v4854 = vrot.slane %v4426, 5
      %v4855 = vsel %vm1368, %v4853, %v4854
      %v4856 = vrot.slane %v4854, 4
      %v4857 = vrot.slane %v4427, 5
      %v4858 = vsel %vm1368, %v4856, %v4857
      %v4859 = vrot.slane %v4807, 5
      %v4860 = vrot.slane %v4859, 4
      %v4861 = vrot.slane %v4429, 5
      %v4862 = vsel %vm1368, %v4860, %v4861
      %v4863 = vrot.slane %v4861, 4
      %v4864 = vrot.slane %v4430, 5
      %v4865 = vsel %vm1368, %v4863, %v4864
      %v4866 = vrot.slane %v4808, 5
      %v4867 = vrot.slane %v4866, 4
      %v4868 = vrot.slane %v4432, 5
      %v4869 = vsel %vm1368, %v4867, %v4868
      %v4870 = vrot.slane %v4868, 4
      %v4871 = vrot.slane %v4433, 5
      %v4872 = vsel %vm1368, %v4870, %v4871
      %v4873 = vrot.slane %v4809, 5
      %v4874 = vrot.slane %v4873, 4
      %v4875 = vrot.slane %v4435, 5
      %v4876 = vsel %vm1368, %v4874, %v4875
      %v4877 = vrot.slane %v4875, 4
      %v4878 = vrot.slane %v4436, 5
      %v4879 = vsel %vm1368, %v4877, %v4878
      %v4880 = vrot.slane %v4810, 5
      %v4881 = vrot.slane %v4880, 4
      %v4882 = vrot.slane %v4438, 5
      %v4883 = vsel %vm1368, %v4881, %v4882
      %v4884 = vrot.slane %v4882, 4
      %v4885 = vrot.slane %v4439, 5
      %v4886 = vsel %vm1368, %v4884, %v4885
      %v4887 = vrot.slane %v4811, 5
      %v4888 = vrot.slane %v4887, 4
      %v4889 = vrot.slane %v4441, 5
      %v4890 = vsel %vm1368, %v4888, %v4889
      %v4891 = vrot.slane %v4889, 4
      %v4892 = vrot.slane %v4442, 5
      %v4893 = vsel %vm1368, %v4891, %v4892
      %v4894 = vunpack.c.l.b16 %v4841
      %v4895 = vunpack.c.l.b16 %v4844
      %v4896 = vunpack.c.l.b16 %v4848
      %v4897 = vunpack.c.l.b16 %v4851
      %v4898 = vunpack.c.l.b16 %v4855
      %v4899 = vunpack.c.l.b16 %v4858
      %v4900 = vunpack.c.l.b16 %v4862
      %v4901 = vunpack.c.l.b16 %v4865
      %v4902 = vunpack.c.l.b16 %v4869
      %v4903 = vunpack.c.l.b16 %v4872
      %v4904 = vunpack.c.l.b16 %v4876
      %v4905 = vunpack.c.l.b16 %v4879
      %v4906 = vunpack.c.l.b16 %v4883
      %v4907 = vunpack.c.l.b16 %v4886
      %v4908 = vunpack.c.l.b16 %v4890
      %v4909 = vunpack.c.l.b16 %v4893
      %v4910 = vpack.c.b16 %v4895, %v4894
      %v4911 = vpack.c.b16 %v4897, %v4896
      %v4912 = vpack.c.b16 %v4899, %v4898
      %v4913 = vpack.c.b16 %v4901, %v4900
      %v4914 = vpack.c.b16 %v4903, %v4902
      %v4915 = vpack.c.b16 %v4905, %v4904
      %v4916 = vpack.c.b16 %v4907, %v4906
      %v4917 = vpack.c.b16 %v4909, %v4908
      %v4920 = vunpack.c.l.b16 %v4812
      %v4921 = vunpack.c.l.b16 %v4813
      %v4922 = vpack.c.b16 %v4921, %v4920
      %v4925 = vsel %vm1051, %v4910, 0
      %v4928 = vsel %vm1051, %v4911, 0
      %v4931 = vsel %vm1051, %v4912, 0
      %v4934 = vsel %vm1051, %v4913, 0
      %v4937 = vsel %vm1051, %v4914, 0
      %v4940 = vsel %vm1051, %v4915, 0
      %v4943 = vsel %vm1051, %v4916, 0
      %v4946 = vsel %vm1051, %v4917, 0
      %4948 = vmatprep.subr.bf16.mxu0 0
      %4949 = vmatpush1.bf16.msra.mxu0 %v4922
      %4950 = vmatprep.subr.bf16.mxu0 0
      %4951 = vmatpush1.bf16.msra.mxu0 0
      %4952 = vmatprep.subr.bf16.mxu0 0
      %4953 = vmatpush1.bf16.msra.mxu0 0
      %4954 = vmatprep.subr.bf16.mxu0 0
      %4955 = vmatpush1.bf16.msra.mxu0 0
      %4956 = vmatprep.subr.bf16.mxu0 0
      %4957 = vmatpush1.bf16.msra.mxu0 0
      %4958 = vmatprep.subr.bf16.mxu0 0
      %4959 = vmatpush1.bf16.msra.mxu0 0
      %4960 = vmatprep.subr.bf16.mxu0 0
      %4961 = vmatpush1.bf16.msra.mxu0 0
      %4962 = vmatprep.subr.bf16.mxu0 0
      %4963 = vmatpush1.bf16.msra.mxu0 0
      %4964 = vmatprep.subr.bf16.mxu0 0
      %4965 = vmatpush1.bf16.msra.mxu0 0
      %4966 = vmatprep.subr.bf16.mxu0 0
      %4967 = vmatpush1.bf16.msra.mxu0 0
      %4968 = vmatprep.subr.bf16.mxu0 0
      %4969 = vmatpush1.bf16.msra.mxu0 0
      %4970 = vmatprep.subr.bf16.mxu0 0
      %4971 = vmatpush1.bf16.msra.mxu0 0
      %4972 = vmatprep.subr.bf16.mxu0 0
      %4973 = vmatpush1.bf16.msra.mxu0 0
      %4974 = vmatprep.subr.bf16.mxu0 0
      %4975 = vmatpush1.bf16.msra.mxu0 0
      %4976 = vmatprep.subr.bf16.mxu0 0
      %4977 = vmatpush1.bf16.msra.mxu0 0
      %4978 = vmatprep.subr.bf16.mxu0 0
      %4979 = vmatpush1.bf16.msra.mxu0 0
      %4980 = vmatprep.mubr.bf16.mxu0 0
      %4981 = vmatmul.mubr.bf16.gmra.mrb[0].mxu0 %v4925
      %v4982 = vpop.f32.mrb[0].mxu0
      %v4983 = vadd.f32 0.0, %v4982
      %v4984 = vpop.f32.mrb[0].mxu0
      %v4985 = vpop.f32.mrb[0].mxu0
      %v4986 = vadd.f32 0.0, %v4985
      %v4987 = vpop.f32.mrb[0].mxu0
      %4988 = vmatprep.mubr.bf16.mxu0 0
      %4989 = vmatmul.mubr.bf16.gmra.mrb[0].mxu0 %v4928
      %v4990 = vpop.f32.mrb[0].mxu0
      %v4991 = vadd.f32 0.0, %v4990
      %v4992 = vpop.f32.mrb[0].mxu0
      %v4993 = vpop.f32.mrb[0].mxu0
      %v4994 = vadd.f32 0.0, %v4993
      %v4995 = vpop.f32.mrb[0].mxu0
      %4996 = vmatprep.mubr.bf16.mxu0 0
      %4997 = vmatmul.mubr.bf16.gmra.mrb[0].mxu0 %v4931
      %v4998 = vpop.f32.mrb[0].mxu0
      %v4999 = vadd.f32 0.0, %v4998
      %v5000 = vpop.f32.mrb[0].mxu0
      %v5001 = vpop.f32.mrb[0].mxu0
      %v5002 = vadd.f32 0.0, %v5001
      %v5003 = vpop.f32.mrb[0].mxu0
      %5004 = vmatprep.mubr.bf16.mxu0 0
      %5005 = vmatmul.mubr.bf16.gmra.mrb[0].mxu0 %v4934
      %v5006 = vpop.f32.mrb[0].mxu0
      %v5007 = vadd.f32 0.0, %v5006
      %v5008 = vpop.f32.mrb[0].mxu0
      %v5009 = vpop.f32.mrb[0].mxu0
      %v5010 = vadd.f32 0.0, %v5009
      %v5011 = vpop.f32.mrb[0].mxu0
      %5012 = vmatprep.mubr.bf16.mxu0 0
      %5013 = vmatmul.mubr.bf16.gmra.mrb[0].mxu0 %v4937
      %v5014 = vpop.f32.mrb[0].mxu0
      %v5015 = vadd.f32 0.0, %v5014
      %v5016 = vpop.f32.mrb[0].mxu0
      %v5017 = vpop.f32.mrb[0].mxu0
      %v5018 = vadd.f32 0.0, %v5017
      %v5019 = vpop.f32.mrb[0].mxu0
      %5020 = vmatprep.mubr.bf16.mxu0 0
      %5021 = vmatmul.mubr.bf16.gmra.mrb[0].mxu0 %v4940
      %v5022 = vpop.f32.mrb[0].mxu0
      %v5023 = vadd.f32 0.0, %v5022
      %v5024 = vpop.f32.mrb[0].mxu0
      %v5025 = vpop.f32.mrb[0].mxu0
      %v5026 = vadd.f32 0.0, %v5025
      %v5027 = vpop.f32.mrb[0].mxu0
      %5028 = vmatprep.mubr.bf16.mxu0 0
      %5029 = vmatmul.mubr.bf16.gmra.mrb[0].mxu0 %v4943
      %v5030 = vpop.f32.mrb[0].mxu0
      %v5031 = vadd.f32 0.0, %v5030
      %v5032 = vpop.f32.mrb[0].mxu0
      %v5033 = vpop.f32.mrb[0].mxu0
      %v5034 = vadd.f32 0.0, %v5033
      %v5035 = vpop.f32.mrb[0].mxu0
      %5036 = vmatprep.mubr.bf16.mxu0 0
      %5037 = vmatmul.mubr.bf16.gmra.mrb[0].mxu0 %v4946
      %v5038 = vpop.f32.mrb[0].mxu0
      %v5039 = vadd.f32 0.0, %v5038
      %v5040 = vpop.f32.mrb[0].mxu0
      %v5041 = vpop.f32.mrb[0].mxu0
      %v5042 = vadd.f32 0.0, %v5041
      %v5043 = vpop.f32.mrb[0].mxu0
      %5044 = vdwg.mxu0
      %v5045 = vadd.f32 %v4788, %v4983
      %v5046 = vadd.f32 %v4789, %v4986
      %v5047 = vadd.f32 %v4790, %v4991
      %v5048 = vadd.f32 %v4791, %v4994
      %v5049 = vadd.f32 %v4792, %v4999
      %v5050 = vadd.f32 %v4793, %v5002
      %v5051 = vadd.f32 %v4794, %v5007
      %v5052 = vadd.f32 %v4795, %v5010
      %v5053 = vadd.f32 %v4796, %v5015
      %v5054 = vadd.f32 %v4797, %v5018
      %v5055 = vadd.f32 %v4798, %v5023
      %v5056 = vadd.f32 %v4799, %v5026
      %v5057 = vadd.f32 %v4800, %v5031
      %v5058 = vadd.f32 %v4801, %v5034
      %v5059 = vadd.f32 %v4802, %v5039
      %v5060 = vadd.f32 %v4803, %v5042
      %s5061 = scalar_lea.vmem [#allocation2], 120
      %v5062 = vld [vmem:[%s5061] sm:$0xf]
      %v5063 = vld [vmem:[%s5061 + $0x4] sm:$0xf]
      %v5064 = vld [vmem:[%s5061 + $0xc] sm:$0xf]
      %v5065 = vld [vmem:[%s5061 + $0x10] sm:$0xf]
      %v5066 = vld [vmem:[%s5061 + $0x18] sm:$0xf]
      %v5067 = vld [vmem:[%s5061 + $0x1c] sm:$0xf]
      %v5068 = vld [vmem:[%s5061 + $0x24] sm:$0xf]
      %v5069 = vld [vmem:[%s5061 + $0x28] sm:$0xf]
      %v5070 = vld [vmem:[%s5061 + $0x30] sm:$0xf]
      %v5071 = vld [vmem:[%s5061 + $0x34] sm:$0xf]
      %v5072 = vld [vmem:[%s5061 + $0x3c] sm:$0xf]
      %v5073 = vld [vmem:[%s5061 + $0x40] sm:$0xf]
      %v5074 = vld [vmem:[%s5061 + $0x48] sm:$0xf]
      %v5075 = vld [vmem:[%s5061 + $0x4c] sm:$0xf]
      %v5076 = vld [vmem:[%s5061 + $0x54] sm:$0xf]
      %v5077 = vld [vmem:[%s5061 + $0x58] sm:$0xf]
      %v5078 = vld [vmem:[%s1 + $0x30] sm:$0xf]
      %v5079 = vld [vmem:[%s1 + $0x34] sm:$0xf]
      %v5096 = vunpack.c.l.b16 %v5062
      %v5097 = vunpack.c.l.b16 %v5063
      %v5098 = vunpack.c.l.b16 %v5064
      %v5099 = vunpack.c.l.b16 %v5065
      %v5100 = vunpack.c.l.b16 %v5066
      %v5101 = vunpack.c.l.b16 %v5067
      %v5102 = vunpack.c.l.b16 %v5068
      %v5103 = vunpack.c.l.b16 %v5069
      %v5104 = vunpack.c.l.b16 %v5070
      %v5105 = vunpack.c.l.b16 %v5071
      %v5106 = vunpack.c.l.b16 %v5072
      %v5107 = vunpack.c.l.b16 %v5073
      %v5108 = vunpack.c.l.b16 %v5074
      %v5109 = vunpack.c.l.b16 %v5075
      %v5110 = vunpack.c.l.b16 %v5076
      %v5111 = vunpack.c.l.b16 %v5077
      %v5112 = vpack.c.b16 %v5097, %v5096
      %v5113 = vpack.c.b16 %v5099, %v5098
      %v5114 = vpack.c.b16 %v5101, %v5100
      %v5115 = vpack.c.b16 %v5103, %v5102
      %v5116 = vpack.c.b16 %v5105, %v5104
      %v5117 = vpack.c.b16 %v5107, %v5106
      %v5118 = vpack.c.b16 %v5109, %v5108
      %v5119 = vpack.c.b16 %v5111, %v5110
      %v5122 = vunpack.c.l.b16 %v5078
      %v5123 = vunpack.c.l.b16 %v5079
      %v5124 = vpack.c.b16 %v5123, %v5122
      %v5127 = vsel %vm1051, %v5112, 0
      %v5130 = vsel %vm1051, %v5113, 0
      %v5133 = vsel %vm1051, %v5114, 0
      %v5136 = vsel %vm1051, %v5115, 0
      %v5139 = vsel %vm1051, %v5116, 0
      %v5142 = vsel %vm1051, %v5117, 0
      %v5145 = vsel %vm1051, %v5118, 0
      %v5148 = vsel %vm1051, %v5119, 0
      %5150 = vmatprep.subr.bf16.mxu0 0
      %5151 = vmatpush1.bf16.msra.mxu0 %v5124
      %5152 = vmatprep.subr.bf16.mxu0 0
      %5153 = vmatpush1.bf16.msra.mxu0 0
      %5154 = vmatprep.subr.bf16.mxu0 0
      %5155 = vmatpush1.bf16.msra.mxu0 0
      %5156 = vmatprep.subr.bf16.mxu0 0
      %5157 = vmatpush1.bf16.msra.mxu0 0
      %5158 = vmatprep.subr.bf16.mxu0 0
      %5159 = vmatpush1.bf16.msra.mxu0 0
      %5160 = vmatprep.subr.bf16.mxu0 0
      %5161 = vmatpush1.bf16.msra.mxu0 0
      %5162 = vmatprep.subr.bf16.mxu0 0
      %5163 = vmatpush1.bf16.msra.mxu0 0
      %5164 = vmatprep.subr.bf16.mxu0 0
      %5165 = vmatpush1.bf16.msra.mxu0 0
      %5166 = vmatprep.subr.bf16.mxu0 0
      %5167 = vmatpush1.bf16.msra.mxu0 0
      %5168 = vmatprep.subr.bf16.mxu0 0
      %5169 = vmatpush1.bf16.msra.mxu0 0
      %5170 = vmatprep.subr.bf16.mxu0 0
      %5171 = vmatpush1.bf16.msra.mxu0 0
      %5172 = vmatprep.subr.bf16.mxu0 0
      %5173 = vmatpush1.bf16.msra.mxu0 0
      %5174 = vmatprep.subr.bf16.mxu0 0
      %5175 = vmatpush1.bf16.msra.mxu0 0
      %5176 = vmatprep.subr.bf16.mxu0 0
      %5177 = vmatpush1.bf16.msra.mxu0 0
      %5178 = vmatprep.subr.bf16.mxu0 0
      %5179 = vmatpush1.bf16.msra.mxu0 0
      %5180 = vmatprep.subr.bf16.mxu0 0
      %5181 = vmatpush1.bf16.msra.mxu0 0
      %5182 = vmatprep.mubr.bf16.mxu0 0
      %5183 = vmatmul.mubr.bf16.gmra.mrb[0].mxu0 %v5127
      %v5184 = vpop.f32.mrb[0].mxu0
      %v5185 = vadd.f32 0.0, %v5184
      %v5186 = vpop.f32.mrb[0].mxu0
      %v5187 = vpop.f32.mrb[0].mxu0
      %v5188 = vadd.f32 0.0, %v5187
      %v5189 = vpop.f32.mrb[0].mxu0
      %5190 = vmatprep.mubr.bf16.mxu0 0
      %5191 = vmatmul.mubr.bf16.gmra.mrb[0].mxu0 %v5130
      %v5192 = vpop.f32.mrb[0].mxu0
      %v5193 = vadd.f32 0.0, %v5192
      %v5194 = vpop.f32.mrb[0].mxu0
      %v5195 = vpop.f32.mrb[0].mxu0
      %v5196 = vadd.f32 0.0, %v5195
      %v5197 = vpop.f32.mrb[0].mxu0
      %5198 = vmatprep.mubr.bf16.mxu0 0
      %5199 = vmatmul.mubr.bf16.gmra.mrb[0].mxu0 %v5133
      %v5200 = vpop.f32.mrb[0].mxu0
      %v5201 = vadd.f32 0.0, %v5200
      %v5202 = vpop.f32.mrb[0].mxu0
      %v5203 = vpop.f32.mrb[0].mxu0
      %v5204 = vadd.f32 0.0, %v5203
      %v5205 = vpop.f32.mrb[0].mxu0
      %5206 = vmatprep.mubr.bf16.mxu0 0
      %5207 = vmatmul.mubr.bf16.gmra.mrb[0].mxu0 %v5136
      %v5208 = vpop.f32.mrb[0].mxu0
      %v5209 = vadd.f32 0.0, %v5208
      %v5210 = vpop.f32.mrb[0].mxu0
      %v5211 = vpop.f32.mrb[0].mxu0
      %v5212 = vadd.f32 0.0, %v5211
      %v5213 = vpop.f32.mrb[0].mxu0
      %5214 = vmatprep.mubr.bf16.mxu0 0
      %5215 = vmatmul.mubr.bf16.gmra.mrb[0].mxu0 %v5139
      %v5216 = vpop.f32.mrb[0].mxu0
      %v5217 = vadd.f32 0.0, %v5216
      %v5218 = vpop.f32.mrb[0].mxu0
      %v5219 = vpop.f32.mrb[0].mxu0
      %v5220 = vadd.f32 0.0, %v5219
      %v5221 = vpop.f32.mrb[0].mxu0
      %5222 = vmatprep.mubr.bf16.mxu0 0
      %5223 = vmatmul.mubr.bf16.gmra.mrb[0].mxu0 %v5142
      %v5224 = vpop.f32.mrb[0].mxu0
      %v5225 = vadd.f32 0.0, %v5224
      %v5226 = vpop.f32.mrb[0].mxu0
      %v5227 = vpop.f32.mrb[0].mxu0
      %v5228 = vadd.f32 0.0, %v5227
      %v5229 = vpop.f32.mrb[0].mxu0
      %5230 = vmatprep.mubr.bf16.mxu0 0
      %5231 = vmatmul.mubr.bf16.gmra.mrb[0].mxu0 %v5145
      %v5232 = vpop.f32.mrb[0].mxu0
      %v5233 = vadd.f32 0.0, %v5232
      %v5234 = vpop.f32.mrb[0].mxu0
      %v5235 = vpop.f32.mrb[0].mxu0
      %v5236 = vadd.f32 0.0, %v5235
      %v5237 = vpop.f32.mrb[0].mxu0
      %5238 = vmatprep.mubr.bf16.mxu0 0
      %5239 = vmatmul.mubr.bf16.gmra.mrb[0].mxu0 %v5148
      %v5240 = vpop.f32.mrb[0].mxu0
      %v5241 = vadd.f32 0.0, %v5240
      %v5242 = vpop.f32.mrb[0].mxu0
      %v5243 = vpop.f32.mrb[0].mxu0
      %v5244 = vadd.f32 0.0, %v5243
      %v5245 = vpop.f32.mrb[0].mxu0
      %5246 = vdwg.mxu0
      %v5247 = vadd.f32 %v5045, %v5185
      %v5248 = vadd.f32 %v5046, %v5188
      %v5249 = vadd.f32 %v5047, %v5193
      %v5250 = vadd.f32 %v5048, %v5196
      %v5251 = vadd.f32 %v5049, %v5201
      %v5252 = vadd.f32 %v5050, %v5204
      %v5253 = vadd.f32 %v5051, %v5209
      %v5254 = vadd.f32 %v5052, %v5212
      %v5255 = vadd.f32 %v5053, %v5217
      %v5256 = vadd.f32 %v5054, %v5220
      %v5257 = vadd.f32 %v5055, %v5225
      %v5258 = vadd.f32 %v5056, %v5228
      %v5259 = vadd.f32 %v5057, %v5233
      %v5260 = vadd.f32 %v5058, %v5236
      %v5261 = vadd.f32 %v5059, %v5241
      %v5262 = vadd.f32 %v5060, %v5244
      %v5263 = vld [vmem:[%s5061] sm:$0xf]
      %v5264 = vld [vmem:[%s5061 + $0x4] sm:$0xf]
      %v5265 = vld [vmem:[%s5061 + $0x8] sm:$0x1]
      %v5266 = vld [vmem:[%s5061 + $0xc] sm:$0xf]
      %v5267 = vld [vmem:[%s5061 + $0x10] sm:$0xf]
      %v5268 = vld [vmem:[%s5061 + $0x14] sm:$0x1]
      %v5269 = vld [vmem:[%s5061 + $0x18] sm:$0xf]
      %v5270 = vld [vmem:[%s5061 + $0x1c] sm:$0xf]
      %v5271 = vld [vmem:[%s5061 + $0x20] sm:$0x1]
      %v5272 = vld [vmem:[%s5061 + $0x24] sm:$0xf]
      %v5273 = vld [vmem:[%s5061 + $0x28] sm:$0xf]
      %v5274 = vld [vmem:[%s5061 + $0x2c] sm:$0x1]
      %v5275 = vld [vmem:[%s5061 + $0x30] sm:$0xf]
      %v5276 = vld [vmem:[%s5061 + $0x34] sm:$0xf]
      %v5277 = vld [vmem:[%s5061 + $0x38] sm:$0x1]
      %v5278 = vld [vmem:[%s5061 + $0x3c] sm:$0xf]
      %v5279 = vld [vmem:[%s5061 + $0x40] sm:$0xf]
      %v5280 = vld [vmem:[%s5061 + $0x44] sm:$0x1]
      %v5281 = vld [vmem:[%s5061 + $0x48] sm:$0xf]
      %v5282 = vld [vmem:[%s5061 + $0x4c] sm:$0xf]
      %v5283 = vld [vmem:[%s5061 + $0x50] sm:$0x1]
      %v5284 = vld [vmem:[%s5061 + $0x54] sm:$0xf]
      %v5285 = vld [vmem:[%s5061 + $0x58] sm:$0xf]
      %v5286 = vld [vmem:[%s5061 + $0x5c] sm:$0x1]
      %v5287 = vld [vmem:[%s1 + $0x38] sm:$0xf]
      %v5288 = vld [vmem:[%s1 + $0x3c] sm:$0xf]
      %v5290 = vshrl.u32 %v5263, 16
      %v5292 = vrot.slane %v5290, 4
      %v5293 = vshll.u32 %v5263, 16
      %v5295 = vrot.slane %v5293, 5
      %v5296 = vor.u32 %v5292, %v5295
      %v5297 = vrot.slane %v5296, 4
      %v5299 = vshll.u32 %v5264, 16
      %v5301 = vrot.slane %v5299, 5
      %v5302 = vsel %vm828, %v5297, %v5301
      %v5303 = vshrl.u32 %v5264, 16
      %v5305 = vrot.slane %v5303, 4
      %v5306 = vor.u32 %v5305, %v5301
      %v5307 = vrot.slane %v5306, 4
      %v5309 = vshll.u32 %v5265, 16
      %v5311 = vrot.slane %v5309, 5
      %v5312 = vsel %vm828, %v5307, %v5311
      %v5314 = vshrl.u32 %v5266, 16
      %v5316 = vrot.slane %v5314, 4
      %v5317 = vshll.u32 %v5266, 16
      %v5319 = vrot.slane %v5317, 5
      %v5320 = vor.u32 %v5316, %v5319
      %v5321 = vrot.slane %v5320, 4
      %v5323 = vshll.u32 %v5267, 16
      %v5325 = vrot.slane %v5323, 5
      %v5326 = vsel %vm828, %v5321, %v5325
      %v5327 = vshrl.u32 %v5267, 16
      %v5329 = vrot.slane %v5327, 4
      %v5330 = vor.u32 %v5329, %v5325
      %v5331 = vrot.slane %v5330, 4
      %v5333 = vshll.u32 %v5268, 16
      %v5335 = vrot.slane %v5333, 5
      %v5336 = vsel %vm828, %v5331, %v5335
      %v5338 = vshrl.u32 %v5269, 16
      %v5340 = vrot.slane %v5338, 4
      %v5341 = vshll.u32 %v5269, 16
      %v5343 = vrot.slane %v5341, 5
      %v5344 = vor.u32 %v5340, %v5343
      %v5345 = vrot.slane %v5344, 4
      %v5347 = vshll.u32 %v5270, 16
      %v5349 = vrot.slane %v5347, 5
      %v5350 = vsel %vm828, %v5345, %v5349
      %v5351 = vshrl.u32 %v5270, 16
      %v5353 = vrot.slane %v5351, 4
      %v5354 = vor.u32 %v5353, %v5349
      %v5355 = vrot.slane %v5354, 4
      %v5357 = vshll.u32 %v5271, 16
      %v5359 = vrot.slane %v5357, 5
      %v5360 = vsel %vm828, %v5355, %v5359
      %v5362 = vshrl.u32 %v5272, 16
      %v5364 = vrot.slane %v5362, 4
      %v5365 = vshll.u32 %v5272, 16
      %v5367 = vrot.slane %v5365, 5
      %v5368 = vor.u32 %v5364, %v5367
      %v5369 = vrot.slane %v5368, 4
      %v5371 = vshll.u32 %v5273, 16
      %v5373 = vrot.slane %v5371, 5
      %v5374 = vsel %vm828, %v5369, %v5373
      %v5375 = vshrl.u32 %v5273, 16
      %v5377 = vrot.slane %v5375, 4
      %v5378 = vor.u32 %v5377, %v5373
      %v5379 = vrot.slane %v5378, 4
      %v5381 = vshll.u32 %v5274, 16
      %v5383 = vrot.slane %v5381, 5
      %v5384 = vsel %vm828, %v5379, %v5383
      %v5386 = vshrl.u32 %v5275, 16
      %v5388 = vrot.slane %v5386, 4
      %v5389 = vshll.u32 %v5275, 16
      %v5391 = vrot.slane %v5389, 5
      %v5392 = vor.u32 %v5388, %v5391
      %v5393 = vrot.slane %v5392, 4
      %v5395 = vshll.u32 %v5276, 16
      %v5397 = vrot.slane %v5395, 5
      %v5398 = vsel %vm828, %v5393, %v5397
      %v5399 = vshrl.u32 %v5276, 16
      %v5401 = vrot.slane %v5399, 4
      %v5402 = vor.u32 %v5401, %v5397
      %v5403 = vrot.slane %v5402, 4
      %v5405 = vshll.u32 %v5277, 16
      %v5407 = vrot.slane %v5405, 5
      %v5408 = vsel %vm828, %v5403, %v5407
      %v5410 = vshrl.u32 %v5278, 16
      %v5412 = vrot.slane %v5410, 4
      %v5413 = vshll.u32 %v5278, 16
      %v5415 = vrot.slane %v5413, 5
      %v5416 = vor.u32 %v5412, %v5415
      %v5417 = vrot.slane %v5416, 4
      %v5419 = vshll.u32 %v5279, 16
      %v5421 = vrot.slane %v5419, 5
      %v5422 = vsel %vm828, %v5417, %v5421
      %v5423 = vshrl.u32 %v5279, 16
      %v5425 = vrot.slane %v5423, 4
      %v5426 = vor.u32 %v5425, %v5421
      %v5427 = vrot.slane %v5426, 4
      %v5429 = vshll.u32 %v5280, 16
      %v5431 = vrot.slane %v5429, 5
      %v5432 = vsel %vm828, %v5427, %v5431
      %v5434 = vshrl.u32 %v5281, 16
      %v5436 = vrot.slane %v5434, 4
      %v5437 = vshll.u32 %v5281, 16
      %v5439 = vrot.slane %v5437, 5
      %v5440 = vor.u32 %v5436, %v5439
      %v5441 = vrot.slane %v5440, 4
      %v5443 = vshll.u32 %v5282, 16
      %v5445 = vrot.slane %v5443, 5
      %v5446 = vsel %vm828, %v5441, %v5445
      %v5447 = vshrl.u32 %v5282, 16
      %v5449 = vrot.slane %v5447, 4
      %v5450 = vor.u32 %v5449, %v5445
      %v5451 = vrot.slane %v5450, 4
      %v5453 = vshll.u32 %v5283, 16
      %v5455 = vrot.slane %v5453, 5
      %v5456 = vsel %vm828, %v5451, %v5455
      %v5458 = vshrl.u32 %v5284, 16
      %v5460 = vrot.slane %v5458, 4
      %v5461 = vshll.u32 %v5284, 16
      %v5463 = vrot.slane %v5461, 5
      %v5464 = vor.u32 %v5460, %v5463
      %v5465 = vrot.slane %v5464, 4
      %v5467 = vshll.u32 %v5285, 16
      %v5469 = vrot.slane %v5467, 5
      %v5470 = vsel %vm828, %v5465, %v5469
      %v5471 = vshrl.u32 %v5285, 16
      %v5473 = vrot.slane %v5471, 4
      %v5474 = vor.u32 %v5473, %v5469
      %v5475 = vrot.slane %v5474, 4
      %v5477 = vshll.u32 %v5286, 16
      %v5479 = vrot.slane %v5477, 5
      %v5480 = vsel %vm828, %v5475, %v5479
      %v5481 = vunpack.c.l.b16 %v5302
      %v5482 = vunpack.c.l.b16 %v5312
      %v5483 = vunpack.c.l.b16 %v5326
      %v5484 = vunpack.c.l.b16 %v5336
      %v5485 = vunpack.c.l.b16 %v5350
      %v5486 = vunpack.c.l.b16 %v5360
      %v5487 = vunpack.c.l.b16 %v5374
      %v5488 = vunpack.c.l.b16 %v5384
      %v5489 = vunpack.c.l.b16 %v5398
      %v5490 = vunpack.c.l.b16 %v5408
      %v5491 = vunpack.c.l.b16 %v5422
      %v5492 = vunpack.c.l.b16 %v5432
      %v5493 = vunpack.c.l.b16 %v5446
      %v5494 = vunpack.c.l.b16 %v5456
      %v5495 = vunpack.c.l.b16 %v5470
      %v5496 = vunpack.c.l.b16 %v5480
      %v5497 = vpack.c.b16 %v5482, %v5481
      %v5498 = vpack.c.b16 %v5484, %v5483
      %v5499 = vpack.c.b16 %v5486, %v5485
      %v5500 = vpack.c.b16 %v5488, %v5487
      %v5501 = vpack.c.b16 %v5490, %v5489
      %v5502 = vpack.c.b16 %v5492, %v5491
      %v5503 = vpack.c.b16 %v5494, %v5493
      %v5504 = vpack.c.b16 %v5496, %v5495
      %v5507 = vunpack.c.l.b16 %v5287
      %v5508 = vunpack.c.l.b16 %v5288
      %v5509 = vpack.c.b16 %v5508, %v5507
      %v5512 = vsel %vm1051, %v5497, 0
      %v5515 = vsel %vm1051, %v5498, 0
      %v5518 = vsel %vm1051, %v5499, 0
      %v5521 = vsel %vm1051, %v5500, 0
      %v5524 = vsel %vm1051, %v5501, 0
      %v5527 = vsel %vm1051, %v5502, 0
      %v5530 = vsel %vm1051, %v5503, 0
      %v5533 = vsel %vm1051, %v5504, 0
      %5535 = vmatprep.subr.bf16.mxu0 0
      %5536 = vmatpush1.bf16.msra.mxu0 %v5509
      %5537 = vmatprep.subr.bf16.mxu0 0
      %5538 = vmatpush1.bf16.msra.mxu0 0
      %5539 = vmatprep.subr.bf16.mxu0 0
      %5540 = vmatpush1.bf16.msra.mxu0 0
      %5541 = vmatprep.subr.bf16.mxu0 0
      %5542 = vmatpush1.bf16.msra.mxu0 0
      %5543 = vmatprep.subr.bf16.mxu0 0
      %5544 = vmatpush1.bf16.msra.mxu0 0
      %5545 = vmatprep.subr.bf16.mxu0 0
      %5546 = vmatpush1.bf16.msra.mxu0 0
      %5547 = vmatprep.subr.bf16.mxu0 0
      %5548 = vmatpush1.bf16.msra.mxu0 0
      %5549 = vmatprep.subr.bf16.mxu0 0
      %5550 = vmatpush1.bf16.msra.mxu0 0
      %5551 = vmatprep.subr.bf16.mxu0 0
      %5552 = vmatpush1.bf16.msra.mxu0 0
      %5553 = vmatprep.subr.bf16.mxu0 0
      %5554 = vmatpush1.bf16.msra.mxu0 0
      %5555 = vmatprep.subr.bf16.mxu0 0
      %5556 = vmatpush1.bf16.msra.mxu0 0
      %5557 = vmatprep.subr.bf16.mxu0 0
      %5558 = vmatpush1.bf16.msra.mxu0 0
      %5559 = vmatprep.subr.bf16.mxu0 0
      %5560 = vmatpush1.bf16.msra.mxu0 0
      %5561 = vmatprep.subr.bf16.mxu0 0
      %5562 = vmatpush1.bf16.msra.mxu0 0
      %5563 = vmatprep.subr.bf16.mxu0 0
      %5564 = vmatpush1.bf16.msra.mxu0 0
      %5565 = vmatprep.subr.bf16.mxu0 0
      %5566 = vmatpush1.bf16.msra.mxu0 0
      %5567 = vmatprep.mubr.bf16.mxu0 0
      %5568 = vmatmul.mubr.bf16.gmra.mrb[0].mxu0 %v5512
      %v5569 = vpop.f32.mrb[0].mxu0
      %v5570 = vadd.f32 0.0, %v5569
      %v5571 = vpop.f32.mrb[0].mxu0
      %v5572 = vpop.f32.mrb[0].mxu0
      %v5573 = vadd.f32 0.0, %v5572
      %v5574 = vpop.f32.mrb[0].mxu0
      %5575 = vmatprep.mubr.bf16.mxu0 0
      %5576 = vmatmul.mubr.bf16.gmra.mrb[0].mxu0 %v5515
      %v5577 = vpop.f32.mrb[0].mxu0
      %v5578 = vadd.f32 0.0, %v5577
      %v5579 = vpop.f32.mrb[0].mxu0
      %v5580 = vpop.f32.mrb[0].mxu0
      %v5581 = vadd.f32 0.0, %v5580
      %v5582 = vpop.f32.mrb[0].mxu0
      %5583 = vmatprep.mubr.bf16.mxu0 0
      %5584 = vmatmul.mubr.bf16.gmra.mrb[0].mxu0 %v5518
      %v5585 = vpop.f32.mrb[0].mxu0
      %v5586 = vadd.f32 0.0, %v5585
      %v5587 = vpop.f32.mrb[0].mxu0
      %v5588 = vpop.f32.mrb[0].mxu0
      %v5589 = vadd.f32 0.0, %v5588
      %v5590 = vpop.f32.mrb[0].mxu0
      %5591 = vmatprep.mubr.bf16.mxu0 0
      %5592 = vmatmul.mubr.bf16.gmra.mrb[0].mxu0 %v5521
      %v5593 = vpop.f32.mrb[0].mxu0
      %v5594 = vadd.f32 0.0, %v5593
      %v5595 = vpop.f32.mrb[0].mxu0
      %v5596 = vpop.f32.mrb[0].mxu0
      %v5597 = vadd.f32 0.0, %v5596
      %v5598 = vpop.f32.mrb[0].mxu0
      %5599 = vmatprep.mubr.bf16.mxu0 0
      %5600 = vmatmul.mubr.bf16.gmra.mrb[0].mxu0 %v5524
      %v5601 = vpop.f32.mrb[0].mxu0
      %v5602 = vadd.f32 0.0, %v5601
      %v5603 = vpop.f32.mrb[0].mxu0
      %v5604 = vpop.f32.mrb[0].mxu0
      %v5605 = vadd.f32 0.0, %v5604
      %v5606 = vpop.f32.mrb[0].mxu0
      %5607 = vmatprep.mubr.bf16.mxu0 0
      %5608 = vmatmul.mubr.bf16.gmra.mrb[0].mxu0 %v5527
      %v5609 = vpop.f32.mrb[0].mxu0
      %v5610 = vadd.f32 0.0, %v5609
      %v5611 = vpop.f32.mrb[0].mxu0
      %v5612 = vpop.f32.mrb[0].mxu0
      %v5613 = vadd.f32 0.0, %v5612
      %v5614 = vpop.f32.mrb[0].mxu0
      %5615 = vmatprep.mubr.bf16.mxu0 0
      %5616 = vmatmul.mubr.bf16.gmra.mrb[0].mxu0 %v5530
      %v5617 = vpop.f32.mrb[0].mxu0
      %v5618 = vadd.f32 0.0, %v5617
      %v5619 = vpop.f32.mrb[0].mxu0
      %v5620 = vpop.f32.mrb[0].mxu0
      %v5621 = vadd.f32 0.0, %v5620
      %v5622 = vpop.f32.mrb[0].mxu0
      %5623 = vmatprep.mubr.bf16.mxu0 0
      %5624 = vmatmul.mubr.bf16.gmra.mrb[0].mxu0 %v5533
      %v5625 = vpop.f32.mrb[0].mxu0
      %v5626 = vadd.f32 0.0, %v5625
      %v5627 = vpop.f32.mrb[0].mxu0
      %v5628 = vpop.f32.mrb[0].mxu0
      %v5629 = vadd.f32 0.0, %v5628
      %v5630 = vpop.f32.mrb[0].mxu0
      %5631 = vdwg.mxu0
      %v5632 = vadd.f32 %v5247, %v5570
      %v5633 = vadd.f32 %v5248, %v5573
      %v5634 = vadd.f32 %v5249, %v5578
      %v5635 = vadd.f32 %v5250, %v5581
      %v5636 = vadd.f32 %v5251, %v5586
      %v5637 = vadd.f32 %v5252, %v5589
      %v5638 = vadd.f32 %v5253, %v5594
      %v5639 = vadd.f32 %v5254, %v5597
      %v5640 = vadd.f32 %v5255, %v5602
      %v5641 = vadd.f32 %v5256, %v5605
      %v5642 = vadd.f32 %v5257, %v5610
      %v5643 = vadd.f32 %v5258, %v5613
      %v5644 = vadd.f32 %v5259, %v5618
      %v5645 = vadd.f32 %v5260, %v5621
      %v5646 = vadd.f32 %v5261, %v5626
      %v5647 = vadd.f32 %v5262, %v5629
      %v5648 = vld [vmem:[%s5061] sm:$0xe]
      %v5649 = vld [vmem:[%s5061 + $0xc] sm:$0xe]
      %v5650 = vld [vmem:[%s5061 + $0x18] sm:$0xe]
      %v5651 = vld [vmem:[%s5061 + $0x24] sm:$0xe]
      %v5652 = vld [vmem:[%s5061 + $0x30] sm:$0xe]
      %v5653 = vld [vmem:[%s5061 + $0x3c] sm:$0xe]
      %v5654 = vld [vmem:[%s5061 + $0x48] sm:$0xe]
      %v5655 = vld [vmem:[%s5061 + $0x54] sm:$0xe]
      %v5656 = vld [vmem:[%s1 + $0x40] sm:$0xf]
      %v5657 = vld [vmem:[%s1 + $0x44] sm:$0xf]
      %v5682 = vrot.slane %v5648, 5
      %v5683 = vrot.slane %v5682, 4
      %v5684 = vrot.slane %v5264, 5
      %v5685 = vsel %vm1368, %v5683, %v5684
      %v5686 = vrot.slane %v5684, 4
      %v5687 = vrot.slane %v5265, 5
      %v5688 = vsel %vm1368, %v5686, %v5687
      %v5689 = vrot.slane %v5649, 5
      %v5690 = vrot.slane %v5689, 4
      %v5691 = vrot.slane %v5267, 5
      %v5692 = vsel %vm1368, %v5690, %v5691
      %v5693 = vrot.slane %v5691, 4
      %v5694 = vrot.slane %v5268, 5
      %v5695 = vsel %vm1368, %v5693, %v5694
      %v5696 = vrot.slane %v5650, 5
      %v5697 = vrot.slane %v5696, 4
      %v5698 = vrot.slane %v5270, 5
      %v5699 = vsel %vm1368, %v5697, %v5698
      %v5700 = vrot.slane %v5698, 4
      %v5701 = vrot.slane %v5271, 5
      %v5702 = vsel %vm1368, %v5700, %v5701
      %v5703 = vrot.slane %v5651, 5
      %v5704 = vrot.slane %v5703, 4
      %v5705 = vrot.slane %v5273, 5
      %v5706 = vsel %vm1368, %v5704, %v5705
      %v5707 = vrot.slane %v5705, 4
      %v5708 = vrot.slane %v5274, 5
      %v5709 = vsel %vm1368, %v5707, %v5708
      %v5710 = vrot.slane %v5652, 5
      %v5711 = vrot.slane %v5710, 4
      %v5712 = vrot.slane %v5276, 5
      %v5713 = vsel %vm1368, %v5711, %v5712
      %v5714 = vrot.slane %v5712, 4
      %v5715 = vrot.slane %v5277, 5
      %v5716 = vsel %vm1368, %v5714, %v5715
      %v5717 = vrot.slane %v5653, 5
      %v5718 = vrot.slane %v5717, 4
      %v5719 = vrot.slane %v5279, 5
      %v5720 = vsel %vm1368, %v5718, %v5719
      %v5721 = vrot.slane %v5719, 4
      %v5722 = vrot.slane %v5280, 5
      %v5723 = vsel %vm1368, %v5721, %v5722
      %v5724 = vrot.slane %v5654, 5
      %v5725 = vrot.slane %v5724, 4
      %v5726 = vrot.slane %v5282, 5
      %v5727 = vsel %vm1368, %v5725, %v5726
      %v5728 = vrot.slane %v5726, 4
      %v5729 = vrot.slane %v5283, 5
      %v5730 = vsel %vm1368, %v5728, %v5729
      %v5731 = vrot.slane %v5655, 5
      %v5732 = vrot.slane %v5731, 4
      %v5733 = vrot.slane %v5285, 5
      %v5734 = vsel %vm1368, %v5732, %v5733
      %v5735 = vrot.slane %v5733, 4
      %v5736 = vrot.slane %v5286, 5
      %v5737 = vsel %vm1368, %v5735, %v5736
      %v5738 = vunpack.c.l.b16 %v5685
      %v5739 = vunpack.c.l.b16 %v5688
      %v5740 = vunpack.c.l.b16 %v5692
      %v5741 = vunpack.c.l.b16 %v5695
      %v5742 = vunpack.c.l.b16 %v5699
      %v5743 = vunpack.c.l.b16 %v5702
      %v5744 = vunpack.c.l.b16 %v5706
      %v5745 = vunpack.c.l.b16 %v5709
      %v5746 = vunpack.c.l.b16 %v5713
      %v5747 = vunpack.c.l.b16 %v5716
      %v5748 = vunpack.c.l.b16 %v5720
      %v5749 = vunpack.c.l.b16 %v5723
      %v5750 = vunpack.c.l.b16 %v5727
      %v5751 = vunpack.c.l.b16 %v5730
      %v5752 = vunpack.c.l.b16 %v5734
      %v5753 = vunpack.c.l.b16 %v5737
      %v5754 = vpack.c.b16 %v5739, %v5738
      %v5755 = vpack.c.b16 %v5741, %v5740
      %v5756 = vpack.c.b16 %v5743, %v5742
      %v5757 = vpack.c.b16 %v5745, %v5744
      %v5758 = vpack.c.b16 %v5747, %v5746
      %v5759 = vpack.c.b16 %v5749, %v5748
      %v5760 = vpack.c.b16 %v5751, %v5750
      %v5761 = vpack.c.b16 %v5753, %v5752
      %v5764 = vunpack.c.l.b16 %v5656
      %v5765 = vunpack.c.l.b16 %v5657
      %v5766 = vpack.c.b16 %v5765, %v5764
      %v5769 = vsel %vm1051, %v5754, 0
      %v5772 = vsel %vm1051, %v5755, 0
      %v5775 = vsel %vm1051, %v5756, 0
      %v5778 = vsel %vm1051, %v5757, 0
      %v5781 = vsel %vm1051, %v5758, 0
      %v5784 = vsel %vm1051, %v5759, 0
      %v5787 = vsel %vm1051, %v5760, 0
      %v5790 = vsel %vm1051, %v5761, 0
      %5792 = vmatprep.subr.bf16.mxu0 0
      %5793 = vmatpush1.bf16.msra.mxu0 %v5766
      %5794 = vmatprep.subr.bf16.mxu0 0
      %5795 = vmatpush1.bf16.msra.mxu0 0
      %5796 = vmatprep.subr.bf16.mxu0 0
      %5797 = vmatpush1.bf16.msra.mxu0 0
      %5798 = vmatprep.subr.bf16.mxu0 0
      %5799 = vmatpush1.bf16.msra.mxu0 0
      %5800 = vmatprep.subr.bf16.mxu0 0
      %5801 = vmatpush1.bf16.msra.mxu0 0
      %5802 = vmatprep.subr.bf16.mxu0 0
      %5803 = vmatpush1.bf16.msra.mxu0 0
      %5804 = vmatprep.subr.bf16.mxu0 0
      %5805 = vmatpush1.bf16.msra.mxu0 0
      %5806 = vmatprep.subr.bf16.mxu0 0
      %5807 = vmatpush1.bf16.msra.mxu0 0
      %5808 = vmatprep.subr.bf16.mxu0 0
      %5809 = vmatpush1.bf16.msra.mxu0 0
      %5810 = vmatprep.subr.bf16.mxu0 0
      %5811 = vmatpush1.bf16.msra.mxu0 0
      %5812 = vmatprep.subr.bf16.mxu0 0
      %5813 = vmatpush1.bf16.msra.mxu0 0
      %5814 = vmatprep.subr.bf16.mxu0 0
      %5815 = vmatpush1.bf16.msra.mxu0 0
      %5816 = vmatprep.subr.bf16.mxu0 0
      %5817 = vmatpush1.bf16.msra.mxu0 0
      %5818 = vmatprep.subr.bf16.mxu0 0
      %5819 = vmatpush1.bf16.msra.mxu0 0
      %5820 = vmatprep.subr.bf16.mxu0 0
      %5821 = vmatpush1.bf16.msra.mxu0 0
      %5822 = vmatprep.subr.bf16.mxu0 0
      %5823 = vmatpush1.bf16.msra.mxu0 0
      %5824 = vmatprep.mubr.bf16.mxu0 0
      %5825 = vmatmul.mubr.bf16.gmra.mrb[0].mxu0 %v5769
      %v5826 = vpop.f32.mrb[0].mxu0
      %v5827 = vadd.f32 0.0, %v5826
      %v5828 = vpop.f32.mrb[0].mxu0
      %v5829 = vpop.f32.mrb[0].mxu0
      %v5830 = vadd.f32 0.0, %v5829
      %v5831 = vpop.f32.mrb[0].mxu0
      %5832 = vmatprep.mubr.bf16.mxu0 0
      %5833 = vmatmul.mubr.bf16.gmra.mrb[0].mxu0 %v5772
      %v5834 = vpop.f32.mrb[0].mxu0
      %v5835 = vadd.f32 0.0, %v5834
      %v5836 = vpop.f32.mrb[0].mxu0
      %v5837 = vpop.f32.mrb[0].mxu0
      %v5838 = vadd.f32 0.0, %v5837
      %v5839 = vpop.f32.mrb[0].mxu0
      %5840 = vmatprep.mubr.bf16.mxu0 0
      %5841 = vmatmul.mubr.bf16.gmra.mrb[0].mxu0 %v5775
      %v5842 = vpop.f32.mrb[0].mxu0
      %v5843 = vadd.f32 0.0, %v5842
      %v5844 = vpop.f32.mrb[0].mxu0
      %v5845 = vpop.f32.mrb[0].mxu0
      %v5846 = vadd.f32 0.0, %v5845
      %v5847 = vpop.f32.mrb[0].mxu0
      %5848 = vmatprep.mubr.bf16.mxu0 0
      %5849 = vmatmul.mubr.bf16.gmra.mrb[0].mxu0 %v5778
      %v5850 = vpop.f32.mrb[0].mxu0
      %v5851 = vadd.f32 0.0, %v5850
      %v5852 = vpop.f32.mrb[0].mxu0
      %v5853 = vpop.f32.mrb[0].mxu0
      %v5854 = vadd.f32 0.0, %v5853
      %v5855 = vpop.f32.mrb[0].mxu0
      %5856 = vmatprep.mubr.bf16.mxu0 0
      %5857 = vmatmul.mubr.bf16.gmra.mrb[0].mxu0 %v5781
      %v5858 = vpop.f32.mrb[0].mxu0
      %v5859 = vadd.f32 0.0, %v5858
      %v5860 = vpop.f32.mrb[0].mxu0
      %v5861 = vpop.f32.mrb[0].mxu0
      %v5862 = vadd.f32 0.0, %v5861
      %v5863 = vpop.f32.mrb[0].mxu0
      %5864 = vmatprep.mubr.bf16.mxu0 0
      %5865 = vmatmul.mubr.bf16.gmra.mrb[0].mxu0 %v5784
      %v5866 = vpop.f32.mrb[0].mxu0
      %v5867 = vadd.f32 0.0, %v5866
      %v5868 = vpop.f32.mrb[0].mxu0
      %v5869 = vpop.f32.mrb[0].mxu0
      %v5870 = vadd.f32 0.0, %v5869
      %v5871 = vpop.f32.mrb[0].mxu0
      %5872 = vmatprep.mubr.bf16.mxu0 0
      %5873 = vmatmul.mubr.bf16.gmra.mrb[0].mxu0 %v5787
      %v5874 = vpop.f32.mrb[0].mxu0
      %v5875 = vadd.f32 0.0, %v5874
      %v5876 = vpop.f32.mrb[0].mxu0
      %v5877 = vpop.f32.mrb[0].mxu0
      %v5878 = vadd.f32 0.0, %v5877
      %v5879 = vpop.f32.mrb[0].mxu0
      %5880 = vmatprep.mubr.bf16.mxu0 0
      %5881 = vmatmul.mubr.bf16.gmra.mrb[0].mxu0 %v5790
      %v5882 = vpop.f32.mrb[0].mxu0
      %v5883 = vadd.f32 0.0, %v5882
      %v5884 = vpop.f32.mrb[0].mxu0
      %v5885 = vpop.f32.mrb[0].mxu0
      %v5886 = vadd.f32 0.0, %v5885
      %v5887 = vpop.f32.mrb[0].mxu0
      %5888 = vdwg.mxu0
      %v5889 = vadd.f32 %v5632, %v5827
      %v5890 = vadd.f32 %v5633, %v5830
      %v5891 = vadd.f32 %v5634, %v5835
      %v5892 = vadd.f32 %v5635, %v5838
      %v5893 = vadd.f32 %v5636, %v5843
      %v5894 = vadd.f32 %v5637, %v5846
      %v5895 = vadd.f32 %v5638, %v5851
      %v5896 = vadd.f32 %v5639, %v5854
      %v5897 = vadd.f32 %v5640, %v5859
      %v5898 = vadd.f32 %v5641, %v5862
      %v5899 = vadd.f32 %v5642, %v5867
      %v5900 = vadd.f32 %v5643, %v5870
      %v5901 = vadd.f32 %v5644, %v5875
      %v5902 = vadd.f32 %v5645, %v5878
      %v5903 = vadd.f32 %v5646, %v5883
      %v5904 = vadd.f32 %v5647, %v5886
      %v5905 = vadd.f32 %v5889, %v3283
      %v5906 = vadd.f32 %v5890, %v3283
      %v5907 = vadd.f32 %v5891, %v3283
      %v5908 = vadd.f32 %v5892, %v3283
      %v5909 = vadd.f32 %v5893, %v3283
      %v5910 = vadd.f32 %v5894, %v3283
      %v5911 = vadd.f32 %v5895, %v3283
      %v5912 = vadd.f32 %v5896, %v3283
      %v5913 = vadd.f32 %v5897, %v3283
      %v5914 = vadd.f32 %v5898, %v3283
      %v5915 = vadd.f32 %v5899, %v3283
      %v5916 = vadd.f32 %v5900, %v3283
      %v5917 = vadd.f32 %v5901, %v3283
      %v5918 = vadd.f32 %v5902, %v3283
      %v5919 = vadd.f32 %v5903, %v3283
      %v5920 = vadd.f32 %v5904, %v3283
      %vm5921 = vcmp.ge.f32.partialorder %v5905, 0.0
      %vm5922 = vcmp.ge.f32.partialorder %v5906, 0.0
      %vm5923 = vcmp.ge.f32.partialorder %v5907, 0.0
      %vm5924 = vcmp.ge.f32.partialorder %v5908, 0.0
      %vm5925 = vcmp.ge.f32.partialorder %v5909, 0.0
      %vm5926 = vcmp.ge.f32.partialorder %v5910, 0.0
      %vm5927 = vcmp.ge.f32.partialorder %v5911, 0.0
      %vm5928 = vcmp.ge.f32.partialorder %v5912, 0.0
      %vm5929 = vcmp.ge.f32.partialorder %v5913, 0.0
      %vm5930 = vcmp.ge.f32.partialorder %v5914, 0.0
      %vm5931 = vcmp.ge.f32.partialorder %v5915, 0.0
      %vm5932 = vcmp.ge.f32.partialorder %v5916, 0.0
      %vm5933 = vcmp.ge.f32.partialorder %v5917, 0.0
      %vm5934 = vcmp.ge.f32.partialorder %v5918, 0.0
      %vm5935 = vcmp.ge.f32.partialorder %v5919, 0.0
      %vm5936 = vcmp.ge.f32.partialorder %v5920, 0.0
      %v5937 = vmul.f32 %v5905, 0.01
      %v5938 = vmul.f32 %v5906, 0.01
      %v5939 = vmul.f32 %v5907, 0.01
      %v5940 = vmul.f32 %v5908, 0.01
      %v5941 = vmul.f32 %v5909, 0.01
      %v5942 = vmul.f32 %v5910, 0.01
      %v5943 = vmul.f32 %v5911, 0.01
      %v5944 = vmul.f32 %v5912, 0.01
      %v5945 = vmul.f32 %v5913, 0.01
      %v5946 = vmul.f32 %v5914, 0.01
      %v5947 = vmul.f32 %v5915, 0.01
      %v5948 = vmul.f32 %v5916, 0.01
      %v5949 = vmul.f32 %v5917, 0.01
      %v5950 = vmul.f32 %v5918, 0.01
      %v5951 = vmul.f32 %v5919, 0.01
      %v5952 = vmul.f32 %v5920, 0.01
      %v5953 = vsel %vm5921, %v5905, %v5937
      %v5954 = vsel %vm5922, %v5906, %v5938
      %v5955 = vsel %vm5923, %v5907, %v5939
      %v5956 = vsel %vm5924, %v5908, %v5940
      %v5957 = vsel %vm5925, %v5909, %v5941
      %v5958 = vsel %vm5926, %v5910, %v5942
      %v5959 = vsel %vm5927, %v5911, %v5943
      %v5960 = vsel %vm5928, %v5912, %v5944
      %v5961 = vsel %vm5929, %v5913, %v5945
      %v5962 = vsel %vm5930, %v5914, %v5946
      %v5963 = vsel %vm5931, %v5915, %v5947
      %v5964 = vsel %vm5932, %v5916, %v5948
      %v5965 = vsel %vm5933, %v5917, %v5949
      %v5966 = vsel %vm5934, %v5918, %v5950
      %v5967 = vsel %vm5935, %v5919, %v5951
      %v5968 = vsel %vm5936, %v5920, %v5952
      %v5969 = vpack.c.bf16 %v5954, %v5953
      %v5970 = vpack.c.bf16 %v5956, %v5955
      %v5971 = vpack.c.bf16 %v5958, %v5957
      %v5972 = vpack.c.bf16 %v5960, %v5959
      %v5973 = vpack.c.bf16 %v5962, %v5961
      %v5974 = vpack.c.bf16 %v5964, %v5963
      %v5975 = vpack.c.bf16 %v5966, %v5965
      %v5976 = vpack.c.bf16 %v5968, %v5967
      %v5985 = vunpack.c.l.b16 %v5969
      %v5986 = vunpack.c.h.b16 %v5969
      %v5987 = vunpack.c.l.b16 %v5970
      %v5988 = vunpack.c.h.b16 %v5970
      %v5989 = vunpack.c.l.b16 %v5971
      %v5990 = vunpack.c.h.b16 %v5971
      %v5991 = vunpack.c.l.b16 %v5972
      %v5992 = vunpack.c.h.b16 %v5972
      %v5993 = vunpack.c.l.b16 %v5973
      %v5994 = vunpack.c.h.b16 %v5973
      %v5995 = vunpack.c.l.b16 %v5974
      %v5996 = vunpack.c.h.b16 %v5974
      %v5997 = vunpack.c.l.b16 %v5975
      %v5998 = vunpack.c.h.b16 %v5975
      %v5999 = vunpack.c.l.b16 %v5976
      %v6000 = vunpack.c.h.b16 %v5976
      %v6001 = vpack.c.b16 %v5985, %v5985
      %v6002 = vpack.c.b16 %v5986, %v5986
      %v6003 = vpack.c.b16 %v5987, %v5987
      %v6004 = vpack.c.b16 %v5988, %v5988
      %v6005 = vpack.c.b16 %v5989, %v5989
      %v6006 = vpack.c.b16 %v5990, %v5990
      %v6007 = vpack.c.b16 %v5991, %v5991
      %v6008 = vpack.c.b16 %v5992, %v5992
      %v6009 = vpack.c.b16 %v5993, %v5993
      %v6010 = vpack.c.b16 %v5994, %v5994
      %v6011 = vpack.c.b16 %v5995, %v5995
      %v6012 = vpack.c.b16 %v5996, %v5996
      %v6013 = vpack.c.b16 %v5997, %v5997
      %v6014 = vpack.c.b16 %v5998, %v5998
      %v6015 = vpack.c.b16 %v5999, %v5999
      %v6016 = vpack.c.b16 %v6000, %v6000
      %s6033 = scalar_lea.vmem %s170, 64
      %6034 = vst [vmem:[%s6033] sm:$0xf] %v6001
      %6035 = vst [vmem:[%s6033 + $0x4] sm:$0xf] %v6002
      %6036 = vst [vmem:[%s6033 + $0x8] sm:$0xf] %v6003
      %6037 = vst [vmem:[%s6033 + $0xc] sm:$0xf] %v6004
      %6038 = vst [vmem:[%s6033 + $0x10] sm:$0xf] %v6005
      %6039 = vst [vmem:[%s6033 + $0x14] sm:$0xf] %v6006
      %6040 = vst [vmem:[%s6033 + $0x18] sm:$0xf] %v6007
      %6041 = vst [vmem:[%s6033 + $0x1c] sm:$0xf] %v6008
      %6042 = vst [vmem:[%s6033 + $0x20] sm:$0xf] %v6009
      %6043 = vst [vmem:[%s6033 + $0x24] sm:$0xf] %v6010
      %6044 = vst [vmem:[%s6033 + $0x28] sm:$0xf] %v6011
      %6045 = vst [vmem:[%s6033 + $0x2c] sm:$0xf] %v6012
      %6046 = vst [vmem:[%s6033 + $0x30] sm:$0xf] %v6013
      %6047 = vst [vmem:[%s6033 + $0x34] sm:$0xf] %v6014
      %6048 = vst [vmem:[%s6033 + $0x38] sm:$0xf] %v6015
      %6049 = vst [vmem:[%s6033 + $0x3c] sm:$0xf] %v6016
      %p6050 = scmp.lt.s32.totalorder %s14, 1
      %s6051 = scalar_select %p6050, %s14, 1
      %s6052 = smul.addr %s6051, 32
      %s6053 = smul.addr %s6052, 4
      %s6054 = scalar_lea.vmem %s3, %s6053
      // Predicated region
      $region33: #{convnet_forward.4} parent=31 // pred_check
        %p6055 = pneg %p100
      $region34: #{convnet_forward.4} parent=31 // pred_check_branch
        %6057 = sbr.rel (%p6055) target = $region36
      $region35: #{convnet_forward.4} parent=31 // pred_region
        _
      $region36: #{convnet_forward.4} parent=31 // pred_fallthru
        _
    $region32: #{convnet_forward.4} parent=5 // pred_fallthru
      _
    %p6058 = scmp.le.s32.totalorder 2, %s9
    // Predicated region
    $region37: #{convnet_forward.4} parent=5 // pred_check
      %p6059 = pneg %p6058
    $region38: #{convnet_forward.4} parent=5 // pred_check_branch
      %6061 = sbr.rel (%p6059) target = $region40
    $region39: #{convnet_forward.4} parent=5 // pred_region
      %s6062 = ssub.s32 %s9, 2
      // Predicated region
      $region41: #{convnet_forward.4} parent=39 // pred_check
        %p6063 = pneg %p106
      $region42: #{convnet_forward.4} parent=39 // pred_check_branch
        %6065 = sbr.rel (%p6063) target = $region44
      $region43: #{convnet_forward.4} parent=39 // pred_region
        %p6066 = scmp.lt.s32.totalorder %s15, 1
        %s6067 = scalar_select %p6066, %s15, 1
        %s6068 = smul.addr %s6067, 32
        %s6069 = smul.addr %s6068, 4
        %s6070 = scalar_lea.vmem %s3, %s6069
      $region44: #{convnet_forward.4} parent=39 // pred_fallthru
        _
    $region40: #{convnet_forward.4} parent=5 // pred_fallthru
      _
  $region6: #{convnet_forward.4} parent=0 // loop_footer
    %s13 = sadd.s32 1, %s9
  $region7: #{convnet_forward.4} parent=0 // loop_footer_branch
    %8 = sbr.rel target = $region3
  $region8: #{convnet_forward.4} parent=0 // loop_exit
    _

</llo_original>
